<compile_context>
chip_gen: v7x
topology: tpu7x:2x2x1
jax: 0.10.0
libtpu: 0.0.40
codegen_flags: <defaults>
</compile_context>

<pallas_src>
import numpy as np

import jax
import jax.numpy as jnp
from jax.experimental import pallas as pl
from jax.experimental.pallas import tpu as pltpu

EPS = 1e-5
N_PER_BLOCK = 5   # prepared arrays per residual block: (vc, vcm, w1, w2stack, w3)

_BLOCK_ORDER = [
    'lower_res0_branch',
    'lower_res1_main', 'lower_res1_branch',
    'lower_res2_main', 'lower_res2_branch',
    'lower_res3_main', 'lower_res3_branch',
    'lower_res4_main', 'middle', 'upper_res4_main',
    'upper_res3_main', 'upper_res2_main', 'upper_res1_main',
    'output_res',
]

_BLOCK_LEVEL = {
    'lower_res0_branch': 0,
    'lower_res1_main': 1, 'lower_res1_branch': 1,
    'lower_res2_main': 2, 'lower_res2_branch': 2,
    'lower_res3_main': 3, 'lower_res3_branch': 3,
    'lower_res4_main': 4, 'middle': 4, 'upper_res4_main': 4,
    'upper_res3_main': 3, 'upper_res2_main': 2, 'upper_res1_main': 1,
    'output_res': 0,
}


# ----------------------------------------------------------------------------
# In-kernel building blocks (operate on 2-D lane-dense values (rows, lanes)).
# ----------------------------------------------------------------------------
def _res_apply(x2d, vc_ref, vcm_ref, w1_ref, w2_ref, w3_ref):
    """Pre-activation bottleneck residual block on an (H, W*C) lane-dense tile.

    vc  = (4, W*C)  rows: [bn1_scale, bn1_offset, prelu1, bias3]
    vcm = (8, W*Cm) rows: [bias1, bn2_s, bn2_t, prelu2, bias2, bn3_s, bn3_t, prelu3]
    w1  = (W*C,  W*Cm)   block-diagonal 1x1 conv C->Cm            (bf16)
    w2s = (3*W*Cm, W*Cm) stacked banded 3x3-conv matrices (ky=0,1,2) (bf16)
    w3  = (W*Cm, W*C)    block-diagonal 1x1 conv Cm->C            (bf16)
    """
    vc = vc_ref[...]
    vcm = vcm_ref[...]
    s1, t1, a1, b3 = vc[0:1], vc[1:2], vc[2:3], vc[3:4]
    b1, s2, t2, a2 = vcm[0:1], vcm[1:2], vcm[2:3], vcm[3:4]
    b2, s3, t3, a3 = vcm[4:5], vcm[5:6], vcm[6:7], vcm[7:8]

    # BN + PReLU (f32 elementwise).
    y = x2d * s1 + t1
    y = jnp.where(y >= 0.0, y, a1 * y)

    # 1x1 conv C -> Cm (block-diagonal matmul over lanes), bf16 operands, f32 acc.
    y = jnp.dot(y.astype(jnp.bfloat16), w1_ref[...],
                preferred_element_type=jnp.float32) + b1
    y = y * s2 + t2
    y = jnp.where(y >= 0.0, y, a2 * y)

    # 3x3 conv (padding=1): vertical taps via row slices + zero row (no matmul),
    # then ONE merged banded matmul over the lane-concatenated [ym1 | y | yp1].
    h, wcm = y.shape
    zrow = jnp.zeros((1, wcm), jnp.float32)
    if h > 1:
        ym1 = jnp.concatenate([zrow, y[:-1, :]], axis=0)   # row r-1, zero at top
        yp1 = jnp.concatenate([y[1:, :], zrow], axis=0)    # row r+1, zero at bottom
    else:
        ym1 = jnp.zeros_like(y)
        yp1 = jnp.zeros_like(y)
    ybands = jnp.concatenate([ym1, y, yp1], axis=1).astype(jnp.bfloat16)   # (h, 3*wcm)
    c = jnp.dot(ybands, w2_ref[...], preferred_element_type=jnp.float32) + b2
    c = c * s3 + t3
    c = jnp.where(c >= 0.0, c, a3 * c)

    # 1x1 conv Cm -> C, residual add.
    r = jnp.dot(c.astype(jnp.bfloat16), w3_ref[...],
                preferred_element_type=jnp.float32) + b3
    return x2d + r


def _pool2x2(x2d, rowsel_ref, colsel_ref):
    """Exact 2x2 max-pool via even/odd selection matmuls (bf16 0/1 matrices)."""
    xb = x2d.astype(jnp.bfloat16)
    r0 = jnp.dot(rowsel_ref[0], xb, preferred_element_type=jnp.float32)
    r1 = jnp.dot(rowsel_ref[1], xb, preferred_element_type=jnp.float32)
    xh = jnp.maximum(r0, r1).astype(jnp.bfloat16)
    c0 = jnp.dot(xh, colsel_ref[0], preferred_element_type=jnp.float32)
    c1 = jnp.dot(xh, colsel_ref[1], preferred_element_type=jnp.float32)
    return jnp.maximum(c0, c1)


def _upsample2x(x2d, uh_ref, uw_ref):
    """Bilinear 2x upsample (align_corners=True) as two interpolation matmuls."""
    z = jnp.dot(x2d.astype(jnp.bfloat16), uw_ref[...],
                preferred_element_type=jnp.float32)                 # (h, 2*w*c)
    return jnp.dot(uh_ref[...], z.astype(jnp.bfloat16),
                   preferred_element_type=jnp.float32)              # (2h, 2*w*c)


# ----------------------------------------------------------------------------
# The single fused kernel.
# ----------------------------------------------------------------------------
def _make_hourglass_kernel(h0, w0, c):
    n_blk = len(_BLOCK_ORDER)

    def kernel(*refs):
        x_ref = refs[0]
        pos = 1
        blk = {}
        for name in _BLOCK_ORDER:
            blk[name] = refs[pos:pos + N_PER_BLOCK]
            pos += N_PER_BLOCK
        rowsel = refs[pos:pos + 4]; pos += 4
        colsel = refs[pos:pos + 4]; pos += 4
        uh = refs[pos:pos + 4]; pos += 4
        uw = refs[pos:pos + 4]; pos += 4
        obn_ref = refs[pos]; pos += 1
        o_ref = refs[pos]

        def res(v, name):
            return _res_apply(v, *blk[name])

        def pool(v, lvl):
            return _pool2x2(v, rowsel[lvl], colsel[lvl])

        def up(v, lvl):
            return _upsample2x(v, uh[lvl], uw[lvl])

        x = x_ref[...].reshape(h0, w0 * c)

        # -------- down path (skip branches stay VMEM-resident) --------
        branch0 = res(x, 'lower_res0_branch')
        body = pool(x, 0)
        body = res(body, 'lower_res1_main')
        branch1 = res(body, 'lower_res1_branch')
        body = pool(body, 1)
        body = res(body, 'lower_res2_main')
        branch2 = res(body, 'lower_res2_branch')
        body = pool(body, 2)
        body = res(body, 'lower_res3_main')
        branch3 = res(body, 'lower_res3_branch')
        body = pool(body, 3)

        # -------- bottom --------
        body = res(body, 'lower_res4_main')
        body = res(body, 'middle')
        body = res(body, 'upper_res4_main')

        # -------- up path --------
        body = up(body, 3) + branch3
        body = res(body, 'upper_res3_main')
        body = up(body, 2) + branch2
        body = res(body, 'upper_res2_main')
        body = up(body, 1) + branch1
        body = res(body, 'upper_res1_main')
        body = up(body, 0) + branch0
        body = res(body, 'output_res')

        # trailing BN + PReLU
        obn = obn_ref[...]
        y = body * obn[0:1] + obn[1:2]
        y = jnp.where(y >= 0.0, y, obn[2:3] * y)
        o_ref[...] = y.reshape(1, h0, w0 * c)

    return kernel


# ----------------------------------------------------------------------------
# Parameter construction (synthetic, deterministic) and lane-dense preparation.
# ----------------------------------------------------------------------------
def _make_bn(key, ch):
    k1, k2, k3 = jax.random.split(key, 3)
    gamma = 1.0 + 0.1 * jax.random.normal(k1, (ch,), jnp.float32)
    beta = 0.1 * jax.random.normal(k2, (ch,), jnp.float32)
    mean = 0.1 * jax.random.normal(k3, (ch,), jnp.float32)
    var = jnp.ones((ch,), jnp.float32)
    s = gamma / jnp.sqrt(var + EPS)
    t = beta - mean * s
    return s.reshape(1, ch), t.reshape(1, ch)


def _make_resblock_raw(key, c, cm):
    ks = jax.random.split(key, 9)
    s1, t1 = _make_bn(ks[0], c)
    s2, t2 = _make_bn(ks[1], cm)
    s3, t3 = _make_bn(ks[2], cm)
    return dict(
        s1=s1, t1=t1, a1=jnp.full((1, c), 0.25, jnp.float32),
        w1=0.2 * jax.random.normal(ks[3], (c, cm), jnp.float32),
        b1=0.02 * jax.random.normal(ks[4], (1, cm), jnp.float32),
        s2=s2, t2=t2, a2=jnp.full((1, cm), 0.25, jnp.float32),
        w2=0.2 * jax.random.normal(ks[5], (3, 3, cm, cm), jnp.float32),
        b2=0.02 * jax.random.normal(ks[6], (1, cm), jnp.float32),
        s3=s3, t3=t3, a3=jnp.full((1, cm), 0.25, jnp.float32),
        w3=0.2 * jax.random.normal(ks[7], (cm, c), jnp.float32),
        b3=0.02 * jax.random.normal(ks[8], (1, c), jnp.float32),
    )


def _prep_resblock(p, wd, c, cm):
    """Prepare a residual block for the lane-dense (rows, W*C) layout at width wd."""
    def tile_w(v):
        return jnp.tile(v.astype(jnp.float32), (1, wd))

    vc = jnp.concatenate([tile_w(p['s1']), tile_w(p['t1']),
                          tile_w(p['a1']), tile_w(p['b3'])], axis=0)        # (4, wd*C)
    vcm = jnp.concatenate([tile_w(p['b1']), tile_w(p['s2']), tile_w(p['t2']),
                           tile_w(p['a2']), tile_w(p['b2']), tile_w(p['s3']),
                           tile_w(p['t3']), tile_w(p['a3'])], axis=0)       # (8, wd*Cm)

    eye_w = jnp.asarray(np.eye(wd, dtype=np.float32))
    w1bd = jnp.kron(eye_w, p['w1']).astype(jnp.bfloat16)                    # (wd*C, wd*Cm)
    w3bd = jnp.kron(eye_w, p['w3']).astype(jnp.bfloat16)                    # (wd*Cm, wd*C)
    bands = []
    for dy in range(3):
        m = jnp.zeros((wd * cm, wd * cm), jnp.float32)
        for dx in range(3):
            s = jnp.asarray(np.eye(wd, k=1 - dx, dtype=np.float32))
            m = m + jnp.kron(s, p['w2'][dy, dx])
        bands.append(m)
    w2stack = jnp.concatenate(bands, axis=0).astype(jnp.bfloat16)           # (3*wd*Cm, wd*Cm)

    return (vc, vcm, w1bd, w2stack, w3bd)


def _prep_pool(hd, wd, c):
    rs = np.zeros((2, hd // 2, hd), np.float32)
    for k in range(hd // 2):
        rs[0, k, 2 * k] = 1.0
        rs[1, k, 2 * k + 1] = 1.0
    cs = np.zeros((2, wd * c, (wd // 2) * c), np.float32)
    for k in range(wd // 2):
        for ch in range(c):
            cs[0, 2 * k * c + ch, k * c + ch] = 1.0
            cs[1, (2 * k + 1) * c + ch, k * c + ch] = 1.0
    return (jnp.asarray(rs).astype(jnp.bfloat16),
            jnp.asarray(cs).astype(jnp.bfloat16))


def _interp_1d(n_in, n_out):
    lo = np.zeros(n_out, np.int64)
    hi = np.zeros(n_out, np.int64)
    fr = np.zeros(n_out, np.float64)
    for i in range(n_out):
        src = 0.0 if n_in == 1 else i * (n_in - 1) / (n_out - 1)
        l = min(int(np.floor(src)), n_in - 1)
        h = min(l + 1, n_in - 1)
        lo[i], hi[i], fr[i] = l, h, src - l
    return lo, hi, fr


def _prep_upsample(h, w, c):
    """Matrices for bilinear 2x upsample (align_corners=True) from (h, w) to (2h, 2w)."""
    lo, hi, fr = _interp_1d(h, 2 * h)
    uh = np.zeros((2 * h, h), np.float32)
    for i in range(2 * h):
        uh[i, lo[i]] += 1.0 - fr[i]
        uh[i, hi[i]] += fr[i]
    lo, hi, fr = _interp_1d(w, 2 * w)
    uw = np.zeros((w * c, 2 * w * c), np.float32)
    for j in range(2 * w):
        for ch in range(c):
            uw[lo[j] * c + ch, j * c + ch] += 1.0 - fr[j]
            uw[hi[j] * c + ch, j * c + ch] += fr[j]
    return (jnp.asarray(uh).astype(jnp.bfloat16),
            jnp.asarray(uw).astype(jnp.bfloat16))


def make_hourglass_params(key, c, h0, w0):
    cm = max(c // 4, 1)        # channel_fac = 4
    keys = jax.random.split(key, len(_BLOCK_ORDER) + 1)
    blocks = {}
    for name, k in zip(_BLOCK_ORDER, keys[:-1]):
        raw = _make_resblock_raw(k, c, cm)
        wd = w0 >> _BLOCK_LEVEL[name]
        blocks[name] = _prep_resblock(raw, wd, c, cm)
    so, to = _make_bn(keys[-1], c)
    ao = jnp.full((1, c), 0.25, jnp.float32)
    obn = jnp.concatenate([jnp.tile(so, (1, w0)), jnp.tile(to, (1, w0)),
                           jnp.tile(ao, (1, w0))], axis=0)                  # (3, w0*C)
    return dict(
        blocks=blocks,
        output_bn=obn,
        pool=tuple(_prep_pool(h0 >> l, w0 >> l, c) for l in range(4)),
        up=tuple(_prep_upsample(h0 >> (l + 1), w0 >> (l + 1), c) for l in range(4)),
    )


# ----------------------------------------------------------------------------
# HourglassBlock forward (NCHW in / NCHW out) — one pallas_call, grid over batch.
# ----------------------------------------------------------------------------
def _full_spec(arr):
    nd = arr.ndim
    return pl.BlockSpec(arr.shape, lambda b, _n=nd: (0,) * _n)


def hourglass_forward(x_nchw, prep):
    bsz, c, h, w = x_nchw.shape
    wc = w * c
    x = jnp.transpose(x_nchw, (0, 2, 3, 1)).reshape(bsz, h, wc).astype(jnp.float32)

    # Flat operand list (order must match the kernel's positional unpacking).
    flat = [x]
    for name in _BLOCK_ORDER:
        flat.extend(prep['blocks'][name])
    for l in range(4):
        flat.append(prep['pool'][l][0])     # rowsel
    for l in range(4):
        flat.append(prep['pool'][l][1])     # colsel
    for l in range(4):
        flat.append(prep['up'][l][0])       # uh
    for l in range(4):
        flat.append(prep['up'][l][1])       # uw
    flat.append(prep['output_bn'])

    # Weights use constant index maps -> fetched once, reused across grid steps.
    in_specs = ([pl.BlockSpec((1, h, wc), lambda b: (b, 0, 0))]
                + [_full_spec(a) for a in flat[1:]])
    out_spec = pl.BlockSpec((1, h, wc), lambda b: (b, 0, 0))

    kernel = _make_hourglass_kernel(h, w, c)
    fn = pl.pallas_call(
        kernel,
        grid=(bsz,),
        out_shape=jax.ShapeDtypeStruct((bsz, h, wc), jnp.float32),
        in_specs=in_specs,
        out_specs=out_spec,
        compiler_params=pltpu.CompilerParams(dimension_semantics=("parallel",)),
    )
    out = fn(*flat)

    out = out.reshape(bsz, h, w, c)
    return jnp.transpose(out, (0, 3, 1, 2))


if __name__ == "__main__":
    B, C, H, W = 2, 8, 16, 16          # W*C = 128 -> lane-dense full-res tiles
    key = jax.random.PRNGKey(0)
    kx, kp = jax.random.split(key)
    x = jax.random.normal(kx, (B, C, H, W), jnp.float32)
    prep = make_hourglass_params(kp, C, H, W)

    fwd = jax.jit(hourglass_forward)
    out = jax.block_until_ready(fwd(x, prep))

    assert out.shape == (B, C, H, W), out.shape
    assert bool(jnp.all(jnp.isfinite(out)))
    print("KERNEL_OK")
</pallas_src>

<mosaic_0001>
module attributes {stable_mosaic.version = 11 : i64} {
  func.func @kernel(%arg0: i32, %arg1: memref<1x16x128xf32, #tpu.memory_space<vmem>>, %arg2: memref<4x128xf32, #tpu.memory_space<vmem>>, %arg3: memref<8x32xf32, #tpu.memory_space<vmem>>, %arg4: memref<128x32xbf16, #tpu.memory_space<vmem>>, %arg5: memref<96x32xbf16, #tpu.memory_space<vmem>>, %arg6: memref<32x128xbf16, #tpu.memory_space<vmem>>, %arg7: memref<4x64xf32, #tpu.memory_space<vmem>>, %arg8: memref<8x16xf32, #tpu.memory_space<vmem>>, %arg9: memref<64x16xbf16, #tpu.memory_space<vmem>>, %arg10: memref<48x16xbf16, #tpu.memory_space<vmem>>, %arg11: memref<16x64xbf16, #tpu.memory_space<vmem>>, %arg12: memref<4x64xf32, #tpu.memory_space<vmem>>, %arg13: memref<8x16xf32, #tpu.memory_space<vmem>>, %arg14: memref<64x16xbf16, #tpu.memory_space<vmem>>, %arg15: memref<48x16xbf16, #tpu.memory_space<vmem>>, %arg16: memref<16x64xbf16, #tpu.memory_space<vmem>>, %arg17: memref<4x32xf32, #tpu.memory_space<vmem>>, %arg18: memref<8x8xf32, #tpu.memory_space<vmem>>, %arg19: memref<32x8xbf16, #tpu.memory_space<vmem>>, %arg20: memref<24x8xbf16, #tpu.memory_space<vmem>>, %arg21: memref<8x32xbf16, #tpu.memory_space<vmem>>, %arg22: memref<4x32xf32, #tpu.memory_space<vmem>>, %arg23: memref<8x8xf32, #tpu.memory_space<vmem>>, %arg24: memref<32x8xbf16, #tpu.memory_space<vmem>>, %arg25: memref<24x8xbf16, #tpu.memory_space<vmem>>, %arg26: memref<8x32xbf16, #tpu.memory_space<vmem>>, %arg27: memref<4x16xf32, #tpu.memory_space<vmem>>, %arg28: memref<8x4xf32, #tpu.memory_space<vmem>>, %arg29: memref<16x4xbf16, #tpu.memory_space<vmem>>, %arg30: memref<12x4xbf16, #tpu.memory_space<vmem>>, %arg31: memref<4x16xbf16, #tpu.memory_space<vmem>>, %arg32: memref<4x16xf32, #tpu.memory_space<vmem>>, %arg33: memref<8x4xf32, #tpu.memory_space<vmem>>, %arg34: memref<16x4xbf16, #tpu.memory_space<vmem>>, %arg35: memref<12x4xbf16, #tpu.memory_space<vmem>>, %arg36: memref<4x16xbf16, #tpu.memory_space<vmem>>, %arg37: memref<4x8xf32, #tpu.memory_space<vmem>>, %arg38: memref<8x2xf32, #tpu.memory_space<vmem>>, %arg39: memref<8x2xbf16, #tpu.memory_space<vmem>>, %arg40: memref<6x2xbf16, #tpu.memory_space<vmem>>, %arg41: memref<2x8xbf16, #tpu.memory_space<vmem>>, %arg42: memref<4x8xf32, #tpu.memory_space<vmem>>, %arg43: memref<8x2xf32, #tpu.memory_space<vmem>>, %arg44: memref<8x2xbf16, #tpu.memory_space<vmem>>, %arg45: memref<6x2xbf16, #tpu.memory_space<vmem>>, %arg46: memref<2x8xbf16, #tpu.memory_space<vmem>>, %arg47: memref<4x8xf32, #tpu.memory_space<vmem>>, %arg48: memref<8x2xf32, #tpu.memory_space<vmem>>, %arg49: memref<8x2xbf16, #tpu.memory_space<vmem>>, %arg50: memref<6x2xbf16, #tpu.memory_space<vmem>>, %arg51: memref<2x8xbf16, #tpu.memory_space<vmem>>, %arg52: memref<4x16xf32, #tpu.memory_space<vmem>>, %arg53: memref<8x4xf32, #tpu.memory_space<vmem>>, %arg54: memref<16x4xbf16, #tpu.memory_space<vmem>>, %arg55: memref<12x4xbf16, #tpu.memory_space<vmem>>, %arg56: memref<4x16xbf16, #tpu.memory_space<vmem>>, %arg57: memref<4x32xf32, #tpu.memory_space<vmem>>, %arg58: memref<8x8xf32, #tpu.memory_space<vmem>>, %arg59: memref<32x8xbf16, #tpu.memory_space<vmem>>, %arg60: memref<24x8xbf16, #tpu.memory_space<vmem>>, %arg61: memref<8x32xbf16, #tpu.memory_space<vmem>>, %arg62: memref<4x64xf32, #tpu.memory_space<vmem>>, %arg63: memref<8x16xf32, #tpu.memory_space<vmem>>, %arg64: memref<64x16xbf16, #tpu.memory_space<vmem>>, %arg65: memref<48x16xbf16, #tpu.memory_space<vmem>>, %arg66: memref<16x64xbf16, #tpu.memory_space<vmem>>, %arg67: memref<4x128xf32, #tpu.memory_space<vmem>>, %arg68: memref<8x32xf32, #tpu.memory_space<vmem>>, %arg69: memref<128x32xbf16, #tpu.memory_space<vmem>>, %arg70: memref<96x32xbf16, #tpu.memory_space<vmem>>, %arg71: memref<32x128xbf16, #tpu.memory_space<vmem>>, %arg72: memref<2x8x16xbf16, #tpu.memory_space<vmem>>, %arg73: memref<2x4x8xbf16, #tpu.memory_space<vmem>>, %arg74: memref<2x2x4xbf16, #tpu.memory_space<vmem>>, %arg75: memref<2x1x2xbf16, #tpu.memory_space<vmem>>, %arg76: memref<2x128x64xbf16, #tpu.memory_space<vmem>>, %arg77: memref<2x64x32xbf16, #tpu.memory_space<vmem>>, %arg78: memref<2x32x16xbf16, #tpu.memory_space<vmem>>, %arg79: memref<2x16x8xbf16, #tpu.memory_space<vmem>>, %arg80: memref<16x8xbf16, #tpu.memory_space<vmem>>, %arg81: memref<8x4xbf16, #tpu.memory_space<vmem>>, %arg82: memref<4x2xbf16, #tpu.memory_space<vmem>>, %arg83: memref<2x1xbf16, #tpu.memory_space<vmem>>, %arg84: memref<64x128xbf16, #tpu.memory_space<vmem>>, %arg85: memref<32x64xbf16, #tpu.memory_space<vmem>>, %arg86: memref<16x32xbf16, #tpu.memory_space<vmem>>, %arg87: memref<8x16xbf16, #tpu.memory_space<vmem>>, %arg88: memref<3x128xf32, #tpu.memory_space<vmem>>, %arg89: memref<1x16x128xf32, #tpu.memory_space<vmem>>) attributes {dimension_semantics = [#tpu.dimension_semantics<parallel>], iteration_bounds = array<i64: 2>, scalar_prefetch = 0 : i64, scratch_operands = 0 : i64, tpu.core_type = #tpu.core_type<tc>, window_params = [{transform_indices = @transform_0, window_bounds = array<i64: 1, 16, 128>}, {pipeline_mode = #tpu.pipeline_mode<synchronous>, transform_indices = @transform_1, window_bounds = array<i64: 4, 128>}, {pipeline_mode = #tpu.pipeline_mode<synchronous>, transform_indices = @transform_2, window_bounds = array<i64: 8, 32>}, {pipeline_mode = #tpu.pipeline_mode<synchronous>, transform_indices = @transform_3, window_bounds = array<i64: 128, 32>}, {pipeline_mode = #tpu.pipeline_mode<synchronous>, transform_indices = @transform_4, window_bounds = array<i64: 96, 32>}, {pipeline_mode = #tpu.pipeline_mode<synchronous>, transform_indices = @transform_5, window_bounds = array<i64: 32, 128>}, {pipeline_mode = #tpu.pipeline_mode<synchronous>, transform_indices = @transform_6, window_bounds = array<i64: 4, 64>}, {pipeline_mode = #tpu.pipeline_mode<synchronous>, transform_indices = @transform_7, window_bounds = array<i64: 8, 16>}, {pipeline_mode = #tpu.pipeline_mode<synchronous>, transform_indices = @transform_8, window_bounds = array<i64: 64, 16>}, {pipeline_mode = #tpu.pipeline_mode<synchronous>, transform_indices = @transform_9, window_bounds = array<i64: 48, 16>}, {pipeline_mode = #tpu.pipeline_mode<synchronous>, transform_indices = @transform_10, window_bounds = array<i64: 16, 64>}, {pipeline_mode = #tpu.pipeline_mode<synchronous>, transform_indices = @transform_11, window_bounds = array<i64: 4, 64>}, {pipeline_mode = #tpu.pipeline_mode<synchronous>, transform_indices = @transform_12, window_bounds = array<i64: 8, 16>}, {pipeline_mode = #tpu.pipeline_mode<synchronous>, transform_indices = @transform_13, window_bounds = array<i64: 64, 16>}, {pipeline_mode = #tpu.pipeline_mode<synchronous>, transform_indices = @transform_14, window_bounds = array<i64: 48, 16>}, {pipeline_mode = #tpu.pipeline_mode<synchronous>, transform_indices = @transform_15, window_bounds = array<i64: 16, 64>}, {pipeline_mode = #tpu.pipeline_mode<synchronous>, transform_indices = @transform_16, window_bounds = array<i64: 4, 32>}, {pipeline_mode = #tpu.pipeline_mode<synchronous>, transform_indices = @transform_17, window_bounds = array<i64: 8, 8>}, {pipeline_mode = #tpu.pipeline_mode<synchronous>, transform_indices = @transform_18, window_bounds = array<i64: 32, 8>}, {pipeline_mode = #tpu.pipeline_mode<synchronous>, transform_indices = @transform_19, window_bounds = array<i64: 24, 8>}, {pipeline_mode = #tpu.pipeline_mode<synchronous>, transform_indices = @transform_20, window_bounds = array<i64: 8, 32>}, {pipeline_mode = #tpu.pipeline_mode<synchronous>, transform_indices = @transform_21, window_bounds = array<i64: 4, 32>}, {pipeline_mode = #tpu.pipeline_mode<synchronous>, transform_indices = @transform_22, window_bounds = array<i64: 8, 8>}, {pipeline_mode = #tpu.pipeline_mode<synchronous>, transform_indices = @transform_23, window_bounds = array<i64: 32, 8>}, {pipeline_mode = #tpu.pipeline_mode<synchronous>, transform_indices = @transform_24, window_bounds = array<i64: 24, 8>}, {pipeline_mode = #tpu.pipeline_mode<synchronous>, transform_indices = @transform_25, window_bounds = array<i64: 8, 32>}, {pipeline_mode = #tpu.pipeline_mode<synchronous>, transform_indices = @transform_26, window_bounds = array<i64: 4, 16>}, {pipeline_mode = #tpu.pipeline_mode<synchronous>, transform_indices = @transform_27, window_bounds = array<i64: 8, 4>}, {pipeline_mode = #tpu.pipeline_mode<synchronous>, transform_indices = @transform_28, window_bounds = array<i64: 16, 4>}, {pipeline_mode = #tpu.pipeline_mode<synchronous>, transform_indices = @transform_29, window_bounds = array<i64: 12, 4>}, {pipeline_mode = #tpu.pipeline_mode<synchronous>, transform_indices = @transform_30, window_bounds = array<i64: 4, 16>}, {pipeline_mode = #tpu.pipeline_mode<synchronous>, transform_indices = @transform_31, window_bounds = array<i64: 4, 16>}, {pipeline_mode = #tpu.pipeline_mode<synchronous>, transform_indices = @transform_32, window_bounds = array<i64: 8, 4>}, {pipeline_mode = #tpu.pipeline_mode<synchronous>, transform_indices = @transform_33, window_bounds = array<i64: 16, 4>}, {pipeline_mode = #tpu.pipeline_mode<synchronous>, transform_indices = @transform_34, window_bounds = array<i64: 12, 4>}, {pipeline_mode = #tpu.pipeline_mode<synchronous>, transform_indices = @transform_35, window_bounds = array<i64: 4, 16>}, {pipeline_mode = #tpu.pipeline_mode<synchronous>, transform_indices = @transform_36, window_bounds = array<i64: 4, 8>}, {pipeline_mode = #tpu.pipeline_mode<synchronous>, transform_indices = @transform_37, window_bounds = array<i64: 8, 2>}, {pipeline_mode = #tpu.pipeline_mode<synchronous>, transform_indices = @transform_38, window_bounds = array<i64: 8, 2>}, {pipeline_mode = #tpu.pipeline_mode<synchronous>, transform_indices = @transform_39, window_bounds = array<i64: 6, 2>}, {pipeline_mode = #tpu.pipeline_mode<synchronous>, transform_indices = @transform_40, window_bounds = array<i64: 2, 8>}, {pipeline_mode = #tpu.pipeline_mode<synchronous>, transform_indices = @transform_41, window_bounds = array<i64: 4, 8>}, {pipeline_mode = #tpu.pipeline_mode<synchronous>, transform_indices = @transform_42, window_bounds = array<i64: 8, 2>}, {pipeline_mode = #tpu.pipeline_mode<synchronous>, transform_indices = @transform_43, window_bounds = array<i64: 8, 2>}, {pipeline_mode = #tpu.pipeline_mode<synchronous>, transform_indices = @transform_44, window_bounds = array<i64: 6, 2>}, {pipeline_mode = #tpu.pipeline_mode<synchronous>, transform_indices = @transform_45, window_bounds = array<i64: 2, 8>}, {pipeline_mode = #tpu.pipeline_mode<synchronous>, transform_indices = @transform_46, window_bounds = array<i64: 4, 8>}, {pipeline_mode = #tpu.pipeline_mode<synchronous>, transform_indices = @transform_47, window_bounds = array<i64: 8, 2>}, {pipeline_mode = #tpu.pipeline_mode<synchronous>, transform_indices = @transform_48, window_bounds = array<i64: 8, 2>}, {pipeline_mode = #tpu.pipeline_mode<synchronous>, transform_indices = @transform_49, window_bounds = array<i64: 6, 2>}, {pipeline_mode = #tpu.pipeline_mode<synchronous>, transform_indices = @transform_50, window_bounds = array<i64: 2, 8>}, {pipeline_mode = #tpu.pipeline_mode<synchronous>, transform_indices = @transform_51, window_bounds = array<i64: 4, 16>}, {pipeline_mode = #tpu.pipeline_mode<synchronous>, transform_indices = @transform_52, window_bounds = array<i64: 8, 4>}, {pipeline_mode = #tpu.pipeline_mode<synchronous>, transform_indices = @transform_53, window_bounds = array<i64: 16, 4>}, {pipeline_mode = #tpu.pipeline_mode<synchronous>, transform_indices = @transform_54, window_bounds = array<i64: 12, 4>}, {pipeline_mode = #tpu.pipeline_mode<synchronous>, transform_indices = @transform_55, window_bounds = array<i64: 4, 16>}, {pipeline_mode = #tpu.pipeline_mode<synchronous>, transform_indices = @transform_56, window_bounds = array<i64: 4, 32>}, {pipeline_mode = #tpu.pipeline_mode<synchronous>, transform_indices = @transform_57, window_bounds = array<i64: 8, 8>}, {pipeline_mode = #tpu.pipeline_mode<synchronous>, transform_indices = @transform_58, window_bounds = array<i64: 32, 8>}, {pipeline_mode = #tpu.pipeline_mode<synchronous>, transform_indices = @transform_59, window_bounds = array<i64: 24, 8>}, {pipeline_mode = #tpu.pipeline_mode<synchronous>, transform_indices = @transform_60, window_bounds = array<i64: 8, 32>}, {pipeline_mode = #tpu.pipeline_mode<synchronous>, transform_indices = @transform_61, window_bounds = array<i64: 4, 64>}, {pipeline_mode = #tpu.pipeline_mode<synchronous>, transform_indices = @transform_62, window_bounds = array<i64: 8, 16>}, {pipeline_mode = #tpu.pipeline_mode<synchronous>, transform_indices = @transform_63, window_bounds = array<i64: 64, 16>}, {pipeline_mode = #tpu.pipeline_mode<synchronous>, transform_indices = @transform_64, window_bounds = array<i64: 48, 16>}, {pipeline_mode = #tpu.pipeline_mode<synchronous>, transform_indices = @transform_65, window_bounds = array<i64: 16, 64>}, {pipeline_mode = #tpu.pipeline_mode<synchronous>, transform_indices = @transform_66, window_bounds = array<i64: 4, 128>}, {pipeline_mode = #tpu.pipeline_mode<synchronous>, transform_indices = @transform_67, window_bounds = array<i64: 8, 32>}, {pipeline_mode = #tpu.pipeline_mode<synchronous>, transform_indices = @transform_68, window_bounds = array<i64: 128, 32>}, {pipeline_mode = #tpu.pipeline_mode<synchronous>, transform_indices = @transform_69, window_bounds = array<i64: 96, 32>}, {pipeline_mode = #tpu.pipeline_mode<synchronous>, transform_indices = @transform_70, window_bounds = array<i64: 32, 128>}, {pipeline_mode = #tpu.pipeline_mode<synchronous>, transform_indices = @transform_71, window_bounds = array<i64: 2, 8, 16>}, {pipeline_mode = #tpu.pipeline_mode<synchronous>, transform_indices = @transform_72, window_bounds = array<i64: 2, 4, 8>}, {pipeline_mode = #tpu.pipeline_mode<synchronous>, transform_indices = @transform_73, window_bounds = array<i64: 2, 2, 4>}, {pipeline_mode = #tpu.pipeline_mode<synchronous>, transform_indices = @transform_74, window_bounds = array<i64: 2, 1, 2>}, {pipeline_mode = #tpu.pipeline_mode<synchronous>, transform_indices = @transform_75, window_bounds = array<i64: 2, 128, 64>}, {pipeline_mode = #tpu.pipeline_mode<synchronous>, transform_indices = @transform_76, window_bounds = array<i64: 2, 64, 32>}, {pipeline_mode = #tpu.pipeline_mode<synchronous>, transform_indices = @transform_77, window_bounds = array<i64: 2, 32, 16>}, {pipeline_mode = #tpu.pipeline_mode<synchronous>, transform_indices = @transform_78, window_bounds = array<i64: 2, 16, 8>}, {pipeline_mode = #tpu.pipeline_mode<synchronous>, transform_indices = @transform_79, window_bounds = array<i64: 16, 8>}, {pipeline_mode = #tpu.pipeline_mode<synchronous>, transform_indices = @transform_80, window_bounds = array<i64: 8, 4>}, {pipeline_mode = #tpu.pipeline_mode<synchronous>, transform_indices = @transform_81, window_bounds = array<i64: 4, 2>}, {pipeline_mode = #tpu.pipeline_mode<synchronous>, transform_indices = @transform_82, window_bounds = array<i64: 2, 1>}, {pipeline_mode = #tpu.pipeline_mode<synchronous>, transform_indices = @transform_83, window_bounds = array<i64: 64, 128>}, {pipeline_mode = #tpu.pipeline_mode<synchronous>, transform_indices = @transform_84, window_bounds = array<i64: 32, 64>}, {pipeline_mode = #tpu.pipeline_mode<synchronous>, transform_indices = @transform_85, window_bounds = array<i64: 16, 32>}, {pipeline_mode = #tpu.pipeline_mode<synchronous>, transform_indices = @transform_86, window_bounds = array<i64: 8, 16>}, {pipeline_mode = #tpu.pipeline_mode<synchronous>, transform_indices = @transform_87, window_bounds = array<i64: 3, 128>}, {transform_indices = @transform_88, window_bounds = array<i64: 1, 16, 128>}]} {
    %c0 = arith.constant 0 : index
    %c0_0 = arith.constant 0 : index
    %c0_1 = arith.constant 0 : index
    %0 = vector.load %arg1[%c0, %c0_0, %c0_1] : memref<1x16x128xf32, #tpu.memory_space<vmem>>, vector<1x16x128xf32>
    %1 = vector.shape_cast %0 : vector<1x16x128xf32> to vector<16x128xf32>
    %c0_2 = arith.constant 0 : index
    %c0_3 = arith.constant 0 : index
    %2 = vector.load %arg2[%c0_2, %c0_3] : memref<4x128xf32, #tpu.memory_space<vmem>>, vector<4x128xf32>
    %c0_4 = arith.constant 0 : index
    %c0_5 = arith.constant 0 : index
    %3 = vector.load %arg3[%c0_4, %c0_5] : memref<8x32xf32, #tpu.memory_space<vmem>>, vector<8x32xf32>
    %4 = vector.extract_strided_slice %2 {offsets = [0, 0], sizes = [1, 128], strides = [1, 1]} : vector<4x128xf32> to vector<1x128xf32>
    %5 = vector.extract_strided_slice %2 {offsets = [1, 0], sizes = [1, 128], strides = [1, 1]} : vector<4x128xf32> to vector<1x128xf32>
    %6 = vector.extract_strided_slice %2 {offsets = [2, 0], sizes = [1, 128], strides = [1, 1]} : vector<4x128xf32> to vector<1x128xf32>
    %7 = vector.extract_strided_slice %2 {offsets = [3, 0], sizes = [1, 128], strides = [1, 1]} : vector<4x128xf32> to vector<1x128xf32>
    %8 = vector.extract_strided_slice %3 {offsets = [0, 0], sizes = [1, 32], strides = [1, 1]} : vector<8x32xf32> to vector<1x32xf32>
    %9 = vector.extract_strided_slice %3 {offsets = [1, 0], sizes = [1, 32], strides = [1, 1]} : vector<8x32xf32> to vector<1x32xf32>
    %10 = vector.extract_strided_slice %3 {offsets = [2, 0], sizes = [1, 32], strides = [1, 1]} : vector<8x32xf32> to vector<1x32xf32>
    %11 = vector.extract_strided_slice %3 {offsets = [3, 0], sizes = [1, 32], strides = [1, 1]} : vector<8x32xf32> to vector<1x32xf32>
    %12 = vector.extract_strided_slice %3 {offsets = [4, 0], sizes = [1, 32], strides = [1, 1]} : vector<8x32xf32> to vector<1x32xf32>
    %13 = vector.extract_strided_slice %3 {offsets = [5, 0], sizes = [1, 32], strides = [1, 1]} : vector<8x32xf32> to vector<1x32xf32>
    %14 = vector.extract_strided_slice %3 {offsets = [6, 0], sizes = [1, 32], strides = [1, 1]} : vector<8x32xf32> to vector<1x32xf32>
    %15 = vector.extract_strided_slice %3 {offsets = [7, 0], sizes = [1, 32], strides = [1, 1]} : vector<8x32xf32> to vector<1x32xf32>
    %16 = vector.broadcast %4 : vector<1x128xf32> to vector<16x128xf32>
    %17 = arith.mulf %1, %16 : vector<16x128xf32>
    %18 = vector.broadcast %5 : vector<1x128xf32> to vector<16x128xf32>
    %19 = arith.addf %17, %18 : vector<16x128xf32>
    %cst = arith.constant 0.000000e+00 : f32
    %20 = vector.broadcast %cst : f32 to vector<16x128xf32>
    %21 = arith.cmpf oge, %19, %20 : vector<16x128xf32>
    %22 = vector.broadcast %6 : vector<1x128xf32> to vector<16x128xf32>
    %23 = arith.mulf %22, %19 : vector<16x128xf32>
    %24 = arith.select %21, %19, %23 : vector<16x128xi1>, vector<16x128xf32>
    %25 = arith.truncf %24 : vector<16x128xf32> to vector<16x128xbf16>
    %c0_6 = arith.constant 0 : index
    %c0_7 = arith.constant 0 : index
    %26 = vector.load %arg4[%c0_6, %c0_7] : memref<128x32xbf16, #tpu.memory_space<vmem>>, vector<128x32xbf16>
    %cst_8 = arith.constant dense<0.000000e+00> : vector<16x32xf32>
    %27 = tpu.matmul %25, %26, %cst_8 {dimension_numbers = #tpu.dot_dimension_numbers<[1], [0], [0], [1], [0, 0, 1, 1], [], []>} : vector<16x128xbf16>, vector<128x32xbf16>, vector<16x32xf32> -> vector<16x32xf32>
    %28 = vector.broadcast %8 : vector<1x32xf32> to vector<16x32xf32>
    %29 = arith.addf %27, %28 : vector<16x32xf32>
    %30 = vector.broadcast %9 : vector<1x32xf32> to vector<16x32xf32>
    %31 = arith.mulf %29, %30 : vector<16x32xf32>
    %32 = vector.broadcast %10 : vector<1x32xf32> to vector<16x32xf32>
    %33 = arith.addf %31, %32 : vector<16x32xf32>
    %cst_9 = arith.constant 0.000000e+00 : f32
    %34 = vector.broadcast %cst_9 : f32 to vector<16x32xf32>
    %35 = arith.cmpf oge, %33, %34 : vector<16x32xf32>
    %36 = vector.broadcast %11 : vector<1x32xf32> to vector<16x32xf32>
    %37 = arith.mulf %36, %33 : vector<16x32xf32>
    %38 = arith.select %35, %33, %37 : vector<16x32xi1>, vector<16x32xf32>
    %cst_10 = arith.constant 0.000000e+00 : f32
    %39 = vector.broadcast %cst_10 : f32 to vector<1x32xf32>
    %40 = vector.extract_strided_slice %38 {offsets = [0, 0], sizes = [15, 32], strides = [1, 1]} : vector<16x32xf32> to vector<15x32xf32>
    %41 = tpu.concatenate %39, %40 in 0 : vector<1x32xf32>, vector<15x32xf32> -> vector<16x32xf32>
    %42 = vector.extract_strided_slice %38 {offsets = [1, 0], sizes = [15, 32], strides = [1, 1]} : vector<16x32xf32> to vector<15x32xf32>
    %43 = tpu.concatenate %42, %39 in 0 : vector<15x32xf32>, vector<1x32xf32> -> vector<16x32xf32>
    %44 = tpu.concatenate %41, %38, %43 in 1 : vector<16x32xf32>, vector<16x32xf32>, vector<16x32xf32> -> vector<16x96xf32>
    %45 = arith.truncf %44 : vector<16x96xf32> to vector<16x96xbf16>
    %c0_11 = arith.constant 0 : index
    %c0_12 = arith.constant 0 : index
    %46 = vector.load %arg5[%c0_11, %c0_12] : memref<96x32xbf16, #tpu.memory_space<vmem>>, vector<96x32xbf16>
    %cst_13 = arith.constant dense<0.000000e+00> : vector<16x32xf32>
    %47 = tpu.matmul %45, %46, %cst_13 {dimension_numbers = #tpu.dot_dimension_numbers<[1], [0], [0], [1], [0, 0, 1, 1], [], []>} : vector<16x96xbf16>, vector<96x32xbf16>, vector<16x32xf32> -> vector<16x32xf32>
    %48 = vector.broadcast %12 : vector<1x32xf32> to vector<16x32xf32>
    %49 = arith.addf %47, %48 : vector<16x32xf32>
    %50 = vector.broadcast %13 : vector<1x32xf32> to vector<16x32xf32>
    %51 = arith.mulf %49, %50 : vector<16x32xf32>
    %52 = vector.broadcast %14 : vector<1x32xf32> to vector<16x32xf32>
    %53 = arith.addf %51, %52 : vector<16x32xf32>
    %cst_14 = arith.constant 0.000000e+00 : f32
    %54 = vector.broadcast %cst_14 : f32 to vector<16x32xf32>
    %55 = arith.cmpf oge, %53, %54 : vector<16x32xf32>
    %56 = vector.broadcast %15 : vector<1x32xf32> to vector<16x32xf32>
    %57 = arith.mulf %56, %53 : vector<16x32xf32>
    %58 = arith.select %55, %53, %57 : vector<16x32xi1>, vector<16x32xf32>
    %59 = arith.truncf %58 : vector<16x32xf32> to vector<16x32xbf16>
    %c0_15 = arith.constant 0 : index
    %c0_16 = arith.constant 0 : index
    %60 = vector.load %arg6[%c0_15, %c0_16] : memref<32x128xbf16, #tpu.memory_space<vmem>>, vector<32x128xbf16>
    %cst_17 = arith.constant dense<0.000000e+00> : vector<16x128xf32>
    %61 = tpu.matmul %59, %60, %cst_17 {dimension_numbers = #tpu.dot_dimension_numbers<[1], [0], [0], [1], [0, 0, 1, 1], [], []>} : vector<16x32xbf16>, vector<32x128xbf16>, vector<16x128xf32> -> vector<16x128xf32>
    %62 = vector.broadcast %7 : vector<1x128xf32> to vector<16x128xf32>
    %63 = arith.addf %61, %62 : vector<16x128xf32>
    %64 = arith.addf %1, %63 : vector<16x128xf32>
    %65 = arith.truncf %1 : vector<16x128xf32> to vector<16x128xbf16>
    %c0_18 = arith.constant 0 : index
    %c0_19 = arith.constant 0 : index
    %c0_20 = arith.constant 0 : index
    %66 = vector.load %arg72[%c0_18, %c0_19, %c0_20] : memref<2x8x16xbf16, #tpu.memory_space<vmem>>, vector<1x8x16xbf16>
    %67 = vector.shape_cast %66 : vector<1x8x16xbf16> to vector<8x16xbf16>
    %cst_21 = arith.constant dense<0.000000e+00> : vector<8x128xf32>
    %68 = tpu.matmul %67, %65, %cst_21 {dimension_numbers = #tpu.dot_dimension_numbers<[1], [0], [0], [1], [0, 0, 1, 1], [], []>} : vector<8x16xbf16>, vector<16x128xbf16>, vector<8x128xf32> -> vector<8x128xf32>
    %c1 = arith.constant 1 : index
    %c0_22 = arith.constant 0 : index
    %c0_23 = arith.constant 0 : index
    %69 = vector.load %arg72[%c1, %c0_22, %c0_23] : memref<2x8x16xbf16, #tpu.memory_space<vmem>>, vector<1x8x16xbf16>
    %70 = vector.shape_cast %69 : vector<1x8x16xbf16> to vector<8x16xbf16>
    %cst_24 = arith.constant dense<0.000000e+00> : vector<8x128xf32>
    %71 = tpu.matmul %70, %65, %cst_24 {dimension_numbers = #tpu.dot_dimension_numbers<[1], [0], [0], [1], [0, 0, 1, 1], [], []>} : vector<8x16xbf16>, vector<16x128xbf16>, vector<8x128xf32> -> vector<8x128xf32>
    %72 = arith.maximumf %68, %71 : vector<8x128xf32>
    %73 = arith.truncf %72 : vector<8x128xf32> to vector<8x128xbf16>
    %c0_25 = arith.constant 0 : index
    %c0_26 = arith.constant 0 : index
    %c0_27 = arith.constant 0 : index
    %74 = vector.load %arg76[%c0_25, %c0_26, %c0_27] : memref<2x128x64xbf16, #tpu.memory_space<vmem>>, vector<1x128x64xbf16>
    %75 = vector.shape_cast %74 : vector<1x128x64xbf16> to vector<128x64xbf16>
    %cst_28 = arith.constant dense<0.000000e+00> : vector<8x64xf32>
    %76 = tpu.matmul %73, %75, %cst_28 {dimension_numbers = #tpu.dot_dimension_numbers<[1], [0], [0], [1], [0, 0, 1, 1], [], []>} : vector<8x128xbf16>, vector<128x64xbf16>, vector<8x64xf32> -> vector<8x64xf32>
    %c1_29 = arith.constant 1 : index
    %c0_30 = arith.constant 0 : index
    %c0_31 = arith.constant 0 : index
    %77 = vector.load %arg76[%c1_29, %c0_30, %c0_31] : memref<2x128x64xbf16, #tpu.memory_space<vmem>>, vector<1x128x64xbf16>
    %78 = vector.shape_cast %77 : vector<1x128x64xbf16> to vector<128x64xbf16>
    %cst_32 = arith.constant dense<0.000000e+00> : vector<8x64xf32>
    %79 = tpu.matmul %73, %78, %cst_32 {dimension_numbers = #tpu.dot_dimension_numbers<[1], [0], [0], [1], [0, 0, 1, 1], [], []>} : vector<8x128xbf16>, vector<128x64xbf16>, vector<8x64xf32> -> vector<8x64xf32>
    %80 = arith.maximumf %76, %79 : vector<8x64xf32>
    %c0_33 = arith.constant 0 : index
    %c0_34 = arith.constant 0 : index
    %81 = vector.load %arg7[%c0_33, %c0_34] : memref<4x64xf32, #tpu.memory_space<vmem>>, vector<4x64xf32>
    %c0_35 = arith.constant 0 : index
    %c0_36 = arith.constant 0 : index
    %82 = vector.load %arg8[%c0_35, %c0_36] : memref<8x16xf32, #tpu.memory_space<vmem>>, vector<8x16xf32>
    %83 = vector.extract_strided_slice %81 {offsets = [0, 0], sizes = [1, 64], strides = [1, 1]} : vector<4x64xf32> to vector<1x64xf32>
    %84 = vector.extract_strided_slice %81 {offsets = [1, 0], sizes = [1, 64], strides = [1, 1]} : vector<4x64xf32> to vector<1x64xf32>
    %85 = vector.extract_strided_slice %81 {offsets = [2, 0], sizes = [1, 64], strides = [1, 1]} : vector<4x64xf32> to vector<1x64xf32>
    %86 = vector.extract_strided_slice %81 {offsets = [3, 0], sizes = [1, 64], strides = [1, 1]} : vector<4x64xf32> to vector<1x64xf32>
    %87 = vector.extract_strided_slice %82 {offsets = [0, 0], sizes = [1, 16], strides = [1, 1]} : vector<8x16xf32> to vector<1x16xf32>
    %88 = vector.extract_strided_slice %82 {offsets = [1, 0], sizes = [1, 16], strides = [1, 1]} : vector<8x16xf32> to vector<1x16xf32>
    %89 = vector.extract_strided_slice %82 {offsets = [2, 0], sizes = [1, 16], strides = [1, 1]} : vector<8x16xf32> to vector<1x16xf32>
    %90 = vector.extract_strided_slice %82 {offsets = [3, 0], sizes = [1, 16], strides = [1, 1]} : vector<8x16xf32> to vector<1x16xf32>
    %91 = vector.extract_strided_slice %82 {offsets = [4, 0], sizes = [1, 16], strides = [1, 1]} : vector<8x16xf32> to vector<1x16xf32>
    %92 = vector.extract_strided_slice %82 {offsets = [5, 0], sizes = [1, 16], strides = [1, 1]} : vector<8x16xf32> to vector<1x16xf32>
    %93 = vector.extract_strided_slice %82 {offsets = [6, 0], sizes = [1, 16], strides = [1, 1]} : vector<8x16xf32> to vector<1x16xf32>
    %94 = vector.extract_strided_slice %82 {offsets = [7, 0], sizes = [1, 16], strides = [1, 1]} : vector<8x16xf32> to vector<1x16xf32>
    %95 = vector.broadcast %83 : vector<1x64xf32> to vector<8x64xf32>
    %96 = arith.mulf %80, %95 : vector<8x64xf32>
    %97 = vector.broadcast %84 : vector<1x64xf32> to vector<8x64xf32>
    %98 = arith.addf %96, %97 : vector<8x64xf32>
    %cst_37 = arith.constant 0.000000e+00 : f32
    %99 = vector.broadcast %cst_37 : f32 to vector<8x64xf32>
    %100 = arith.cmpf oge, %98, %99 : vector<8x64xf32>
    %101 = vector.broadcast %85 : vector<1x64xf32> to vector<8x64xf32>
    %102 = arith.mulf %101, %98 : vector<8x64xf32>
    %103 = arith.select %100, %98, %102 : vector<8x64xi1>, vector<8x64xf32>
    %104 = arith.truncf %103 : vector<8x64xf32> to vector<8x64xbf16>
    %c0_38 = arith.constant 0 : index
    %c0_39 = arith.constant 0 : index
    %105 = vector.load %arg9[%c0_38, %c0_39] : memref<64x16xbf16, #tpu.memory_space<vmem>>, vector<64x16xbf16>
    %cst_40 = arith.constant dense<0.000000e+00> : vector<8x16xf32>
    %106 = tpu.matmul %104, %105, %cst_40 {dimension_numbers = #tpu.dot_dimension_numbers<[1], [0], [0], [1], [0, 0, 1, 1], [], []>} : vector<8x64xbf16>, vector<64x16xbf16>, vector<8x16xf32> -> vector<8x16xf32>
    %107 = vector.broadcast %87 : vector<1x16xf32> to vector<8x16xf32>
    %108 = arith.addf %106, %107 : vector<8x16xf32>
    %109 = vector.broadcast %88 : vector<1x16xf32> to vector<8x16xf32>
    %110 = arith.mulf %108, %109 : vector<8x16xf32>
    %111 = vector.broadcast %89 : vector<1x16xf32> to vector<8x16xf32>
    %112 = arith.addf %110, %111 : vector<8x16xf32>
    %cst_41 = arith.constant 0.000000e+00 : f32
    %113 = vector.broadcast %cst_41 : f32 to vector<8x16xf32>
    %114 = arith.cmpf oge, %112, %113 : vector<8x16xf32>
    %115 = vector.broadcast %90 : vector<1x16xf32> to vector<8x16xf32>
    %116 = arith.mulf %115, %112 : vector<8x16xf32>
    %117 = arith.select %114, %112, %116 : vector<8x16xi1>, vector<8x16xf32>
    %cst_42 = arith.constant 0.000000e+00 : f32
    %118 = vector.broadcast %cst_42 : f32 to vector<1x16xf32>
    %119 = vector.extract_strided_slice %117 {offsets = [0, 0], sizes = [7, 16], strides = [1, 1]} : vector<8x16xf32> to vector<7x16xf32>
    %120 = tpu.concatenate %118, %119 in 0 : vector<1x16xf32>, vector<7x16xf32> -> vector<8x16xf32>
    %121 = vector.extract_strided_slice %117 {offsets = [1, 0], sizes = [7, 16], strides = [1, 1]} : vector<8x16xf32> to vector<7x16xf32>
    %122 = tpu.concatenate %121, %118 in 0 : vector<7x16xf32>, vector<1x16xf32> -> vector<8x16xf32>
    %123 = tpu.concatenate %120, %117, %122 in 1 : vector<8x16xf32>, vector<8x16xf32>, vector<8x16xf32> -> vector<8x48xf32>
    %124 = arith.truncf %123 : vector<8x48xf32> to vector<8x48xbf16>
    %c0_43 = arith.constant 0 : index
    %c0_44 = arith.constant 0 : index
    %125 = vector.load %arg10[%c0_43, %c0_44] : memref<48x16xbf16, #tpu.memory_space<vmem>>, vector<48x16xbf16>
    %cst_45 = arith.constant dense<0.000000e+00> : vector<8x16xf32>
    %126 = tpu.matmul %124, %125, %cst_45 {dimension_numbers = #tpu.dot_dimension_numbers<[1], [0], [0], [1], [0, 0, 1, 1], [], []>} : vector<8x48xbf16>, vector<48x16xbf16>, vector<8x16xf32> -> vector<8x16xf32>
    %127 = vector.broadcast %91 : vector<1x16xf32> to vector<8x16xf32>
    %128 = arith.addf %126, %127 : vector<8x16xf32>
    %129 = vector.broadcast %92 : vector<1x16xf32> to vector<8x16xf32>
    %130 = arith.mulf %128, %129 : vector<8x16xf32>
    %131 = vector.broadcast %93 : vector<1x16xf32> to vector<8x16xf32>
    %132 = arith.addf %130, %131 : vector<8x16xf32>
    %cst_46 = arith.constant 0.000000e+00 : f32
    %133 = vector.broadcast %cst_46 : f32 to vector<8x16xf32>
    %134 = arith.cmpf oge, %132, %133 : vector<8x16xf32>
    %135 = vector.broadcast %94 : vector<1x16xf32> to vector<8x16xf32>
    %136 = arith.mulf %135, %132 : vector<8x16xf32>
    %137 = arith.select %134, %132, %136 : vector<8x16xi1>, vector<8x16xf32>
    %138 = arith.truncf %137 : vector<8x16xf32> to vector<8x16xbf16>
    %c0_47 = arith.constant 0 : index
    %c0_48 = arith.constant 0 : index
    %139 = vector.load %arg11[%c0_47, %c0_48] : memref<16x64xbf16, #tpu.memory_space<vmem>>, vector<16x64xbf16>
    %cst_49 = arith.constant dense<0.000000e+00> : vector<8x64xf32>
    %140 = tpu.matmul %138, %139, %cst_49 {dimension_numbers = #tpu.dot_dimension_numbers<[1], [0], [0], [1], [0, 0, 1, 1], [], []>} : vector<8x16xbf16>, vector<16x64xbf16>, vector<8x64xf32> -> vector<8x64xf32>
    %141 = vector.broadcast %86 : vector<1x64xf32> to vector<8x64xf32>
    %142 = arith.addf %140, %141 : vector<8x64xf32>
    %143 = arith.addf %80, %142 : vector<8x64xf32>
    %c0_50 = arith.constant 0 : index
    %c0_51 = arith.constant 0 : index
    %144 = vector.load %arg12[%c0_50, %c0_51] : memref<4x64xf32, #tpu.memory_space<vmem>>, vector<4x64xf32>
    %c0_52 = arith.constant 0 : index
    %c0_53 = arith.constant 0 : index
    %145 = vector.load %arg13[%c0_52, %c0_53] : memref<8x16xf32, #tpu.memory_space<vmem>>, vector<8x16xf32>
    %146 = vector.extract_strided_slice %144 {offsets = [0, 0], sizes = [1, 64], strides = [1, 1]} : vector<4x64xf32> to vector<1x64xf32>
    %147 = vector.extract_strided_slice %144 {offsets = [1, 0], sizes = [1, 64], strides = [1, 1]} : vector<4x64xf32> to vector<1x64xf32>
    %148 = vector.extract_strided_slice %144 {offsets = [2, 0], sizes = [1, 64], strides = [1, 1]} : vector<4x64xf32> to vector<1x64xf32>
    %149 = vector.extract_strided_slice %144 {offsets = [3, 0], sizes = [1, 64], strides = [1, 1]} : vector<4x64xf32> to vector<1x64xf32>
    %150 = vector.extract_strided_slice %145 {offsets = [0, 0], sizes = [1, 16], strides = [1, 1]} : vector<8x16xf32> to vector<1x16xf32>
    %151 = vector.extract_strided_slice %145 {offsets = [1, 0], sizes = [1, 16], strides = [1, 1]} : vector<8x16xf32> to vector<1x16xf32>
    %152 = vector.extract_strided_slice %145 {offsets = [2, 0], sizes = [1, 16], strides = [1, 1]} : vector<8x16xf32> to vector<1x16xf32>
    %153 = vector.extract_strided_slice %145 {offsets = [3, 0], sizes = [1, 16], strides = [1, 1]} : vector<8x16xf32> to vector<1x16xf32>
    %154 = vector.extract_strided_slice %145 {offsets = [4, 0], sizes = [1, 16], strides = [1, 1]} : vector<8x16xf32> to vector<1x16xf32>
    %155 = vector.extract_strided_slice %145 {offsets = [5, 0], sizes = [1, 16], strides = [1, 1]} : vector<8x16xf32> to vector<1x16xf32>
    %156 = vector.extract_strided_slice %145 {offsets = [6, 0], sizes = [1, 16], strides = [1, 1]} : vector<8x16xf32> to vector<1x16xf32>
    %157 = vector.extract_strided_slice %145 {offsets = [7, 0], sizes = [1, 16], strides = [1, 1]} : vector<8x16xf32> to vector<1x16xf32>
    %158 = vector.broadcast %146 : vector<1x64xf32> to vector<8x64xf32>
    %159 = arith.mulf %143, %158 : vector<8x64xf32>
    %160 = vector.broadcast %147 : vector<1x64xf32> to vector<8x64xf32>
    %161 = arith.addf %159, %160 : vector<8x64xf32>
    %cst_54 = arith.constant 0.000000e+00 : f32
    %162 = vector.broadcast %cst_54 : f32 to vector<8x64xf32>
    %163 = arith.cmpf oge, %161, %162 : vector<8x64xf32>
    %164 = vector.broadcast %148 : vector<1x64xf32> to vector<8x64xf32>
    %165 = arith.mulf %164, %161 : vector<8x64xf32>
    %166 = arith.select %163, %161, %165 : vector<8x64xi1>, vector<8x64xf32>
    %167 = arith.truncf %166 : vector<8x64xf32> to vector<8x64xbf16>
    %c0_55 = arith.constant 0 : index
    %c0_56 = arith.constant 0 : index
    %168 = vector.load %arg14[%c0_55, %c0_56] : memref<64x16xbf16, #tpu.memory_space<vmem>>, vector<64x16xbf16>
    %cst_57 = arith.constant dense<0.000000e+00> : vector<8x16xf32>
    %169 = tpu.matmul %167, %168, %cst_57 {dimension_numbers = #tpu.dot_dimension_numbers<[1], [0], [0], [1], [0, 0, 1, 1], [], []>} : vector<8x64xbf16>, vector<64x16xbf16>, vector<8x16xf32> -> vector<8x16xf32>
    %170 = vector.broadcast %150 : vector<1x16xf32> to vector<8x16xf32>
    %171 = arith.addf %169, %170 : vector<8x16xf32>
    %172 = vector.broadcast %151 : vector<1x16xf32> to vector<8x16xf32>
    %173 = arith.mulf %171, %172 : vector<8x16xf32>
    %174 = vector.broadcast %152 : vector<1x16xf32> to vector<8x16xf32>
    %175 = arith.addf %173, %174 : vector<8x16xf32>
    %cst_58 = arith.constant 0.000000e+00 : f32
    %176 = vector.broadcast %cst_58 : f32 to vector<8x16xf32>
    %177 = arith.cmpf oge, %175, %176 : vector<8x16xf32>
    %178 = vector.broadcast %153 : vector<1x16xf32> to vector<8x16xf32>
    %179 = arith.mulf %178, %175 : vector<8x16xf32>
    %180 = arith.select %177, %175, %179 : vector<8x16xi1>, vector<8x16xf32>
    %cst_59 = arith.constant 0.000000e+00 : f32
    %181 = vector.broadcast %cst_59 : f32 to vector<1x16xf32>
    %182 = vector.extract_strided_slice %180 {offsets = [0, 0], sizes = [7, 16], strides = [1, 1]} : vector<8x16xf32> to vector<7x16xf32>
    %183 = tpu.concatenate %181, %182 in 0 : vector<1x16xf32>, vector<7x16xf32> -> vector<8x16xf32>
    %184 = vector.extract_strided_slice %180 {offsets = [1, 0], sizes = [7, 16], strides = [1, 1]} : vector<8x16xf32> to vector<7x16xf32>
    %185 = tpu.concatenate %184, %181 in 0 : vector<7x16xf32>, vector<1x16xf32> -> vector<8x16xf32>
    %186 = tpu.concatenate %183, %180, %185 in 1 : vector<8x16xf32>, vector<8x16xf32>, vector<8x16xf32> -> vector<8x48xf32>
    %187 = arith.truncf %186 : vector<8x48xf32> to vector<8x48xbf16>
    %c0_60 = arith.constant 0 : index
    %c0_61 = arith.constant 0 : index
    %188 = vector.load %arg15[%c0_60, %c0_61] : memref<48x16xbf16, #tpu.memory_space<vmem>>, vector<48x16xbf16>
    %cst_62 = arith.constant dense<0.000000e+00> : vector<8x16xf32>
    %189 = tpu.matmul %187, %188, %cst_62 {dimension_numbers = #tpu.dot_dimension_numbers<[1], [0], [0], [1], [0, 0, 1, 1], [], []>} : vector<8x48xbf16>, vector<48x16xbf16>, vector<8x16xf32> -> vector<8x16xf32>
    %190 = vector.broadcast %154 : vector<1x16xf32> to vector<8x16xf32>
    %191 = arith.addf %189, %190 : vector<8x16xf32>
    %192 = vector.broadcast %155 : vector<1x16xf32> to vector<8x16xf32>
    %193 = arith.mulf %191, %192 : vector<8x16xf32>
    %194 = vector.broadcast %156 : vector<1x16xf32> to vector<8x16xf32>
    %195 = arith.addf %193, %194 : vector<8x16xf32>
    %cst_63 = arith.constant 0.000000e+00 : f32
    %196 = vector.broadcast %cst_63 : f32 to vector<8x16xf32>
    %197 = arith.cmpf oge, %195, %196 : vector<8x16xf32>
    %198 = vector.broadcast %157 : vector<1x16xf32> to vector<8x16xf32>
    %199 = arith.mulf %198, %195 : vector<8x16xf32>
    %200 = arith.select %197, %195, %199 : vector<8x16xi1>, vector<8x16xf32>
    %201 = arith.truncf %200 : vector<8x16xf32> to vector<8x16xbf16>
    %c0_64 = arith.constant 0 : index
    %c0_65 = arith.constant 0 : index
    %202 = vector.load %arg16[%c0_64, %c0_65] : memref<16x64xbf16, #tpu.memory_space<vmem>>, vector<16x64xbf16>
    %cst_66 = arith.constant dense<0.000000e+00> : vector<8x64xf32>
    %203 = tpu.matmul %201, %202, %cst_66 {dimension_numbers = #tpu.dot_dimension_numbers<[1], [0], [0], [1], [0, 0, 1, 1], [], []>} : vector<8x16xbf16>, vector<16x64xbf16>, vector<8x64xf32> -> vector<8x64xf32>
    %204 = vector.broadcast %149 : vector<1x64xf32> to vector<8x64xf32>
    %205 = arith.addf %203, %204 : vector<8x64xf32>
    %206 = arith.addf %143, %205 : vector<8x64xf32>
    %207 = arith.truncf %143 : vector<8x64xf32> to vector<8x64xbf16>
    %c0_67 = arith.constant 0 : index
    %c0_68 = arith.constant 0 : index
    %c0_69 = arith.constant 0 : index
    %208 = vector.load %arg73[%c0_67, %c0_68, %c0_69] : memref<2x4x8xbf16, #tpu.memory_space<vmem>>, vector<1x4x8xbf16>
    %209 = vector.shape_cast %208 : vector<1x4x8xbf16> to vector<4x8xbf16>
    %cst_70 = arith.constant dense<0.000000e+00> : vector<4x64xf32>
    %210 = tpu.matmul %209, %207, %cst_70 {dimension_numbers = #tpu.dot_dimension_numbers<[1], [0], [0], [1], [0, 0, 1, 1], [], []>} : vector<4x8xbf16>, vector<8x64xbf16>, vector<4x64xf32> -> vector<4x64xf32>
    %c1_71 = arith.constant 1 : index
    %c0_72 = arith.constant 0 : index
    %c0_73 = arith.constant 0 : index
    %211 = vector.load %arg73[%c1_71, %c0_72, %c0_73] : memref<2x4x8xbf16, #tpu.memory_space<vmem>>, vector<1x4x8xbf16>
    %212 = vector.shape_cast %211 : vector<1x4x8xbf16> to vector<4x8xbf16>
    %cst_74 = arith.constant dense<0.000000e+00> : vector<4x64xf32>
    %213 = tpu.matmul %212, %207, %cst_74 {dimension_numbers = #tpu.dot_dimension_numbers<[1], [0], [0], [1], [0, 0, 1, 1], [], []>} : vector<4x8xbf16>, vector<8x64xbf16>, vector<4x64xf32> -> vector<4x64xf32>
    %214 = arith.maximumf %210, %213 : vector<4x64xf32>
    %215 = arith.truncf %214 : vector<4x64xf32> to vector<4x64xbf16>
    %c0_75 = arith.constant 0 : index
    %c0_76 = arith.constant 0 : index
    %c0_77 = arith.constant 0 : index
    %216 = vector.load %arg77[%c0_75, %c0_76, %c0_77] : memref<2x64x32xbf16, #tpu.memory_space<vmem>>, vector<1x64x32xbf16>
    %217 = vector.shape_cast %216 : vector<1x64x32xbf16> to vector<64x32xbf16>
    %cst_78 = arith.constant dense<0.000000e+00> : vector<4x32xf32>
    %218 = tpu.matmul %215, %217, %cst_78 {dimension_numbers = #tpu.dot_dimension_numbers<[1], [0], [0], [1], [0, 0, 1, 1], [], []>} : vector<4x64xbf16>, vector<64x32xbf16>, vector<4x32xf32> -> vector<4x32xf32>
    %c1_79 = arith.constant 1 : index
    %c0_80 = arith.constant 0 : index
    %c0_81 = arith.constant 0 : index
    %219 = vector.load %arg77[%c1_79, %c0_80, %c0_81] : memref<2x64x32xbf16, #tpu.memory_space<vmem>>, vector<1x64x32xbf16>
    %220 = vector.shape_cast %219 : vector<1x64x32xbf16> to vector<64x32xbf16>
    %cst_82 = arith.constant dense<0.000000e+00> : vector<4x32xf32>
    %221 = tpu.matmul %215, %220, %cst_82 {dimension_numbers = #tpu.dot_dimension_numbers<[1], [0], [0], [1], [0, 0, 1, 1], [], []>} : vector<4x64xbf16>, vector<64x32xbf16>, vector<4x32xf32> -> vector<4x32xf32>
    %222 = arith.maximumf %218, %221 : vector<4x32xf32>
    %c0_83 = arith.constant 0 : index
    %c0_84 = arith.constant 0 : index
    %223 = vector.load %arg17[%c0_83, %c0_84] : memref<4x32xf32, #tpu.memory_space<vmem>>, vector<4x32xf32>
    %c0_85 = arith.constant 0 : index
    %c0_86 = arith.constant 0 : index
    %224 = vector.load %arg18[%c0_85, %c0_86] : memref<8x8xf32, #tpu.memory_space<vmem>>, vector<8x8xf32>
    %225 = vector.extract_strided_slice %223 {offsets = [0, 0], sizes = [1, 32], strides = [1, 1]} : vector<4x32xf32> to vector<1x32xf32>
    %226 = vector.extract_strided_slice %223 {offsets = [1, 0], sizes = [1, 32], strides = [1, 1]} : vector<4x32xf32> to vector<1x32xf32>
    %227 = vector.extract_strided_slice %223 {offsets = [2, 0], sizes = [1, 32], strides = [1, 1]} : vector<4x32xf32> to vector<1x32xf32>
    %228 = vector.extract_strided_slice %223 {offsets = [3, 0], sizes = [1, 32], strides = [1, 1]} : vector<4x32xf32> to vector<1x32xf32>
    %229 = vector.extract_strided_slice %224 {offsets = [0, 0], sizes = [1, 8], strides = [1, 1]} : vector<8x8xf32> to vector<1x8xf32>
    %230 = vector.extract_strided_slice %224 {offsets = [1, 0], sizes = [1, 8], strides = [1, 1]} : vector<8x8xf32> to vector<1x8xf32>
    %231 = vector.extract_strided_slice %224 {offsets = [2, 0], sizes = [1, 8], strides = [1, 1]} : vector<8x8xf32> to vector<1x8xf32>
    %232 = vector.extract_strided_slice %224 {offsets = [3, 0], sizes = [1, 8], strides = [1, 1]} : vector<8x8xf32> to vector<1x8xf32>
    %233 = vector.extract_strided_slice %224 {offsets = [4, 0], sizes = [1, 8], strides = [1, 1]} : vector<8x8xf32> to vector<1x8xf32>
    %234 = vector.extract_strided_slice %224 {offsets = [5, 0], sizes = [1, 8], strides = [1, 1]} : vector<8x8xf32> to vector<1x8xf32>
    %235 = vector.extract_strided_slice %224 {offsets = [6, 0], sizes = [1, 8], strides = [1, 1]} : vector<8x8xf32> to vector<1x8xf32>
    %236 = vector.extract_strided_slice %224 {offsets = [7, 0], sizes = [1, 8], strides = [1, 1]} : vector<8x8xf32> to vector<1x8xf32>
    %237 = vector.broadcast %225 : vector<1x32xf32> to vector<4x32xf32>
    %238 = arith.mulf %222, %237 : vector<4x32xf32>
    %239 = vector.broadcast %226 : vector<1x32xf32> to vector<4x32xf32>
    %240 = arith.addf %238, %239 : vector<4x32xf32>
    %cst_87 = arith.constant 0.000000e+00 : f32
    %241 = vector.broadcast %cst_87 : f32 to vector<4x32xf32>
    %242 = arith.cmpf oge, %240, %241 : vector<4x32xf32>
    %243 = vector.broadcast %227 : vector<1x32xf32> to vector<4x32xf32>
    %244 = arith.mulf %243, %240 : vector<4x32xf32>
    %245 = arith.select %242, %240, %244 : vector<4x32xi1>, vector<4x32xf32>
    %246 = arith.truncf %245 : vector<4x32xf32> to vector<4x32xbf16>
    %c0_88 = arith.constant 0 : index
    %c0_89 = arith.constant 0 : index
    %247 = vector.load %arg19[%c0_88, %c0_89] : memref<32x8xbf16, #tpu.memory_space<vmem>>, vector<32x8xbf16>
    %cst_90 = arith.constant dense<0.000000e+00> : vector<4x8xf32>
    %248 = tpu.matmul %246, %247, %cst_90 {dimension_numbers = #tpu.dot_dimension_numbers<[1], [0], [0], [1], [0, 0, 1, 1], [], []>} : vector<4x32xbf16>, vector<32x8xbf16>, vector<4x8xf32> -> vector<4x8xf32>
    %249 = vector.broadcast %229 : vector<1x8xf32> to vector<4x8xf32>
    %250 = arith.addf %248, %249 : vector<4x8xf32>
    %251 = vector.broadcast %230 : vector<1x8xf32> to vector<4x8xf32>
    %252 = arith.mulf %250, %251 : vector<4x8xf32>
    %253 = vector.broadcast %231 : vector<1x8xf32> to vector<4x8xf32>
    %254 = arith.addf %252, %253 : vector<4x8xf32>
    %cst_91 = arith.constant 0.000000e+00 : f32
    %255 = vector.broadcast %cst_91 : f32 to vector<4x8xf32>
    %256 = arith.cmpf oge, %254, %255 : vector<4x8xf32>
    %257 = vector.broadcast %232 : vector<1x8xf32> to vector<4x8xf32>
    %258 = arith.mulf %257, %254 : vector<4x8xf32>
    %259 = arith.select %256, %254, %258 : vector<4x8xi1>, vector<4x8xf32>
    %cst_92 = arith.constant 0.000000e+00 : f32
    %260 = vector.broadcast %cst_92 : f32 to vector<1x8xf32>
    %261 = vector.extract_strided_slice %259 {offsets = [0, 0], sizes = [3, 8], strides = [1, 1]} : vector<4x8xf32> to vector<3x8xf32>
    %262 = tpu.concatenate %260, %261 in 0 : vector<1x8xf32>, vector<3x8xf32> -> vector<4x8xf32>
    %263 = vector.extract_strided_slice %259 {offsets = [1, 0], sizes = [3, 8], strides = [1, 1]} : vector<4x8xf32> to vector<3x8xf32>
    %264 = tpu.concatenate %263, %260 in 0 : vector<3x8xf32>, vector<1x8xf32> -> vector<4x8xf32>
    %265 = tpu.concatenate %262, %259, %264 in 1 : vector<4x8xf32>, vector<4x8xf32>, vector<4x8xf32> -> vector<4x24xf32>
    %266 = arith.truncf %265 : vector<4x24xf32> to vector<4x24xbf16>
    %c0_93 = arith.constant 0 : index
    %c0_94 = arith.constant 0 : index
    %267 = vector.load %arg20[%c0_93, %c0_94] : memref<24x8xbf16, #tpu.memory_space<vmem>>, vector<24x8xbf16>
    %cst_95 = arith.constant dense<0.000000e+00> : vector<4x8xf32>
    %268 = tpu.matmul %266, %267, %cst_95 {dimension_numbers = #tpu.dot_dimension_numbers<[1], [0], [0], [1], [0, 0, 1, 1], [], []>} : vector<4x24xbf16>, vector<24x8xbf16>, vector<4x8xf32> -> vector<4x8xf32>
    %269 = vector.broadcast %233 : vector<1x8xf32> to vector<4x8xf32>
    %270 = arith.addf %268, %269 : vector<4x8xf32>
    %271 = vector.broadcast %234 : vector<1x8xf32> to vector<4x8xf32>
    %272 = arith.mulf %270, %271 : vector<4x8xf32>
    %273 = vector.broadcast %235 : vector<1x8xf32> to vector<4x8xf32>
    %274 = arith.addf %272, %273 : vector<4x8xf32>
    %cst_96 = arith.constant 0.000000e+00 : f32
    %275 = vector.broadcast %cst_96 : f32 to vector<4x8xf32>
    %276 = arith.cmpf oge, %274, %275 : vector<4x8xf32>
    %277 = vector.broadcast %236 : vector<1x8xf32> to vector<4x8xf32>
    %278 = arith.mulf %277, %274 : vector<4x8xf32>
    %279 = arith.select %276, %274, %278 : vector<4x8xi1>, vector<4x8xf32>
    %280 = arith.truncf %279 : vector<4x8xf32> to vector<4x8xbf16>
    %c0_97 = arith.constant 0 : index
    %c0_98 = arith.constant 0 : index
    %281 = vector.load %arg21[%c0_97, %c0_98] : memref<8x32xbf16, #tpu.memory_space<vmem>>, vector<8x32xbf16>
    %cst_99 = arith.constant dense<0.000000e+00> : vector<4x32xf32>
    %282 = tpu.matmul %280, %281, %cst_99 {dimension_numbers = #tpu.dot_dimension_numbers<[1], [0], [0], [1], [0, 0, 1, 1], [], []>} : vector<4x8xbf16>, vector<8x32xbf16>, vector<4x32xf32> -> vector<4x32xf32>
    %283 = vector.broadcast %228 : vector<1x32xf32> to vector<4x32xf32>
    %284 = arith.addf %282, %283 : vector<4x32xf32>
    %285 = arith.addf %222, %284 : vector<4x32xf32>
    %c0_100 = arith.constant 0 : index
    %c0_101 = arith.constant 0 : index
    %286 = vector.load %arg22[%c0_100, %c0_101] : memref<4x32xf32, #tpu.memory_space<vmem>>, vector<4x32xf32>
    %c0_102 = arith.constant 0 : index
    %c0_103 = arith.constant 0 : index
    %287 = vector.load %arg23[%c0_102, %c0_103] : memref<8x8xf32, #tpu.memory_space<vmem>>, vector<8x8xf32>
    %288 = vector.extract_strided_slice %286 {offsets = [0, 0], sizes = [1, 32], strides = [1, 1]} : vector<4x32xf32> to vector<1x32xf32>
    %289 = vector.extract_strided_slice %286 {offsets = [1, 0], sizes = [1, 32], strides = [1, 1]} : vector<4x32xf32> to vector<1x32xf32>
    %290 = vector.extract_strided_slice %286 {offsets = [2, 0], sizes = [1, 32], strides = [1, 1]} : vector<4x32xf32> to vector<1x32xf32>
    %291 = vector.extract_strided_slice %286 {offsets = [3, 0], sizes = [1, 32], strides = [1, 1]} : vector<4x32xf32> to vector<1x32xf32>
    %292 = vector.extract_strided_slice %287 {offsets = [0, 0], sizes = [1, 8], strides = [1, 1]} : vector<8x8xf32> to vector<1x8xf32>
    %293 = vector.extract_strided_slice %287 {offsets = [1, 0], sizes = [1, 8], strides = [1, 1]} : vector<8x8xf32> to vector<1x8xf32>
    %294 = vector.extract_strided_slice %287 {offsets = [2, 0], sizes = [1, 8], strides = [1, 1]} : vector<8x8xf32> to vector<1x8xf32>
    %295 = vector.extract_strided_slice %287 {offsets = [3, 0], sizes = [1, 8], strides = [1, 1]} : vector<8x8xf32> to vector<1x8xf32>
    %296 = vector.extract_strided_slice %287 {offsets = [4, 0], sizes = [1, 8], strides = [1, 1]} : vector<8x8xf32> to vector<1x8xf32>
    %297 = vector.extract_strided_slice %287 {offsets = [5, 0], sizes = [1, 8], strides = [1, 1]} : vector<8x8xf32> to vector<1x8xf32>
    %298 = vector.extract_strided_slice %287 {offsets = [6, 0], sizes = [1, 8], strides = [1, 1]} : vector<8x8xf32> to vector<1x8xf32>
    %299 = vector.extract_strided_slice %287 {offsets = [7, 0], sizes = [1, 8], strides = [1, 1]} : vector<8x8xf32> to vector<1x8xf32>
    %300 = vector.broadcast %288 : vector<1x32xf32> to vector<4x32xf32>
    %301 = arith.mulf %285, %300 : vector<4x32xf32>
    %302 = vector.broadcast %289 : vector<1x32xf32> to vector<4x32xf32>
    %303 = arith.addf %301, %302 : vector<4x32xf32>
    %cst_104 = arith.constant 0.000000e+00 : f32
    %304 = vector.broadcast %cst_104 : f32 to vector<4x32xf32>
    %305 = arith.cmpf oge, %303, %304 : vector<4x32xf32>
    %306 = vector.broadcast %290 : vector<1x32xf32> to vector<4x32xf32>
    %307 = arith.mulf %306, %303 : vector<4x32xf32>
    %308 = arith.select %305, %303, %307 : vector<4x32xi1>, vector<4x32xf32>
    %309 = arith.truncf %308 : vector<4x32xf32> to vector<4x32xbf16>
    %c0_105 = arith.constant 0 : index
    %c0_106 = arith.constant 0 : index
    %310 = vector.load %arg24[%c0_105, %c0_106] : memref<32x8xbf16, #tpu.memory_space<vmem>>, vector<32x8xbf16>
    %cst_107 = arith.constant dense<0.000000e+00> : vector<4x8xf32>
    %311 = tpu.matmul %309, %310, %cst_107 {dimension_numbers = #tpu.dot_dimension_numbers<[1], [0], [0], [1], [0, 0, 1, 1], [], []>} : vector<4x32xbf16>, vector<32x8xbf16>, vector<4x8xf32> -> vector<4x8xf32>
    %312 = vector.broadcast %292 : vector<1x8xf32> to vector<4x8xf32>
    %313 = arith.addf %311, %312 : vector<4x8xf32>
    %314 = vector.broadcast %293 : vector<1x8xf32> to vector<4x8xf32>
    %315 = arith.mulf %313, %314 : vector<4x8xf32>
    %316 = vector.broadcast %294 : vector<1x8xf32> to vector<4x8xf32>
    %317 = arith.addf %315, %316 : vector<4x8xf32>
    %cst_108 = arith.constant 0.000000e+00 : f32
    %318 = vector.broadcast %cst_108 : f32 to vector<4x8xf32>
    %319 = arith.cmpf oge, %317, %318 : vector<4x8xf32>
    %320 = vector.broadcast %295 : vector<1x8xf32> to vector<4x8xf32>
    %321 = arith.mulf %320, %317 : vector<4x8xf32>
    %322 = arith.select %319, %317, %321 : vector<4x8xi1>, vector<4x8xf32>
    %cst_109 = arith.constant 0.000000e+00 : f32
    %323 = vector.broadcast %cst_109 : f32 to vector<1x8xf32>
    %324 = vector.extract_strided_slice %322 {offsets = [0, 0], sizes = [3, 8], strides = [1, 1]} : vector<4x8xf32> to vector<3x8xf32>
    %325 = tpu.concatenate %323, %324 in 0 : vector<1x8xf32>, vector<3x8xf32> -> vector<4x8xf32>
    %326 = vector.extract_strided_slice %322 {offsets = [1, 0], sizes = [3, 8], strides = [1, 1]} : vector<4x8xf32> to vector<3x8xf32>
    %327 = tpu.concatenate %326, %323 in 0 : vector<3x8xf32>, vector<1x8xf32> -> vector<4x8xf32>
    %328 = tpu.concatenate %325, %322, %327 in 1 : vector<4x8xf32>, vector<4x8xf32>, vector<4x8xf32> -> vector<4x24xf32>
    %329 = arith.truncf %328 : vector<4x24xf32> to vector<4x24xbf16>
    %c0_110 = arith.constant 0 : index
    %c0_111 = arith.constant 0 : index
    %330 = vector.load %arg25[%c0_110, %c0_111] : memref<24x8xbf16, #tpu.memory_space<vmem>>, vector<24x8xbf16>
    %cst_112 = arith.constant dense<0.000000e+00> : vector<4x8xf32>
    %331 = tpu.matmul %329, %330, %cst_112 {dimension_numbers = #tpu.dot_dimension_numbers<[1], [0], [0], [1], [0, 0, 1, 1], [], []>} : vector<4x24xbf16>, vector<24x8xbf16>, vector<4x8xf32> -> vector<4x8xf32>
    %332 = vector.broadcast %296 : vector<1x8xf32> to vector<4x8xf32>
    %333 = arith.addf %331, %332 : vector<4x8xf32>
    %334 = vector.broadcast %297 : vector<1x8xf32> to vector<4x8xf32>
    %335 = arith.mulf %333, %334 : vector<4x8xf32>
    %336 = vector.broadcast %298 : vector<1x8xf32> to vector<4x8xf32>
    %337 = arith.addf %335, %336 : vector<4x8xf32>
    %cst_113 = arith.constant 0.000000e+00 : f32
    %338 = vector.broadcast %cst_113 : f32 to vector<4x8xf32>
    %339 = arith.cmpf oge, %337, %338 : vector<4x8xf32>
    %340 = vector.broadcast %299 : vector<1x8xf32> to vector<4x8xf32>
    %341 = arith.mulf %340, %337 : vector<4x8xf32>
    %342 = arith.select %339, %337, %341 : vector<4x8xi1>, vector<4x8xf32>
    %343 = arith.truncf %342 : vector<4x8xf32> to vector<4x8xbf16>
    %c0_114 = arith.constant 0 : index
    %c0_115 = arith.constant 0 : index
    %344 = vector.load %arg26[%c0_114, %c0_115] : memref<8x32xbf16, #tpu.memory_space<vmem>>, vector<8x32xbf16>
    %cst_116 = arith.constant dense<0.000000e+00> : vector<4x32xf32>
    %345 = tpu.matmul %343, %344, %cst_116 {dimension_numbers = #tpu.dot_dimension_numbers<[1], [0], [0], [1], [0, 0, 1, 1], [], []>} : vector<4x8xbf16>, vector<8x32xbf16>, vector<4x32xf32> -> vector<4x32xf32>
    %346 = vector.broadcast %291 : vector<1x32xf32> to vector<4x32xf32>
    %347 = arith.addf %345, %346 : vector<4x32xf32>
    %348 = arith.addf %285, %347 : vector<4x32xf32>
    %349 = arith.truncf %285 : vector<4x32xf32> to vector<4x32xbf16>
    %c0_117 = arith.constant 0 : index
    %c0_118 = arith.constant 0 : index
    %c0_119 = arith.constant 0 : index
    %350 = vector.load %arg74[%c0_117, %c0_118, %c0_119] : memref<2x2x4xbf16, #tpu.memory_space<vmem>>, vector<1x2x4xbf16>
    %351 = vector.shape_cast %350 : vector<1x2x4xbf16> to vector<2x4xbf16>
    %cst_120 = arith.constant dense<0.000000e+00> : vector<2x32xf32>
    %352 = tpu.matmul %351, %349, %cst_120 {dimension_numbers = #tpu.dot_dimension_numbers<[1], [0], [0], [1], [0, 0, 1, 1], [], []>} : vector<2x4xbf16>, vector<4x32xbf16>, vector<2x32xf32> -> vector<2x32xf32>
    %c1_121 = arith.constant 1 : index
    %c0_122 = arith.constant 0 : index
    %c0_123 = arith.constant 0 : index
    %353 = vector.load %arg74[%c1_121, %c0_122, %c0_123] : memref<2x2x4xbf16, #tpu.memory_space<vmem>>, vector<1x2x4xbf16>
    %354 = vector.shape_cast %353 : vector<1x2x4xbf16> to vector<2x4xbf16>
    %cst_124 = arith.constant dense<0.000000e+00> : vector<2x32xf32>
    %355 = tpu.matmul %354, %349, %cst_124 {dimension_numbers = #tpu.dot_dimension_numbers<[1], [0], [0], [1], [0, 0, 1, 1], [], []>} : vector<2x4xbf16>, vector<4x32xbf16>, vector<2x32xf32> -> vector<2x32xf32>
    %356 = arith.maximumf %352, %355 : vector<2x32xf32>
    %357 = arith.truncf %356 : vector<2x32xf32> to vector<2x32xbf16>
    %c0_125 = arith.constant 0 : index
    %c0_126 = arith.constant 0 : index
    %c0_127 = arith.constant 0 : index
    %358 = vector.load %arg78[%c0_125, %c0_126, %c0_127] : memref<2x32x16xbf16, #tpu.memory_space<vmem>>, vector<1x32x16xbf16>
    %359 = vector.shape_cast %358 : vector<1x32x16xbf16> to vector<32x16xbf16>
    %cst_128 = arith.constant dense<0.000000e+00> : vector<2x16xf32>
    %360 = tpu.matmul %357, %359, %cst_128 {dimension_numbers = #tpu.dot_dimension_numbers<[1], [0], [0], [1], [0, 0, 1, 1], [], []>} : vector<2x32xbf16>, vector<32x16xbf16>, vector<2x16xf32> -> vector<2x16xf32>
    %c1_129 = arith.constant 1 : index
    %c0_130 = arith.constant 0 : index
    %c0_131 = arith.constant 0 : index
    %361 = vector.load %arg78[%c1_129, %c0_130, %c0_131] : memref<2x32x16xbf16, #tpu.memory_space<vmem>>, vector<1x32x16xbf16>
    %362 = vector.shape_cast %361 : vector<1x32x16xbf16> to vector<32x16xbf16>
    %cst_132 = arith.constant dense<0.000000e+00> : vector<2x16xf32>
    %363 = tpu.matmul %357, %362, %cst_132 {dimension_numbers = #tpu.dot_dimension_numbers<[1], [0], [0], [1], [0, 0, 1, 1], [], []>} : vector<2x32xbf16>, vector<32x16xbf16>, vector<2x16xf32> -> vector<2x16xf32>
    %364 = arith.maximumf %360, %363 : vector<2x16xf32>
    %c0_133 = arith.constant 0 : index
    %c0_134 = arith.constant 0 : index
    %365 = vector.load %arg27[%c0_133, %c0_134] : memref<4x16xf32, #tpu.memory_space<vmem>>, vector<4x16xf32>
    %c0_135 = arith.constant 0 : index
    %c0_136 = arith.constant 0 : index
    %366 = vector.load %arg28[%c0_135, %c0_136] : memref<8x4xf32, #tpu.memory_space<vmem>>, vector<8x4xf32>
    %367 = vector.extract_strided_slice %365 {offsets = [0, 0], sizes = [1, 16], strides = [1, 1]} : vector<4x16xf32> to vector<1x16xf32>
    %368 = vector.extract_strided_slice %365 {offsets = [1, 0], sizes = [1, 16], strides = [1, 1]} : vector<4x16xf32> to vector<1x16xf32>
    %369 = vector.extract_strided_slice %365 {offsets = [2, 0], sizes = [1, 16], strides = [1, 1]} : vector<4x16xf32> to vector<1x16xf32>
    %370 = vector.extract_strided_slice %365 {offsets = [3, 0], sizes = [1, 16], strides = [1, 1]} : vector<4x16xf32> to vector<1x16xf32>
    %371 = vector.extract_strided_slice %366 {offsets = [0, 0], sizes = [1, 4], strides = [1, 1]} : vector<8x4xf32> to vector<1x4xf32>
    %372 = vector.extract_strided_slice %366 {offsets = [1, 0], sizes = [1, 4], strides = [1, 1]} : vector<8x4xf32> to vector<1x4xf32>
    %373 = vector.extract_strided_slice %366 {offsets = [2, 0], sizes = [1, 4], strides = [1, 1]} : vector<8x4xf32> to vector<1x4xf32>
    %374 = vector.extract_strided_slice %366 {offsets = [3, 0], sizes = [1, 4], strides = [1, 1]} : vector<8x4xf32> to vector<1x4xf32>
    %375 = vector.extract_strided_slice %366 {offsets = [4, 0], sizes = [1, 4], strides = [1, 1]} : vector<8x4xf32> to vector<1x4xf32>
    %376 = vector.extract_strided_slice %366 {offsets = [5, 0], sizes = [1, 4], strides = [1, 1]} : vector<8x4xf32> to vector<1x4xf32>
    %377 = vector.extract_strided_slice %366 {offsets = [6, 0], sizes = [1, 4], strides = [1, 1]} : vector<8x4xf32> to vector<1x4xf32>
    %378 = vector.extract_strided_slice %366 {offsets = [7, 0], sizes = [1, 4], strides = [1, 1]} : vector<8x4xf32> to vector<1x4xf32>
    %379 = vector.broadcast %367 : vector<1x16xf32> to vector<2x16xf32>
    %380 = arith.mulf %364, %379 : vector<2x16xf32>
    %381 = vector.broadcast %368 : vector<1x16xf32> to vector<2x16xf32>
    %382 = arith.addf %380, %381 : vector<2x16xf32>
    %cst_137 = arith.constant 0.000000e+00 : f32
    %383 = vector.broadcast %cst_137 : f32 to vector<2x16xf32>
    %384 = arith.cmpf oge, %382, %383 : vector<2x16xf32>
    %385 = vector.broadcast %369 : vector<1x16xf32> to vector<2x16xf32>
    %386 = arith.mulf %385, %382 : vector<2x16xf32>
    %387 = arith.select %384, %382, %386 : vector<2x16xi1>, vector<2x16xf32>
    %388 = arith.truncf %387 : vector<2x16xf32> to vector<2x16xbf16>
    %c0_138 = arith.constant 0 : index
    %c0_139 = arith.constant 0 : index
    %389 = vector.load %arg29[%c0_138, %c0_139] : memref<16x4xbf16, #tpu.memory_space<vmem>>, vector<16x4xbf16>
    %cst_140 = arith.constant dense<0.000000e+00> : vector<2x4xf32>
    %390 = tpu.matmul %388, %389, %cst_140 {dimension_numbers = #tpu.dot_dimension_numbers<[1], [0], [0], [1], [0, 0, 1, 1], [], []>} : vector<2x16xbf16>, vector<16x4xbf16>, vector<2x4xf32> -> vector<2x4xf32>
    %391 = vector.broadcast %371 : vector<1x4xf32> to vector<2x4xf32>
    %392 = arith.addf %390, %391 : vector<2x4xf32>
    %393 = vector.broadcast %372 : vector<1x4xf32> to vector<2x4xf32>
    %394 = arith.mulf %392, %393 : vector<2x4xf32>
    %395 = vector.broadcast %373 : vector<1x4xf32> to vector<2x4xf32>
    %396 = arith.addf %394, %395 : vector<2x4xf32>
    %cst_141 = arith.constant 0.000000e+00 : f32
    %397 = vector.broadcast %cst_141 : f32 to vector<2x4xf32>
    %398 = arith.cmpf oge, %396, %397 : vector<2x4xf32>
    %399 = vector.broadcast %374 : vector<1x4xf32> to vector<2x4xf32>
    %400 = arith.mulf %399, %396 : vector<2x4xf32>
    %401 = arith.select %398, %396, %400 : vector<2x4xi1>, vector<2x4xf32>
    %cst_142 = arith.constant 0.000000e+00 : f32
    %402 = vector.broadcast %cst_142 : f32 to vector<1x4xf32>
    %403 = vector.extract_strided_slice %401 {offsets = [0, 0], sizes = [1, 4], strides = [1, 1]} : vector<2x4xf32> to vector<1x4xf32>
    %404 = tpu.concatenate %402, %403 in 0 : vector<1x4xf32>, vector<1x4xf32> -> vector<2x4xf32>
    %405 = vector.extract_strided_slice %401 {offsets = [1, 0], sizes = [1, 4], strides = [1, 1]} : vector<2x4xf32> to vector<1x4xf32>
    %406 = tpu.concatenate %405, %402 in 0 : vector<1x4xf32>, vector<1x4xf32> -> vector<2x4xf32>
    %407 = tpu.concatenate %404, %401, %406 in 1 : vector<2x4xf32>, vector<2x4xf32>, vector<2x4xf32> -> vector<2x12xf32>
    %408 = arith.truncf %407 : vector<2x12xf32> to vector<2x12xbf16>
    %c0_143 = arith.constant 0 : index
    %c0_144 = arith.constant 0 : index
    %409 = vector.load %arg30[%c0_143, %c0_144] : memref<12x4xbf16, #tpu.memory_space<vmem>>, vector<12x4xbf16>
    %cst_145 = arith.constant dense<0.000000e+00> : vector<2x4xf32>
    %410 = tpu.matmul %408, %409, %cst_145 {dimension_numbers = #tpu.dot_dimension_numbers<[1], [0], [0], [1], [0, 0, 1, 1], [], []>} : vector<2x12xbf16>, vector<12x4xbf16>, vector<2x4xf32> -> vector<2x4xf32>
    %411 = vector.broadcast %375 : vector<1x4xf32> to vector<2x4xf32>
    %412 = arith.addf %410, %411 : vector<2x4xf32>
    %413 = vector.broadcast %376 : vector<1x4xf32> to vector<2x4xf32>
    %414 = arith.mulf %412, %413 : vector<2x4xf32>
    %415 = vector.broadcast %377 : vector<1x4xf32> to vector<2x4xf32>
    %416 = arith.addf %414, %415 : vector<2x4xf32>
    %cst_146 = arith.constant 0.000000e+00 : f32
    %417 = vector.broadcast %cst_146 : f32 to vector<2x4xf32>
    %418 = arith.cmpf oge, %416, %417 : vector<2x4xf32>
    %419 = vector.broadcast %378 : vector<1x4xf32> to vector<2x4xf32>
    %420 = arith.mulf %419, %416 : vector<2x4xf32>
    %421 = arith.select %418, %416, %420 : vector<2x4xi1>, vector<2x4xf32>
    %422 = arith.truncf %421 : vector<2x4xf32> to vector<2x4xbf16>
    %c0_147 = arith.constant 0 : index
    %c0_148 = arith.constant 0 : index
    %423 = vector.load %arg31[%c0_147, %c0_148] : memref<4x16xbf16, #tpu.memory_space<vmem>>, vector<4x16xbf16>
    %cst_149 = arith.constant dense<0.000000e+00> : vector<2x16xf32>
    %424 = tpu.matmul %422, %423, %cst_149 {dimension_numbers = #tpu.dot_dimension_numbers<[1], [0], [0], [1], [0, 0, 1, 1], [], []>} : vector<2x4xbf16>, vector<4x16xbf16>, vector<2x16xf32> -> vector<2x16xf32>
    %425 = vector.broadcast %370 : vector<1x16xf32> to vector<2x16xf32>
    %426 = arith.addf %424, %425 : vector<2x16xf32>
    %427 = arith.addf %364, %426 : vector<2x16xf32>
    %c0_150 = arith.constant 0 : index
    %c0_151 = arith.constant 0 : index
    %428 = vector.load %arg32[%c0_150, %c0_151] : memref<4x16xf32, #tpu.memory_space<vmem>>, vector<4x16xf32>
    %c0_152 = arith.constant 0 : index
    %c0_153 = arith.constant 0 : index
    %429 = vector.load %arg33[%c0_152, %c0_153] : memref<8x4xf32, #tpu.memory_space<vmem>>, vector<8x4xf32>
    %430 = vector.extract_strided_slice %428 {offsets = [0, 0], sizes = [1, 16], strides = [1, 1]} : vector<4x16xf32> to vector<1x16xf32>
    %431 = vector.extract_strided_slice %428 {offsets = [1, 0], sizes = [1, 16], strides = [1, 1]} : vector<4x16xf32> to vector<1x16xf32>
    %432 = vector.extract_strided_slice %428 {offsets = [2, 0], sizes = [1, 16], strides = [1, 1]} : vector<4x16xf32> to vector<1x16xf32>
    %433 = vector.extract_strided_slice %428 {offsets = [3, 0], sizes = [1, 16], strides = [1, 1]} : vector<4x16xf32> to vector<1x16xf32>
    %434 = vector.extract_strided_slice %429 {offsets = [0, 0], sizes = [1, 4], strides = [1, 1]} : vector<8x4xf32> to vector<1x4xf32>
    %435 = vector.extract_strided_slice %429 {offsets = [1, 0], sizes = [1, 4], strides = [1, 1]} : vector<8x4xf32> to vector<1x4xf32>
    %436 = vector.extract_strided_slice %429 {offsets = [2, 0], sizes = [1, 4], strides = [1, 1]} : vector<8x4xf32> to vector<1x4xf32>
    %437 = vector.extract_strided_slice %429 {offsets = [3, 0], sizes = [1, 4], strides = [1, 1]} : vector<8x4xf32> to vector<1x4xf32>
    %438 = vector.extract_strided_slice %429 {offsets = [4, 0], sizes = [1, 4], strides = [1, 1]} : vector<8x4xf32> to vector<1x4xf32>
    %439 = vector.extract_strided_slice %429 {offsets = [5, 0], sizes = [1, 4], strides = [1, 1]} : vector<8x4xf32> to vector<1x4xf32>
    %440 = vector.extract_strided_slice %429 {offsets = [6, 0], sizes = [1, 4], strides = [1, 1]} : vector<8x4xf32> to vector<1x4xf32>
    %441 = vector.extract_strided_slice %429 {offsets = [7, 0], sizes = [1, 4], strides = [1, 1]} : vector<8x4xf32> to vector<1x4xf32>
    %442 = vector.broadcast %430 : vector<1x16xf32> to vector<2x16xf32>
    %443 = arith.mulf %427, %442 : vector<2x16xf32>
    %444 = vector.broadcast %431 : vector<1x16xf32> to vector<2x16xf32>
    %445 = arith.addf %443, %444 : vector<2x16xf32>
    %cst_154 = arith.constant 0.000000e+00 : f32
    %446 = vector.broadcast %cst_154 : f32 to vector<2x16xf32>
    %447 = arith.cmpf oge, %445, %446 : vector<2x16xf32>
    %448 = vector.broadcast %432 : vector<1x16xf32> to vector<2x16xf32>
    %449 = arith.mulf %448, %445 : vector<2x16xf32>
    %450 = arith.select %447, %445, %449 : vector<2x16xi1>, vector<2x16xf32>
    %451 = arith.truncf %450 : vector<2x16xf32> to vector<2x16xbf16>
    %c0_155 = arith.constant 0 : index
    %c0_156 = arith.constant 0 : index
    %452 = vector.load %arg34[%c0_155, %c0_156] : memref<16x4xbf16, #tpu.memory_space<vmem>>, vector<16x4xbf16>
    %cst_157 = arith.constant dense<0.000000e+00> : vector<2x4xf32>
    %453 = tpu.matmul %451, %452, %cst_157 {dimension_numbers = #tpu.dot_dimension_numbers<[1], [0], [0], [1], [0, 0, 1, 1], [], []>} : vector<2x16xbf16>, vector<16x4xbf16>, vector<2x4xf32> -> vector<2x4xf32>
    %454 = vector.broadcast %434 : vector<1x4xf32> to vector<2x4xf32>
    %455 = arith.addf %453, %454 : vector<2x4xf32>
    %456 = vector.broadcast %435 : vector<1x4xf32> to vector<2x4xf32>
    %457 = arith.mulf %455, %456 : vector<2x4xf32>
    %458 = vector.broadcast %436 : vector<1x4xf32> to vector<2x4xf32>
    %459 = arith.addf %457, %458 : vector<2x4xf32>
    %cst_158 = arith.constant 0.000000e+00 : f32
    %460 = vector.broadcast %cst_158 : f32 to vector<2x4xf32>
    %461 = arith.cmpf oge, %459, %460 : vector<2x4xf32>
    %462 = vector.broadcast %437 : vector<1x4xf32> to vector<2x4xf32>
    %463 = arith.mulf %462, %459 : vector<2x4xf32>
    %464 = arith.select %461, %459, %463 : vector<2x4xi1>, vector<2x4xf32>
    %cst_159 = arith.constant 0.000000e+00 : f32
    %465 = vector.broadcast %cst_159 : f32 to vector<1x4xf32>
    %466 = vector.extract_strided_slice %464 {offsets = [0, 0], sizes = [1, 4], strides = [1, 1]} : vector<2x4xf32> to vector<1x4xf32>
    %467 = tpu.concatenate %465, %466 in 0 : vector<1x4xf32>, vector<1x4xf32> -> vector<2x4xf32>
    %468 = vector.extract_strided_slice %464 {offsets = [1, 0], sizes = [1, 4], strides = [1, 1]} : vector<2x4xf32> to vector<1x4xf32>
    %469 = tpu.concatenate %468, %465 in 0 : vector<1x4xf32>, vector<1x4xf32> -> vector<2x4xf32>
    %470 = tpu.concatenate %467, %464, %469 in 1 : vector<2x4xf32>, vector<2x4xf32>, vector<2x4xf32> -> vector<2x12xf32>
    %471 = arith.truncf %470 : vector<2x12xf32> to vector<2x12xbf16>
    %c0_160 = arith.constant 0 : index
    %c0_161 = arith.constant 0 : index
    %472 = vector.load %arg35[%c0_160, %c0_161] : memref<12x4xbf16, #tpu.memory_space<vmem>>, vector<12x4xbf16>
    %cst_162 = arith.constant dense<0.000000e+00> : vector<2x4xf32>
    %473 = tpu.matmul %471, %472, %cst_162 {dimension_numbers = #tpu.dot_dimension_numbers<[1], [0], [0], [1], [0, 0, 1, 1], [], []>} : vector<2x12xbf16>, vector<12x4xbf16>, vector<2x4xf32> -> vector<2x4xf32>
    %474 = vector.broadcast %438 : vector<1x4xf32> to vector<2x4xf32>
    %475 = arith.addf %473, %474 : vector<2x4xf32>
    %476 = vector.broadcast %439 : vector<1x4xf32> to vector<2x4xf32>
    %477 = arith.mulf %475, %476 : vector<2x4xf32>
    %478 = vector.broadcast %440 : vector<1x4xf32> to vector<2x4xf32>
    %479 = arith.addf %477, %478 : vector<2x4xf32>
    %cst_163 = arith.constant 0.000000e+00 : f32
    %480 = vector.broadcast %cst_163 : f32 to vector<2x4xf32>
    %481 = arith.cmpf oge, %479, %480 : vector<2x4xf32>
    %482 = vector.broadcast %441 : vector<1x4xf32> to vector<2x4xf32>
    %483 = arith.mulf %482, %479 : vector<2x4xf32>
    %484 = arith.select %481, %479, %483 : vector<2x4xi1>, vector<2x4xf32>
    %485 = arith.truncf %484 : vector<2x4xf32> to vector<2x4xbf16>
    %c0_164 = arith.constant 0 : index
    %c0_165 = arith.constant 0 : index
    %486 = vector.load %arg36[%c0_164, %c0_165] : memref<4x16xbf16, #tpu.memory_space<vmem>>, vector<4x16xbf16>
    %cst_166 = arith.constant dense<0.000000e+00> : vector<2x16xf32>
    %487 = tpu.matmul %485, %486, %cst_166 {dimension_numbers = #tpu.dot_dimension_numbers<[1], [0], [0], [1], [0, 0, 1, 1], [], []>} : vector<2x4xbf16>, vector<4x16xbf16>, vector<2x16xf32> -> vector<2x16xf32>
    %488 = vector.broadcast %433 : vector<1x16xf32> to vector<2x16xf32>
    %489 = arith.addf %487, %488 : vector<2x16xf32>
    %490 = arith.addf %427, %489 : vector<2x16xf32>
    %491 = arith.truncf %427 : vector<2x16xf32> to vector<2x16xbf16>
    %c0_167 = arith.constant 0 : index
    %c0_168 = arith.constant 0 : index
    %c0_169 = arith.constant 0 : index
    %492 = vector.load %arg75[%c0_167, %c0_168, %c0_169] : memref<2x1x2xbf16, #tpu.memory_space<vmem>>, vector<1x1x2xbf16>
    %493 = vector.shape_cast %492 : vector<1x1x2xbf16> to vector<1x2xbf16>
    %cst_170 = arith.constant dense<0.000000e+00> : vector<1x16xf32>
    %494 = tpu.matmul %493, %491, %cst_170 {dimension_numbers = #tpu.dot_dimension_numbers<[1], [0], [0], [1], [0, 0, 1, 1], [], []>} : vector<1x2xbf16>, vector<2x16xbf16>, vector<1x16xf32> -> vector<1x16xf32>
    %c1_171 = arith.constant 1 : index
    %c0_172 = arith.constant 0 : index
    %c0_173 = arith.constant 0 : index
    %495 = vector.load %arg75[%c1_171, %c0_172, %c0_173] : memref<2x1x2xbf16, #tpu.memory_space<vmem>>, vector<1x1x2xbf16>
    %496 = vector.shape_cast %495 : vector<1x1x2xbf16> to vector<1x2xbf16>
    %cst_174 = arith.constant dense<0.000000e+00> : vector<1x16xf32>
    %497 = tpu.matmul %496, %491, %cst_174 {dimension_numbers = #tpu.dot_dimension_numbers<[1], [0], [0], [1], [0, 0, 1, 1], [], []>} : vector<1x2xbf16>, vector<2x16xbf16>, vector<1x16xf32> -> vector<1x16xf32>
    %498 = arith.maximumf %494, %497 : vector<1x16xf32>
    %499 = arith.truncf %498 : vector<1x16xf32> to vector<1x16xbf16>
    %c0_175 = arith.constant 0 : index
    %c0_176 = arith.constant 0 : index
    %c0_177 = arith.constant 0 : index
    %500 = vector.load %arg79[%c0_175, %c0_176, %c0_177] : memref<2x16x8xbf16, #tpu.memory_space<vmem>>, vector<1x16x8xbf16>
    %501 = vector.shape_cast %500 : vector<1x16x8xbf16> to vector<16x8xbf16>
    %cst_178 = arith.constant dense<0.000000e+00> : vector<1x8xf32>
    %502 = tpu.matmul %499, %501, %cst_178 {dimension_numbers = #tpu.dot_dimension_numbers<[1], [0], [0], [1], [0, 0, 1, 1], [], []>} : vector<1x16xbf16>, vector<16x8xbf16>, vector<1x8xf32> -> vector<1x8xf32>
    %c1_179 = arith.constant 1 : index
    %c0_180 = arith.constant 0 : index
    %c0_181 = arith.constant 0 : index
    %503 = vector.load %arg79[%c1_179, %c0_180, %c0_181] : memref<2x16x8xbf16, #tpu.memory_space<vmem>>, vector<1x16x8xbf16>
    %504 = vector.shape_cast %503 : vector<1x16x8xbf16> to vector<16x8xbf16>
    %cst_182 = arith.constant dense<0.000000e+00> : vector<1x8xf32>
    %505 = tpu.matmul %499, %504, %cst_182 {dimension_numbers = #tpu.dot_dimension_numbers<[1], [0], [0], [1], [0, 0, 1, 1], [], []>} : vector<1x16xbf16>, vector<16x8xbf16>, vector<1x8xf32> -> vector<1x8xf32>
    %506 = arith.maximumf %502, %505 : vector<1x8xf32>
    %c0_183 = arith.constant 0 : index
    %c0_184 = arith.constant 0 : index
    %507 = vector.load %arg37[%c0_183, %c0_184] : memref<4x8xf32, #tpu.memory_space<vmem>>, vector<4x8xf32>
    %c0_185 = arith.constant 0 : index
    %c0_186 = arith.constant 0 : index
    %508 = vector.load %arg38[%c0_185, %c0_186] : memref<8x2xf32, #tpu.memory_space<vmem>>, vector<8x2xf32>
    %509 = vector.extract_strided_slice %507 {offsets = [0, 0], sizes = [1, 8], strides = [1, 1]} : vector<4x8xf32> to vector<1x8xf32>
    %510 = vector.extract_strided_slice %507 {offsets = [1, 0], sizes = [1, 8], strides = [1, 1]} : vector<4x8xf32> to vector<1x8xf32>
    %511 = vector.extract_strided_slice %507 {offsets = [2, 0], sizes = [1, 8], strides = [1, 1]} : vector<4x8xf32> to vector<1x8xf32>
    %512 = vector.extract_strided_slice %507 {offsets = [3, 0], sizes = [1, 8], strides = [1, 1]} : vector<4x8xf32> to vector<1x8xf32>
    %513 = vector.extract_strided_slice %508 {offsets = [0, 0], sizes = [1, 2], strides = [1, 1]} : vector<8x2xf32> to vector<1x2xf32>
    %514 = vector.extract_strided_slice %508 {offsets = [1, 0], sizes = [1, 2], strides = [1, 1]} : vector<8x2xf32> to vector<1x2xf32>
    %515 = vector.extract_strided_slice %508 {offsets = [2, 0], sizes = [1, 2], strides = [1, 1]} : vector<8x2xf32> to vector<1x2xf32>
    %516 = vector.extract_strided_slice %508 {offsets = [3, 0], sizes = [1, 2], strides = [1, 1]} : vector<8x2xf32> to vector<1x2xf32>
    %517 = vector.extract_strided_slice %508 {offsets = [4, 0], sizes = [1, 2], strides = [1, 1]} : vector<8x2xf32> to vector<1x2xf32>
    %518 = vector.extract_strided_slice %508 {offsets = [5, 0], sizes = [1, 2], strides = [1, 1]} : vector<8x2xf32> to vector<1x2xf32>
    %519 = vector.extract_strided_slice %508 {offsets = [6, 0], sizes = [1, 2], strides = [1, 1]} : vector<8x2xf32> to vector<1x2xf32>
    %520 = vector.extract_strided_slice %508 {offsets = [7, 0], sizes = [1, 2], strides = [1, 1]} : vector<8x2xf32> to vector<1x2xf32>
    %521 = arith.mulf %506, %509 : vector<1x8xf32>
    %522 = arith.addf %521, %510 : vector<1x8xf32>
    %cst_187 = arith.constant 0.000000e+00 : f32
    %523 = vector.broadcast %cst_187 : f32 to vector<1x8xf32>
    %524 = arith.cmpf oge, %522, %523 : vector<1x8xf32>
    %525 = arith.mulf %511, %522 : vector<1x8xf32>
    %526 = arith.select %524, %522, %525 : vector<1x8xi1>, vector<1x8xf32>
    %527 = arith.truncf %526 : vector<1x8xf32> to vector<1x8xbf16>
    %c0_188 = arith.constant 0 : index
    %c0_189 = arith.constant 0 : index
    %528 = vector.load %arg39[%c0_188, %c0_189] : memref<8x2xbf16, #tpu.memory_space<vmem>>, vector<8x2xbf16>
    %cst_190 = arith.constant dense<0.000000e+00> : vector<1x2xf32>
    %529 = tpu.matmul %527, %528, %cst_190 {dimension_numbers = #tpu.dot_dimension_numbers<[1], [0], [0], [1], [0, 0, 1, 1], [], []>} : vector<1x8xbf16>, vector<8x2xbf16>, vector<1x2xf32> -> vector<1x2xf32>
    %530 = arith.addf %529, %513 : vector<1x2xf32>
    %531 = arith.mulf %530, %514 : vector<1x2xf32>
    %532 = arith.addf %531, %515 : vector<1x2xf32>
    %cst_191 = arith.constant 0.000000e+00 : f32
    %533 = vector.broadcast %cst_191 : f32 to vector<1x2xf32>
    %534 = arith.cmpf oge, %532, %533 : vector<1x2xf32>
    %535 = arith.mulf %516, %532 : vector<1x2xf32>
    %536 = arith.select %534, %532, %535 : vector<1x2xi1>, vector<1x2xf32>
    %cst_192 = arith.constant 0.000000e+00 : f32
    %537 = vector.broadcast %cst_192 : f32 to vector<1x2xf32>
    %cst_193 = arith.constant 0.000000e+00 : f32
    %538 = vector.broadcast %cst_193 : f32 to vector<1x2xf32>
    %539 = tpu.concatenate %537, %536, %538 in 1 : vector<1x2xf32>, vector<1x2xf32>, vector<1x2xf32> -> vector<1x6xf32>
    %540 = arith.truncf %539 : vector<1x6xf32> to vector<1x6xbf16>
    %c0_194 = arith.constant 0 : index
    %c0_195 = arith.constant 0 : index
    %541 = vector.load %arg40[%c0_194, %c0_195] : memref<6x2xbf16, #tpu.memory_space<vmem>>, vector<6x2xbf16>
    %cst_196 = arith.constant dense<0.000000e+00> : vector<1x2xf32>
    %542 = tpu.matmul %540, %541, %cst_196 {dimension_numbers = #tpu.dot_dimension_numbers<[1], [0], [0], [1], [0, 0, 1, 1], [], []>} : vector<1x6xbf16>, vector<6x2xbf16>, vector<1x2xf32> -> vector<1x2xf32>
    %543 = arith.addf %542, %517 : vector<1x2xf32>
    %544 = arith.mulf %543, %518 : vector<1x2xf32>
    %545 = arith.addf %544, %519 : vector<1x2xf32>
    %cst_197 = arith.constant 0.000000e+00 : f32
    %546 = vector.broadcast %cst_197 : f32 to vector<1x2xf32>
    %547 = arith.cmpf oge, %545, %546 : vector<1x2xf32>
    %548 = arith.mulf %520, %545 : vector<1x2xf32>
    %549 = arith.select %547, %545, %548 : vector<1x2xi1>, vector<1x2xf32>
    %550 = arith.truncf %549 : vector<1x2xf32> to vector<1x2xbf16>
    %c0_198 = arith.constant 0 : index
    %c0_199 = arith.constant 0 : index
    %551 = vector.load %arg41[%c0_198, %c0_199] : memref<2x8xbf16, #tpu.memory_space<vmem>>, vector<2x8xbf16>
    %cst_200 = arith.constant dense<0.000000e+00> : vector<1x8xf32>
    %552 = tpu.matmul %550, %551, %cst_200 {dimension_numbers = #tpu.dot_dimension_numbers<[1], [0], [0], [1], [0, 0, 1, 1], [], []>} : vector<1x2xbf16>, vector<2x8xbf16>, vector<1x8xf32> -> vector<1x8xf32>
    %553 = arith.addf %552, %512 : vector<1x8xf32>
    %554 = arith.addf %506, %553 : vector<1x8xf32>
    %c0_201 = arith.constant 0 : index
    %c0_202 = arith.constant 0 : index
    %555 = vector.load %arg42[%c0_201, %c0_202] : memref<4x8xf32, #tpu.memory_space<vmem>>, vector<4x8xf32>
    %c0_203 = arith.constant 0 : index
    %c0_204 = arith.constant 0 : index
    %556 = vector.load %arg43[%c0_203, %c0_204] : memref<8x2xf32, #tpu.memory_space<vmem>>, vector<8x2xf32>
    %557 = vector.extract_strided_slice %555 {offsets = [0, 0], sizes = [1, 8], strides = [1, 1]} : vector<4x8xf32> to vector<1x8xf32>
    %558 = vector.extract_strided_slice %555 {offsets = [1, 0], sizes = [1, 8], strides = [1, 1]} : vector<4x8xf32> to vector<1x8xf32>
    %559 = vector.extract_strided_slice %555 {offsets = [2, 0], sizes = [1, 8], strides = [1, 1]} : vector<4x8xf32> to vector<1x8xf32>
    %560 = vector.extract_strided_slice %555 {offsets = [3, 0], sizes = [1, 8], strides = [1, 1]} : vector<4x8xf32> to vector<1x8xf32>
    %561 = vector.extract_strided_slice %556 {offsets = [0, 0], sizes = [1, 2], strides = [1, 1]} : vector<8x2xf32> to vector<1x2xf32>
    %562 = vector.extract_strided_slice %556 {offsets = [1, 0], sizes = [1, 2], strides = [1, 1]} : vector<8x2xf32> to vector<1x2xf32>
    %563 = vector.extract_strided_slice %556 {offsets = [2, 0], sizes = [1, 2], strides = [1, 1]} : vector<8x2xf32> to vector<1x2xf32>
    %564 = vector.extract_strided_slice %556 {offsets = [3, 0], sizes = [1, 2], strides = [1, 1]} : vector<8x2xf32> to vector<1x2xf32>
    %565 = vector.extract_strided_slice %556 {offsets = [4, 0], sizes = [1, 2], strides = [1, 1]} : vector<8x2xf32> to vector<1x2xf32>
    %566 = vector.extract_strided_slice %556 {offsets = [5, 0], sizes = [1, 2], strides = [1, 1]} : vector<8x2xf32> to vector<1x2xf32>
    %567 = vector.extract_strided_slice %556 {offsets = [6, 0], sizes = [1, 2], strides = [1, 1]} : vector<8x2xf32> to vector<1x2xf32>
    %568 = vector.extract_strided_slice %556 {offsets = [7, 0], sizes = [1, 2], strides = [1, 1]} : vector<8x2xf32> to vector<1x2xf32>
    %569 = arith.mulf %554, %557 : vector<1x8xf32>
    %570 = arith.addf %569, %558 : vector<1x8xf32>
    %cst_205 = arith.constant 0.000000e+00 : f32
    %571 = vector.broadcast %cst_205 : f32 to vector<1x8xf32>
    %572 = arith.cmpf oge, %570, %571 : vector<1x8xf32>
    %573 = arith.mulf %559, %570 : vector<1x8xf32>
    %574 = arith.select %572, %570, %573 : vector<1x8xi1>, vector<1x8xf32>
    %575 = arith.truncf %574 : vector<1x8xf32> to vector<1x8xbf16>
    %c0_206 = arith.constant 0 : index
    %c0_207 = arith.constant 0 : index
    %576 = vector.load %arg44[%c0_206, %c0_207] : memref<8x2xbf16, #tpu.memory_space<vmem>>, vector<8x2xbf16>
    %cst_208 = arith.constant dense<0.000000e+00> : vector<1x2xf32>
    %577 = tpu.matmul %575, %576, %cst_208 {dimension_numbers = #tpu.dot_dimension_numbers<[1], [0], [0], [1], [0, 0, 1, 1], [], []>} : vector<1x8xbf16>, vector<8x2xbf16>, vector<1x2xf32> -> vector<1x2xf32>
    %578 = arith.addf %577, %561 : vector<1x2xf32>
    %579 = arith.mulf %578, %562 : vector<1x2xf32>
    %580 = arith.addf %579, %563 : vector<1x2xf32>
    %cst_209 = arith.constant 0.000000e+00 : f32
    %581 = vector.broadcast %cst_209 : f32 to vector<1x2xf32>
    %582 = arith.cmpf oge, %580, %581 : vector<1x2xf32>
    %583 = arith.mulf %564, %580 : vector<1x2xf32>
    %584 = arith.select %582, %580, %583 : vector<1x2xi1>, vector<1x2xf32>
    %cst_210 = arith.constant 0.000000e+00 : f32
    %585 = vector.broadcast %cst_210 : f32 to vector<1x2xf32>
    %cst_211 = arith.constant 0.000000e+00 : f32
    %586 = vector.broadcast %cst_211 : f32 to vector<1x2xf32>
    %587 = tpu.concatenate %585, %584, %586 in 1 : vector<1x2xf32>, vector<1x2xf32>, vector<1x2xf32> -> vector<1x6xf32>
    %588 = arith.truncf %587 : vector<1x6xf32> to vector<1x6xbf16>
    %c0_212 = arith.constant 0 : index
    %c0_213 = arith.constant 0 : index
    %589 = vector.load %arg45[%c0_212, %c0_213] : memref<6x2xbf16, #tpu.memory_space<vmem>>, vector<6x2xbf16>
    %cst_214 = arith.constant dense<0.000000e+00> : vector<1x2xf32>
    %590 = tpu.matmul %588, %589, %cst_214 {dimension_numbers = #tpu.dot_dimension_numbers<[1], [0], [0], [1], [0, 0, 1, 1], [], []>} : vector<1x6xbf16>, vector<6x2xbf16>, vector<1x2xf32> -> vector<1x2xf32>
    %591 = arith.addf %590, %565 : vector<1x2xf32>
    %592 = arith.mulf %591, %566 : vector<1x2xf32>
    %593 = arith.addf %592, %567 : vector<1x2xf32>
    %cst_215 = arith.constant 0.000000e+00 : f32
    %594 = vector.broadcast %cst_215 : f32 to vector<1x2xf32>
    %595 = arith.cmpf oge, %593, %594 : vector<1x2xf32>
    %596 = arith.mulf %568, %593 : vector<1x2xf32>
    %597 = arith.select %595, %593, %596 : vector<1x2xi1>, vector<1x2xf32>
    %598 = arith.truncf %597 : vector<1x2xf32> to vector<1x2xbf16>
    %c0_216 = arith.constant 0 : index
    %c0_217 = arith.constant 0 : index
    %599 = vector.load %arg46[%c0_216, %c0_217] : memref<2x8xbf16, #tpu.memory_space<vmem>>, vector<2x8xbf16>
    %cst_218 = arith.constant dense<0.000000e+00> : vector<1x8xf32>
    %600 = tpu.matmul %598, %599, %cst_218 {dimension_numbers = #tpu.dot_dimension_numbers<[1], [0], [0], [1], [0, 0, 1, 1], [], []>} : vector<1x2xbf16>, vector<2x8xbf16>, vector<1x8xf32> -> vector<1x8xf32>
    %601 = arith.addf %600, %560 : vector<1x8xf32>
    %602 = arith.addf %554, %601 : vector<1x8xf32>
    %c0_219 = arith.constant 0 : index
    %c0_220 = arith.constant 0 : index
    %603 = vector.load %arg47[%c0_219, %c0_220] : memref<4x8xf32, #tpu.memory_space<vmem>>, vector<4x8xf32>
    %c0_221 = arith.constant 0 : index
    %c0_222 = arith.constant 0 : index
    %604 = vector.load %arg48[%c0_221, %c0_222] : memref<8x2xf32, #tpu.memory_space<vmem>>, vector<8x2xf32>
    %605 = vector.extract_strided_slice %603 {offsets = [0, 0], sizes = [1, 8], strides = [1, 1]} : vector<4x8xf32> to vector<1x8xf32>
    %606 = vector.extract_strided_slice %603 {offsets = [1, 0], sizes = [1, 8], strides = [1, 1]} : vector<4x8xf32> to vector<1x8xf32>
    %607 = vector.extract_strided_slice %603 {offsets = [2, 0], sizes = [1, 8], strides = [1, 1]} : vector<4x8xf32> to vector<1x8xf32>
    %608 = vector.extract_strided_slice %603 {offsets = [3, 0], sizes = [1, 8], strides = [1, 1]} : vector<4x8xf32> to vector<1x8xf32>
    %609 = vector.extract_strided_slice %604 {offsets = [0, 0], sizes = [1, 2], strides = [1, 1]} : vector<8x2xf32> to vector<1x2xf32>
    %610 = vector.extract_strided_slice %604 {offsets = [1, 0], sizes = [1, 2], strides = [1, 1]} : vector<8x2xf32> to vector<1x2xf32>
    %611 = vector.extract_strided_slice %604 {offsets = [2, 0], sizes = [1, 2], strides = [1, 1]} : vector<8x2xf32> to vector<1x2xf32>
    %612 = vector.extract_strided_slice %604 {offsets = [3, 0], sizes = [1, 2], strides = [1, 1]} : vector<8x2xf32> to vector<1x2xf32>
    %613 = vector.extract_strided_slice %604 {offsets = [4, 0], sizes = [1, 2], strides = [1, 1]} : vector<8x2xf32> to vector<1x2xf32>
    %614 = vector.extract_strided_slice %604 {offsets = [5, 0], sizes = [1, 2], strides = [1, 1]} : vector<8x2xf32> to vector<1x2xf32>
    %615 = vector.extract_strided_slice %604 {offsets = [6, 0], sizes = [1, 2], strides = [1, 1]} : vector<8x2xf32> to vector<1x2xf32>
    %616 = vector.extract_strided_slice %604 {offsets = [7, 0], sizes = [1, 2], strides = [1, 1]} : vector<8x2xf32> to vector<1x2xf32>
    %617 = arith.mulf %602, %605 : vector<1x8xf32>
    %618 = arith.addf %617, %606 : vector<1x8xf32>
    %cst_223 = arith.constant 0.000000e+00 : f32
    %619 = vector.broadcast %cst_223 : f32 to vector<1x8xf32>
    %620 = arith.cmpf oge, %618, %619 : vector<1x8xf32>
    %621 = arith.mulf %607, %618 : vector<1x8xf32>
    %622 = arith.select %620, %618, %621 : vector<1x8xi1>, vector<1x8xf32>
    %623 = arith.truncf %622 : vector<1x8xf32> to vector<1x8xbf16>
    %c0_224 = arith.constant 0 : index
    %c0_225 = arith.constant 0 : index
    %624 = vector.load %arg49[%c0_224, %c0_225] : memref<8x2xbf16, #tpu.memory_space<vmem>>, vector<8x2xbf16>
    %cst_226 = arith.constant dense<0.000000e+00> : vector<1x2xf32>
    %625 = tpu.matmul %623, %624, %cst_226 {dimension_numbers = #tpu.dot_dimension_numbers<[1], [0], [0], [1], [0, 0, 1, 1], [], []>} : vector<1x8xbf16>, vector<8x2xbf16>, vector<1x2xf32> -> vector<1x2xf32>
    %626 = arith.addf %625, %609 : vector<1x2xf32>
    %627 = arith.mulf %626, %610 : vector<1x2xf32>
    %628 = arith.addf %627, %611 : vector<1x2xf32>
    %cst_227 = arith.constant 0.000000e+00 : f32
    %629 = vector.broadcast %cst_227 : f32 to vector<1x2xf32>
    %630 = arith.cmpf oge, %628, %629 : vector<1x2xf32>
    %631 = arith.mulf %612, %628 : vector<1x2xf32>
    %632 = arith.select %630, %628, %631 : vector<1x2xi1>, vector<1x2xf32>
    %cst_228 = arith.constant 0.000000e+00 : f32
    %633 = vector.broadcast %cst_228 : f32 to vector<1x2xf32>
    %cst_229 = arith.constant 0.000000e+00 : f32
    %634 = vector.broadcast %cst_229 : f32 to vector<1x2xf32>
    %635 = tpu.concatenate %633, %632, %634 in 1 : vector<1x2xf32>, vector<1x2xf32>, vector<1x2xf32> -> vector<1x6xf32>
    %636 = arith.truncf %635 : vector<1x6xf32> to vector<1x6xbf16>
    %c0_230 = arith.constant 0 : index
    %c0_231 = arith.constant 0 : index
    %637 = vector.load %arg50[%c0_230, %c0_231] : memref<6x2xbf16, #tpu.memory_space<vmem>>, vector<6x2xbf16>
    %cst_232 = arith.constant dense<0.000000e+00> : vector<1x2xf32>
    %638 = tpu.matmul %636, %637, %cst_232 {dimension_numbers = #tpu.dot_dimension_numbers<[1], [0], [0], [1], [0, 0, 1, 1], [], []>} : vector<1x6xbf16>, vector<6x2xbf16>, vector<1x2xf32> -> vector<1x2xf32>
    %639 = arith.addf %638, %613 : vector<1x2xf32>
    %640 = arith.mulf %639, %614 : vector<1x2xf32>
    %641 = arith.addf %640, %615 : vector<1x2xf32>
    %cst_233 = arith.constant 0.000000e+00 : f32
    %642 = vector.broadcast %cst_233 : f32 to vector<1x2xf32>
    %643 = arith.cmpf oge, %641, %642 : vector<1x2xf32>
    %644 = arith.mulf %616, %641 : vector<1x2xf32>
    %645 = arith.select %643, %641, %644 : vector<1x2xi1>, vector<1x2xf32>
    %646 = arith.truncf %645 : vector<1x2xf32> to vector<1x2xbf16>
    %c0_234 = arith.constant 0 : index
    %c0_235 = arith.constant 0 : index
    %647 = vector.load %arg51[%c0_234, %c0_235] : memref<2x8xbf16, #tpu.memory_space<vmem>>, vector<2x8xbf16>
    %cst_236 = arith.constant dense<0.000000e+00> : vector<1x8xf32>
    %648 = tpu.matmul %646, %647, %cst_236 {dimension_numbers = #tpu.dot_dimension_numbers<[1], [0], [0], [1], [0, 0, 1, 1], [], []>} : vector<1x2xbf16>, vector<2x8xbf16>, vector<1x8xf32> -> vector<1x8xf32>
    %649 = arith.addf %648, %608 : vector<1x8xf32>
    %650 = arith.addf %602, %649 : vector<1x8xf32>
    %651 = arith.truncf %650 : vector<1x8xf32> to vector<1x8xbf16>
    %c0_237 = arith.constant 0 : index
    %c0_238 = arith.constant 0 : index
    %652 = vector.load %arg87[%c0_237, %c0_238] : memref<8x16xbf16, #tpu.memory_space<vmem>>, vector<8x16xbf16>
    %cst_239 = arith.constant dense<0.000000e+00> : vector<1x16xf32>
    %653 = tpu.matmul %651, %652, %cst_239 {dimension_numbers = #tpu.dot_dimension_numbers<[1], [0], [0], [1], [0, 0, 1, 1], [], []>} : vector<1x8xbf16>, vector<8x16xbf16>, vector<1x16xf32> -> vector<1x16xf32>
    %c0_240 = arith.constant 0 : index
    %c0_241 = arith.constant 0 : index
    %654 = vector.load %arg83[%c0_240, %c0_241] : memref<2x1xbf16, #tpu.memory_space<vmem>>, vector<2x1xbf16>
    %655 = arith.truncf %653 : vector<1x16xf32> to vector<1x16xbf16>
    %cst_242 = arith.constant dense<0.000000e+00> : vector<2x16xf32>
    %656 = tpu.matmul %654, %655, %cst_242 {dimension_numbers = #tpu.dot_dimension_numbers<[1], [0], [0], [1], [0, 0, 1, 1], [], []>} : vector<2x1xbf16>, vector<1x16xbf16>, vector<2x16xf32> -> vector<2x16xf32>
    %657 = arith.addf %656, %490 : vector<2x16xf32>
    %c0_243 = arith.constant 0 : index
    %c0_244 = arith.constant 0 : index
    %658 = vector.load %arg52[%c0_243, %c0_244] : memref<4x16xf32, #tpu.memory_space<vmem>>, vector<4x16xf32>
    %c0_245 = arith.constant 0 : index
    %c0_246 = arith.constant 0 : index
    %659 = vector.load %arg53[%c0_245, %c0_246] : memref<8x4xf32, #tpu.memory_space<vmem>>, vector<8x4xf32>
    %660 = vector.extract_strided_slice %658 {offsets = [0, 0], sizes = [1, 16], strides = [1, 1]} : vector<4x16xf32> to vector<1x16xf32>
    %661 = vector.extract_strided_slice %658 {offsets = [1, 0], sizes = [1, 16], strides = [1, 1]} : vector<4x16xf32> to vector<1x16xf32>
    %662 = vector.extract_strided_slice %658 {offsets = [2, 0], sizes = [1, 16], strides = [1, 1]} : vector<4x16xf32> to vector<1x16xf32>
    %663 = vector.extract_strided_slice %658 {offsets = [3, 0], sizes = [1, 16], strides = [1, 1]} : vector<4x16xf32> to vector<1x16xf32>
    %664 = vector.extract_strided_slice %659 {offsets = [0, 0], sizes = [1, 4], strides = [1, 1]} : vector<8x4xf32> to vector<1x4xf32>
    %665 = vector.extract_strided_slice %659 {offsets = [1, 0], sizes = [1, 4], strides = [1, 1]} : vector<8x4xf32> to vector<1x4xf32>
    %666 = vector.extract_strided_slice %659 {offsets = [2, 0], sizes = [1, 4], strides = [1, 1]} : vector<8x4xf32> to vector<1x4xf32>
    %667 = vector.extract_strided_slice %659 {offsets = [3, 0], sizes = [1, 4], strides = [1, 1]} : vector<8x4xf32> to vector<1x4xf32>
    %668 = vector.extract_strided_slice %659 {offsets = [4, 0], sizes = [1, 4], strides = [1, 1]} : vector<8x4xf32> to vector<1x4xf32>
    %669 = vector.extract_strided_slice %659 {offsets = [5, 0], sizes = [1, 4], strides = [1, 1]} : vector<8x4xf32> to vector<1x4xf32>
    %670 = vector.extract_strided_slice %659 {offsets = [6, 0], sizes = [1, 4], strides = [1, 1]} : vector<8x4xf32> to vector<1x4xf32>
    %671 = vector.extract_strided_slice %659 {offsets = [7, 0], sizes = [1, 4], strides = [1, 1]} : vector<8x4xf32> to vector<1x4xf32>
    %672 = vector.broadcast %660 : vector<1x16xf32> to vector<2x16xf32>
    %673 = arith.mulf %657, %672 : vector<2x16xf32>
    %674 = vector.broadcast %661 : vector<1x16xf32> to vector<2x16xf32>
    %675 = arith.addf %673, %674 : vector<2x16xf32>
    %cst_247 = arith.constant 0.000000e+00 : f32
    %676 = vector.broadcast %cst_247 : f32 to vector<2x16xf32>
    %677 = arith.cmpf oge, %675, %676 : vector<2x16xf32>
    %678 = vector.broadcast %662 : vector<1x16xf32> to vector<2x16xf32>
    %679 = arith.mulf %678, %675 : vector<2x16xf32>
    %680 = arith.select %677, %675, %679 : vector<2x16xi1>, vector<2x16xf32>
    %681 = arith.truncf %680 : vector<2x16xf32> to vector<2x16xbf16>
    %c0_248 = arith.constant 0 : index
    %c0_249 = arith.constant 0 : index
    %682 = vector.load %arg54[%c0_248, %c0_249] : memref<16x4xbf16, #tpu.memory_space<vmem>>, vector<16x4xbf16>
    %cst_250 = arith.constant dense<0.000000e+00> : vector<2x4xf32>
    %683 = tpu.matmul %681, %682, %cst_250 {dimension_numbers = #tpu.dot_dimension_numbers<[1], [0], [0], [1], [0, 0, 1, 1], [], []>} : vector<2x16xbf16>, vector<16x4xbf16>, vector<2x4xf32> -> vector<2x4xf32>
    %684 = vector.broadcast %664 : vector<1x4xf32> to vector<2x4xf32>
    %685 = arith.addf %683, %684 : vector<2x4xf32>
    %686 = vector.broadcast %665 : vector<1x4xf32> to vector<2x4xf32>
    %687 = arith.mulf %685, %686 : vector<2x4xf32>
    %688 = vector.broadcast %666 : vector<1x4xf32> to vector<2x4xf32>
    %689 = arith.addf %687, %688 : vector<2x4xf32>
    %cst_251 = arith.constant 0.000000e+00 : f32
    %690 = vector.broadcast %cst_251 : f32 to vector<2x4xf32>
    %691 = arith.cmpf oge, %689, %690 : vector<2x4xf32>
    %692 = vector.broadcast %667 : vector<1x4xf32> to vector<2x4xf32>
    %693 = arith.mulf %692, %689 : vector<2x4xf32>
    %694 = arith.select %691, %689, %693 : vector<2x4xi1>, vector<2x4xf32>
    %cst_252 = arith.constant 0.000000e+00 : f32
    %695 = vector.broadcast %cst_252 : f32 to vector<1x4xf32>
    %696 = vector.extract_strided_slice %694 {offsets = [0, 0], sizes = [1, 4], strides = [1, 1]} : vector<2x4xf32> to vector<1x4xf32>
    %697 = tpu.concatenate %695, %696 in 0 : vector<1x4xf32>, vector<1x4xf32> -> vector<2x4xf32>
    %698 = vector.extract_strided_slice %694 {offsets = [1, 0], sizes = [1, 4], strides = [1, 1]} : vector<2x4xf32> to vector<1x4xf32>
    %699 = tpu.concatenate %698, %695 in 0 : vector<1x4xf32>, vector<1x4xf32> -> vector<2x4xf32>
    %700 = tpu.concatenate %697, %694, %699 in 1 : vector<2x4xf32>, vector<2x4xf32>, vector<2x4xf32> -> vector<2x12xf32>
    %701 = arith.truncf %700 : vector<2x12xf32> to vector<2x12xbf16>
    %c0_253 = arith.constant 0 : index
    %c0_254 = arith.constant 0 : index
    %702 = vector.load %arg55[%c0_253, %c0_254] : memref<12x4xbf16, #tpu.memory_space<vmem>>, vector<12x4xbf16>
    %cst_255 = arith.constant dense<0.000000e+00> : vector<2x4xf32>
    %703 = tpu.matmul %701, %702, %cst_255 {dimension_numbers = #tpu.dot_dimension_numbers<[1], [0], [0], [1], [0, 0, 1, 1], [], []>} : vector<2x12xbf16>, vector<12x4xbf16>, vector<2x4xf32> -> vector<2x4xf32>
    %704 = vector.broadcast %668 : vector<1x4xf32> to vector<2x4xf32>
    %705 = arith.addf %703, %704 : vector<2x4xf32>
    %706 = vector.broadcast %669 : vector<1x4xf32> to vector<2x4xf32>
    %707 = arith.mulf %705, %706 : vector<2x4xf32>
    %708 = vector.broadcast %670 : vector<1x4xf32> to vector<2x4xf32>
    %709 = arith.addf %707, %708 : vector<2x4xf32>
    %cst_256 = arith.constant 0.000000e+00 : f32
    %710 = vector.broadcast %cst_256 : f32 to vector<2x4xf32>
    %711 = arith.cmpf oge, %709, %710 : vector<2x4xf32>
    %712 = vector.broadcast %671 : vector<1x4xf32> to vector<2x4xf32>
    %713 = arith.mulf %712, %709 : vector<2x4xf32>
    %714 = arith.select %711, %709, %713 : vector<2x4xi1>, vector<2x4xf32>
    %715 = arith.truncf %714 : vector<2x4xf32> to vector<2x4xbf16>
    %c0_257 = arith.constant 0 : index
    %c0_258 = arith.constant 0 : index
    %716 = vector.load %arg56[%c0_257, %c0_258] : memref<4x16xbf16, #tpu.memory_space<vmem>>, vector<4x16xbf16>
    %cst_259 = arith.constant dense<0.000000e+00> : vector<2x16xf32>
    %717 = tpu.matmul %715, %716, %cst_259 {dimension_numbers = #tpu.dot_dimension_numbers<[1], [0], [0], [1], [0, 0, 1, 1], [], []>} : vector<2x4xbf16>, vector<4x16xbf16>, vector<2x16xf32> -> vector<2x16xf32>
    %718 = vector.broadcast %663 : vector<1x16xf32> to vector<2x16xf32>
    %719 = arith.addf %717, %718 : vector<2x16xf32>
    %720 = arith.addf %657, %719 : vector<2x16xf32>
    %721 = arith.truncf %720 : vector<2x16xf32> to vector<2x16xbf16>
    %c0_260 = arith.constant 0 : index
    %c0_261 = arith.constant 0 : index
    %722 = vector.load %arg86[%c0_260, %c0_261] : memref<16x32xbf16, #tpu.memory_space<vmem>>, vector<16x32xbf16>
    %cst_262 = arith.constant dense<0.000000e+00> : vector<2x32xf32>
    %723 = tpu.matmul %721, %722, %cst_262 {dimension_numbers = #tpu.dot_dimension_numbers<[1], [0], [0], [1], [0, 0, 1, 1], [], []>} : vector<2x16xbf16>, vector<16x32xbf16>, vector<2x32xf32> -> vector<2x32xf32>
    %c0_263 = arith.constant 0 : index
    %c0_264 = arith.constant 0 : index
    %724 = vector.load %arg82[%c0_263, %c0_264] : memref<4x2xbf16, #tpu.memory_space<vmem>>, vector<4x2xbf16>
    %725 = arith.truncf %723 : vector<2x32xf32> to vector<2x32xbf16>
    %cst_265 = arith.constant dense<0.000000e+00> : vector<4x32xf32>
    %726 = tpu.matmul %724, %725, %cst_265 {dimension_numbers = #tpu.dot_dimension_numbers<[1], [0], [0], [1], [0, 0, 1, 1], [], []>} : vector<4x2xbf16>, vector<2x32xbf16>, vector<4x32xf32> -> vector<4x32xf32>
    %727 = arith.addf %726, %348 : vector<4x32xf32>
    %c0_266 = arith.constant 0 : index
    %c0_267 = arith.constant 0 : index
    %728 = vector.load %arg57[%c0_266, %c0_267] : memref<4x32xf32, #tpu.memory_space<vmem>>, vector<4x32xf32>
    %c0_268 = arith.constant 0 : index
    %c0_269 = arith.constant 0 : index
    %729 = vector.load %arg58[%c0_268, %c0_269] : memref<8x8xf32, #tpu.memory_space<vmem>>, vector<8x8xf32>
    %730 = vector.extract_strided_slice %728 {offsets = [0, 0], sizes = [1, 32], strides = [1, 1]} : vector<4x32xf32> to vector<1x32xf32>
    %731 = vector.extract_strided_slice %728 {offsets = [1, 0], sizes = [1, 32], strides = [1, 1]} : vector<4x32xf32> to vector<1x32xf32>
    %732 = vector.extract_strided_slice %728 {offsets = [2, 0], sizes = [1, 32], strides = [1, 1]} : vector<4x32xf32> to vector<1x32xf32>
    %733 = vector.extract_strided_slice %728 {offsets = [3, 0], sizes = [1, 32], strides = [1, 1]} : vector<4x32xf32> to vector<1x32xf32>
    %734 = vector.extract_strided_slice %729 {offsets = [0, 0], sizes = [1, 8], strides = [1, 1]} : vector<8x8xf32> to vector<1x8xf32>
    %735 = vector.extract_strided_slice %729 {offsets = [1, 0], sizes = [1, 8], strides = [1, 1]} : vector<8x8xf32> to vector<1x8xf32>
    %736 = vector.extract_strided_slice %729 {offsets = [2, 0], sizes = [1, 8], strides = [1, 1]} : vector<8x8xf32> to vector<1x8xf32>
    %737 = vector.extract_strided_slice %729 {offsets = [3, 0], sizes = [1, 8], strides = [1, 1]} : vector<8x8xf32> to vector<1x8xf32>
    %738 = vector.extract_strided_slice %729 {offsets = [4, 0], sizes = [1, 8], strides = [1, 1]} : vector<8x8xf32> to vector<1x8xf32>
    %739 = vector.extract_strided_slice %729 {offsets = [5, 0], sizes = [1, 8], strides = [1, 1]} : vector<8x8xf32> to vector<1x8xf32>
    %740 = vector.extract_strided_slice %729 {offsets = [6, 0], sizes = [1, 8], strides = [1, 1]} : vector<8x8xf32> to vector<1x8xf32>
    %741 = vector.extract_strided_slice %729 {offsets = [7, 0], sizes = [1, 8], strides = [1, 1]} : vector<8x8xf32> to vector<1x8xf32>
    %742 = vector.broadcast %730 : vector<1x32xf32> to vector<4x32xf32>
    %743 = arith.mulf %727, %742 : vector<4x32xf32>
    %744 = vector.broadcast %731 : vector<1x32xf32> to vector<4x32xf32>
    %745 = arith.addf %743, %744 : vector<4x32xf32>
    %cst_270 = arith.constant 0.000000e+00 : f32
    %746 = vector.broadcast %cst_270 : f32 to vector<4x32xf32>
    %747 = arith.cmpf oge, %745, %746 : vector<4x32xf32>
    %748 = vector.broadcast %732 : vector<1x32xf32> to vector<4x32xf32>
    %749 = arith.mulf %748, %745 : vector<4x32xf32>
    %750 = arith.select %747, %745, %749 : vector<4x32xi1>, vector<4x32xf32>
    %751 = arith.truncf %750 : vector<4x32xf32> to vector<4x32xbf16>
    %c0_271 = arith.constant 0 : index
    %c0_272 = arith.constant 0 : index
    %752 = vector.load %arg59[%c0_271, %c0_272] : memref<32x8xbf16, #tpu.memory_space<vmem>>, vector<32x8xbf16>
    %cst_273 = arith.constant dense<0.000000e+00> : vector<4x8xf32>
    %753 = tpu.matmul %751, %752, %cst_273 {dimension_numbers = #tpu.dot_dimension_numbers<[1], [0], [0], [1], [0, 0, 1, 1], [], []>} : vector<4x32xbf16>, vector<32x8xbf16>, vector<4x8xf32> -> vector<4x8xf32>
    %754 = vector.broadcast %734 : vector<1x8xf32> to vector<4x8xf32>
    %755 = arith.addf %753, %754 : vector<4x8xf32>
    %756 = vector.broadcast %735 : vector<1x8xf32> to vector<4x8xf32>
    %757 = arith.mulf %755, %756 : vector<4x8xf32>
    %758 = vector.broadcast %736 : vector<1x8xf32> to vector<4x8xf32>
    %759 = arith.addf %757, %758 : vector<4x8xf32>
    %cst_274 = arith.constant 0.000000e+00 : f32
    %760 = vector.broadcast %cst_274 : f32 to vector<4x8xf32>
    %761 = arith.cmpf oge, %759, %760 : vector<4x8xf32>
    %762 = vector.broadcast %737 : vector<1x8xf32> to vector<4x8xf32>
    %763 = arith.mulf %762, %759 : vector<4x8xf32>
    %764 = arith.select %761, %759, %763 : vector<4x8xi1>, vector<4x8xf32>
    %cst_275 = arith.constant 0.000000e+00 : f32
    %765 = vector.broadcast %cst_275 : f32 to vector<1x8xf32>
    %766 = vector.extract_strided_slice %764 {offsets = [0, 0], sizes = [3, 8], strides = [1, 1]} : vector<4x8xf32> to vector<3x8xf32>
    %767 = tpu.concatenate %765, %766 in 0 : vector<1x8xf32>, vector<3x8xf32> -> vector<4x8xf32>
    %768 = vector.extract_strided_slice %764 {offsets = [1, 0], sizes = [3, 8], strides = [1, 1]} : vector<4x8xf32> to vector<3x8xf32>
    %769 = tpu.concatenate %768, %765 in 0 : vector<3x8xf32>, vector<1x8xf32> -> vector<4x8xf32>
    %770 = tpu.concatenate %767, %764, %769 in 1 : vector<4x8xf32>, vector<4x8xf32>, vector<4x8xf32> -> vector<4x24xf32>
    %771 = arith.truncf %770 : vector<4x24xf32> to vector<4x24xbf16>
    %c0_276 = arith.constant 0 : index
    %c0_277 = arith.constant 0 : index
    %772 = vector.load %arg60[%c0_276, %c0_277] : memref<24x8xbf16, #tpu.memory_space<vmem>>, vector<24x8xbf16>
    %cst_278 = arith.constant dense<0.000000e+00> : vector<4x8xf32>
    %773 = tpu.matmul %771, %772, %cst_278 {dimension_numbers = #tpu.dot_dimension_numbers<[1], [0], [0], [1], [0, 0, 1, 1], [], []>} : vector<4x24xbf16>, vector<24x8xbf16>, vector<4x8xf32> -> vector<4x8xf32>
    %774 = vector.broadcast %738 : vector<1x8xf32> to vector<4x8xf32>
    %775 = arith.addf %773, %774 : vector<4x8xf32>
    %776 = vector.broadcast %739 : vector<1x8xf32> to vector<4x8xf32>
    %777 = arith.mulf %775, %776 : vector<4x8xf32>
    %778 = vector.broadcast %740 : vector<1x8xf32> to vector<4x8xf32>
    %779 = arith.addf %777, %778 : vector<4x8xf32>
    %cst_279 = arith.constant 0.000000e+00 : f32
    %780 = vector.broadcast %cst_279 : f32 to vector<4x8xf32>
    %781 = arith.cmpf oge, %779, %780 : vector<4x8xf32>
    %782 = vector.broadcast %741 : vector<1x8xf32> to vector<4x8xf32>
    %783 = arith.mulf %782, %779 : vector<4x8xf32>
    %784 = arith.select %781, %779, %783 : vector<4x8xi1>, vector<4x8xf32>
    %785 = arith.truncf %784 : vector<4x8xf32> to vector<4x8xbf16>
    %c0_280 = arith.constant 0 : index
    %c0_281 = arith.constant 0 : index
    %786 = vector.load %arg61[%c0_280, %c0_281] : memref<8x32xbf16, #tpu.memory_space<vmem>>, vector<8x32xbf16>
    %cst_282 = arith.constant dense<0.000000e+00> : vector<4x32xf32>
    %787 = tpu.matmul %785, %786, %cst_282 {dimension_numbers = #tpu.dot_dimension_numbers<[1], [0], [0], [1], [0, 0, 1, 1], [], []>} : vector<4x8xbf16>, vector<8x32xbf16>, vector<4x32xf32> -> vector<4x32xf32>
    %788 = vector.broadcast %733 : vector<1x32xf32> to vector<4x32xf32>
    %789 = arith.addf %787, %788 : vector<4x32xf32>
    %790 = arith.addf %727, %789 : vector<4x32xf32>
    %791 = arith.truncf %790 : vector<4x32xf32> to vector<4x32xbf16>
    %c0_283 = arith.constant 0 : index
    %c0_284 = arith.constant 0 : index
    %792 = vector.load %arg85[%c0_283, %c0_284] : memref<32x64xbf16, #tpu.memory_space<vmem>>, vector<32x64xbf16>
    %cst_285 = arith.constant dense<0.000000e+00> : vector<4x64xf32>
    %793 = tpu.matmul %791, %792, %cst_285 {dimension_numbers = #tpu.dot_dimension_numbers<[1], [0], [0], [1], [0, 0, 1, 1], [], []>} : vector<4x32xbf16>, vector<32x64xbf16>, vector<4x64xf32> -> vector<4x64xf32>
    %c0_286 = arith.constant 0 : index
    %c0_287 = arith.constant 0 : index
    %794 = vector.load %arg81[%c0_286, %c0_287] : memref<8x4xbf16, #tpu.memory_space<vmem>>, vector<8x4xbf16>
    %795 = arith.truncf %793 : vector<4x64xf32> to vector<4x64xbf16>
    %cst_288 = arith.constant dense<0.000000e+00> : vector<8x64xf32>
    %796 = tpu.matmul %794, %795, %cst_288 {dimension_numbers = #tpu.dot_dimension_numbers<[1], [0], [0], [1], [0, 0, 1, 1], [], []>} : vector<8x4xbf16>, vector<4x64xbf16>, vector<8x64xf32> -> vector<8x64xf32>
    %797 = arith.addf %796, %206 : vector<8x64xf32>
    %c0_289 = arith.constant 0 : index
    %c0_290 = arith.constant 0 : index
    %798 = vector.load %arg62[%c0_289, %c0_290] : memref<4x64xf32, #tpu.memory_space<vmem>>, vector<4x64xf32>
    %c0_291 = arith.constant 0 : index
    %c0_292 = arith.constant 0 : index
    %799 = vector.load %arg63[%c0_291, %c0_292] : memref<8x16xf32, #tpu.memory_space<vmem>>, vector<8x16xf32>
    %800 = vector.extract_strided_slice %798 {offsets = [0, 0], sizes = [1, 64], strides = [1, 1]} : vector<4x64xf32> to vector<1x64xf32>
    %801 = vector.extract_strided_slice %798 {offsets = [1, 0], sizes = [1, 64], strides = [1, 1]} : vector<4x64xf32> to vector<1x64xf32>
    %802 = vector.extract_strided_slice %798 {offsets = [2, 0], sizes = [1, 64], strides = [1, 1]} : vector<4x64xf32> to vector<1x64xf32>
    %803 = vector.extract_strided_slice %798 {offsets = [3, 0], sizes = [1, 64], strides = [1, 1]} : vector<4x64xf32> to vector<1x64xf32>
    %804 = vector.extract_strided_slice %799 {offsets = [0, 0], sizes = [1, 16], strides = [1, 1]} : vector<8x16xf32> to vector<1x16xf32>
    %805 = vector.extract_strided_slice %799 {offsets = [1, 0], sizes = [1, 16], strides = [1, 1]} : vector<8x16xf32> to vector<1x16xf32>
    %806 = vector.extract_strided_slice %799 {offsets = [2, 0], sizes = [1, 16], strides = [1, 1]} : vector<8x16xf32> to vector<1x16xf32>
    %807 = vector.extract_strided_slice %799 {offsets = [3, 0], sizes = [1, 16], strides = [1, 1]} : vector<8x16xf32> to vector<1x16xf32>
    %808 = vector.extract_strided_slice %799 {offsets = [4, 0], sizes = [1, 16], strides = [1, 1]} : vector<8x16xf32> to vector<1x16xf32>
    %809 = vector.extract_strided_slice %799 {offsets = [5, 0], sizes = [1, 16], strides = [1, 1]} : vector<8x16xf32> to vector<1x16xf32>
    %810 = vector.extract_strided_slice %799 {offsets = [6, 0], sizes = [1, 16], strides = [1, 1]} : vector<8x16xf32> to vector<1x16xf32>
    %811 = vector.extract_strided_slice %799 {offsets = [7, 0], sizes = [1, 16], strides = [1, 1]} : vector<8x16xf32> to vector<1x16xf32>
    %812 = vector.broadcast %800 : vector<1x64xf32> to vector<8x64xf32>
    %813 = arith.mulf %797, %812 : vector<8x64xf32>
    %814 = vector.broadcast %801 : vector<1x64xf32> to vector<8x64xf32>
    %815 = arith.addf %813, %814 : vector<8x64xf32>
    %cst_293 = arith.constant 0.000000e+00 : f32
    %816 = vector.broadcast %cst_293 : f32 to vector<8x64xf32>
    %817 = arith.cmpf oge, %815, %816 : vector<8x64xf32>
    %818 = vector.broadcast %802 : vector<1x64xf32> to vector<8x64xf32>
    %819 = arith.mulf %818, %815 : vector<8x64xf32>
    %820 = arith.select %817, %815, %819 : vector<8x64xi1>, vector<8x64xf32>
    %821 = arith.truncf %820 : vector<8x64xf32> to vector<8x64xbf16>
    %c0_294 = arith.constant 0 : index
    %c0_295 = arith.constant 0 : index
    %822 = vector.load %arg64[%c0_294, %c0_295] : memref<64x16xbf16, #tpu.memory_space<vmem>>, vector<64x16xbf16>
    %cst_296 = arith.constant dense<0.000000e+00> : vector<8x16xf32>
    %823 = tpu.matmul %821, %822, %cst_296 {dimension_numbers = #tpu.dot_dimension_numbers<[1], [0], [0], [1], [0, 0, 1, 1], [], []>} : vector<8x64xbf16>, vector<64x16xbf16>, vector<8x16xf32> -> vector<8x16xf32>
    %824 = vector.broadcast %804 : vector<1x16xf32> to vector<8x16xf32>
    %825 = arith.addf %823, %824 : vector<8x16xf32>
    %826 = vector.broadcast %805 : vector<1x16xf32> to vector<8x16xf32>
    %827 = arith.mulf %825, %826 : vector<8x16xf32>
    %828 = vector.broadcast %806 : vector<1x16xf32> to vector<8x16xf32>
    %829 = arith.addf %827, %828 : vector<8x16xf32>
    %cst_297 = arith.constant 0.000000e+00 : f32
    %830 = vector.broadcast %cst_297 : f32 to vector<8x16xf32>
    %831 = arith.cmpf oge, %829, %830 : vector<8x16xf32>
    %832 = vector.broadcast %807 : vector<1x16xf32> to vector<8x16xf32>
    %833 = arith.mulf %832, %829 : vector<8x16xf32>
    %834 = arith.select %831, %829, %833 : vector<8x16xi1>, vector<8x16xf32>
    %cst_298 = arith.constant 0.000000e+00 : f32
    %835 = vector.broadcast %cst_298 : f32 to vector<1x16xf32>
    %836 = vector.extract_strided_slice %834 {offsets = [0, 0], sizes = [7, 16], strides = [1, 1]} : vector<8x16xf32> to vector<7x16xf32>
    %837 = tpu.concatenate %835, %836 in 0 : vector<1x16xf32>, vector<7x16xf32> -> vector<8x16xf32>
    %838 = vector.extract_strided_slice %834 {offsets = [1, 0], sizes = [7, 16], strides = [1, 1]} : vector<8x16xf32> to vector<7x16xf32>
    %839 = tpu.concatenate %838, %835 in 0 : vector<7x16xf32>, vector<1x16xf32> -> vector<8x16xf32>
    %840 = tpu.concatenate %837, %834, %839 in 1 : vector<8x16xf32>, vector<8x16xf32>, vector<8x16xf32> -> vector<8x48xf32>
    %841 = arith.truncf %840 : vector<8x48xf32> to vector<8x48xbf16>
    %c0_299 = arith.constant 0 : index
    %c0_300 = arith.constant 0 : index
    %842 = vector.load %arg65[%c0_299, %c0_300] : memref<48x16xbf16, #tpu.memory_space<vmem>>, vector<48x16xbf16>
    %cst_301 = arith.constant dense<0.000000e+00> : vector<8x16xf32>
    %843 = tpu.matmul %841, %842, %cst_301 {dimension_numbers = #tpu.dot_dimension_numbers<[1], [0], [0], [1], [0, 0, 1, 1], [], []>} : vector<8x48xbf16>, vector<48x16xbf16>, vector<8x16xf32> -> vector<8x16xf32>
    %844 = vector.broadcast %808 : vector<1x16xf32> to vector<8x16xf32>
    %845 = arith.addf %843, %844 : vector<8x16xf32>
    %846 = vector.broadcast %809 : vector<1x16xf32> to vector<8x16xf32>
    %847 = arith.mulf %845, %846 : vector<8x16xf32>
    %848 = vector.broadcast %810 : vector<1x16xf32> to vector<8x16xf32>
    %849 = arith.addf %847, %848 : vector<8x16xf32>
    %cst_302 = arith.constant 0.000000e+00 : f32
    %850 = vector.broadcast %cst_302 : f32 to vector<8x16xf32>
    %851 = arith.cmpf oge, %849, %850 : vector<8x16xf32>
    %852 = vector.broadcast %811 : vector<1x16xf32> to vector<8x16xf32>
    %853 = arith.mulf %852, %849 : vector<8x16xf32>
    %854 = arith.select %851, %849, %853 : vector<8x16xi1>, vector<8x16xf32>
    %855 = arith.truncf %854 : vector<8x16xf32> to vector<8x16xbf16>
    %c0_303 = arith.constant 0 : index
    %c0_304 = arith.constant 0 : index
    %856 = vector.load %arg66[%c0_303, %c0_304] : memref<16x64xbf16, #tpu.memory_space<vmem>>, vector<16x64xbf16>
    %cst_305 = arith.constant dense<0.000000e+00> : vector<8x64xf32>
    %857 = tpu.matmul %855, %856, %cst_305 {dimension_numbers = #tpu.dot_dimension_numbers<[1], [0], [0], [1], [0, 0, 1, 1], [], []>} : vector<8x16xbf16>, vector<16x64xbf16>, vector<8x64xf32> -> vector<8x64xf32>
    %858 = vector.broadcast %803 : vector<1x64xf32> to vector<8x64xf32>
    %859 = arith.addf %857, %858 : vector<8x64xf32>
    %860 = arith.addf %797, %859 : vector<8x64xf32>
    %861 = arith.truncf %860 : vector<8x64xf32> to vector<8x64xbf16>
    %c0_306 = arith.constant 0 : index
    %c0_307 = arith.constant 0 : index
    %862 = vector.load %arg84[%c0_306, %c0_307] : memref<64x128xbf16, #tpu.memory_space<vmem>>, vector<64x128xbf16>
    %cst_308 = arith.constant dense<0.000000e+00> : vector<8x128xf32>
    %863 = tpu.matmul %861, %862, %cst_308 {dimension_numbers = #tpu.dot_dimension_numbers<[1], [0], [0], [1], [0, 0, 1, 1], [], []>} : vector<8x64xbf16>, vector<64x128xbf16>, vector<8x128xf32> -> vector<8x128xf32>
    %c0_309 = arith.constant 0 : index
    %c0_310 = arith.constant 0 : index
    %864 = vector.load %arg80[%c0_309, %c0_310] : memref<16x8xbf16, #tpu.memory_space<vmem>>, vector<16x8xbf16>
    %865 = arith.truncf %863 : vector<8x128xf32> to vector<8x128xbf16>
    %cst_311 = arith.constant dense<0.000000e+00> : vector<16x128xf32>
    %866 = tpu.matmul %864, %865, %cst_311 {dimension_numbers = #tpu.dot_dimension_numbers<[1], [0], [0], [1], [0, 0, 1, 1], [], []>} : vector<16x8xbf16>, vector<8x128xbf16>, vector<16x128xf32> -> vector<16x128xf32>
    %867 = arith.addf %866, %64 : vector<16x128xf32>
    %c0_312 = arith.constant 0 : index
    %c0_313 = arith.constant 0 : index
    %868 = vector.load %arg67[%c0_312, %c0_313] : memref<4x128xf32, #tpu.memory_space<vmem>>, vector<4x128xf32>
    %c0_314 = arith.constant 0 : index
    %c0_315 = arith.constant 0 : index
    %869 = vector.load %arg68[%c0_314, %c0_315] : memref<8x32xf32, #tpu.memory_space<vmem>>, vector<8x32xf32>
    %870 = vector.extract_strided_slice %868 {offsets = [0, 0], sizes = [1, 128], strides = [1, 1]} : vector<4x128xf32> to vector<1x128xf32>
    %871 = vector.extract_strided_slice %868 {offsets = [1, 0], sizes = [1, 128], strides = [1, 1]} : vector<4x128xf32> to vector<1x128xf32>
    %872 = vector.extract_strided_slice %868 {offsets = [2, 0], sizes = [1, 128], strides = [1, 1]} : vector<4x128xf32> to vector<1x128xf32>
    %873 = vector.extract_strided_slice %868 {offsets = [3, 0], sizes = [1, 128], strides = [1, 1]} : vector<4x128xf32> to vector<1x128xf32>
    %874 = vector.extract_strided_slice %869 {offsets = [0, 0], sizes = [1, 32], strides = [1, 1]} : vector<8x32xf32> to vector<1x32xf32>
    %875 = vector.extract_strided_slice %869 {offsets = [1, 0], sizes = [1, 32], strides = [1, 1]} : vector<8x32xf32> to vector<1x32xf32>
    %876 = vector.extract_strided_slice %869 {offsets = [2, 0], sizes = [1, 32], strides = [1, 1]} : vector<8x32xf32> to vector<1x32xf32>
    %877 = vector.extract_strided_slice %869 {offsets = [3, 0], sizes = [1, 32], strides = [1, 1]} : vector<8x32xf32> to vector<1x32xf32>
    %878 = vector.extract_strided_slice %869 {offsets = [4, 0], sizes = [1, 32], strides = [1, 1]} : vector<8x32xf32> to vector<1x32xf32>
    %879 = vector.extract_strided_slice %869 {offsets = [5, 0], sizes = [1, 32], strides = [1, 1]} : vector<8x32xf32> to vector<1x32xf32>
    %880 = vector.extract_strided_slice %869 {offsets = [6, 0], sizes = [1, 32], strides = [1, 1]} : vector<8x32xf32> to vector<1x32xf32>
    %881 = vector.extract_strided_slice %869 {offsets = [7, 0], sizes = [1, 32], strides = [1, 1]} : vector<8x32xf32> to vector<1x32xf32>
    %882 = vector.broadcast %870 : vector<1x128xf32> to vector<16x128xf32>
    %883 = arith.mulf %867, %882 : vector<16x128xf32>
    %884 = vector.broadcast %871 : vector<1x128xf32> to vector<16x128xf32>
    %885 = arith.addf %883, %884 : vector<16x128xf32>
    %cst_316 = arith.constant 0.000000e+00 : f32
    %886 = vector.broadcast %cst_316 : f32 to vector<16x128xf32>
    %887 = arith.cmpf oge, %885, %886 : vector<16x128xf32>
    %888 = vector.broadcast %872 : vector<1x128xf32> to vector<16x128xf32>
    %889 = arith.mulf %888, %885 : vector<16x128xf32>
    %890 = arith.select %887, %885, %889 : vector<16x128xi1>, vector<16x128xf32>
    %891 = arith.truncf %890 : vector<16x128xf32> to vector<16x128xbf16>
    %c0_317 = arith.constant 0 : index
    %c0_318 = arith.constant 0 : index
    %892 = vector.load %arg69[%c0_317, %c0_318] : memref<128x32xbf16, #tpu.memory_space<vmem>>, vector<128x32xbf16>
    %cst_319 = arith.constant dense<0.000000e+00> : vector<16x32xf32>
    %893 = tpu.matmul %891, %892, %cst_319 {dimension_numbers = #tpu.dot_dimension_numbers<[1], [0], [0], [1], [0, 0, 1, 1], [], []>} : vector<16x128xbf16>, vector<128x32xbf16>, vector<16x32xf32> -> vector<16x32xf32>
    %894 = vector.broadcast %874 : vector<1x32xf32> to vector<16x32xf32>
    %895 = arith.addf %893, %894 : vector<16x32xf32>
    %896 = vector.broadcast %875 : vector<1x32xf32> to vector<16x32xf32>
    %897 = arith.mulf %895, %896 : vector<16x32xf32>
    %898 = vector.broadcast %876 : vector<1x32xf32> to vector<16x32xf32>
    %899 = arith.addf %897, %898 : vector<16x32xf32>
    %cst_320 = arith.constant 0.000000e+00 : f32
    %900 = vector.broadcast %cst_320 : f32 to vector<16x32xf32>
    %901 = arith.cmpf oge, %899, %900 : vector<16x32xf32>
    %902 = vector.broadcast %877 : vector<1x32xf32> to vector<16x32xf32>
    %903 = arith.mulf %902, %899 : vector<16x32xf32>
    %904 = arith.select %901, %899, %903 : vector<16x32xi1>, vector<16x32xf32>
    %cst_321 = arith.constant 0.000000e+00 : f32
    %905 = vector.broadcast %cst_321 : f32 to vector<1x32xf32>
    %906 = vector.extract_strided_slice %904 {offsets = [0, 0], sizes = [15, 32], strides = [1, 1]} : vector<16x32xf32> to vector<15x32xf32>
    %907 = tpu.concatenate %905, %906 in 0 : vector<1x32xf32>, vector<15x32xf32> -> vector<16x32xf32>
    %908 = vector.extract_strided_slice %904 {offsets = [1, 0], sizes = [15, 32], strides = [1, 1]} : vector<16x32xf32> to vector<15x32xf32>
    %909 = tpu.concatenate %908, %905 in 0 : vector<15x32xf32>, vector<1x32xf32> -> vector<16x32xf32>
    %910 = tpu.concatenate %907, %904, %909 in 1 : vector<16x32xf32>, vector<16x32xf32>, vector<16x32xf32> -> vector<16x96xf32>
    %911 = arith.truncf %910 : vector<16x96xf32> to vector<16x96xbf16>
    %c0_322 = arith.constant 0 : index
    %c0_323 = arith.constant 0 : index
    %912 = vector.load %arg70[%c0_322, %c0_323] : memref<96x32xbf16, #tpu.memory_space<vmem>>, vector<96x32xbf16>
    %cst_324 = arith.constant dense<0.000000e+00> : vector<16x32xf32>
    %913 = tpu.matmul %911, %912, %cst_324 {dimension_numbers = #tpu.dot_dimension_numbers<[1], [0], [0], [1], [0, 0, 1, 1], [], []>} : vector<16x96xbf16>, vector<96x32xbf16>, vector<16x32xf32> -> vector<16x32xf32>
    %914 = vector.broadcast %878 : vector<1x32xf32> to vector<16x32xf32>
    %915 = arith.addf %913, %914 : vector<16x32xf32>
    %916 = vector.broadcast %879 : vector<1x32xf32> to vector<16x32xf32>
    %917 = arith.mulf %915, %916 : vector<16x32xf32>
    %918 = vector.broadcast %880 : vector<1x32xf32> to vector<16x32xf32>
    %919 = arith.addf %917, %918 : vector<16x32xf32>
    %cst_325 = arith.constant 0.000000e+00 : f32
    %920 = vector.broadcast %cst_325 : f32 to vector<16x32xf32>
    %921 = arith.cmpf oge, %919, %920 : vector<16x32xf32>
    %922 = vector.broadcast %881 : vector<1x32xf32> to vector<16x32xf32>
    %923 = arith.mulf %922, %919 : vector<16x32xf32>
    %924 = arith.select %921, %919, %923 : vector<16x32xi1>, vector<16x32xf32>
    %925 = arith.truncf %924 : vector<16x32xf32> to vector<16x32xbf16>
    %c0_326 = arith.constant 0 : index
    %c0_327 = arith.constant 0 : index
    %926 = vector.load %arg71[%c0_326, %c0_327] : memref<32x128xbf16, #tpu.memory_space<vmem>>, vector<32x128xbf16>
    %cst_328 = arith.constant dense<0.000000e+00> : vector<16x128xf32>
    %927 = tpu.matmul %925, %926, %cst_328 {dimension_numbers = #tpu.dot_dimension_numbers<[1], [0], [0], [1], [0, 0, 1, 1], [], []>} : vector<16x32xbf16>, vector<32x128xbf16>, vector<16x128xf32> -> vector<16x128xf32>
    %928 = vector.broadcast %873 : vector<1x128xf32> to vector<16x128xf32>
    %929 = arith.addf %927, %928 : vector<16x128xf32>
    %930 = arith.addf %867, %929 : vector<16x128xf32>
    %c0_329 = arith.constant 0 : index
    %c0_330 = arith.constant 0 : index
    %931 = vector.load %arg88[%c0_329, %c0_330] : memref<3x128xf32, #tpu.memory_space<vmem>>, vector<3x128xf32>
    %932 = vector.extract_strided_slice %931 {offsets = [0, 0], sizes = [1, 128], strides = [1, 1]} : vector<3x128xf32> to vector<1x128xf32>
    %933 = vector.broadcast %932 : vector<1x128xf32> to vector<16x128xf32>
    %934 = arith.mulf %930, %933 : vector<16x128xf32>
    %935 = vector.extract_strided_slice %931 {offsets = [1, 0], sizes = [1, 128], strides = [1, 1]} : vector<3x128xf32> to vector<1x128xf32>
    %936 = vector.broadcast %935 : vector<1x128xf32> to vector<16x128xf32>
    %937 = arith.addf %934, %936 : vector<16x128xf32>
    %cst_331 = arith.constant 0.000000e+00 : f32
    %938 = vector.broadcast %cst_331 : f32 to vector<16x128xf32>
    %939 = arith.cmpf oge, %937, %938 : vector<16x128xf32>
    %940 = vector.extract_strided_slice %931 {offsets = [2, 0], sizes = [1, 128], strides = [1, 1]} : vector<3x128xf32> to vector<1x128xf32>
    %941 = vector.broadcast %940 : vector<1x128xf32> to vector<16x128xf32>
    %942 = arith.mulf %941, %937 : vector<16x128xf32>
    %943 = arith.select %939, %937, %942 : vector<16x128xi1>, vector<16x128xf32>
    %944 = vector.shape_cast %943 : vector<16x128xf32> to vector<1x16x128xf32>
    %c0_332 = arith.constant 0 : index
    %c0_333 = arith.constant 0 : index
    %c0_334 = arith.constant 0 : index
    %945 = vector.load %arg89[%c0_332, %c0_333, %c0_334] : memref<1x16x128xf32, #tpu.memory_space<vmem>>, vector<1x16x128xf32>
    tpu.vector_store %arg89[%c0_332, %c0_333, %c0_334], %944 {strides = array<i32>} : memref<1x16x128xf32, #tpu.memory_space<vmem>>, vector<1x16x128xf32>,
    return
  }
  func.func @transform_0(%arg0: i32) -> (i32, i32, i32) {
    %c0_i32 = arith.constant 0 : i32
    %c0_i32_0 = arith.constant 0 : i32
    %c0_i32_1 = arith.constant 0 : i32
    return %arg0, %c0_i32, %c0_i32_0 : i32, i32, i32
  }
  func.func @transform_1(%arg0: i32) -> (i32, i32) {
    %c0_i32 = arith.constant 0 : i32
    %c0_i32_0 = arith.constant 0 : i32
    %c0_i32_1 = arith.constant 0 : i32
    return %c0_i32, %c0_i32_0 : i32, i32
  }
  func.func @transform_2(%arg0: i32) -> (i32, i32) {
    %c0_i32 = arith.constant 0 : i32
    %c0_i32_0 = arith.constant 0 : i32
    %c0_i32_1 = arith.constant 0 : i32
    return %c0_i32, %c0_i32_0 : i32, i32
  }
  func.func @transform_3(%arg0: i32) -> (i32, i32) {
    %c0_i32 = arith.constant 0 : i32
    %c0_i32_0 = arith.constant 0 : i32
    %c0_i32_1 = arith.constant 0 : i32
    return %c0_i32, %c0_i32_0 : i32, i32
  }
  func.func @transform_4(%arg0: i32) -> (i32, i32) {
    %c0_i32 = arith.constant 0 : i32
    %c0_i32_0 = arith.constant 0 : i32
    %c0_i32_1 = arith.constant 0 : i32
    return %c0_i32, %c0_i32_0 : i32, i32
  }
  func.func @transform_5(%arg0: i32) -> (i32, i32) {
    %c0_i32 = arith.constant 0 : i32
    %c0_i32_0 = arith.constant 0 : i32
    %c0_i32_1 = arith.constant 0 : i32
    return %c0_i32, %c0_i32_0 : i32, i32
  }
  func.func @transform_6(%arg0: i32) -> (i32, i32) {
    %c0_i32 = arith.constant 0 : i32
    %c0_i32_0 = arith.constant 0 : i32
    %c0_i32_1 = arith.constant 0 : i32
    return %c0_i32, %c0_i32_0 : i32, i32
  }
  func.func @transform_7(%arg0: i32) -> (i32, i32) {
    %c0_i32 = arith.constant 0 : i32
    %c0_i32_0 = arith.constant 0 : i32
    %c0_i32_1 = arith.constant 0 : i32
    return %c0_i32, %c0_i32_0 : i32, i32
  }
  func.func @transform_8(%arg0: i32) -> (i32, i32) {
    %c0_i32 = arith.constant 0 : i32
    %c0_i32_0 = arith.constant 0 : i32
    %c0_i32_1 = arith.constant 0 : i32
    return %c0_i32, %c0_i32_0 : i32, i32
  }
  func.func @transform_9(%arg0: i32) -> (i32, i32) {
    %c0_i32 = arith.constant 0 : i32
    %c0_i32_0 = arith.constant 0 : i32
    %c0_i32_1 = arith.constant 0 : i32
    return %c0_i32, %c0_i32_0 : i32, i32
  }
  func.func @transform_10(%arg0: i32) -> (i32, i32) {
    %c0_i32 = arith.constant 0 : i32
    %c0_i32_0 = arith.constant 0 : i32
    %c0_i32_1 = arith.constant 0 : i32
    return %c0_i32, %c0_i32_0 : i32, i32
  }
  func.func @transform_11(%arg0: i32) -> (i32, i32) {
    %c0_i32 = arith.constant 0 : i32
    %c0_i32_0 = arith.constant 0 : i32
    %c0_i32_1 = arith.constant 0 : i32
    return %c0_i32, %c0_i32_0 : i32, i32
  }
  func.func @transform_12(%arg0: i32) -> (i32, i32) {
    %c0_i32 = arith.constant 0 : i32
    %c0_i32_0 = arith.constant 0 : i32
    %c0_i32_1 = arith.constant 0 : i32
    return %c0_i32, %c0_i32_0 : i32, i32
  }
  func.func @transform_13(%arg0: i32) -> (i32, i32) {
    %c0_i32 = arith.constant 0 : i32
    %c0_i32_0 = arith.constant 0 : i32
    %c0_i32_1 = arith.constant 0 : i32
    return %c0_i32, %c0_i32_0 : i32, i32
  }
  func.func @transform_14(%arg0: i32) -> (i32, i32) {
    %c0_i32 = arith.constant 0 : i32
    %c0_i32_0 = arith.constant 0 : i32
    %c0_i32_1 = arith.constant 0 : i32
    return %c0_i32, %c0_i32_0 : i32, i32
  }
  func.func @transform_15(%arg0: i32) -> (i32, i32) {
    %c0_i32 = arith.constant 0 : i32
    %c0_i32_0 = arith.constant 0 : i32
    %c0_i32_1 = arith.constant 0 : i32
    return %c0_i32, %c0_i32_0 : i32, i32
  }
  func.func @transform_16(%arg0: i32) -> (i32, i32) {
    %c0_i32 = arith.constant 0 : i32
    %c0_i32_0 = arith.constant 0 : i32
    %c0_i32_1 = arith.constant 0 : i32
    return %c0_i32, %c0_i32_0 : i32, i32
  }
  func.func @transform_17(%arg0: i32) -> (i32, i32) {
    %c0_i32 = arith.constant 0 : i32
    %c0_i32_0 = arith.constant 0 : i32
    %c0_i32_1 = arith.constant 0 : i32
    return %c0_i32, %c0_i32_0 : i32, i32
  }
  func.func @transform_18(%arg0: i32) -> (i32, i32) {
    %c0_i32 = arith.constant 0 : i32
    %c0_i32_0 = arith.constant 0 : i32
    %c0_i32_1 = arith.constant 0 : i32
    return %c0_i32, %c0_i32_0 : i32, i32
  }
  func.func @transform_19(%arg0: i32) -> (i32, i32) {
    %c0_i32 = arith.constant 0 : i32
    %c0_i32_0 = arith.constant 0 : i32
    %c0_i32_1 = arith.constant 0 : i32
    return %c0_i32, %c0_i32_0 : i32, i32
  }
  func.func @transform_20(%arg0: i32) -> (i32, i32) {
    %c0_i32 = arith.constant 0 : i32
    %c0_i32_0 = arith.constant 0 : i32
    %c0_i32_1 = arith.constant 0 : i32
    return %c0_i32, %c0_i32_0 : i32, i32
  }
  func.func @transform_21(%arg0: i32) -> (i32, i32) {
    %c0_i32 = arith.constant 0 : i32
    %c0_i32_0 = arith.constant 0 : i32
    %c0_i32_1 = arith.constant 0 : i32
    return %c0_i32, %c0_i32_0 : i32, i32
  }
  func.func @transform_22(%arg0: i32) -> (i32, i32) {
    %c0_i32 = arith.constant 0 : i32
    %c0_i32_0 = arith.constant 0 : i32
    %c0_i32_1 = arith.constant 0 : i32
    return %c0_i32, %c0_i32_0 : i32, i32
  }
  func.func @transform_23(%arg0: i32) -> (i32, i32) {
    %c0_i32 = arith.constant 0 : i32
    %c0_i32_0 = arith.constant 0 : i32
    %c0_i32_1 = arith.constant 0 : i32
    return %c0_i32, %c0_i32_0 : i32, i32
  }
  func.func @transform_24(%arg0: i32) -> (i32, i32) {
    %c0_i32 = arith.constant 0 : i32
    %c0_i32_0 = arith.constant 0 : i32
    %c0_i32_1 = arith.constant 0 : i32
    return %c0_i32, %c0_i32_0 : i32, i32
  }
  func.func @transform_25(%arg0: i32) -> (i32, i32) {
    %c0_i32 = arith.constant 0 : i32
    %c0_i32_0 = arith.constant 0 : i32
    %c0_i32_1 = arith.constant 0 : i32
    return %c0_i32, %c0_i32_0 : i32, i32
  }
  func.func @transform_26(%arg0: i32) -> (i32, i32) {
    %c0_i32 = arith.constant 0 : i32
    %c0_i32_0 = arith.constant 0 : i32
    %c0_i32_1 = arith.constant 0 : i32
    return %c0_i32, %c0_i32_0 : i32, i32
  }
  func.func @transform_27(%arg0: i32) -> (i32, i32) {
    %c0_i32 = arith.constant 0 : i32
    %c0_i32_0 = arith.constant 0 : i32
    %c0_i32_1 = arith.constant 0 : i32
    return %c0_i32, %c0_i32_0 : i32, i32
  }
  func.func @transform_28(%arg0: i32) -> (i32, i32) {
    %c0_i32 = arith.constant 0 : i32
    %c0_i32_0 = arith.constant 0 : i32
    %c0_i32_1 = arith.constant 0 : i32
    return %c0_i32, %c0_i32_0 : i32, i32
  }
  func.func @transform_29(%arg0: i32) -> (i32, i32) {
    %c0_i32 = arith.constant 0 : i32
    %c0_i32_0 = arith.constant 0 : i32
    %c0_i32_1 = arith.constant 0 : i32
    return %c0_i32, %c0_i32_0 : i32, i32
  }
  func.func @transform_30(%arg0: i32) -> (i32, i32) {
    %c0_i32 = arith.constant 0 : i32
    %c0_i32_0 = arith.constant 0 : i32
    %c0_i32_1 = arith.constant 0 : i32
    return %c0_i32, %c0_i32_0 : i32, i32
  }
  func.func @transform_31(%arg0: i32) -> (i32, i32) {
    %c0_i32 = arith.constant 0 : i32
    %c0_i32_0 = arith.constant 0 : i32
    %c0_i32_1 = arith.constant 0 : i32
    return %c0_i32, %c0_i32_0 : i32, i32
  }
  func.func @transform_32(%arg0: i32) -> (i32, i32) {
    %c0_i32 = arith.constant 0 : i32
    %c0_i32_0 = arith.constant 0 : i32
    %c0_i32_1 = arith.constant 0 : i32
    return %c0_i32, %c0_i32_0 : i32, i32
  }
  func.func @transform_33(%arg0: i32) -> (i32, i32) {
    %c0_i32 = arith.constant 0 : i32
    %c0_i32_0 = arith.constant 0 : i32
    %c0_i32_1 = arith.constant 0 : i32
    return %c0_i32, %c0_i32_0 : i32, i32
  }
  func.func @transform_34(%arg0: i32) -> (i32, i32) {
    %c0_i32 = arith.constant 0 : i32
    %c0_i32_0 = arith.constant 0 : i32
    %c0_i32_1 = arith.constant 0 : i32
    return %c0_i32, %c0_i32_0 : i32, i32
  }
  func.func @transform_35(%arg0: i32) -> (i32, i32) {
    %c0_i32 = arith.constant 0 : i32
    %c0_i32_0 = arith.constant 0 : i32
    %c0_i32_1 = arith.constant 0 : i32
    return %c0_i32, %c0_i32_0 : i32, i32
  }
  func.func @transform_36(%arg0: i32) -> (i32, i32) {
    %c0_i32 = arith.constant 0 : i32
    %c0_i32_0 = arith.constant 0 : i32
    %c0_i32_1 = arith.constant 0 : i32
    return %c0_i32, %c0_i32_0 : i32, i32
  }
  func.func @transform_37(%arg0: i32) -> (i32, i32) {
    %c0_i32 = arith.constant 0 : i32
    %c0_i32_0 = arith.constant 0 : i32
    %c0_i32_1 = arith.constant 0 : i32
    return %c0_i32, %c0_i32_0 : i32, i32
  }
  func.func @transform_38(%arg0: i32) -> (i32, i32) {
    %c0_i32 = arith.constant 0 : i32
    %c0_i32_0 = arith.constant 0 : i32
    %c0_i32_1 = arith.constant 0 : i32
    return %c0_i32, %c0_i32_0 : i32, i32
  }
  func.func @transform_39(%arg0: i32) -> (i32, i32) {
    %c0_i32 = arith.constant 0 : i32
    %c0_i32_0 = arith.constant 0 : i32
    %c0_i32_1 = arith.constant 0 : i32
    return %c0_i32, %c0_i32_0 : i32, i32
  }
  func.func @transform_40(%arg0: i32) -> (i32, i32) {
    %c0_i32 = arith.constant 0 : i32
    %c0_i32_0 = arith.constant 0 : i32
    %c0_i32_1 = arith.constant 0 : i32
    return %c0_i32, %c0_i32_0 : i32, i32
  }
  func.func @transform_41(%arg0: i32) -> (i32, i32) {
    %c0_i32 = arith.constant 0 : i32
    %c0_i32_0 = arith.constant 0 : i32
    %c0_i32_1 = arith.constant 0 : i32
    return %c0_i32, %c0_i32_0 : i32, i32
  }
  func.func @transform_42(%arg0: i32) -> (i32, i32) {
    %c0_i32 = arith.constant 0 : i32
    %c0_i32_0 = arith.constant 0 : i32
    %c0_i32_1 = arith.constant 0 : i32
    return %c0_i32, %c0_i32_0 : i32, i32
  }
  func.func @transform_43(%arg0: i32) -> (i32, i32) {
    %c0_i32 = arith.constant 0 : i32
    %c0_i32_0 = arith.constant 0 : i32
    %c0_i32_1 = arith.constant 0 : i32
    return %c0_i32, %c0_i32_0 : i32, i32
  }
  func.func @transform_44(%arg0: i32) -> (i32, i32) {
    %c0_i32 = arith.constant 0 : i32
    %c0_i32_0 = arith.constant 0 : i32
    %c0_i32_1 = arith.constant 0 : i32
    return %c0_i32, %c0_i32_0 : i32, i32
  }
  func.func @transform_45(%arg0: i32) -> (i32, i32) {
    %c0_i32 = arith.constant 0 : i32
    %c0_i32_0 = arith.constant 0 : i32
    %c0_i32_1 = arith.constant 0 : i32
    return %c0_i32, %c0_i32_0 : i32, i32
  }
  func.func @transform_46(%arg0: i32) -> (i32, i32) {
    %c0_i32 = arith.constant 0 : i32
    %c0_i32_0 = arith.constant 0 : i32
    %c0_i32_1 = arith.constant 0 : i32
    return %c0_i32, %c0_i32_0 : i32, i32
  }
  func.func @transform_47(%arg0: i32) -> (i32, i32) {
    %c0_i32 = arith.constant 0 : i32
    %c0_i32_0 = arith.constant 0 : i32
    %c0_i32_1 = arith.constant 0 : i32
    return %c0_i32, %c0_i32_0 : i32, i32
  }
  func.func @transform_48(%arg0: i32) -> (i32, i32) {
    %c0_i32 = arith.constant 0 : i32
    %c0_i32_0 = arith.constant 0 : i32
    %c0_i32_1 = arith.constant 0 : i32
    return %c0_i32, %c0_i32_0 : i32, i32
  }
  func.func @transform_49(%arg0: i32) -> (i32, i32) {
    %c0_i32 = arith.constant 0 : i32
    %c0_i32_0 = arith.constant 0 : i32
    %c0_i32_1 = arith.constant 0 : i32
    return %c0_i32, %c0_i32_0 : i32, i32
  }
  func.func @transform_50(%arg0: i32) -> (i32, i32) {
    %c0_i32 = arith.constant 0 : i32
    %c0_i32_0 = arith.constant 0 : i32
    %c0_i32_1 = arith.constant 0 : i32
    return %c0_i32, %c0_i32_0 : i32, i32
  }
  func.func @transform_51(%arg0: i32) -> (i32, i32) {
    %c0_i32 = arith.constant 0 : i32
    %c0_i32_0 = arith.constant 0 : i32
    %c0_i32_1 = arith.constant 0 : i32
    return %c0_i32, %c0_i32_0 : i32, i32
  }
  func.func @transform_52(%arg0: i32) -> (i32, i32) {
    %c0_i32 = arith.constant 0 : i32
    %c0_i32_0 = arith.constant 0 : i32
    %c0_i32_1 = arith.constant 0 : i32
    return %c0_i32, %c0_i32_0 : i32, i32
  }
  func.func @transform_53(%arg0: i32) -> (i32, i32) {
    %c0_i32 = arith.constant 0 : i32
    %c0_i32_0 = arith.constant 0 : i32
    %c0_i32_1 = arith.constant 0 : i32
    return %c0_i32, %c0_i32_0 : i32, i32
  }
  func.func @transform_54(%arg0: i32) -> (i32, i32) {
    %c0_i32 = arith.constant 0 : i32
    %c0_i32_0 = arith.constant 0 : i32
    %c0_i32_1 = arith.constant 0 : i32
    return %c0_i32, %c0_i32_0 : i32, i32
  }
  func.func @transform_55(%arg0: i32) -> (i32, i32) {
    %c0_i32 = arith.constant 0 : i32
    %c0_i32_0 = arith.constant 0 : i32
    %c0_i32_1 = arith.constant 0 : i32
    return %c0_i32, %c0_i32_0 : i32, i32
  }
  func.func @transform_56(%arg0: i32) -> (i32, i32) {
    %c0_i32 = arith.constant 0 : i32
    %c0_i32_0 = arith.constant 0 : i32
    %c0_i32_1 = arith.constant 0 : i32
    return %c0_i32, %c0_i32_0 : i32, i32
  }
  func.func @transform_57(%arg0: i32) -> (i32, i32) {
    %c0_i32 = arith.constant 0 : i32
    %c0_i32_0 = arith.constant 0 : i32
    %c0_i32_1 = arith.constant 0 : i32
    return %c0_i32, %c0_i32_0 : i32, i32
  }
  func.func @transform_58(%arg0: i32) -> (i32, i32) {
    %c0_i32 = arith.constant 0 : i32
    %c0_i32_0 = arith.constant 0 : i32
    %c0_i32_1 = arith.constant 0 : i32
    return %c0_i32, %c0_i32_0 : i32, i32
  }
  func.func @transform_59(%arg0: i32) -> (i32, i32) {
    %c0_i32 = arith.constant 0 : i32
    %c0_i32_0 = arith.constant 0 : i32
    %c0_i32_1 = arith.constant 0 : i32
    return %c0_i32, %c0_i32_0 : i32, i32
  }
  func.func @transform_60(%arg0: i32) -> (i32, i32) {
    %c0_i32 = arith.constant 0 : i32
    %c0_i32_0 = arith.constant 0 : i32
    %c0_i32_1 = arith.constant 0 : i32
    return %c0_i32, %c0_i32_0 : i32, i32
  }
  func.func @transform_61(%arg0: i32) -> (i32, i32) {
    %c0_i32 = arith.constant 0 : i32
    %c0_i32_0 = arith.constant 0 : i32
    %c0_i32_1 = arith.constant 0 : i32
    return %c0_i32, %c0_i32_0 : i32, i32
  }
  func.func @transform_62(%arg0: i32) -> (i32, i32) {
    %c0_i32 = arith.constant 0 : i32
    %c0_i32_0 = arith.constant 0 : i32
    %c0_i32_1 = arith.constant 0 : i32
    return %c0_i32, %c0_i32_0 : i32, i32
  }
  func.func @transform_63(%arg0: i32) -> (i32, i32) {
    %c0_i32 = arith.constant 0 : i32
    %c0_i32_0 = arith.constant 0 : i32
    %c0_i32_1 = arith.constant 0 : i32
    return %c0_i32, %c0_i32_0 : i32, i32
  }
  func.func @transform_64(%arg0: i32) -> (i32, i32) {
    %c0_i32 = arith.constant 0 : i32
    %c0_i32_0 = arith.constant 0 : i32
    %c0_i32_1 = arith.constant 0 : i32
    return %c0_i32, %c0_i32_0 : i32, i32
  }
  func.func @transform_65(%arg0: i32) -> (i32, i32) {
    %c0_i32 = arith.constant 0 : i32
    %c0_i32_0 = arith.constant 0 : i32
    %c0_i32_1 = arith.constant 0 : i32
    return %c0_i32, %c0_i32_0 : i32, i32
  }
  func.func @transform_66(%arg0: i32) -> (i32, i32) {
    %c0_i32 = arith.constant 0 : i32
    %c0_i32_0 = arith.constant 0 : i32
    %c0_i32_1 = arith.constant 0 : i32
    return %c0_i32, %c0_i32_0 : i32, i32
  }
  func.func @transform_67(%arg0: i32) -> (i32, i32) {
    %c0_i32 = arith.constant 0 : i32
    %c0_i32_0 = arith.constant 0 : i32
    %c0_i32_1 = arith.constant 0 : i32
    return %c0_i32, %c0_i32_0 : i32, i32
  }
  func.func @transform_68(%arg0: i32) -> (i32, i32) {
    %c0_i32 = arith.constant 0 : i32
    %c0_i32_0 = arith.constant 0 : i32
    %c0_i32_1 = arith.constant 0 : i32
    return %c0_i32, %c0_i32_0 : i32, i32
  }
  func.func @transform_69(%arg0: i32) -> (i32, i32) {
    %c0_i32 = arith.constant 0 : i32
    %c0_i32_0 = arith.constant 0 : i32
    %c0_i32_1 = arith.constant 0 : i32
    return %c0_i32, %c0_i32_0 : i32, i32
  }
  func.func @transform_70(%arg0: i32) -> (i32, i32) {
    %c0_i32 = arith.constant 0 : i32
    %c0_i32_0 = arith.constant 0 : i32
    %c0_i32_1 = arith.constant 0 : i32
    return %c0_i32, %c0_i32_0 : i32, i32
  }
  func.func @transform_71(%arg0: i32) -> (i32, i32, i32) {
    %c0_i32 = arith.constant 0 : i32
    %c0_i32_0 = arith.constant 0 : i32
    %c0_i32_1 = arith.constant 0 : i32
    %c0_i32_2 = arith.constant 0 : i32
    return %c0_i32, %c0_i32_0, %c0_i32_1 : i32, i32, i32
  }
  func.func @transform_72(%arg0: i32) -> (i32, i32, i32) {
    %c0_i32 = arith.constant 0 : i32
    %c0_i32_0 = arith.constant 0 : i32
    %c0_i32_1 = arith.constant 0 : i32
    %c0_i32_2 = arith.constant 0 : i32
    return %c0_i32, %c0_i32_0, %c0_i32_1 : i32, i32, i32
  }
  func.func @transform_73(%arg0: i32) -> (i32, i32, i32) {
    %c0_i32 = arith.constant 0 : i32
    %c0_i32_0 = arith.constant 0 : i32
    %c0_i32_1 = arith.constant 0 : i32
    %c0_i32_2 = arith.constant 0 : i32
    return %c0_i32, %c0_i32_0, %c0_i32_1 : i32, i32, i32
  }
  func.func @transform_74(%arg0: i32) -> (i32, i32, i32) {
    %c0_i32 = arith.constant 0 : i32
    %c0_i32_0 = arith.constant 0 : i32
    %c0_i32_1 = arith.constant 0 : i32
    %c0_i32_2 = arith.constant 0 : i32
    return %c0_i32, %c0_i32_0, %c0_i32_1 : i32, i32, i32
  }
  func.func @transform_75(%arg0: i32) -> (i32, i32, i32) {
    %c0_i32 = arith.constant 0 : i32
    %c0_i32_0 = arith.constant 0 : i32
    %c0_i32_1 = arith.constant 0 : i32
    %c0_i32_2 = arith.constant 0 : i32
    return %c0_i32, %c0_i32_0, %c0_i32_1 : i32, i32, i32
  }
  func.func @transform_76(%arg0: i32) -> (i32, i32, i32) {
    %c0_i32 = arith.constant 0 : i32
    %c0_i32_0 = arith.constant 0 : i32
    %c0_i32_1 = arith.constant 0 : i32
    %c0_i32_2 = arith.constant 0 : i32
    return %c0_i32, %c0_i32_0, %c0_i32_1 : i32, i32, i32
  }
  func.func @transform_77(%arg0: i32) -> (i32, i32, i32) {
    %c0_i32 = arith.constant 0 : i32
    %c0_i32_0 = arith.constant 0 : i32
    %c0_i32_1 = arith.constant 0 : i32
    %c0_i32_2 = arith.constant 0 : i32
    return %c0_i32, %c0_i32_0, %c0_i32_1 : i32, i32, i32
  }
  func.func @transform_78(%arg0: i32) -> (i32, i32, i32) {
    %c0_i32 = arith.constant 0 : i32
    %c0_i32_0 = arith.constant 0 : i32
    %c0_i32_1 = arith.constant 0 : i32
    %c0_i32_2 = arith.constant 0 : i32
    return %c0_i32, %c0_i32_0, %c0_i32_1 : i32, i32, i32
  }
  func.func @transform_79(%arg0: i32) -> (i32, i32) {
    %c0_i32 = arith.constant 0 : i32
    %c0_i32_0 = arith.constant 0 : i32
    %c0_i32_1 = arith.constant 0 : i32
    return %c0_i32, %c0_i32_0 : i32, i32
  }
  func.func @transform_80(%arg0: i32) -> (i32, i32) {
    %c0_i32 = arith.constant 0 : i32
    %c0_i32_0 = arith.constant 0 : i32
    %c0_i32_1 = arith.constant 0 : i32
    return %c0_i32, %c0_i32_0 : i32, i32
  }
  func.func @transform_81(%arg0: i32) -> (i32, i32) {
    %c0_i32 = arith.constant 0 : i32
    %c0_i32_0 = arith.constant 0 : i32
    %c0_i32_1 = arith.constant 0 : i32
    return %c0_i32, %c0_i32_0 : i32, i32
  }
  func.func @transform_82(%arg0: i32) -> (i32, i32) {
    %c0_i32 = arith.constant 0 : i32
    %c0_i32_0 = arith.constant 0 : i32
    %c0_i32_1 = arith.constant 0 : i32
    return %c0_i32, %c0_i32_0 : i32, i32
  }
  func.func @transform_83(%arg0: i32) -> (i32, i32) {
    %c0_i32 = arith.constant 0 : i32
    %c0_i32_0 = arith.constant 0 : i32
    %c0_i32_1 = arith.constant 0 : i32
    return %c0_i32, %c0_i32_0 : i32, i32
  }
  func.func @transform_84(%arg0: i32) -> (i32, i32) {
    %c0_i32 = arith.constant 0 : i32
    %c0_i32_0 = arith.constant 0 : i32
    %c0_i32_1 = arith.constant 0 : i32
    return %c0_i32, %c0_i32_0 : i32, i32
  }
  func.func @transform_85(%arg0: i32) -> (i32, i32) {
    %c0_i32 = arith.constant 0 : i32
    %c0_i32_0 = arith.constant 0 : i32
    %c0_i32_1 = arith.constant 0 : i32
    return %c0_i32, %c0_i32_0 : i32, i32
  }
  func.func @transform_86(%arg0: i32) -> (i32, i32) {
    %c0_i32 = arith.constant 0 : i32
    %c0_i32_0 = arith.constant 0 : i32
    %c0_i32_1 = arith.constant 0 : i32
    return %c0_i32, %c0_i32_0 : i32, i32
  }
  func.func @transform_87(%arg0: i32) -> (i32, i32) {
    %c0_i32 = arith.constant 0 : i32
    %c0_i32_0 = arith.constant 0 : i32
    %c0_i32_1 = arith.constant 0 : i32
    return %c0_i32, %c0_i32_0 : i32, i32
  }
  func.func @transform_88(%arg0: i32) -> (i32, i32, i32) {
    %c0_i32 = arith.constant 0 : i32
    %c0_i32_0 = arith.constant 0 : i32
    %c0_i32_1 = arith.constant 0 : i32
    return %arg0, %c0_i32, %c0_i32_0 : i32, i32, i32
  }
}

</mosaic_0001>

<llo_original>
// kernel: hourglass_forward.1
$region0: #{hourglass_forward.1}
  #allocation0 [shape = 'u32[]', space=smem, size = 0x4, offset = 0x4, fixed_abs, tag = 'smem constant byte address 0x4 - core index']
  #allocation1 [shape = 'u32[144,128]{1,0:T(1,128)}', space=vmem, size = 0x12000, scoped, tag = 'internal scratch']
  %s0 = inlined_call_operand.smem [shape: u32[89], index: -1, kind: input, shape index: {}]
  %s1 = sld [smem:[%s0]]
  %s2 = scalar_lea.smem %s0, 1
  %s3 = sld [smem:[%s2]]
  %s4 = scalar_lea.smem %s0, 2
  %s5 = sld [smem:[%s4]]
  %s6 = scalar_lea.smem %s0, 3
  %s7 = sld [smem:[%s6]]
  %s8 = scalar_lea.smem %s0, 4
  %s9 = sld [smem:[%s8]]
  %s10 = scalar_lea.smem %s0, 5
  %s11 = sld [smem:[%s10]]
  %s12 = scalar_lea.smem %s0, 6
  %s13 = sld [smem:[%s12]]
  %s14 = scalar_lea.smem %s0, 7
  %s15 = sld [smem:[%s14]]
  %s16 = scalar_lea.smem %s0, 8
  %s17 = sld [smem:[%s16]]
  %s18 = scalar_lea.smem %s0, 9
  %s19 = sld [smem:[%s18]]
  %s20 = scalar_lea.smem %s0, 10
  %s21 = sld [smem:[%s20]]
  %s22 = scalar_lea.smem %s0, 11
  %s23 = sld [smem:[%s22]]
  %s24 = scalar_lea.smem %s0, 12
  %s25 = sld [smem:[%s24]]
  %s26 = scalar_lea.smem %s0, 13
  %s27 = sld [smem:[%s26]]
  %s28 = scalar_lea.smem %s0, 14
  %s29 = sld [smem:[%s28]]
  %s30 = scalar_lea.smem %s0, 15
  %s31 = sld [smem:[%s30]]
  %s32 = scalar_lea.smem %s0, 16
  %s33 = sld [smem:[%s32]]
  %s34 = scalar_lea.smem %s0, 17
  %s35 = sld [smem:[%s34]]
  %s36 = scalar_lea.smem %s0, 18
  %s37 = sld [smem:[%s36]]
  %s38 = scalar_lea.smem %s0, 19
  %s39 = sld [smem:[%s38]]
  %s40 = scalar_lea.smem %s0, 20
  %s41 = sld [smem:[%s40]]
  %s42 = scalar_lea.smem %s0, 21
  %s43 = sld [smem:[%s42]]
  %s44 = scalar_lea.smem %s0, 22
  %s45 = sld [smem:[%s44]]
  %s46 = scalar_lea.smem %s0, 23
  %s47 = sld [smem:[%s46]]
  %s48 = scalar_lea.smem %s0, 24
  %s49 = sld [smem:[%s48]]
  %s50 = scalar_lea.smem %s0, 25
  %s51 = sld [smem:[%s50]]
  %s52 = scalar_lea.smem %s0, 26
  %s53 = sld [smem:[%s52]]
  %s54 = scalar_lea.smem %s0, 27
  %s55 = sld [smem:[%s54]]
  %s56 = scalar_lea.smem %s0, 28
  %s57 = sld [smem:[%s56]]
  %s58 = scalar_lea.smem %s0, 29
  %s59 = sld [smem:[%s58]]
  %s60 = scalar_lea.smem %s0, 30
  %s61 = sld [smem:[%s60]]
  %s62 = scalar_lea.smem %s0, 31
  %s63 = sld [smem:[%s62]]
  %s64 = scalar_lea.smem %s0, 32
  %s65 = sld [smem:[%s64]]
  %s66 = scalar_lea.smem %s0, 33
  %s67 = sld [smem:[%s66]]
  %s68 = scalar_lea.smem %s0, 34
  %s69 = sld [smem:[%s68]]
  %s70 = scalar_lea.smem %s0, 35
  %s71 = sld [smem:[%s70]]
  %s72 = scalar_lea.smem %s0, 36
  %s73 = sld [smem:[%s72]]
  %s74 = scalar_lea.smem %s0, 37
  %s75 = sld [smem:[%s74]]
  %s76 = scalar_lea.smem %s0, 38
  %s77 = sld [smem:[%s76]]
  %s78 = scalar_lea.smem %s0, 39
  %s79 = sld [smem:[%s78]]
  %s80 = scalar_lea.smem %s0, 40
  %s81 = sld [smem:[%s80]]
  %s82 = scalar_lea.smem %s0, 41
  %s83 = sld [smem:[%s82]]
  %s84 = scalar_lea.smem %s0, 42
  %s85 = sld [smem:[%s84]]
  %s86 = scalar_lea.smem %s0, 43
  %s87 = sld [smem:[%s86]]
  %s88 = scalar_lea.smem %s0, 44
  %s89 = sld [smem:[%s88]]
  %s90 = scalar_lea.smem %s0, 45
  %s91 = sld [smem:[%s90]]
  %s92 = scalar_lea.smem %s0, 46
  %s93 = sld [smem:[%s92]]
  %s94 = scalar_lea.smem %s0, 47
  %s95 = sld [smem:[%s94]]
  %s96 = scalar_lea.smem %s0, 48
  %s97 = sld [smem:[%s96]]
  %s98 = scalar_lea.smem %s0, 49
  %s99 = sld [smem:[%s98]]
  %s100 = scalar_lea.smem %s0, 50
  %s101 = sld [smem:[%s100]]
  %s102 = scalar_lea.smem %s0, 51
  %s103 = sld [smem:[%s102]]
  %s104 = scalar_lea.smem %s0, 52
  %s105 = sld [smem:[%s104]]
  %s106 = scalar_lea.smem %s0, 53
  %s107 = sld [smem:[%s106]]
  %s108 = scalar_lea.smem %s0, 54
  %s109 = sld [smem:[%s108]]
  %s110 = scalar_lea.smem %s0, 55
  %s111 = sld [smem:[%s110]]
  %s112 = scalar_lea.smem %s0, 56
  %s113 = sld [smem:[%s112]]
  %s114 = scalar_lea.smem %s0, 57
  %s115 = sld [smem:[%s114]]
  %s116 = scalar_lea.smem %s0, 58
  %s117 = sld [smem:[%s116]]
  %s118 = scalar_lea.smem %s0, 59
  %s119 = sld [smem:[%s118]]
  %s120 = scalar_lea.smem %s0, 60
  %s121 = sld [smem:[%s120]]
  %s122 = scalar_lea.smem %s0, 61
  %s123 = sld [smem:[%s122]]
  %s124 = scalar_lea.smem %s0, 62
  %s125 = sld [smem:[%s124]]
  %s126 = scalar_lea.smem %s0, 63
  %s127 = sld [smem:[%s126]]
  %s128 = scalar_lea.smem %s0, 64
  %s129 = sld [smem:[%s128]]
  %s130 = scalar_lea.smem %s0, 65
  %s131 = sld [smem:[%s130]]
  %s132 = scalar_lea.smem %s0, 66
  %s133 = sld [smem:[%s132]]
  %s134 = scalar_lea.smem %s0, 67
  %s135 = sld [smem:[%s134]]
  %s136 = scalar_lea.smem %s0, 68
  %s137 = sld [smem:[%s136]]
  %s138 = scalar_lea.smem %s0, 69
  %s139 = sld [smem:[%s138]]
  %s140 = scalar_lea.smem %s0, 70
  %s141 = sld [smem:[%s140]]
  %s142 = scalar_lea.smem %s0, 71
  %s143 = sld [smem:[%s142]]
  %s144 = scalar_lea.smem %s0, 72
  %s145 = sld [smem:[%s144]]
  %s146 = scalar_lea.smem %s0, 73
  %s147 = sld [smem:[%s146]]
  %s148 = scalar_lea.smem %s0, 74
  %s149 = sld [smem:[%s148]]
  %s150 = scalar_lea.smem %s0, 75
  %s151 = sld [smem:[%s150]]
  %s152 = scalar_lea.smem %s0, 76
  %s153 = sld [smem:[%s152]]
  %s154 = scalar_lea.smem %s0, 77
  %s155 = sld [smem:[%s154]]
  %s156 = scalar_lea.smem %s0, 78
  %s157 = sld [smem:[%s156]]
  %s158 = scalar_lea.smem %s0, 79
  %s159 = sld [smem:[%s158]]
  %s160 = scalar_lea.smem %s0, 80
  %s161 = sld [smem:[%s160]]
  %s162 = scalar_lea.smem %s0, 81
  %s163 = sld [smem:[%s162]]
  %s164 = scalar_lea.smem %s0, 82
  %s165 = sld [smem:[%s164]]
  %s166 = scalar_lea.smem %s0, 83
  %s167 = sld [smem:[%s166]]
  %s168 = scalar_lea.smem %s0, 84
  %s169 = sld [smem:[%s168]]
  %s170 = scalar_lea.smem %s0, 85
  %s171 = sld [smem:[%s170]]
  %s172 = scalar_lea.smem %s0, 86
  %s173 = sld [smem:[%s172]]
  %s174 = scalar_lea.smem %s0, 87
  %s175 = sld [smem:[%s174]]
  %s176 = scalar_lea.smem %s0, 88
  %s177 = sld [smem:[%s176]]
  %s178 = sld [smem:[#allocation0]]
  $region413: #{hourglass_forward.1} parent=0
    _
  %s180 = ssub.s32 1, %s178
  %s181 = scalar_select 0, %s180, %s178
  $region1: #{hourglass_forward.1} parent=0
    #allocation2 [shape = 'u8[1024]{0}', space=vmem, size = 0x400, scoped, tag = 'input window, operand 30, single buffered']
    #allocation3 [shape = 's32[2]{0}', space=sflag, size = 0x8, scoped, tag = 'scoped memory for hourglass_forward.1']
    #allocation4 [shape = 'u8[1024]{0}', space=vmem, size = 0x400, scoped, tag = 'input window, operand 35, single buffered']
    #allocation5 [shape = 's32[1]{0}', space=sflag, size = 0x4, scoped, tag = 'scoped memory for hourglass_forward.1']
    #allocation6 [shape = 'u8[512]{0}', space=vmem, size = 0x400, scoped, tag = 'input window, operand 45, single buffered']
    #allocation7 [shape = 'u8[512]{0}', space=vmem, size = 0x400, scoped, tag = 'input window, operand 50, single buffered']
    #allocation8 [shape = 's32[1]{0}', space=sflag, size = 0x4, scoped, tag = 'scoped memory for hourglass_forward.1']
    #allocation9 [shape = 'u8[1024]{0}', space=vmem, size = 0x400, scoped, tag = 'input window, operand 55, single buffered']
    #allocation10 [shape = 'u8[1024]{0}', space=vmem, size = 0x400, scoped, tag = 'input window, operand 73, single buffered']
    #allocation11 [shape = 's32[1]{0}', space=sflag, size = 0x4, scoped, tag = 'scoped memory for hourglass_forward.1']
    #allocation12 [shape = 'u8[512]{0}', space=vmem, size = 0x400, scoped, tag = 'input window, operand 82, single buffered']
    %182 = vsyncpa [#allocation3], 0
    %183 = vsyncpa [#allocation5], 0
    %184 = vsyncpa [#allocation8], 0
    %185 = vsyncpa [#allocation11], 0
    loop: start=0, step=1, limit=4
    $region2: #{hourglass_forward.1} parent=1 // loop_pre_header
      _
    $region3: #{hourglass_forward.1} parent=1 // loop_header
      %s187 = sphi 0, %s191
      %p188 = scmp.ge.s32.totalorder %s187, 4
      %s197 = sphi 0, %s199
      %s200 = sphi 0, %s197
      %s201 = sphi 0, %s200
      %s217 = sphi 0, %s201
      %s221 = sphi 0, %s221
      %s223 = sphi 0, %s221
      %s224 = sphi 0, %s223
      %s238 = sphi 0, %s224
      %s242 = sphi 0, %s242
      %s244 = sphi 0, %s242
      %s245 = sphi 0, %s244
      %s259 = sphi 0, %s245
      %s263 = sphi 0, %s263
      %s265 = sphi 0, %s263
      %s266 = sphi 0, %s265
      %s280 = sphi 0, %s266
      %s284 = sphi 0, %s284
      %s286 = sphi 0, %s284
      %s287 = sphi 0, %s286
      %s301 = sphi 0, %s287
      %s305 = sphi 0, %s305
      %s307 = sphi 0, %s305
      %s308 = sphi 0, %s307
      %s322 = sphi 0, %s308
      %s326 = sphi 0, %s326
      %s328 = sphi 0, %s326
      %s329 = sphi 0, %s328
      %s343 = sphi 0, %s329
      %s347 = sphi 0, %s347
      %s349 = sphi 0, %s347
      %s350 = sphi 0, %s349
      %s364 = sphi 0, %s350
      %s368 = sphi 0, %s368
      %s370 = sphi 0, %s368
      %s371 = sphi 0, %s370
      %s385 = sphi 0, %s371
      %s389 = sphi 0, %s389
      %s391 = sphi 0, %s389
      %s392 = sphi 0, %s391
      %s406 = sphi 0, %s392
      %s410 = sphi 0, %s410
      %s412 = sphi 0, %s410
      %s413 = sphi 0, %s412
      %s427 = sphi 0, %s413
      %s431 = sphi 0, %s431
      %s433 = sphi 0, %s431
      %s434 = sphi 0, %s433
      %s448 = sphi 0, %s434
      %s452 = sphi 0, %s452
      %s454 = sphi 0, %s452
      %s455 = sphi 0, %s454
      %s469 = sphi 0, %s455
      %s473 = sphi 0, %s473
      %s475 = sphi 0, %s473
      %s476 = sphi 0, %s475
      %s490 = sphi 0, %s476
      %s494 = sphi 0, %s494
      %s496 = sphi 0, %s494
      %s497 = sphi 0, %s496
      %s511 = sphi 0, %s497
      %s515 = sphi 0, %s515
      %s517 = sphi 0, %s515
      %s518 = sphi 0, %s517
      %s532 = sphi 0, %s518
      %s536 = sphi 0, %s536
      %s538 = sphi 0, %s536
      %s539 = sphi 0, %s538
      %s553 = sphi 0, %s539
      %s557 = sphi 0, %s557
      %s559 = sphi 0, %s557
      %s560 = sphi 0, %s559
      %s574 = sphi 0, %s560
      %s578 = sphi 0, %s578
      %s580 = sphi 0, %s578
      %s581 = sphi 0, %s580
      %s595 = sphi 0, %s581
      %s599 = sphi 0, %s599
      %s601 = sphi 0, %s599
      %s602 = sphi 0, %s601
      %s616 = sphi 0, %s602
      %s620 = sphi 0, %s620
      %s622 = sphi 0, %s620
      %s623 = sphi 0, %s622
      %s637 = sphi 0, %s623
      %s641 = sphi 0, %s641
      %s643 = sphi 0, %s641
      %s644 = sphi 0, %s643
      %s658 = sphi 0, %s644
      %s662 = sphi 0, %s662
      %s664 = sphi 0, %s662
      %s665 = sphi 0, %s664
      %s679 = sphi 0, %s665
      %s683 = sphi 0, %s683
      %s685 = sphi 0, %s683
      %s686 = sphi 0, %s685
      %s700 = sphi 0, %s686
      %s704 = sphi 0, %s704
      %s706 = sphi 0, %s704
      %s707 = sphi 0, %s706
      %s721 = sphi 0, %s707
      %s725 = sphi 0, %s725
      %s727 = sphi 0, %s725
      %s728 = sphi 0, %s727
      %s742 = sphi 0, %s728
      %s746 = sphi 0, %s746
      %s748 = sphi 0, %s746
      %s749 = sphi 0, %s748
      %s763 = sphi 0, %s749
      %s767 = sphi 0, %s767
      %s769 = sphi 0, %s767
      %s770 = sphi 0, %s769
      %s784 = sphi 0, %s770
      %s788 = sphi 0, %s788
      %s790 = sphi 0, %s788
      %s791 = sphi 0, %s790
      %s805 = sphi 0, %s791
      %s809 = sphi 0, %s809
      %s811 = sphi 0, %s809
      %s812 = sphi 0, %s811
      %s826 = sphi 0, %s812
      %s830 = sphi 0, %s830
      %s832 = sphi 0, %s830
      %s833 = sphi 0, %s832
      %s847 = sphi 0, %s833
      %s851 = sphi 0, %s851
      %s853 = sphi 0, %s851
      %s854 = sphi 0, %s853
      %s868 = sphi 0, %s854
      %s872 = sphi 0, %s872
      %s874 = sphi 0, %s872
      %s875 = sphi 0, %s874
      %s889 = sphi 0, %s875
      %s893 = sphi 0, %s893
      %s895 = sphi 0, %s893
      %s896 = sphi 0, %s895
      %s910 = sphi 0, %s896
      %s914 = sphi 0, %s914
      %s916 = sphi 0, %s914
      %s917 = sphi 0, %s916
      %s931 = sphi 0, %s917
      %s935 = sphi 0, %s935
      %s937 = sphi 0, %s935
      %s938 = sphi 0, %s937
      %s952 = sphi 0, %s938
      %s956 = sphi 0, %s956
      %s958 = sphi 0, %s956
      %s959 = sphi 0, %s958
      %s973 = sphi 0, %s959
      %s977 = sphi 0, %s977
      %s979 = sphi 0, %s977
      %s980 = sphi 0, %s979
      %s994 = sphi 0, %s980
      %s998 = sphi 0, %s998
      %s1000 = sphi 0, %s998
      %s1001 = sphi 0, %s1000
      %s1015 = sphi 0, %s1001
      %s1019 = sphi 0, %s1019
      %s1021 = sphi 0, %s1019
      %s1022 = sphi 0, %s1021
      %s1036 = sphi 0, %s1022
      %s1040 = sphi 0, %s1040
      %s1042 = sphi 0, %s1040
      %s1043 = sphi 0, %s1042
      %s1057 = sphi 0, %s1043
      %s1061 = sphi 0, %s1061
      %s1063 = sphi 0, %s1061
      %s1064 = sphi 0, %s1063
      %s1078 = sphi 0, %s1064
      %s1082 = sphi 0, %s1082
      %s1084 = sphi 0, %s1082
      %s1085 = sphi 0, %s1084
      %s1099 = sphi 0, %s1085
      %s1103 = sphi 0, %s1103
      %s1105 = sphi 0, %s1103
      %s1106 = sphi 0, %s1105
      %s1120 = sphi 0, %s1106
      %s1124 = sphi 0, %s1124
      %s1126 = sphi 0, %s1124
      %s1127 = sphi 0, %s1126
      %s1141 = sphi 0, %s1127
      %s1145 = sphi 0, %s1145
      %s1147 = sphi 0, %s1145
      %s1148 = sphi 0, %s1147
      %s1162 = sphi 0, %s1148
      %s1166 = sphi 0, %s1166
      %s1168 = sphi 0, %s1166
      %s1169 = sphi 0, %s1168
      %s1183 = sphi 0, %s1169
      %s1187 = sphi 0, %s1187
      %s1189 = sphi 0, %s1187
      %s1190 = sphi 0, %s1189
      %s1204 = sphi 0, %s1190
      %s1208 = sphi 0, %s1208
      %s1210 = sphi 0, %s1208
      %s1211 = sphi 0, %s1210
      %s1225 = sphi 0, %s1211
      %s1229 = sphi 0, %s1229
      %s1231 = sphi 0, %s1229
      %s1232 = sphi 0, %s1231
      %s1246 = sphi 0, %s1232
      %s1250 = sphi 0, %s1250
      %s1252 = sphi 0, %s1250
      %s1253 = sphi 0, %s1252
      %s1267 = sphi 0, %s1253
      %s1271 = sphi 0, %s1271
      %s1273 = sphi 0, %s1271
      %s1274 = sphi 0, %s1273
      %s1288 = sphi 0, %s1274
      %s1292 = sphi 0, %s1292
      %s1294 = sphi 0, %s1292
      %s1295 = sphi 0, %s1294
      %s1309 = sphi 0, %s1295
      %s1313 = sphi 0, %s1313
      %s1315 = sphi 0, %s1313
      %s1316 = sphi 0, %s1315
      %s1330 = sphi 0, %s1316
      %s1334 = sphi 0, %s1334
      %s1336 = sphi 0, %s1334
      %s1337 = sphi 0, %s1336
      %s1351 = sphi 0, %s1337
      %s1355 = sphi 0, %s1355
      %s1357 = sphi 0, %s1355
      %s1358 = sphi 0, %s1357
      %s1372 = sphi 0, %s1358
      %s1376 = sphi 0, %s1376
      %s1378 = sphi 0, %s1376
      %s1379 = sphi 0, %s1378
      %s1393 = sphi 0, %s1379
      %s1397 = sphi 0, %s1397
      %s1399 = sphi 0, %s1397
      %s1400 = sphi 0, %s1399
      %s1414 = sphi 0, %s1400
      %s1418 = sphi 0, %s1418
      %s1420 = sphi 0, %s1418
      %s1421 = sphi 0, %s1420
      %s1435 = sphi 0, %s1421
      %s1439 = sphi 0, %s1439
      %s1441 = sphi 0, %s1439
      %s1442 = sphi 0, %s1441
      %s1456 = sphi 0, %s1442
      %s1460 = sphi 0, %s1460
      %s1462 = sphi 0, %s1460
      %s1463 = sphi 0, %s1462
      %s1477 = sphi 0, %s1463
      %s1481 = sphi 0, %s1481
      %s1483 = sphi 0, %s1481
      %s1484 = sphi 0, %s1483
      %s1498 = sphi 0, %s1484
      %s1502 = sphi 0, %s1502
      %s1504 = sphi 0, %s1502
      %s1505 = sphi 0, %s1504
      %s1519 = sphi 0, %s1505
      %s1523 = sphi 0, %s1523
      %s1525 = sphi 0, %s1523
      %s1526 = sphi 0, %s1525
      %s1540 = sphi 0, %s1526
      %s1544 = sphi 0, %s1544
      %s1546 = sphi 0, %s1544
      %s1547 = sphi 0, %s1546
      %s1561 = sphi 0, %s1547
      %s1565 = sphi 0, %s1565
      %s1567 = sphi 0, %s1565
      %s1568 = sphi 0, %s1567
      %s1582 = sphi 0, %s1568
      %s1586 = sphi 0, %s1586
      %s1588 = sphi 0, %s1586
      %s1589 = sphi 0, %s1588
      %s1603 = sphi 0, %s1589
      %s1607 = sphi 0, %s1607
      %s1609 = sphi 0, %s1607
      %s1610 = sphi 0, %s1609
      %s1624 = sphi 0, %s1610
      %s1628 = sphi 0, %s1628
      %s1630 = sphi 0, %s1628
      %s1631 = sphi 0, %s1630
      %s1645 = sphi 0, %s1631
      %s1649 = sphi 0, %s1649
      %s1651 = sphi 0, %s1649
      %s1652 = sphi 0, %s1651
      %s1666 = sphi 0, %s1652
      %s1670 = sphi 0, %s1670
      %s1672 = sphi 0, %s1670
      %s1673 = sphi 0, %s1672
      %s1687 = sphi 0, %s1673
      %s1691 = sphi 0, %s1691
      %s1693 = sphi 0, %s1691
      %s1694 = sphi 0, %s1693
      %s1708 = sphi 0, %s1694
      %s1712 = sphi 0, %s1712
      %s1714 = sphi 0, %s1712
      %s1715 = sphi 0, %s1714
      %s1729 = sphi 0, %s1715
      %s1733 = sphi 0, %s1733
      %s1735 = sphi 0, %s1733
      %s1736 = sphi 0, %s1735
      %s1750 = sphi 0, %s1736
      %s1754 = sphi 0, %s1754
      %s1756 = sphi 0, %s1754
      %s1757 = sphi 0, %s1756
      %s1771 = sphi 0, %s1757
      %s1775 = sphi 0, %s1775
      %s1777 = sphi 0, %s1775
      %s1778 = sphi 0, %s1777
      %s1792 = sphi 0, %s1778
      %s1796 = sphi 0, %s1796
      %s1798 = sphi 0, %s1796
      %s1799 = sphi 0, %s1798
      %s1813 = sphi 0, %s1799
      %s1817 = sphi 0, %s1817
      %s1819 = sphi 0, %s1817
      %s1820 = sphi 0, %s1819
      %s1834 = sphi 0, %s1820
      %s1838 = sphi 0, %s1838
      %s1840 = sphi 0, %s1838
      %s1841 = sphi 0, %s1840
      %s1855 = sphi 0, %s1841
      %s1859 = sphi 0, %s1859
      %s1861 = sphi 0, %s1859
      %s1862 = sphi 0, %s1861
      %s1876 = sphi 0, %s1862
      %s1880 = sphi 0, %s1880
      %s1882 = sphi 0, %s1880
      %s1883 = sphi 0, %s1882
      %s1897 = sphi 0, %s1883
      %s1901 = sphi 0, %s1901
      %s1903 = sphi 0, %s1901
      %s1904 = sphi 0, %s1903
      %s1918 = sphi 0, %s1904
      %s1922 = sphi 0, %s1922
      %s1924 = sphi 0, %s1922
      %s1925 = sphi 0, %s1924
      %s1939 = sphi 0, %s1925
      %s1943 = sphi 0, %s1943
      %s1945 = sphi 0, %s1943
      %s1946 = sphi 0, %s1945
      %s1960 = sphi 0, %s1946
      %s1964 = sphi 0, %s1964
      %s1966 = sphi 0, %s1964
      %s1967 = sphi 0, %s1966
      %s1981 = sphi 0, %s1967
      %s1985 = sphi 0, %s1985
      %s1987 = sphi 0, %s1985
      %s1988 = sphi 0, %s1987
      %s2002 = sphi 0, %s1988
      %s2006 = sphi 0, %s2006
      %s2008 = sphi 0, %s2006
      %s2009 = sphi 0, %s2008
      %s2023 = sphi 0, %s2009
      %s2027 = sphi 0, %s2027
      %s2029 = sphi 0, %s2027
      %s2030 = sphi 0, %s2029
      %s2044 = sphi 0, %s2030
      %s2050 = sphi 0, %s2052
      %s2053 = sphi 0, %s2050
      %s2054 = sphi 0, %s2053
      %s2070 = sphi 0, %s2054
    $region4: #{hourglass_forward.1} parent=1 // loop_header_branch
      %190 = sbr.rel (%p188) target = $region8
    $region5: #{hourglass_forward.1} parent=1 // loop_body
      %s192 = ssub.s32 %s187, 1
      %s193 = ssub.s32 %s187, 2
      %s194 = sadd.s32 %s187, 1
      %s195 = ssub.s32 %s187, %s194
      %p196 = scmp.eq.s32.totalorder %s195, 0
      %s198 = sadd.s32 %s197, 1
      %s199 = scalar_select %p196, %s197, %s198
      %p202 = pneg %p196
      %p203 = scmp.eq.s32.totalorder %s187, 1
      %p204 = por %p202, %p203
      %p205 = scmp.ne.s32.totalorder %s197, %s200
      %p206 = scmp.eq.s32.totalorder %s187, 0
      %p207 = por %p205, %p206
      %p208 = scmp.ne.s32.totalorder %s197, %s200
      %p209 = scmp.eq.s32.totalorder %s192, 1
      %p210 = por %p208, %p209
      %p211 = scmp.ne.s32.totalorder %s200, %s201
      %p212 = scmp.eq.s32.totalorder %s192, 0
      %p213 = por %p211, %p212
      %p214 = scmp.ne.s32.totalorder %s200, %s201
      %p215 = scmp.eq.s32.totalorder %s193, 1
      %p216 = por %p214, %p215
      %p218 = scmp.ne.s32.totalorder %s201, %s217
      %p219 = scmp.eq.s32.totalorder %s193, 0
      %p220 = por %p218, %p219
      %s222 = sadd.s32 %s221, 1
      %p225 = scmp.eq.s32.totalorder %s187, 1
      %p226 = scmp.ne.s32.totalorder %s221, %s223
      %p227 = scmp.eq.s32.totalorder %s187, 0
      %p228 = por %p226, %p227
      %p229 = scmp.ne.s32.totalorder %s221, %s223
      %p230 = scmp.eq.s32.totalorder %s192, 1
      %p231 = por %p229, %p230
      %p232 = scmp.ne.s32.totalorder %s223, %s224
      %p233 = scmp.eq.s32.totalorder %s192, 0
      %p234 = por %p232, %p233
      %p235 = scmp.ne.s32.totalorder %s223, %s224
      %p236 = scmp.eq.s32.totalorder %s193, 1
      %p237 = por %p235, %p236
      %p239 = scmp.ne.s32.totalorder %s224, %s238
      %p240 = scmp.eq.s32.totalorder %s193, 0
      %p241 = por %p239, %p240
      %s243 = sadd.s32 %s242, 1
      %p246 = scmp.eq.s32.totalorder %s187, 1
      %p247 = scmp.ne.s32.totalorder %s242, %s244
      %p248 = scmp.eq.s32.totalorder %s187, 0
      %p249 = por %p247, %p248
      %p250 = scmp.ne.s32.totalorder %s242, %s244
      %p251 = scmp.eq.s32.totalorder %s192, 1
      %p252 = por %p250, %p251
      %p253 = scmp.ne.s32.totalorder %s244, %s245
      %p254 = scmp.eq.s32.totalorder %s192, 0
      %p255 = por %p253, %p254
      %p256 = scmp.ne.s32.totalorder %s244, %s245
      %p257 = scmp.eq.s32.totalorder %s193, 1
      %p258 = por %p256, %p257
      %p260 = scmp.ne.s32.totalorder %s245, %s259
      %p261 = scmp.eq.s32.totalorder %s193, 0
      %p262 = por %p260, %p261
      %s264 = sadd.s32 %s263, 1
      %p267 = scmp.eq.s32.totalorder %s187, 1
      %p268 = scmp.ne.s32.totalorder %s263, %s265
      %p269 = scmp.eq.s32.totalorder %s187, 0
      %p270 = por %p268, %p269
      %p271 = scmp.ne.s32.totalorder %s263, %s265
      %p272 = scmp.eq.s32.totalorder %s192, 1
      %p273 = por %p271, %p272
      %p274 = scmp.ne.s32.totalorder %s265, %s266
      %p275 = scmp.eq.s32.totalorder %s192, 0
      %p276 = por %p274, %p275
      %p277 = scmp.ne.s32.totalorder %s265, %s266
      %p278 = scmp.eq.s32.totalorder %s193, 1
      %p279 = por %p277, %p278
      %p281 = scmp.ne.s32.totalorder %s266, %s280
      %p282 = scmp.eq.s32.totalorder %s193, 0
      %p283 = por %p281, %p282
      %s285 = sadd.s32 %s284, 1
      %p288 = scmp.eq.s32.totalorder %s187, 1
      %p289 = scmp.ne.s32.totalorder %s284, %s286
      %p290 = scmp.eq.s32.totalorder %s187, 0
      %p291 = por %p289, %p290
      %p292 = scmp.ne.s32.totalorder %s284, %s286
      %p293 = scmp.eq.s32.totalorder %s192, 1
      %p294 = por %p292, %p293
      %p295 = scmp.ne.s32.totalorder %s286, %s287
      %p296 = scmp.eq.s32.totalorder %s192, 0
      %p297 = por %p295, %p296
      %p298 = scmp.ne.s32.totalorder %s286, %s287
      %p299 = scmp.eq.s32.totalorder %s193, 1
      %p300 = por %p298, %p299
      %p302 = scmp.ne.s32.totalorder %s287, %s301
      %p303 = scmp.eq.s32.totalorder %s193, 0
      %p304 = por %p302, %p303
      %s306 = sadd.s32 %s305, 1
      %p309 = scmp.eq.s32.totalorder %s187, 1
      %p310 = scmp.ne.s32.totalorder %s305, %s307
      %p311 = scmp.eq.s32.totalorder %s187, 0
      %p312 = por %p310, %p311
      %p313 = scmp.ne.s32.totalorder %s305, %s307
      %p314 = scmp.eq.s32.totalorder %s192, 1
      %p315 = por %p313, %p314
      %p316 = scmp.ne.s32.totalorder %s307, %s308
      %p317 = scmp.eq.s32.totalorder %s192, 0
      %p318 = por %p316, %p317
      %p319 = scmp.ne.s32.totalorder %s307, %s308
      %p320 = scmp.eq.s32.totalorder %s193, 1
      %p321 = por %p319, %p320
      %p323 = scmp.ne.s32.totalorder %s308, %s322
      %p324 = scmp.eq.s32.totalorder %s193, 0
      %p325 = por %p323, %p324
      %s327 = sadd.s32 %s326, 1
      %p330 = scmp.eq.s32.totalorder %s187, 1
      %p331 = scmp.ne.s32.totalorder %s326, %s328
      %p332 = scmp.eq.s32.totalorder %s187, 0
      %p333 = por %p331, %p332
      %p334 = scmp.ne.s32.totalorder %s326, %s328
      %p335 = scmp.eq.s32.totalorder %s192, 1
      %p336 = por %p334, %p335
      %p337 = scmp.ne.s32.totalorder %s328, %s329
      %p338 = scmp.eq.s32.totalorder %s192, 0
      %p339 = por %p337, %p338
      %p340 = scmp.ne.s32.totalorder %s328, %s329
      %p341 = scmp.eq.s32.totalorder %s193, 1
      %p342 = por %p340, %p341
      %p344 = scmp.ne.s32.totalorder %s329, %s343
      %p345 = scmp.eq.s32.totalorder %s193, 0
      %p346 = por %p344, %p345
      %s348 = sadd.s32 %s347, 1
      %p351 = scmp.eq.s32.totalorder %s187, 1
      %p352 = scmp.ne.s32.totalorder %s347, %s349
      %p353 = scmp.eq.s32.totalorder %s187, 0
      %p354 = por %p352, %p353
      %p355 = scmp.ne.s32.totalorder %s347, %s349
      %p356 = scmp.eq.s32.totalorder %s192, 1
      %p357 = por %p355, %p356
      %p358 = scmp.ne.s32.totalorder %s349, %s350
      %p359 = scmp.eq.s32.totalorder %s192, 0
      %p360 = por %p358, %p359
      %p361 = scmp.ne.s32.totalorder %s349, %s350
      %p362 = scmp.eq.s32.totalorder %s193, 1
      %p363 = por %p361, %p362
      %p365 = scmp.ne.s32.totalorder %s350, %s364
      %p366 = scmp.eq.s32.totalorder %s193, 0
      %p367 = por %p365, %p366
      %s369 = sadd.s32 %s368, 1
      %p372 = scmp.eq.s32.totalorder %s187, 1
      %p373 = scmp.ne.s32.totalorder %s368, %s370
      %p374 = scmp.eq.s32.totalorder %s187, 0
      %p375 = por %p373, %p374
      %p376 = scmp.ne.s32.totalorder %s368, %s370
      %p377 = scmp.eq.s32.totalorder %s192, 1
      %p378 = por %p376, %p377
      %p379 = scmp.ne.s32.totalorder %s370, %s371
      %p380 = scmp.eq.s32.totalorder %s192, 0
      %p381 = por %p379, %p380
      %p382 = scmp.ne.s32.totalorder %s370, %s371
      %p383 = scmp.eq.s32.totalorder %s193, 1
      %p384 = por %p382, %p383
      %p386 = scmp.ne.s32.totalorder %s371, %s385
      %p387 = scmp.eq.s32.totalorder %s193, 0
      %p388 = por %p386, %p387
      %s390 = sadd.s32 %s389, 1
      %p393 = scmp.eq.s32.totalorder %s187, 1
      %p394 = scmp.ne.s32.totalorder %s389, %s391
      %p395 = scmp.eq.s32.totalorder %s187, 0
      %p396 = por %p394, %p395
      %p397 = scmp.ne.s32.totalorder %s389, %s391
      %p398 = scmp.eq.s32.totalorder %s192, 1
      %p399 = por %p397, %p398
      %p400 = scmp.ne.s32.totalorder %s391, %s392
      %p401 = scmp.eq.s32.totalorder %s192, 0
      %p402 = por %p400, %p401
      %p403 = scmp.ne.s32.totalorder %s391, %s392
      %p404 = scmp.eq.s32.totalorder %s193, 1
      %p405 = por %p403, %p404
      %p407 = scmp.ne.s32.totalorder %s392, %s406
      %p408 = scmp.eq.s32.totalorder %s193, 0
      %p409 = por %p407, %p408
      %s411 = sadd.s32 %s410, 1
      %p414 = scmp.eq.s32.totalorder %s187, 1
      %p415 = scmp.ne.s32.totalorder %s410, %s412
      %p416 = scmp.eq.s32.totalorder %s187, 0
      %p417 = por %p415, %p416
      %p418 = scmp.ne.s32.totalorder %s410, %s412
      %p419 = scmp.eq.s32.totalorder %s192, 1
      %p420 = por %p418, %p419
      %p421 = scmp.ne.s32.totalorder %s412, %s413
      %p422 = scmp.eq.s32.totalorder %s192, 0
      %p423 = por %p421, %p422
      %p424 = scmp.ne.s32.totalorder %s412, %s413
      %p425 = scmp.eq.s32.totalorder %s193, 1
      %p426 = por %p424, %p425
      %p428 = scmp.ne.s32.totalorder %s413, %s427
      %p429 = scmp.eq.s32.totalorder %s193, 0
      %p430 = por %p428, %p429
      %s432 = sadd.s32 %s431, 1
      %p435 = scmp.eq.s32.totalorder %s187, 1
      %p436 = scmp.ne.s32.totalorder %s431, %s433
      %p437 = scmp.eq.s32.totalorder %s187, 0
      %p438 = por %p436, %p437
      %p439 = scmp.ne.s32.totalorder %s431, %s433
      %p440 = scmp.eq.s32.totalorder %s192, 1
      %p441 = por %p439, %p440
      %p442 = scmp.ne.s32.totalorder %s433, %s434
      %p443 = scmp.eq.s32.totalorder %s192, 0
      %p444 = por %p442, %p443
      %p445 = scmp.ne.s32.totalorder %s433, %s434
      %p446 = scmp.eq.s32.totalorder %s193, 1
      %p447 = por %p445, %p446
      %p449 = scmp.ne.s32.totalorder %s434, %s448
      %p450 = scmp.eq.s32.totalorder %s193, 0
      %p451 = por %p449, %p450
      %s453 = sadd.s32 %s452, 1
      %p456 = scmp.eq.s32.totalorder %s187, 1
      %p457 = scmp.ne.s32.totalorder %s452, %s454
      %p458 = scmp.eq.s32.totalorder %s187, 0
      %p459 = por %p457, %p458
      %p460 = scmp.ne.s32.totalorder %s452, %s454
      %p461 = scmp.eq.s32.totalorder %s192, 1
      %p462 = por %p460, %p461
      %p463 = scmp.ne.s32.totalorder %s454, %s455
      %p464 = scmp.eq.s32.totalorder %s192, 0
      %p465 = por %p463, %p464
      %p466 = scmp.ne.s32.totalorder %s454, %s455
      %p467 = scmp.eq.s32.totalorder %s193, 1
      %p468 = por %p466, %p467
      %p470 = scmp.ne.s32.totalorder %s455, %s469
      %p471 = scmp.eq.s32.totalorder %s193, 0
      %p472 = por %p470, %p471
      %s474 = sadd.s32 %s473, 1
      %p477 = scmp.eq.s32.totalorder %s187, 1
      %p478 = scmp.ne.s32.totalorder %s473, %s475
      %p479 = scmp.eq.s32.totalorder %s187, 0
      %p480 = por %p478, %p479
      %p481 = scmp.ne.s32.totalorder %s473, %s475
      %p482 = scmp.eq.s32.totalorder %s192, 1
      %p483 = por %p481, %p482
      %p484 = scmp.ne.s32.totalorder %s475, %s476
      %p485 = scmp.eq.s32.totalorder %s192, 0
      %p486 = por %p484, %p485
      %p487 = scmp.ne.s32.totalorder %s475, %s476
      %p488 = scmp.eq.s32.totalorder %s193, 1
      %p489 = por %p487, %p488
      %p491 = scmp.ne.s32.totalorder %s476, %s490
      %p492 = scmp.eq.s32.totalorder %s193, 0
      %p493 = por %p491, %p492
      %s495 = sadd.s32 %s494, 1
      %p498 = scmp.eq.s32.totalorder %s187, 1
      %p499 = scmp.ne.s32.totalorder %s494, %s496
      %p500 = scmp.eq.s32.totalorder %s187, 0
      %p501 = por %p499, %p500
      %p502 = scmp.ne.s32.totalorder %s494, %s496
      %p503 = scmp.eq.s32.totalorder %s192, 1
      %p504 = por %p502, %p503
      %p505 = scmp.ne.s32.totalorder %s496, %s497
      %p506 = scmp.eq.s32.totalorder %s192, 0
      %p507 = por %p505, %p506
      %p508 = scmp.ne.s32.totalorder %s496, %s497
      %p509 = scmp.eq.s32.totalorder %s193, 1
      %p510 = por %p508, %p509
      %p512 = scmp.ne.s32.totalorder %s497, %s511
      %p513 = scmp.eq.s32.totalorder %s193, 0
      %p514 = por %p512, %p513
      %s516 = sadd.s32 %s515, 1
      %p519 = scmp.eq.s32.totalorder %s187, 1
      %p520 = scmp.ne.s32.totalorder %s515, %s517
      %p521 = scmp.eq.s32.totalorder %s187, 0
      %p522 = por %p520, %p521
      %p523 = scmp.ne.s32.totalorder %s515, %s517
      %p524 = scmp.eq.s32.totalorder %s192, 1
      %p525 = por %p523, %p524
      %p526 = scmp.ne.s32.totalorder %s517, %s518
      %p527 = scmp.eq.s32.totalorder %s192, 0
      %p528 = por %p526, %p527
      %p529 = scmp.ne.s32.totalorder %s517, %s518
      %p530 = scmp.eq.s32.totalorder %s193, 1
      %p531 = por %p529, %p530
      %p533 = scmp.ne.s32.totalorder %s518, %s532
      %p534 = scmp.eq.s32.totalorder %s193, 0
      %p535 = por %p533, %p534
      %s537 = sadd.s32 %s536, 1
      %p540 = scmp.eq.s32.totalorder %s187, 1
      %p541 = scmp.ne.s32.totalorder %s536, %s538
      %p542 = scmp.eq.s32.totalorder %s187, 0
      %p543 = por %p541, %p542
      %p544 = scmp.ne.s32.totalorder %s536, %s538
      %p545 = scmp.eq.s32.totalorder %s192, 1
      %p546 = por %p544, %p545
      %p547 = scmp.ne.s32.totalorder %s538, %s539
      %p548 = scmp.eq.s32.totalorder %s192, 0
      %p549 = por %p547, %p548
      %p550 = scmp.ne.s32.totalorder %s538, %s539
      %p551 = scmp.eq.s32.totalorder %s193, 1
      %p552 = por %p550, %p551
      %p554 = scmp.ne.s32.totalorder %s539, %s553
      %p555 = scmp.eq.s32.totalorder %s193, 0
      %p556 = por %p554, %p555
      %s558 = sadd.s32 %s557, 1
      %p561 = scmp.eq.s32.totalorder %s187, 1
      %p562 = scmp.ne.s32.totalorder %s557, %s559
      %p563 = scmp.eq.s32.totalorder %s187, 0
      %p564 = por %p562, %p563
      %p565 = scmp.ne.s32.totalorder %s557, %s559
      %p566 = scmp.eq.s32.totalorder %s192, 1
      %p567 = por %p565, %p566
      %p568 = scmp.ne.s32.totalorder %s559, %s560
      %p569 = scmp.eq.s32.totalorder %s192, 0
      %p570 = por %p568, %p569
      %p571 = scmp.ne.s32.totalorder %s559, %s560
      %p572 = scmp.eq.s32.totalorder %s193, 1
      %p573 = por %p571, %p572
      %p575 = scmp.ne.s32.totalorder %s560, %s574
      %p576 = scmp.eq.s32.totalorder %s193, 0
      %p577 = por %p575, %p576
      %s579 = sadd.s32 %s578, 1
      %p582 = scmp.eq.s32.totalorder %s187, 1
      %p583 = scmp.ne.s32.totalorder %s578, %s580
      %p584 = scmp.eq.s32.totalorder %s187, 0
      %p585 = por %p583, %p584
      %p586 = scmp.ne.s32.totalorder %s578, %s580
      %p587 = scmp.eq.s32.totalorder %s192, 1
      %p588 = por %p586, %p587
      %p589 = scmp.ne.s32.totalorder %s580, %s581
      %p590 = scmp.eq.s32.totalorder %s192, 0
      %p591 = por %p589, %p590
      %p592 = scmp.ne.s32.totalorder %s580, %s581
      %p593 = scmp.eq.s32.totalorder %s193, 1
      %p594 = por %p592, %p593
      %p596 = scmp.ne.s32.totalorder %s581, %s595
      %p597 = scmp.eq.s32.totalorder %s193, 0
      %p598 = por %p596, %p597
      %s600 = sadd.s32 %s599, 1
      %p603 = scmp.eq.s32.totalorder %s187, 1
      %p604 = scmp.ne.s32.totalorder %s599, %s601
      %p605 = scmp.eq.s32.totalorder %s187, 0
      %p606 = por %p604, %p605
      %p607 = scmp.ne.s32.totalorder %s599, %s601
      %p608 = scmp.eq.s32.totalorder %s192, 1
      %p609 = por %p607, %p608
      %p610 = scmp.ne.s32.totalorder %s601, %s602
      %p611 = scmp.eq.s32.totalorder %s192, 0
      %p612 = por %p610, %p611
      %p613 = scmp.ne.s32.totalorder %s601, %s602
      %p614 = scmp.eq.s32.totalorder %s193, 1
      %p615 = por %p613, %p614
      %p617 = scmp.ne.s32.totalorder %s602, %s616
      %p618 = scmp.eq.s32.totalorder %s193, 0
      %p619 = por %p617, %p618
      %s621 = sadd.s32 %s620, 1
      %p624 = scmp.eq.s32.totalorder %s187, 1
      %p625 = scmp.ne.s32.totalorder %s620, %s622
      %p626 = scmp.eq.s32.totalorder %s187, 0
      %p627 = por %p625, %p626
      %p628 = scmp.ne.s32.totalorder %s620, %s622
      %p629 = scmp.eq.s32.totalorder %s192, 1
      %p630 = por %p628, %p629
      %p631 = scmp.ne.s32.totalorder %s622, %s623
      %p632 = scmp.eq.s32.totalorder %s192, 0
      %p633 = por %p631, %p632
      %p634 = scmp.ne.s32.totalorder %s622, %s623
      %p635 = scmp.eq.s32.totalorder %s193, 1
      %p636 = por %p634, %p635
      %p638 = scmp.ne.s32.totalorder %s623, %s637
      %p639 = scmp.eq.s32.totalorder %s193, 0
      %p640 = por %p638, %p639
      %s642 = sadd.s32 %s641, 1
      %p645 = scmp.eq.s32.totalorder %s187, 1
      %p646 = scmp.ne.s32.totalorder %s641, %s643
      %p647 = scmp.eq.s32.totalorder %s187, 0
      %p648 = por %p646, %p647
      %p649 = scmp.ne.s32.totalorder %s641, %s643
      %p650 = scmp.eq.s32.totalorder %s192, 1
      %p651 = por %p649, %p650
      %p652 = scmp.ne.s32.totalorder %s643, %s644
      %p653 = scmp.eq.s32.totalorder %s192, 0
      %p654 = por %p652, %p653
      %p655 = scmp.ne.s32.totalorder %s643, %s644
      %p656 = scmp.eq.s32.totalorder %s193, 1
      %p657 = por %p655, %p656
      %p659 = scmp.ne.s32.totalorder %s644, %s658
      %p660 = scmp.eq.s32.totalorder %s193, 0
      %p661 = por %p659, %p660
      %s663 = sadd.s32 %s662, 1
      %p666 = scmp.eq.s32.totalorder %s187, 1
      %p667 = scmp.ne.s32.totalorder %s662, %s664
      %p668 = scmp.eq.s32.totalorder %s187, 0
      %p669 = por %p667, %p668
      %p670 = scmp.ne.s32.totalorder %s662, %s664
      %p671 = scmp.eq.s32.totalorder %s192, 1
      %p672 = por %p670, %p671
      %p673 = scmp.ne.s32.totalorder %s664, %s665
      %p674 = scmp.eq.s32.totalorder %s192, 0
      %p675 = por %p673, %p674
      %p676 = scmp.ne.s32.totalorder %s664, %s665
      %p677 = scmp.eq.s32.totalorder %s193, 1
      %p678 = por %p676, %p677
      %p680 = scmp.ne.s32.totalorder %s665, %s679
      %p681 = scmp.eq.s32.totalorder %s193, 0
      %p682 = por %p680, %p681
      %s684 = sadd.s32 %s683, 1
      %p687 = scmp.eq.s32.totalorder %s187, 1
      %p688 = scmp.ne.s32.totalorder %s683, %s685
      %p689 = scmp.eq.s32.totalorder %s187, 0
      %p690 = por %p688, %p689
      %p691 = scmp.ne.s32.totalorder %s683, %s685
      %p692 = scmp.eq.s32.totalorder %s192, 1
      %p693 = por %p691, %p692
      %p694 = scmp.ne.s32.totalorder %s685, %s686
      %p695 = scmp.eq.s32.totalorder %s192, 0
      %p696 = por %p694, %p695
      %p697 = scmp.ne.s32.totalorder %s685, %s686
      %p698 = scmp.eq.s32.totalorder %s193, 1
      %p699 = por %p697, %p698
      %p701 = scmp.ne.s32.totalorder %s686, %s700
      %p702 = scmp.eq.s32.totalorder %s193, 0
      %p703 = por %p701, %p702
      %s705 = sadd.s32 %s704, 1
      %p708 = scmp.eq.s32.totalorder %s187, 1
      %p709 = scmp.ne.s32.totalorder %s704, %s706
      %p710 = scmp.eq.s32.totalorder %s187, 0
      %p711 = por %p709, %p710
      %p712 = scmp.ne.s32.totalorder %s704, %s706
      %p713 = scmp.eq.s32.totalorder %s192, 1
      %p714 = por %p712, %p713
      %p715 = scmp.ne.s32.totalorder %s706, %s707
      %p716 = scmp.eq.s32.totalorder %s192, 0
      %p717 = por %p715, %p716
      %p718 = scmp.ne.s32.totalorder %s706, %s707
      %p719 = scmp.eq.s32.totalorder %s193, 1
      %p720 = por %p718, %p719
      %p722 = scmp.ne.s32.totalorder %s707, %s721
      %p723 = scmp.eq.s32.totalorder %s193, 0
      %p724 = por %p722, %p723
      %s726 = sadd.s32 %s725, 1
      %p729 = scmp.eq.s32.totalorder %s187, 1
      %p730 = scmp.ne.s32.totalorder %s725, %s727
      %p731 = scmp.eq.s32.totalorder %s187, 0
      %p732 = por %p730, %p731
      %p733 = scmp.ne.s32.totalorder %s725, %s727
      %p734 = scmp.eq.s32.totalorder %s192, 1
      %p735 = por %p733, %p734
      %p736 = scmp.ne.s32.totalorder %s727, %s728
      %p737 = scmp.eq.s32.totalorder %s192, 0
      %p738 = por %p736, %p737
      %p739 = scmp.ne.s32.totalorder %s727, %s728
      %p740 = scmp.eq.s32.totalorder %s193, 1
      %p741 = por %p739, %p740
      %p743 = scmp.ne.s32.totalorder %s728, %s742
      %p744 = scmp.eq.s32.totalorder %s193, 0
      %p745 = por %p743, %p744
      %s747 = sadd.s32 %s746, 1
      %p750 = scmp.eq.s32.totalorder %s187, 1
      %p751 = scmp.ne.s32.totalorder %s746, %s748
      %p752 = scmp.eq.s32.totalorder %s187, 0
      %p753 = por %p751, %p752
      %p754 = scmp.ne.s32.totalorder %s746, %s748
      %p755 = scmp.eq.s32.totalorder %s192, 1
      %p756 = por %p754, %p755
      %p757 = scmp.ne.s32.totalorder %s748, %s749
      %p758 = scmp.eq.s32.totalorder %s192, 0
      %p759 = por %p757, %p758
      %p760 = scmp.ne.s32.totalorder %s748, %s749
      %p761 = scmp.eq.s32.totalorder %s193, 1
      %p762 = por %p760, %p761
      %p764 = scmp.ne.s32.totalorder %s749, %s763
      %p765 = scmp.eq.s32.totalorder %s193, 0
      %p766 = por %p764, %p765
      %s768 = sadd.s32 %s767, 1
      %p771 = scmp.eq.s32.totalorder %s187, 1
      %p772 = scmp.ne.s32.totalorder %s767, %s769
      %p773 = scmp.eq.s32.totalorder %s187, 0
      %p774 = por %p772, %p773
      %p775 = scmp.ne.s32.totalorder %s767, %s769
      %p776 = scmp.eq.s32.totalorder %s192, 1
      %p777 = por %p775, %p776
      %p778 = scmp.ne.s32.totalorder %s769, %s770
      %p779 = scmp.eq.s32.totalorder %s192, 0
      %p780 = por %p778, %p779
      %p781 = scmp.ne.s32.totalorder %s769, %s770
      %p782 = scmp.eq.s32.totalorder %s193, 1
      %p783 = por %p781, %p782
      %p785 = scmp.ne.s32.totalorder %s770, %s784
      %p786 = scmp.eq.s32.totalorder %s193, 0
      %p787 = por %p785, %p786
      %s789 = sadd.s32 %s788, 1
      %p792 = scmp.eq.s32.totalorder %s187, 1
      %p793 = scmp.ne.s32.totalorder %s788, %s790
      %p794 = scmp.eq.s32.totalorder %s187, 0
      %p795 = por %p793, %p794
      %p796 = scmp.ne.s32.totalorder %s788, %s790
      %p797 = scmp.eq.s32.totalorder %s192, 1
      %p798 = por %p796, %p797
      %p799 = scmp.ne.s32.totalorder %s790, %s791
      %p800 = scmp.eq.s32.totalorder %s192, 0
      %p801 = por %p799, %p800
      %p802 = scmp.ne.s32.totalorder %s790, %s791
      %p803 = scmp.eq.s32.totalorder %s193, 1
      %p804 = por %p802, %p803
      %p806 = scmp.ne.s32.totalorder %s791, %s805
      %p807 = scmp.eq.s32.totalorder %s193, 0
      %p808 = por %p806, %p807
      %s810 = sadd.s32 %s809, 1
      %p813 = scmp.eq.s32.totalorder %s187, 1
      %p814 = scmp.ne.s32.totalorder %s809, %s811
      %p815 = scmp.eq.s32.totalorder %s187, 0
      %p816 = por %p814, %p815
      %p817 = scmp.ne.s32.totalorder %s809, %s811
      %p818 = scmp.eq.s32.totalorder %s192, 1
      %p819 = por %p817, %p818
      %p820 = scmp.ne.s32.totalorder %s811, %s812
      %p821 = scmp.eq.s32.totalorder %s192, 0
      %p822 = por %p820, %p821
      %p823 = scmp.ne.s32.totalorder %s811, %s812
      %p824 = scmp.eq.s32.totalorder %s193, 1
      %p825 = por %p823, %p824
      %p827 = scmp.ne.s32.totalorder %s812, %s826
      %p828 = scmp.eq.s32.totalorder %s193, 0
      %p829 = por %p827, %p828
      %s831 = sadd.s32 %s830, 1
      %p834 = scmp.eq.s32.totalorder %s187, 1
      %p835 = scmp.ne.s32.totalorder %s830, %s832
      %p836 = scmp.eq.s32.totalorder %s187, 0
      %p837 = por %p835, %p836
      %p838 = scmp.ne.s32.totalorder %s830, %s832
      %p839 = scmp.eq.s32.totalorder %s192, 1
      %p840 = por %p838, %p839
      %p841 = scmp.ne.s32.totalorder %s832, %s833
      %p842 = scmp.eq.s32.totalorder %s192, 0
      %p843 = por %p841, %p842
      %p844 = scmp.ne.s32.totalorder %s832, %s833
      %p845 = scmp.eq.s32.totalorder %s193, 1
      %p846 = por %p844, %p845
      %p848 = scmp.ne.s32.totalorder %s833, %s847
      %p849 = scmp.eq.s32.totalorder %s193, 0
      %p850 = por %p848, %p849
      %s852 = sadd.s32 %s851, 1
      %p855 = scmp.eq.s32.totalorder %s187, 1
      %p856 = scmp.ne.s32.totalorder %s851, %s853
      %p857 = scmp.eq.s32.totalorder %s187, 0
      %p858 = por %p856, %p857
      %p859 = scmp.ne.s32.totalorder %s851, %s853
      %p860 = scmp.eq.s32.totalorder %s192, 1
      %p861 = por %p859, %p860
      %p862 = scmp.ne.s32.totalorder %s853, %s854
      %p863 = scmp.eq.s32.totalorder %s192, 0
      %p864 = por %p862, %p863
      %p865 = scmp.ne.s32.totalorder %s853, %s854
      %p866 = scmp.eq.s32.totalorder %s193, 1
      %p867 = por %p865, %p866
      %p869 = scmp.ne.s32.totalorder %s854, %s868
      %p870 = scmp.eq.s32.totalorder %s193, 0
      %p871 = por %p869, %p870
      %s873 = sadd.s32 %s872, 1
      %p876 = scmp.eq.s32.totalorder %s187, 1
      %p877 = scmp.ne.s32.totalorder %s872, %s874
      %p878 = scmp.eq.s32.totalorder %s187, 0
      %p879 = por %p877, %p878
      %p880 = scmp.ne.s32.totalorder %s872, %s874
      %p881 = scmp.eq.s32.totalorder %s192, 1
      %p882 = por %p880, %p881
      %p883 = scmp.ne.s32.totalorder %s874, %s875
      %p884 = scmp.eq.s32.totalorder %s192, 0
      %p885 = por %p883, %p884
      %p886 = scmp.ne.s32.totalorder %s874, %s875
      %p887 = scmp.eq.s32.totalorder %s193, 1
      %p888 = por %p886, %p887
      %p890 = scmp.ne.s32.totalorder %s875, %s889
      %p891 = scmp.eq.s32.totalorder %s193, 0
      %p892 = por %p890, %p891
      %s894 = sadd.s32 %s893, 1
      %p897 = scmp.eq.s32.totalorder %s187, 1
      %p898 = scmp.ne.s32.totalorder %s893, %s895
      %p899 = scmp.eq.s32.totalorder %s187, 0
      %p900 = por %p898, %p899
      %p901 = scmp.ne.s32.totalorder %s893, %s895
      %p902 = scmp.eq.s32.totalorder %s192, 1
      %p903 = por %p901, %p902
      %p904 = scmp.ne.s32.totalorder %s895, %s896
      %p905 = scmp.eq.s32.totalorder %s192, 0
      %p906 = por %p904, %p905
      %p907 = scmp.ne.s32.totalorder %s895, %s896
      %p908 = scmp.eq.s32.totalorder %s193, 1
      %p909 = por %p907, %p908
      %p911 = scmp.ne.s32.totalorder %s896, %s910
      %p912 = scmp.eq.s32.totalorder %s193, 0
      %p913 = por %p911, %p912
      %s915 = sadd.s32 %s914, 1
      %p918 = scmp.eq.s32.totalorder %s187, 1
      %p919 = scmp.ne.s32.totalorder %s914, %s916
      %p920 = scmp.eq.s32.totalorder %s187, 0
      %p921 = por %p919, %p920
      %p922 = scmp.ne.s32.totalorder %s914, %s916
      %p923 = scmp.eq.s32.totalorder %s192, 1
      %p924 = por %p922, %p923
      %p925 = scmp.ne.s32.totalorder %s916, %s917
      %p926 = scmp.eq.s32.totalorder %s192, 0
      %p927 = por %p925, %p926
      %p928 = scmp.ne.s32.totalorder %s916, %s917
      %p929 = scmp.eq.s32.totalorder %s193, 1
      %p930 = por %p928, %p929
      %p932 = scmp.ne.s32.totalorder %s917, %s931
      %p933 = scmp.eq.s32.totalorder %s193, 0
      %p934 = por %p932, %p933
      %s936 = sadd.s32 %s935, 1
      %p939 = scmp.eq.s32.totalorder %s187, 1
      %p940 = scmp.ne.s32.totalorder %s935, %s937
      %p941 = scmp.eq.s32.totalorder %s187, 0
      %p942 = por %p940, %p941
      %p943 = scmp.ne.s32.totalorder %s935, %s937
      %p944 = scmp.eq.s32.totalorder %s192, 1
      %p945 = por %p943, %p944
      %p946 = scmp.ne.s32.totalorder %s937, %s938
      %p947 = scmp.eq.s32.totalorder %s192, 0
      %p948 = por %p946, %p947
      %p949 = scmp.ne.s32.totalorder %s937, %s938
      %p950 = scmp.eq.s32.totalorder %s193, 1
      %p951 = por %p949, %p950
      %p953 = scmp.ne.s32.totalorder %s938, %s952
      %p954 = scmp.eq.s32.totalorder %s193, 0
      %p955 = por %p953, %p954
      %s957 = sadd.s32 %s956, 1
      %p960 = scmp.eq.s32.totalorder %s187, 1
      %p961 = scmp.ne.s32.totalorder %s956, %s958
      %p962 = scmp.eq.s32.totalorder %s187, 0
      %p963 = por %p961, %p962
      %p964 = scmp.ne.s32.totalorder %s956, %s958
      %p965 = scmp.eq.s32.totalorder %s192, 1
      %p966 = por %p964, %p965
      %p967 = scmp.ne.s32.totalorder %s958, %s959
      %p968 = scmp.eq.s32.totalorder %s192, 0
      %p969 = por %p967, %p968
      %p970 = scmp.ne.s32.totalorder %s958, %s959
      %p971 = scmp.eq.s32.totalorder %s193, 1
      %p972 = por %p970, %p971
      %p974 = scmp.ne.s32.totalorder %s959, %s973
      %p975 = scmp.eq.s32.totalorder %s193, 0
      %p976 = por %p974, %p975
      %s978 = sadd.s32 %s977, 1
      %p981 = scmp.eq.s32.totalorder %s187, 1
      %p982 = scmp.ne.s32.totalorder %s977, %s979
      %p983 = scmp.eq.s32.totalorder %s187, 0
      %p984 = por %p982, %p983
      %p985 = scmp.ne.s32.totalorder %s977, %s979
      %p986 = scmp.eq.s32.totalorder %s192, 1
      %p987 = por %p985, %p986
      %p988 = scmp.ne.s32.totalorder %s979, %s980
      %p989 = scmp.eq.s32.totalorder %s192, 0
      %p990 = por %p988, %p989
      %p991 = scmp.ne.s32.totalorder %s979, %s980
      %p992 = scmp.eq.s32.totalorder %s193, 1
      %p993 = por %p991, %p992
      %p995 = scmp.ne.s32.totalorder %s980, %s994
      %p996 = scmp.eq.s32.totalorder %s193, 0
      %p997 = por %p995, %p996
      %s999 = sadd.s32 %s998, 1
      %p1002 = scmp.eq.s32.totalorder %s187, 1
      %p1003 = scmp.ne.s32.totalorder %s998, %s1000
      %p1004 = scmp.eq.s32.totalorder %s187, 0
      %p1005 = por %p1003, %p1004
      %p1006 = scmp.ne.s32.totalorder %s998, %s1000
      %p1007 = scmp.eq.s32.totalorder %s192, 1
      %p1008 = por %p1006, %p1007
      %p1009 = scmp.ne.s32.totalorder %s1000, %s1001
      %p1010 = scmp.eq.s32.totalorder %s192, 0
      %p1011 = por %p1009, %p1010
      %p1012 = scmp.ne.s32.totalorder %s1000, %s1001
      %p1013 = scmp.eq.s32.totalorder %s193, 1
      %p1014 = por %p1012, %p1013
      %p1016 = scmp.ne.s32.totalorder %s1001, %s1015
      %p1017 = scmp.eq.s32.totalorder %s193, 0
      %p1018 = por %p1016, %p1017
      %s1020 = sadd.s32 %s1019, 1
      %p1023 = scmp.eq.s32.totalorder %s187, 1
      %p1024 = scmp.ne.s32.totalorder %s1019, %s1021
      %p1025 = scmp.eq.s32.totalorder %s187, 0
      %p1026 = por %p1024, %p1025
      %p1027 = scmp.ne.s32.totalorder %s1019, %s1021
      %p1028 = scmp.eq.s32.totalorder %s192, 1
      %p1029 = por %p1027, %p1028
      %p1030 = scmp.ne.s32.totalorder %s1021, %s1022
      %p1031 = scmp.eq.s32.totalorder %s192, 0
      %p1032 = por %p1030, %p1031
      %p1033 = scmp.ne.s32.totalorder %s1021, %s1022
      %p1034 = scmp.eq.s32.totalorder %s193, 1
      %p1035 = por %p1033, %p1034
      %p1037 = scmp.ne.s32.totalorder %s1022, %s1036
      %p1038 = scmp.eq.s32.totalorder %s193, 0
      %p1039 = por %p1037, %p1038
      %s1041 = sadd.s32 %s1040, 1
      %p1044 = scmp.eq.s32.totalorder %s187, 1
      %p1045 = scmp.ne.s32.totalorder %s1040, %s1042
      %p1046 = scmp.eq.s32.totalorder %s187, 0
      %p1047 = por %p1045, %p1046
      %p1048 = scmp.ne.s32.totalorder %s1040, %s1042
      %p1049 = scmp.eq.s32.totalorder %s192, 1
      %p1050 = por %p1048, %p1049
      %p1051 = scmp.ne.s32.totalorder %s1042, %s1043
      %p1052 = scmp.eq.s32.totalorder %s192, 0
      %p1053 = por %p1051, %p1052
      %p1054 = scmp.ne.s32.totalorder %s1042, %s1043
      %p1055 = scmp.eq.s32.totalorder %s193, 1
      %p1056 = por %p1054, %p1055
      %p1058 = scmp.ne.s32.totalorder %s1043, %s1057
      %p1059 = scmp.eq.s32.totalorder %s193, 0
      %p1060 = por %p1058, %p1059
      %s1062 = sadd.s32 %s1061, 1
      %p1065 = scmp.eq.s32.totalorder %s187, 1
      %p1066 = scmp.ne.s32.totalorder %s1061, %s1063
      %p1067 = scmp.eq.s32.totalorder %s187, 0
      %p1068 = por %p1066, %p1067
      %p1069 = scmp.ne.s32.totalorder %s1061, %s1063
      %p1070 = scmp.eq.s32.totalorder %s192, 1
      %p1071 = por %p1069, %p1070
      %p1072 = scmp.ne.s32.totalorder %s1063, %s1064
      %p1073 = scmp.eq.s32.totalorder %s192, 0
      %p1074 = por %p1072, %p1073
      %p1075 = scmp.ne.s32.totalorder %s1063, %s1064
      %p1076 = scmp.eq.s32.totalorder %s193, 1
      %p1077 = por %p1075, %p1076
      %p1079 = scmp.ne.s32.totalorder %s1064, %s1078
      %p1080 = scmp.eq.s32.totalorder %s193, 0
      %p1081 = por %p1079, %p1080
      %s1083 = sadd.s32 %s1082, 1
      %p1086 = scmp.eq.s32.totalorder %s187, 1
      %p1087 = scmp.ne.s32.totalorder %s1082, %s1084
      %p1088 = scmp.eq.s32.totalorder %s187, 0
      %p1089 = por %p1087, %p1088
      %p1090 = scmp.ne.s32.totalorder %s1082, %s1084
      %p1091 = scmp.eq.s32.totalorder %s192, 1
      %p1092 = por %p1090, %p1091
      %p1093 = scmp.ne.s32.totalorder %s1084, %s1085
      %p1094 = scmp.eq.s32.totalorder %s192, 0
      %p1095 = por %p1093, %p1094
      %p1096 = scmp.ne.s32.totalorder %s1084, %s1085
      %p1097 = scmp.eq.s32.totalorder %s193, 1
      %p1098 = por %p1096, %p1097
      %p1100 = scmp.ne.s32.totalorder %s1085, %s1099
      %p1101 = scmp.eq.s32.totalorder %s193, 0
      %p1102 = por %p1100, %p1101
      %s1104 = sadd.s32 %s1103, 1
      %p1107 = scmp.eq.s32.totalorder %s187, 1
      %p1108 = scmp.ne.s32.totalorder %s1103, %s1105
      %p1109 = scmp.eq.s32.totalorder %s187, 0
      %p1110 = por %p1108, %p1109
      %p1111 = scmp.ne.s32.totalorder %s1103, %s1105
      %p1112 = scmp.eq.s32.totalorder %s192, 1
      %p1113 = por %p1111, %p1112
      %p1114 = scmp.ne.s32.totalorder %s1105, %s1106
      %p1115 = scmp.eq.s32.totalorder %s192, 0
      %p1116 = por %p1114, %p1115
      %p1117 = scmp.ne.s32.totalorder %s1105, %s1106
      %p1118 = scmp.eq.s32.totalorder %s193, 1
      %p1119 = por %p1117, %p1118
      %p1121 = scmp.ne.s32.totalorder %s1106, %s1120
      %p1122 = scmp.eq.s32.totalorder %s193, 0
      %p1123 = por %p1121, %p1122
      %s1125 = sadd.s32 %s1124, 1
      %p1128 = scmp.eq.s32.totalorder %s187, 1
      %p1129 = scmp.ne.s32.totalorder %s1124, %s1126
      %p1130 = scmp.eq.s32.totalorder %s187, 0
      %p1131 = por %p1129, %p1130
      %p1132 = scmp.ne.s32.totalorder %s1124, %s1126
      %p1133 = scmp.eq.s32.totalorder %s192, 1
      %p1134 = por %p1132, %p1133
      %p1135 = scmp.ne.s32.totalorder %s1126, %s1127
      %p1136 = scmp.eq.s32.totalorder %s192, 0
      %p1137 = por %p1135, %p1136
      %p1138 = scmp.ne.s32.totalorder %s1126, %s1127
      %p1139 = scmp.eq.s32.totalorder %s193, 1
      %p1140 = por %p1138, %p1139
      %p1142 = scmp.ne.s32.totalorder %s1127, %s1141
      %p1143 = scmp.eq.s32.totalorder %s193, 0
      %p1144 = por %p1142, %p1143
      %s1146 = sadd.s32 %s1145, 1
      %p1149 = scmp.eq.s32.totalorder %s187, 1
      %p1150 = scmp.ne.s32.totalorder %s1145, %s1147
      %p1151 = scmp.eq.s32.totalorder %s187, 0
      %p1152 = por %p1150, %p1151
      %p1153 = scmp.ne.s32.totalorder %s1145, %s1147
      %p1154 = scmp.eq.s32.totalorder %s192, 1
      %p1155 = por %p1153, %p1154
      %p1156 = scmp.ne.s32.totalorder %s1147, %s1148
      %p1157 = scmp.eq.s32.totalorder %s192, 0
      %p1158 = por %p1156, %p1157
      %p1159 = scmp.ne.s32.totalorder %s1147, %s1148
      %p1160 = scmp.eq.s32.totalorder %s193, 1
      %p1161 = por %p1159, %p1160
      %p1163 = scmp.ne.s32.totalorder %s1148, %s1162
      %p1164 = scmp.eq.s32.totalorder %s193, 0
      %p1165 = por %p1163, %p1164
      %s1167 = sadd.s32 %s1166, 1
      %p1170 = scmp.eq.s32.totalorder %s187, 1
      %p1171 = scmp.ne.s32.totalorder %s1166, %s1168
      %p1172 = scmp.eq.s32.totalorder %s187, 0
      %p1173 = por %p1171, %p1172
      %p1174 = scmp.ne.s32.totalorder %s1166, %s1168
      %p1175 = scmp.eq.s32.totalorder %s192, 1
      %p1176 = por %p1174, %p1175
      %p1177 = scmp.ne.s32.totalorder %s1168, %s1169
      %p1178 = scmp.eq.s32.totalorder %s192, 0
      %p1179 = por %p1177, %p1178
      %p1180 = scmp.ne.s32.totalorder %s1168, %s1169
      %p1181 = scmp.eq.s32.totalorder %s193, 1
      %p1182 = por %p1180, %p1181
      %p1184 = scmp.ne.s32.totalorder %s1169, %s1183
      %p1185 = scmp.eq.s32.totalorder %s193, 0
      %p1186 = por %p1184, %p1185
      %s1188 = sadd.s32 %s1187, 1
      %p1191 = scmp.eq.s32.totalorder %s187, 1
      %p1192 = scmp.ne.s32.totalorder %s1187, %s1189
      %p1193 = scmp.eq.s32.totalorder %s187, 0
      %p1194 = por %p1192, %p1193
      %p1195 = scmp.ne.s32.totalorder %s1187, %s1189
      %p1196 = scmp.eq.s32.totalorder %s192, 1
      %p1197 = por %p1195, %p1196
      %p1198 = scmp.ne.s32.totalorder %s1189, %s1190
      %p1199 = scmp.eq.s32.totalorder %s192, 0
      %p1200 = por %p1198, %p1199
      %p1201 = scmp.ne.s32.totalorder %s1189, %s1190
      %p1202 = scmp.eq.s32.totalorder %s193, 1
      %p1203 = por %p1201, %p1202
      %p1205 = scmp.ne.s32.totalorder %s1190, %s1204
      %p1206 = scmp.eq.s32.totalorder %s193, 0
      %p1207 = por %p1205, %p1206
      %s1209 = sadd.s32 %s1208, 1
      %p1212 = scmp.eq.s32.totalorder %s187, 1
      %p1213 = scmp.ne.s32.totalorder %s1208, %s1210
      %p1214 = scmp.eq.s32.totalorder %s187, 0
      %p1215 = por %p1213, %p1214
      %p1216 = scmp.ne.s32.totalorder %s1208, %s1210
      %p1217 = scmp.eq.s32.totalorder %s192, 1
      %p1218 = por %p1216, %p1217
      %p1219 = scmp.ne.s32.totalorder %s1210, %s1211
      %p1220 = scmp.eq.s32.totalorder %s192, 0
      %p1221 = por %p1219, %p1220
      %p1222 = scmp.ne.s32.totalorder %s1210, %s1211
      %p1223 = scmp.eq.s32.totalorder %s193, 1
      %p1224 = por %p1222, %p1223
      %p1226 = scmp.ne.s32.totalorder %s1211, %s1225
      %p1227 = scmp.eq.s32.totalorder %s193, 0
      %p1228 = por %p1226, %p1227
      %s1230 = sadd.s32 %s1229, 1
      %p1233 = scmp.eq.s32.totalorder %s187, 1
      %p1234 = scmp.ne.s32.totalorder %s1229, %s1231
      %p1235 = scmp.eq.s32.totalorder %s187, 0
      %p1236 = por %p1234, %p1235
      %p1237 = scmp.ne.s32.totalorder %s1229, %s1231
      %p1238 = scmp.eq.s32.totalorder %s192, 1
      %p1239 = por %p1237, %p1238
      %p1240 = scmp.ne.s32.totalorder %s1231, %s1232
      %p1241 = scmp.eq.s32.totalorder %s192, 0
      %p1242 = por %p1240, %p1241
      %p1243 = scmp.ne.s32.totalorder %s1231, %s1232
      %p1244 = scmp.eq.s32.totalorder %s193, 1
      %p1245 = por %p1243, %p1244
      %p1247 = scmp.ne.s32.totalorder %s1232, %s1246
      %p1248 = scmp.eq.s32.totalorder %s193, 0
      %p1249 = por %p1247, %p1248
      %s1251 = sadd.s32 %s1250, 1
      %p1254 = scmp.eq.s32.totalorder %s187, 1
      %p1255 = scmp.ne.s32.totalorder %s1250, %s1252
      %p1256 = scmp.eq.s32.totalorder %s187, 0
      %p1257 = por %p1255, %p1256
      %p1258 = scmp.ne.s32.totalorder %s1250, %s1252
      %p1259 = scmp.eq.s32.totalorder %s192, 1
      %p1260 = por %p1258, %p1259
      %p1261 = scmp.ne.s32.totalorder %s1252, %s1253
      %p1262 = scmp.eq.s32.totalorder %s192, 0
      %p1263 = por %p1261, %p1262
      %p1264 = scmp.ne.s32.totalorder %s1252, %s1253
      %p1265 = scmp.eq.s32.totalorder %s193, 1
      %p1266 = por %p1264, %p1265
      %p1268 = scmp.ne.s32.totalorder %s1253, %s1267
      %p1269 = scmp.eq.s32.totalorder %s193, 0
      %p1270 = por %p1268, %p1269
      %s1272 = sadd.s32 %s1271, 1
      %p1275 = scmp.eq.s32.totalorder %s187, 1
      %p1276 = scmp.ne.s32.totalorder %s1271, %s1273
      %p1277 = scmp.eq.s32.totalorder %s187, 0
      %p1278 = por %p1276, %p1277
      %p1279 = scmp.ne.s32.totalorder %s1271, %s1273
      %p1280 = scmp.eq.s32.totalorder %s192, 1
      %p1281 = por %p1279, %p1280
      %p1282 = scmp.ne.s32.totalorder %s1273, %s1274
      %p1283 = scmp.eq.s32.totalorder %s192, 0
      %p1284 = por %p1282, %p1283
      %p1285 = scmp.ne.s32.totalorder %s1273, %s1274
      %p1286 = scmp.eq.s32.totalorder %s193, 1
      %p1287 = por %p1285, %p1286
      %p1289 = scmp.ne.s32.totalorder %s1274, %s1288
      %p1290 = scmp.eq.s32.totalorder %s193, 0
      %p1291 = por %p1289, %p1290
      %s1293 = sadd.s32 %s1292, 1
      %p1296 = scmp.eq.s32.totalorder %s187, 1
      %p1297 = scmp.ne.s32.totalorder %s1292, %s1294
      %p1298 = scmp.eq.s32.totalorder %s187, 0
      %p1299 = por %p1297, %p1298
      %p1300 = scmp.ne.s32.totalorder %s1292, %s1294
      %p1301 = scmp.eq.s32.totalorder %s192, 1
      %p1302 = por %p1300, %p1301
      %p1303 = scmp.ne.s32.totalorder %s1294, %s1295
      %p1304 = scmp.eq.s32.totalorder %s192, 0
      %p1305 = por %p1303, %p1304
      %p1306 = scmp.ne.s32.totalorder %s1294, %s1295
      %p1307 = scmp.eq.s32.totalorder %s193, 1
      %p1308 = por %p1306, %p1307
      %p1310 = scmp.ne.s32.totalorder %s1295, %s1309
      %p1311 = scmp.eq.s32.totalorder %s193, 0
      %p1312 = por %p1310, %p1311
      %s1314 = sadd.s32 %s1313, 1
      %p1317 = scmp.eq.s32.totalorder %s187, 1
      %p1318 = scmp.ne.s32.totalorder %s1313, %s1315
      %p1319 = scmp.eq.s32.totalorder %s187, 0
      %p1320 = por %p1318, %p1319
      %p1321 = scmp.ne.s32.totalorder %s1313, %s1315
      %p1322 = scmp.eq.s32.totalorder %s192, 1
      %p1323 = por %p1321, %p1322
      %p1324 = scmp.ne.s32.totalorder %s1315, %s1316
      %p1325 = scmp.eq.s32.totalorder %s192, 0
      %p1326 = por %p1324, %p1325
      %p1327 = scmp.ne.s32.totalorder %s1315, %s1316
      %p1328 = scmp.eq.s32.totalorder %s193, 1
      %p1329 = por %p1327, %p1328
      %p1331 = scmp.ne.s32.totalorder %s1316, %s1330
      %p1332 = scmp.eq.s32.totalorder %s193, 0
      %p1333 = por %p1331, %p1332
      %s1335 = sadd.s32 %s1334, 1
      %p1338 = scmp.eq.s32.totalorder %s187, 1
      %p1339 = scmp.ne.s32.totalorder %s1334, %s1336
      %p1340 = scmp.eq.s32.totalorder %s187, 0
      %p1341 = por %p1339, %p1340
      %p1342 = scmp.ne.s32.totalorder %s1334, %s1336
      %p1343 = scmp.eq.s32.totalorder %s192, 1
      %p1344 = por %p1342, %p1343
      %p1345 = scmp.ne.s32.totalorder %s1336, %s1337
      %p1346 = scmp.eq.s32.totalorder %s192, 0
      %p1347 = por %p1345, %p1346
      %p1348 = scmp.ne.s32.totalorder %s1336, %s1337
      %p1349 = scmp.eq.s32.totalorder %s193, 1
      %p1350 = por %p1348, %p1349
      %p1352 = scmp.ne.s32.totalorder %s1337, %s1351
      %p1353 = scmp.eq.s32.totalorder %s193, 0
      %p1354 = por %p1352, %p1353
      %s1356 = sadd.s32 %s1355, 1
      %p1359 = scmp.eq.s32.totalorder %s187, 1
      %p1360 = scmp.ne.s32.totalorder %s1355, %s1357
      %p1361 = scmp.eq.s32.totalorder %s187, 0
      %p1362 = por %p1360, %p1361
      %p1363 = scmp.ne.s32.totalorder %s1355, %s1357
      %p1364 = scmp.eq.s32.totalorder %s192, 1
      %p1365 = por %p1363, %p1364
      %p1366 = scmp.ne.s32.totalorder %s1357, %s1358
      %p1367 = scmp.eq.s32.totalorder %s192, 0
      %p1368 = por %p1366, %p1367
      %p1369 = scmp.ne.s32.totalorder %s1357, %s1358
      %p1370 = scmp.eq.s32.totalorder %s193, 1
      %p1371 = por %p1369, %p1370
      %p1373 = scmp.ne.s32.totalorder %s1358, %s1372
      %p1374 = scmp.eq.s32.totalorder %s193, 0
      %p1375 = por %p1373, %p1374
      %s1377 = sadd.s32 %s1376, 1
      %p1380 = scmp.eq.s32.totalorder %s187, 1
      %p1381 = scmp.ne.s32.totalorder %s1376, %s1378
      %p1382 = scmp.eq.s32.totalorder %s187, 0
      %p1383 = por %p1381, %p1382
      %p1384 = scmp.ne.s32.totalorder %s1376, %s1378
      %p1385 = scmp.eq.s32.totalorder %s192, 1
      %p1386 = por %p1384, %p1385
      %p1387 = scmp.ne.s32.totalorder %s1378, %s1379
      %p1388 = scmp.eq.s32.totalorder %s192, 0
      %p1389 = por %p1387, %p1388
      %p1390 = scmp.ne.s32.totalorder %s1378, %s1379
      %p1391 = scmp.eq.s32.totalorder %s193, 1
      %p1392 = por %p1390, %p1391
      %p1394 = scmp.ne.s32.totalorder %s1379, %s1393
      %p1395 = scmp.eq.s32.totalorder %s193, 0
      %p1396 = por %p1394, %p1395
      %s1398 = sadd.s32 %s1397, 1
      %p1401 = scmp.eq.s32.totalorder %s187, 1
      %p1402 = scmp.ne.s32.totalorder %s1397, %s1399
      %p1403 = scmp.eq.s32.totalorder %s187, 0
      %p1404 = por %p1402, %p1403
      %p1405 = scmp.ne.s32.totalorder %s1397, %s1399
      %p1406 = scmp.eq.s32.totalorder %s192, 1
      %p1407 = por %p1405, %p1406
      %p1408 = scmp.ne.s32.totalorder %s1399, %s1400
      %p1409 = scmp.eq.s32.totalorder %s192, 0
      %p1410 = por %p1408, %p1409
      %p1411 = scmp.ne.s32.totalorder %s1399, %s1400
      %p1412 = scmp.eq.s32.totalorder %s193, 1
      %p1413 = por %p1411, %p1412
      %p1415 = scmp.ne.s32.totalorder %s1400, %s1414
      %p1416 = scmp.eq.s32.totalorder %s193, 0
      %p1417 = por %p1415, %p1416
      %s1419 = sadd.s32 %s1418, 1
      %p1422 = scmp.eq.s32.totalorder %s187, 1
      %p1423 = scmp.ne.s32.totalorder %s1418, %s1420
      %p1424 = scmp.eq.s32.totalorder %s187, 0
      %p1425 = por %p1423, %p1424
      %p1426 = scmp.ne.s32.totalorder %s1418, %s1420
      %p1427 = scmp.eq.s32.totalorder %s192, 1
      %p1428 = por %p1426, %p1427
      %p1429 = scmp.ne.s32.totalorder %s1420, %s1421
      %p1430 = scmp.eq.s32.totalorder %s192, 0
      %p1431 = por %p1429, %p1430
      %p1432 = scmp.ne.s32.totalorder %s1420, %s1421
      %p1433 = scmp.eq.s32.totalorder %s193, 1
      %p1434 = por %p1432, %p1433
      %p1436 = scmp.ne.s32.totalorder %s1421, %s1435
      %p1437 = scmp.eq.s32.totalorder %s193, 0
      %p1438 = por %p1436, %p1437
      %s1440 = sadd.s32 %s1439, 1
      %p1443 = scmp.eq.s32.totalorder %s187, 1
      %p1444 = scmp.ne.s32.totalorder %s1439, %s1441
      %p1445 = scmp.eq.s32.totalorder %s187, 0
      %p1446 = por %p1444, %p1445
      %p1447 = scmp.ne.s32.totalorder %s1439, %s1441
      %p1448 = scmp.eq.s32.totalorder %s192, 1
      %p1449 = por %p1447, %p1448
      %p1450 = scmp.ne.s32.totalorder %s1441, %s1442
      %p1451 = scmp.eq.s32.totalorder %s192, 0
      %p1452 = por %p1450, %p1451
      %p1453 = scmp.ne.s32.totalorder %s1441, %s1442
      %p1454 = scmp.eq.s32.totalorder %s193, 1
      %p1455 = por %p1453, %p1454
      %p1457 = scmp.ne.s32.totalorder %s1442, %s1456
      %p1458 = scmp.eq.s32.totalorder %s193, 0
      %p1459 = por %p1457, %p1458
      %s1461 = sadd.s32 %s1460, 1
      %p1464 = scmp.eq.s32.totalorder %s187, 1
      %p1465 = scmp.ne.s32.totalorder %s1460, %s1462
      %p1466 = scmp.eq.s32.totalorder %s187, 0
      %p1467 = por %p1465, %p1466
      %p1468 = scmp.ne.s32.totalorder %s1460, %s1462
      %p1469 = scmp.eq.s32.totalorder %s192, 1
      %p1470 = por %p1468, %p1469
      %p1471 = scmp.ne.s32.totalorder %s1462, %s1463
      %p1472 = scmp.eq.s32.totalorder %s192, 0
      %p1473 = por %p1471, %p1472
      %p1474 = scmp.ne.s32.totalorder %s1462, %s1463
      %p1475 = scmp.eq.s32.totalorder %s193, 1
      %p1476 = por %p1474, %p1475
      %p1478 = scmp.ne.s32.totalorder %s1463, %s1477
      %p1479 = scmp.eq.s32.totalorder %s193, 0
      %p1480 = por %p1478, %p1479
      %s1482 = sadd.s32 %s1481, 1
      %p1485 = scmp.eq.s32.totalorder %s187, 1
      %p1486 = scmp.ne.s32.totalorder %s1481, %s1483
      %p1487 = scmp.eq.s32.totalorder %s187, 0
      %p1488 = por %p1486, %p1487
      %p1489 = scmp.ne.s32.totalorder %s1481, %s1483
      %p1490 = scmp.eq.s32.totalorder %s192, 1
      %p1491 = por %p1489, %p1490
      %p1492 = scmp.ne.s32.totalorder %s1483, %s1484
      %p1493 = scmp.eq.s32.totalorder %s192, 0
      %p1494 = por %p1492, %p1493
      %p1495 = scmp.ne.s32.totalorder %s1483, %s1484
      %p1496 = scmp.eq.s32.totalorder %s193, 1
      %p1497 = por %p1495, %p1496
      %p1499 = scmp.ne.s32.totalorder %s1484, %s1498
      %p1500 = scmp.eq.s32.totalorder %s193, 0
      %p1501 = por %p1499, %p1500
      %s1503 = sadd.s32 %s1502, 1
      %p1506 = scmp.eq.s32.totalorder %s187, 1
      %p1507 = scmp.ne.s32.totalorder %s1502, %s1504
      %p1508 = scmp.eq.s32.totalorder %s187, 0
      %p1509 = por %p1507, %p1508
      %p1510 = scmp.ne.s32.totalorder %s1502, %s1504
      %p1511 = scmp.eq.s32.totalorder %s192, 1
      %p1512 = por %p1510, %p1511
      %p1513 = scmp.ne.s32.totalorder %s1504, %s1505
      %p1514 = scmp.eq.s32.totalorder %s192, 0
      %p1515 = por %p1513, %p1514
      %p1516 = scmp.ne.s32.totalorder %s1504, %s1505
      %p1517 = scmp.eq.s32.totalorder %s193, 1
      %p1518 = por %p1516, %p1517
      %p1520 = scmp.ne.s32.totalorder %s1505, %s1519
      %p1521 = scmp.eq.s32.totalorder %s193, 0
      %p1522 = por %p1520, %p1521
      %s1524 = sadd.s32 %s1523, 1
      %p1527 = scmp.eq.s32.totalorder %s187, 1
      %p1528 = scmp.ne.s32.totalorder %s1523, %s1525
      %p1529 = scmp.eq.s32.totalorder %s187, 0
      %p1530 = por %p1528, %p1529
      %p1531 = scmp.ne.s32.totalorder %s1523, %s1525
      %p1532 = scmp.eq.s32.totalorder %s192, 1
      %p1533 = por %p1531, %p1532
      %p1534 = scmp.ne.s32.totalorder %s1525, %s1526
      %p1535 = scmp.eq.s32.totalorder %s192, 0
      %p1536 = por %p1534, %p1535
      %p1537 = scmp.ne.s32.totalorder %s1525, %s1526
      %p1538 = scmp.eq.s32.totalorder %s193, 1
      %p1539 = por %p1537, %p1538
      %p1541 = scmp.ne.s32.totalorder %s1526, %s1540
      %p1542 = scmp.eq.s32.totalorder %s193, 0
      %p1543 = por %p1541, %p1542
      %s1545 = sadd.s32 %s1544, 1
      %p1548 = scmp.eq.s32.totalorder %s187, 1
      %p1549 = scmp.ne.s32.totalorder %s1544, %s1546
      %p1550 = scmp.eq.s32.totalorder %s187, 0
      %p1551 = por %p1549, %p1550
      %p1552 = scmp.ne.s32.totalorder %s1544, %s1546
      %p1553 = scmp.eq.s32.totalorder %s192, 1
      %p1554 = por %p1552, %p1553
      %p1555 = scmp.ne.s32.totalorder %s1546, %s1547
      %p1556 = scmp.eq.s32.totalorder %s192, 0
      %p1557 = por %p1555, %p1556
      %p1558 = scmp.ne.s32.totalorder %s1546, %s1547
      %p1559 = scmp.eq.s32.totalorder %s193, 1
      %p1560 = por %p1558, %p1559
      %p1562 = scmp.ne.s32.totalorder %s1547, %s1561
      %p1563 = scmp.eq.s32.totalorder %s193, 0
      %p1564 = por %p1562, %p1563
      %s1566 = sadd.s32 %s1565, 1
      %p1569 = scmp.eq.s32.totalorder %s187, 1
      %p1570 = scmp.ne.s32.totalorder %s1565, %s1567
      %p1571 = scmp.eq.s32.totalorder %s187, 0
      %p1572 = por %p1570, %p1571
      %p1573 = scmp.ne.s32.totalorder %s1565, %s1567
      %p1574 = scmp.eq.s32.totalorder %s192, 1
      %p1575 = por %p1573, %p1574
      %p1576 = scmp.ne.s32.totalorder %s1567, %s1568
      %p1577 = scmp.eq.s32.totalorder %s192, 0
      %p1578 = por %p1576, %p1577
      %p1579 = scmp.ne.s32.totalorder %s1567, %s1568
      %p1580 = scmp.eq.s32.totalorder %s193, 1
      %p1581 = por %p1579, %p1580
      %p1583 = scmp.ne.s32.totalorder %s1568, %s1582
      %p1584 = scmp.eq.s32.totalorder %s193, 0
      %p1585 = por %p1583, %p1584
      %s1587 = sadd.s32 %s1586, 1
      %p1590 = scmp.eq.s32.totalorder %s187, 1
      %p1591 = scmp.ne.s32.totalorder %s1586, %s1588
      %p1592 = scmp.eq.s32.totalorder %s187, 0
      %p1593 = por %p1591, %p1592
      %p1594 = scmp.ne.s32.totalorder %s1586, %s1588
      %p1595 = scmp.eq.s32.totalorder %s192, 1
      %p1596 = por %p1594, %p1595
      %p1597 = scmp.ne.s32.totalorder %s1588, %s1589
      %p1598 = scmp.eq.s32.totalorder %s192, 0
      %p1599 = por %p1597, %p1598
      %p1600 = scmp.ne.s32.totalorder %s1588, %s1589
      %p1601 = scmp.eq.s32.totalorder %s193, 1
      %p1602 = por %p1600, %p1601
      %p1604 = scmp.ne.s32.totalorder %s1589, %s1603
      %p1605 = scmp.eq.s32.totalorder %s193, 0
      %p1606 = por %p1604, %p1605
      %s1608 = sadd.s32 %s1607, 1
      %p1611 = scmp.eq.s32.totalorder %s187, 1
      %p1612 = scmp.ne.s32.totalorder %s1607, %s1609
      %p1613 = scmp.eq.s32.totalorder %s187, 0
      %p1614 = por %p1612, %p1613
      %p1615 = scmp.ne.s32.totalorder %s1607, %s1609
      %p1616 = scmp.eq.s32.totalorder %s192, 1
      %p1617 = por %p1615, %p1616
      %p1618 = scmp.ne.s32.totalorder %s1609, %s1610
      %p1619 = scmp.eq.s32.totalorder %s192, 0
      %p1620 = por %p1618, %p1619
      %p1621 = scmp.ne.s32.totalorder %s1609, %s1610
      %p1622 = scmp.eq.s32.totalorder %s193, 1
      %p1623 = por %p1621, %p1622
      %p1625 = scmp.ne.s32.totalorder %s1610, %s1624
      %p1626 = scmp.eq.s32.totalorder %s193, 0
      %p1627 = por %p1625, %p1626
      %s1629 = sadd.s32 %s1628, 1
      %p1632 = scmp.eq.s32.totalorder %s187, 1
      %p1633 = scmp.ne.s32.totalorder %s1628, %s1630
      %p1634 = scmp.eq.s32.totalorder %s187, 0
      %p1635 = por %p1633, %p1634
      %p1636 = scmp.ne.s32.totalorder %s1628, %s1630
      %p1637 = scmp.eq.s32.totalorder %s192, 1
      %p1638 = por %p1636, %p1637
      %p1639 = scmp.ne.s32.totalorder %s1630, %s1631
      %p1640 = scmp.eq.s32.totalorder %s192, 0
      %p1641 = por %p1639, %p1640
      %p1642 = scmp.ne.s32.totalorder %s1630, %s1631
      %p1643 = scmp.eq.s32.totalorder %s193, 1
      %p1644 = por %p1642, %p1643
      %p1646 = scmp.ne.s32.totalorder %s1631, %s1645
      %p1647 = scmp.eq.s32.totalorder %s193, 0
      %p1648 = por %p1646, %p1647
      %s1650 = sadd.s32 %s1649, 1
      %p1653 = scmp.eq.s32.totalorder %s187, 1
      %p1654 = scmp.ne.s32.totalorder %s1649, %s1651
      %p1655 = scmp.eq.s32.totalorder %s187, 0
      %p1656 = por %p1654, %p1655
      %p1657 = scmp.ne.s32.totalorder %s1649, %s1651
      %p1658 = scmp.eq.s32.totalorder %s192, 1
      %p1659 = por %p1657, %p1658
      %p1660 = scmp.ne.s32.totalorder %s1651, %s1652
      %p1661 = scmp.eq.s32.totalorder %s192, 0
      %p1662 = por %p1660, %p1661
      %p1663 = scmp.ne.s32.totalorder %s1651, %s1652
      %p1664 = scmp.eq.s32.totalorder %s193, 1
      %p1665 = por %p1663, %p1664
      %p1667 = scmp.ne.s32.totalorder %s1652, %s1666
      %p1668 = scmp.eq.s32.totalorder %s193, 0
      %p1669 = por %p1667, %p1668
      %s1671 = sadd.s32 %s1670, 1
      %p1674 = scmp.eq.s32.totalorder %s187, 1
      %p1675 = scmp.ne.s32.totalorder %s1670, %s1672
      %p1676 = scmp.eq.s32.totalorder %s187, 0
      %p1677 = por %p1675, %p1676
      %p1678 = scmp.ne.s32.totalorder %s1670, %s1672
      %p1679 = scmp.eq.s32.totalorder %s192, 1
      %p1680 = por %p1678, %p1679
      %p1681 = scmp.ne.s32.totalorder %s1672, %s1673
      %p1682 = scmp.eq.s32.totalorder %s192, 0
      %p1683 = por %p1681, %p1682
      %p1684 = scmp.ne.s32.totalorder %s1672, %s1673
      %p1685 = scmp.eq.s32.totalorder %s193, 1
      %p1686 = por %p1684, %p1685
      %p1688 = scmp.ne.s32.totalorder %s1673, %s1687
      %p1689 = scmp.eq.s32.totalorder %s193, 0
      %p1690 = por %p1688, %p1689
      %s1692 = sadd.s32 %s1691, 1
      %p1695 = scmp.eq.s32.totalorder %s187, 1
      %p1696 = scmp.ne.s32.totalorder %s1691, %s1693
      %p1697 = scmp.eq.s32.totalorder %s187, 0
      %p1698 = por %p1696, %p1697
      %p1699 = scmp.ne.s32.totalorder %s1691, %s1693
      %p1700 = scmp.eq.s32.totalorder %s192, 1
      %p1701 = por %p1699, %p1700
      %p1702 = scmp.ne.s32.totalorder %s1693, %s1694
      %p1703 = scmp.eq.s32.totalorder %s192, 0
      %p1704 = por %p1702, %p1703
      %p1705 = scmp.ne.s32.totalorder %s1693, %s1694
      %p1706 = scmp.eq.s32.totalorder %s193, 1
      %p1707 = por %p1705, %p1706
      %p1709 = scmp.ne.s32.totalorder %s1694, %s1708
      %p1710 = scmp.eq.s32.totalorder %s193, 0
      %p1711 = por %p1709, %p1710
      %s1713 = sadd.s32 %s1712, 1
      %p1716 = scmp.eq.s32.totalorder %s187, 1
      %p1717 = scmp.ne.s32.totalorder %s1712, %s1714
      %p1718 = scmp.eq.s32.totalorder %s187, 0
      %p1719 = por %p1717, %p1718
      %p1720 = scmp.ne.s32.totalorder %s1712, %s1714
      %p1721 = scmp.eq.s32.totalorder %s192, 1
      %p1722 = por %p1720, %p1721
      %p1723 = scmp.ne.s32.totalorder %s1714, %s1715
      %p1724 = scmp.eq.s32.totalorder %s192, 0
      %p1725 = por %p1723, %p1724
      %p1726 = scmp.ne.s32.totalorder %s1714, %s1715
      %p1727 = scmp.eq.s32.totalorder %s193, 1
      %p1728 = por %p1726, %p1727
      %p1730 = scmp.ne.s32.totalorder %s1715, %s1729
      %p1731 = scmp.eq.s32.totalorder %s193, 0
      %p1732 = por %p1730, %p1731
      %s1734 = sadd.s32 %s1733, 1
      %p1737 = scmp.eq.s32.totalorder %s187, 1
      %p1738 = scmp.ne.s32.totalorder %s1733, %s1735
      %p1739 = scmp.eq.s32.totalorder %s187, 0
      %p1740 = por %p1738, %p1739
      %p1741 = scmp.ne.s32.totalorder %s1733, %s1735
      %p1742 = scmp.eq.s32.totalorder %s192, 1
      %p1743 = por %p1741, %p1742
      %p1744 = scmp.ne.s32.totalorder %s1735, %s1736
      %p1745 = scmp.eq.s32.totalorder %s192, 0
      %p1746 = por %p1744, %p1745
      %p1747 = scmp.ne.s32.totalorder %s1735, %s1736
      %p1748 = scmp.eq.s32.totalorder %s193, 1
      %p1749 = por %p1747, %p1748
      %p1751 = scmp.ne.s32.totalorder %s1736, %s1750
      %p1752 = scmp.eq.s32.totalorder %s193, 0
      %p1753 = por %p1751, %p1752
      %s1755 = sadd.s32 %s1754, 1
      %p1758 = scmp.eq.s32.totalorder %s187, 1
      %p1759 = scmp.ne.s32.totalorder %s1754, %s1756
      %p1760 = scmp.eq.s32.totalorder %s187, 0
      %p1761 = por %p1759, %p1760
      %p1762 = scmp.ne.s32.totalorder %s1754, %s1756
      %p1763 = scmp.eq.s32.totalorder %s192, 1
      %p1764 = por %p1762, %p1763
      %p1765 = scmp.ne.s32.totalorder %s1756, %s1757
      %p1766 = scmp.eq.s32.totalorder %s192, 0
      %p1767 = por %p1765, %p1766
      %p1768 = scmp.ne.s32.totalorder %s1756, %s1757
      %p1769 = scmp.eq.s32.totalorder %s193, 1
      %p1770 = por %p1768, %p1769
      %p1772 = scmp.ne.s32.totalorder %s1757, %s1771
      %p1773 = scmp.eq.s32.totalorder %s193, 0
      %p1774 = por %p1772, %p1773
      %s1776 = sadd.s32 %s1775, 1
      %p1779 = scmp.eq.s32.totalorder %s187, 1
      %p1780 = scmp.ne.s32.totalorder %s1775, %s1777
      %p1781 = scmp.eq.s32.totalorder %s187, 0
      %p1782 = por %p1780, %p1781
      %p1783 = scmp.ne.s32.totalorder %s1775, %s1777
      %p1784 = scmp.eq.s32.totalorder %s192, 1
      %p1785 = por %p1783, %p1784
      %p1786 = scmp.ne.s32.totalorder %s1777, %s1778
      %p1787 = scmp.eq.s32.totalorder %s192, 0
      %p1788 = por %p1786, %p1787
      %p1789 = scmp.ne.s32.totalorder %s1777, %s1778
      %p1790 = scmp.eq.s32.totalorder %s193, 1
      %p1791 = por %p1789, %p1790
      %p1793 = scmp.ne.s32.totalorder %s1778, %s1792
      %p1794 = scmp.eq.s32.totalorder %s193, 0
      %p1795 = por %p1793, %p1794
      %s1797 = sadd.s32 %s1796, 1
      %p1800 = scmp.eq.s32.totalorder %s187, 1
      %p1801 = scmp.ne.s32.totalorder %s1796, %s1798
      %p1802 = scmp.eq.s32.totalorder %s187, 0
      %p1803 = por %p1801, %p1802
      %p1804 = scmp.ne.s32.totalorder %s1796, %s1798
      %p1805 = scmp.eq.s32.totalorder %s192, 1
      %p1806 = por %p1804, %p1805
      %p1807 = scmp.ne.s32.totalorder %s1798, %s1799
      %p1808 = scmp.eq.s32.totalorder %s192, 0
      %p1809 = por %p1807, %p1808
      %p1810 = scmp.ne.s32.totalorder %s1798, %s1799
      %p1811 = scmp.eq.s32.totalorder %s193, 1
      %p1812 = por %p1810, %p1811
      %p1814 = scmp.ne.s32.totalorder %s1799, %s1813
      %p1815 = scmp.eq.s32.totalorder %s193, 0
      %p1816 = por %p1814, %p1815
      %s1818 = sadd.s32 %s1817, 1
      %p1821 = scmp.eq.s32.totalorder %s187, 1
      %p1822 = scmp.ne.s32.totalorder %s1817, %s1819
      %p1823 = scmp.eq.s32.totalorder %s187, 0
      %p1824 = por %p1822, %p1823
      %p1825 = scmp.ne.s32.totalorder %s1817, %s1819
      %p1826 = scmp.eq.s32.totalorder %s192, 1
      %p1827 = por %p1825, %p1826
      %p1828 = scmp.ne.s32.totalorder %s1819, %s1820
      %p1829 = scmp.eq.s32.totalorder %s192, 0
      %p1830 = por %p1828, %p1829
      %p1831 = scmp.ne.s32.totalorder %s1819, %s1820
      %p1832 = scmp.eq.s32.totalorder %s193, 1
      %p1833 = por %p1831, %p1832
      %p1835 = scmp.ne.s32.totalorder %s1820, %s1834
      %p1836 = scmp.eq.s32.totalorder %s193, 0
      %p1837 = por %p1835, %p1836
      %s1839 = sadd.s32 %s1838, 1
      %p1842 = scmp.eq.s32.totalorder %s187, 1
      %p1843 = scmp.ne.s32.totalorder %s1838, %s1840
      %p1844 = scmp.eq.s32.totalorder %s187, 0
      %p1845 = por %p1843, %p1844
      %p1846 = scmp.ne.s32.totalorder %s1838, %s1840
      %p1847 = scmp.eq.s32.totalorder %s192, 1
      %p1848 = por %p1846, %p1847
      %p1849 = scmp.ne.s32.totalorder %s1840, %s1841
      %p1850 = scmp.eq.s32.totalorder %s192, 0
      %p1851 = por %p1849, %p1850
      %p1852 = scmp.ne.s32.totalorder %s1840, %s1841
      %p1853 = scmp.eq.s32.totalorder %s193, 1
      %p1854 = por %p1852, %p1853
      %p1856 = scmp.ne.s32.totalorder %s1841, %s1855
      %p1857 = scmp.eq.s32.totalorder %s193, 0
      %p1858 = por %p1856, %p1857
      %s1860 = sadd.s32 %s1859, 1
      %p1863 = scmp.eq.s32.totalorder %s187, 1
      %p1864 = scmp.ne.s32.totalorder %s1859, %s1861
      %p1865 = scmp.eq.s32.totalorder %s187, 0
      %p1866 = por %p1864, %p1865
      %p1867 = scmp.ne.s32.totalorder %s1859, %s1861
      %p1868 = scmp.eq.s32.totalorder %s192, 1
      %p1869 = por %p1867, %p1868
      %p1870 = scmp.ne.s32.totalorder %s1861, %s1862
      %p1871 = scmp.eq.s32.totalorder %s192, 0
      %p1872 = por %p1870, %p1871
      %p1873 = scmp.ne.s32.totalorder %s1861, %s1862
      %p1874 = scmp.eq.s32.totalorder %s193, 1
      %p1875 = por %p1873, %p1874
      %p1877 = scmp.ne.s32.totalorder %s1862, %s1876
      %p1878 = scmp.eq.s32.totalorder %s193, 0
      %p1879 = por %p1877, %p1878
      %s1881 = sadd.s32 %s1880, 1
      %p1884 = scmp.eq.s32.totalorder %s187, 1
      %p1885 = scmp.ne.s32.totalorder %s1880, %s1882
      %p1886 = scmp.eq.s32.totalorder %s187, 0
      %p1887 = por %p1885, %p1886
      %p1888 = scmp.ne.s32.totalorder %s1880, %s1882
      %p1889 = scmp.eq.s32.totalorder %s192, 1
      %p1890 = por %p1888, %p1889
      %p1891 = scmp.ne.s32.totalorder %s1882, %s1883
      %p1892 = scmp.eq.s32.totalorder %s192, 0
      %p1893 = por %p1891, %p1892
      %p1894 = scmp.ne.s32.totalorder %s1882, %s1883
      %p1895 = scmp.eq.s32.totalorder %s193, 1
      %p1896 = por %p1894, %p1895
      %p1898 = scmp.ne.s32.totalorder %s1883, %s1897
      %p1899 = scmp.eq.s32.totalorder %s193, 0
      %p1900 = por %p1898, %p1899
      %s1902 = sadd.s32 %s1901, 1
      %p1905 = scmp.eq.s32.totalorder %s187, 1
      %p1906 = scmp.ne.s32.totalorder %s1901, %s1903
      %p1907 = scmp.eq.s32.totalorder %s187, 0
      %p1908 = por %p1906, %p1907
      %p1909 = scmp.ne.s32.totalorder %s1901, %s1903
      %p1910 = scmp.eq.s32.totalorder %s192, 1
      %p1911 = por %p1909, %p1910
      %p1912 = scmp.ne.s32.totalorder %s1903, %s1904
      %p1913 = scmp.eq.s32.totalorder %s192, 0
      %p1914 = por %p1912, %p1913
      %p1915 = scmp.ne.s32.totalorder %s1903, %s1904
      %p1916 = scmp.eq.s32.totalorder %s193, 1
      %p1917 = por %p1915, %p1916
      %p1919 = scmp.ne.s32.totalorder %s1904, %s1918
      %p1920 = scmp.eq.s32.totalorder %s193, 0
      %p1921 = por %p1919, %p1920
      %s1923 = sadd.s32 %s1922, 1
      %p1926 = scmp.eq.s32.totalorder %s187, 1
      %p1927 = scmp.ne.s32.totalorder %s1922, %s1924
      %p1928 = scmp.eq.s32.totalorder %s187, 0
      %p1929 = por %p1927, %p1928
      %p1930 = scmp.ne.s32.totalorder %s1922, %s1924
      %p1931 = scmp.eq.s32.totalorder %s192, 1
      %p1932 = por %p1930, %p1931
      %p1933 = scmp.ne.s32.totalorder %s1924, %s1925
      %p1934 = scmp.eq.s32.totalorder %s192, 0
      %p1935 = por %p1933, %p1934
      %p1936 = scmp.ne.s32.totalorder %s1924, %s1925
      %p1937 = scmp.eq.s32.totalorder %s193, 1
      %p1938 = por %p1936, %p1937
      %p1940 = scmp.ne.s32.totalorder %s1925, %s1939
      %p1941 = scmp.eq.s32.totalorder %s193, 0
      %p1942 = por %p1940, %p1941
      %s1944 = sadd.s32 %s1943, 1
      %p1947 = scmp.eq.s32.totalorder %s187, 1
      %p1948 = scmp.ne.s32.totalorder %s1943, %s1945
      %p1949 = scmp.eq.s32.totalorder %s187, 0
      %p1950 = por %p1948, %p1949
      %p1951 = scmp.ne.s32.totalorder %s1943, %s1945
      %p1952 = scmp.eq.s32.totalorder %s192, 1
      %p1953 = por %p1951, %p1952
      %p1954 = scmp.ne.s32.totalorder %s1945, %s1946
      %p1955 = scmp.eq.s32.totalorder %s192, 0
      %p1956 = por %p1954, %p1955
      %p1957 = scmp.ne.s32.totalorder %s1945, %s1946
      %p1958 = scmp.eq.s32.totalorder %s193, 1
      %p1959 = por %p1957, %p1958
      %p1961 = scmp.ne.s32.totalorder %s1946, %s1960
      %p1962 = scmp.eq.s32.totalorder %s193, 0
      %p1963 = por %p1961, %p1962
      %s1965 = sadd.s32 %s1964, 1
      %p1968 = scmp.eq.s32.totalorder %s187, 1
      %p1969 = scmp.ne.s32.totalorder %s1964, %s1966
      %p1970 = scmp.eq.s32.totalorder %s187, 0
      %p1971 = por %p1969, %p1970
      %p1972 = scmp.ne.s32.totalorder %s1964, %s1966
      %p1973 = scmp.eq.s32.totalorder %s192, 1
      %p1974 = por %p1972, %p1973
      %p1975 = scmp.ne.s32.totalorder %s1966, %s1967
      %p1976 = scmp.eq.s32.totalorder %s192, 0
      %p1977 = por %p1975, %p1976
      %p1978 = scmp.ne.s32.totalorder %s1966, %s1967
      %p1979 = scmp.eq.s32.totalorder %s193, 1
      %p1980 = por %p1978, %p1979
      %p1982 = scmp.ne.s32.totalorder %s1967, %s1981
      %p1983 = scmp.eq.s32.totalorder %s193, 0
      %p1984 = por %p1982, %p1983
      %s1986 = sadd.s32 %s1985, 1
      %p1989 = scmp.eq.s32.totalorder %s187, 1
      %p1990 = scmp.ne.s32.totalorder %s1985, %s1987
      %p1991 = scmp.eq.s32.totalorder %s187, 0
      %p1992 = por %p1990, %p1991
      %p1993 = scmp.ne.s32.totalorder %s1985, %s1987
      %p1994 = scmp.eq.s32.totalorder %s192, 1
      %p1995 = por %p1993, %p1994
      %p1996 = scmp.ne.s32.totalorder %s1987, %s1988
      %p1997 = scmp.eq.s32.totalorder %s192, 0
      %p1998 = por %p1996, %p1997
      %p1999 = scmp.ne.s32.totalorder %s1987, %s1988
      %p2000 = scmp.eq.s32.totalorder %s193, 1
      %p2001 = por %p1999, %p2000
      %p2003 = scmp.ne.s32.totalorder %s1988, %s2002
      %p2004 = scmp.eq.s32.totalorder %s193, 0
      %p2005 = por %p2003, %p2004
      %s2007 = sadd.s32 %s2006, 1
      %p2010 = scmp.eq.s32.totalorder %s187, 1
      %p2011 = scmp.ne.s32.totalorder %s2006, %s2008
      %p2012 = scmp.eq.s32.totalorder %s187, 0
      %p2013 = por %p2011, %p2012
      %p2014 = scmp.ne.s32.totalorder %s2006, %s2008
      %p2015 = scmp.eq.s32.totalorder %s192, 1
      %p2016 = por %p2014, %p2015
      %p2017 = scmp.ne.s32.totalorder %s2008, %s2009
      %p2018 = scmp.eq.s32.totalorder %s192, 0
      %p2019 = por %p2017, %p2018
      %p2020 = scmp.ne.s32.totalorder %s2008, %s2009
      %p2021 = scmp.eq.s32.totalorder %s193, 1
      %p2022 = por %p2020, %p2021
      %p2024 = scmp.ne.s32.totalorder %s2009, %s2023
      %p2025 = scmp.eq.s32.totalorder %s193, 0
      %p2026 = por %p2024, %p2025
      %s2028 = sadd.s32 %s2027, 1
      %p2031 = scmp.eq.s32.totalorder %s187, 1
      %p2032 = scmp.ne.s32.totalorder %s2027, %s2029
      %p2033 = scmp.eq.s32.totalorder %s187, 0
      %p2034 = por %p2032, %p2033
      %p2035 = scmp.ne.s32.totalorder %s2027, %s2029
      %p2036 = scmp.eq.s32.totalorder %s192, 1
      %p2037 = por %p2035, %p2036
      %p2038 = scmp.ne.s32.totalorder %s2029, %s2030
      %p2039 = scmp.eq.s32.totalorder %s192, 0
      %p2040 = por %p2038, %p2039
      %p2041 = scmp.ne.s32.totalorder %s2029, %s2030
      %p2042 = scmp.eq.s32.totalorder %s193, 1
      %p2043 = por %p2041, %p2042
      %p2045 = scmp.ne.s32.totalorder %s2030, %s2044
      %p2046 = scmp.eq.s32.totalorder %s193, 0
      %p2047 = por %p2045, %p2046
      %s2048 = ssub.s32 %s187, %s194
      %p2049 = scmp.eq.s32.totalorder %s2048, 0
      %s2051 = sadd.s32 %s2050, 1
      %s2052 = scalar_select %p2049, %s2050, %s2051
      %p2055 = pneg %p2049
      %p2056 = scmp.eq.s32.totalorder %s187, 1
      %p2057 = por %p2055, %p2056
      %p2058 = scmp.ne.s32.totalorder %s2050, %s2053
      %p2059 = scmp.eq.s32.totalorder %s187, 0
      %p2060 = por %p2058, %p2059
      %p2061 = scmp.ne.s32.totalorder %s2050, %s2053
      %p2062 = scmp.eq.s32.totalorder %s192, 1
      %p2063 = por %p2061, %p2062
      %p2064 = scmp.ne.s32.totalorder %s2053, %s2054
      %p2065 = scmp.eq.s32.totalorder %s192, 0
      %p2066 = por %p2064, %p2065
      %p2067 = scmp.ne.s32.totalorder %s2053, %s2054
      %p2068 = scmp.eq.s32.totalorder %s193, 1
      %p2069 = por %p2067, %p2068
      %p2071 = scmp.ne.s32.totalorder %s2054, %s2070
      %p2072 = scmp.eq.s32.totalorder %s193, 0
      %p2073 = por %p2071, %p2072
      %p2074 = scmp.le.s32.totalorder 1, %s187
      %p2075 = scmp.lt.s32.totalorder %s187, 3
      %p2076 = pnand %p2074, %p2075
      %p2077 = pneg %p2076
      // Predicated region
      $region9: #{hourglass_forward.1} parent=5 // pred_check
        _
      $region10: #{hourglass_forward.1} parent=5 // pred_check_branch
        %2079 = sbr.rel (%p2076) target = $region12
      $region11: #{hourglass_forward.1} parent=5 // pred_region
        %s2080 = ssub.s32 %s187, 1
        // Predicated region
        $region13: #{hourglass_forward.1} parent=11 // pred_check
          %p2081 = pneg %p234
        $region14: #{hourglass_forward.1} parent=11 // pred_check_branch
          %2083 = sbr.rel (%p2081) target = $region16
        $region15: #{hourglass_forward.1} parent=11 // pred_region
          _
        $region16: #{hourglass_forward.1} parent=11 // pred_fallthru
          _
        // Predicated region
        $region17: #{hourglass_forward.1} parent=11 // pred_check
          %p2084 = pneg %p255
        $region18: #{hourglass_forward.1} parent=11 // pred_check_branch
          %2086 = sbr.rel (%p2084) target = $region20
        $region19: #{hourglass_forward.1} parent=11 // pred_region
          _
        $region20: #{hourglass_forward.1} parent=11 // pred_fallthru
          _
        // Predicated region
        $region21: #{hourglass_forward.1} parent=11 // pred_check
          %p2087 = pneg %p276
        $region22: #{hourglass_forward.1} parent=11 // pred_check_branch
          %2089 = sbr.rel (%p2087) target = $region24
        $region23: #{hourglass_forward.1} parent=11 // pred_region
          _
        $region24: #{hourglass_forward.1} parent=11 // pred_fallthru
          _
        // Predicated region
        $region25: #{hourglass_forward.1} parent=11 // pred_check
          %p2090 = pneg %p297
        $region26: #{hourglass_forward.1} parent=11 // pred_check_branch
          %2092 = sbr.rel (%p2090) target = $region28
        $region27: #{hourglass_forward.1} parent=11 // pred_region
          _
        $region28: #{hourglass_forward.1} parent=11 // pred_fallthru
          _
        // Predicated region
        $region29: #{hourglass_forward.1} parent=11 // pred_check
          %p2093 = pneg %p318
        $region30: #{hourglass_forward.1} parent=11 // pred_check_branch
          %2095 = sbr.rel (%p2093) target = $region32
        $region31: #{hourglass_forward.1} parent=11 // pred_region
          _
        $region32: #{hourglass_forward.1} parent=11 // pred_fallthru
          _
        // Predicated region
        $region33: #{hourglass_forward.1} parent=11 // pred_check
          %p2096 = pneg %p339
        $region34: #{hourglass_forward.1} parent=11 // pred_check_branch
          %2098 = sbr.rel (%p2096) target = $region36
        $region35: #{hourglass_forward.1} parent=11 // pred_region
          _
        $region36: #{hourglass_forward.1} parent=11 // pred_fallthru
          _
        // Predicated region
        $region37: #{hourglass_forward.1} parent=11 // pred_check
          %p2099 = pneg %p360
        $region38: #{hourglass_forward.1} parent=11 // pred_check_branch
          %2101 = sbr.rel (%p2099) target = $region40
        $region39: #{hourglass_forward.1} parent=11 // pred_region
          _
        $region40: #{hourglass_forward.1} parent=11 // pred_fallthru
          _
        // Predicated region
        $region41: #{hourglass_forward.1} parent=11 // pred_check
          %p2102 = pneg %p381
        $region42: #{hourglass_forward.1} parent=11 // pred_check_branch
          %2104 = sbr.rel (%p2102) target = $region44
        $region43: #{hourglass_forward.1} parent=11 // pred_region
          _
        $region44: #{hourglass_forward.1} parent=11 // pred_fallthru
          _
        // Predicated region
        $region45: #{hourglass_forward.1} parent=11 // pred_check
          %p2105 = pneg %p402
        $region46: #{hourglass_forward.1} parent=11 // pred_check_branch
          %2107 = sbr.rel (%p2105) target = $region48
        $region47: #{hourglass_forward.1} parent=11 // pred_region
          _
        $region48: #{hourglass_forward.1} parent=11 // pred_fallthru
          _
        // Predicated region
        $region49: #{hourglass_forward.1} parent=11 // pred_check
          %p2108 = pneg %p423
        $region50: #{hourglass_forward.1} parent=11 // pred_check_branch
          %2110 = sbr.rel (%p2108) target = $region52
        $region51: #{hourglass_forward.1} parent=11 // pred_region
          _
        $region52: #{hourglass_forward.1} parent=11 // pred_fallthru
          _
        // Predicated region
        $region53: #{hourglass_forward.1} parent=11 // pred_check
          %p2111 = pneg %p444
        $region54: #{hourglass_forward.1} parent=11 // pred_check_branch
          %2113 = sbr.rel (%p2111) target = $region56
        $region55: #{hourglass_forward.1} parent=11 // pred_region
          _
        $region56: #{hourglass_forward.1} parent=11 // pred_fallthru
          _
        // Predicated region
        $region57: #{hourglass_forward.1} parent=11 // pred_check
          %p2114 = pneg %p465
        $region58: #{hourglass_forward.1} parent=11 // pred_check_branch
          %2116 = sbr.rel (%p2114) target = $region60
        $region59: #{hourglass_forward.1} parent=11 // pred_region
          _
        $region60: #{hourglass_forward.1} parent=11 // pred_fallthru
          _
        // Predicated region
        $region61: #{hourglass_forward.1} parent=11 // pred_check
          %p2117 = pneg %p486
        $region62: #{hourglass_forward.1} parent=11 // pred_check_branch
          %2119 = sbr.rel (%p2117) target = $region64
        $region63: #{hourglass_forward.1} parent=11 // pred_region
          _
        $region64: #{hourglass_forward.1} parent=11 // pred_fallthru
          _
        // Predicated region
        $region65: #{hourglass_forward.1} parent=11 // pred_check
          %p2120 = pneg %p507
        $region66: #{hourglass_forward.1} parent=11 // pred_check_branch
          %2122 = sbr.rel (%p2120) target = $region68
        $region67: #{hourglass_forward.1} parent=11 // pred_region
          _
        $region68: #{hourglass_forward.1} parent=11 // pred_fallthru
          _
        // Predicated region
        $region69: #{hourglass_forward.1} parent=11 // pred_check
          %p2123 = pneg %p528
        $region70: #{hourglass_forward.1} parent=11 // pred_check_branch
          %2125 = sbr.rel (%p2123) target = $region72
        $region71: #{hourglass_forward.1} parent=11 // pred_region
          _
        $region72: #{hourglass_forward.1} parent=11 // pred_fallthru
          _
        // Predicated region
        $region73: #{hourglass_forward.1} parent=11 // pred_check
          %p2126 = pneg %p549
        $region74: #{hourglass_forward.1} parent=11 // pred_check_branch
          %2128 = sbr.rel (%p2126) target = $region76
        $region75: #{hourglass_forward.1} parent=11 // pred_region
          _
        $region76: #{hourglass_forward.1} parent=11 // pred_fallthru
          _
        // Predicated region
        $region77: #{hourglass_forward.1} parent=11 // pred_check
          %p2129 = pneg %p570
        $region78: #{hourglass_forward.1} parent=11 // pred_check_branch
          %2131 = sbr.rel (%p2129) target = $region80
        $region79: #{hourglass_forward.1} parent=11 // pred_region
          _
        $region80: #{hourglass_forward.1} parent=11 // pred_fallthru
          _
        // Predicated region
        $region81: #{hourglass_forward.1} parent=11 // pred_check
          %p2132 = pneg %p591
        $region82: #{hourglass_forward.1} parent=11 // pred_check_branch
          %2134 = sbr.rel (%p2132) target = $region84
        $region83: #{hourglass_forward.1} parent=11 // pred_region
          _
        $region84: #{hourglass_forward.1} parent=11 // pred_fallthru
          _
        // Predicated region
        $region85: #{hourglass_forward.1} parent=11 // pred_check
          %p2135 = pneg %p612
        $region86: #{hourglass_forward.1} parent=11 // pred_check_branch
          %2137 = sbr.rel (%p2135) target = $region88
        $region87: #{hourglass_forward.1} parent=11 // pred_region
          _
        $region88: #{hourglass_forward.1} parent=11 // pred_fallthru
          _
        // Predicated region
        $region89: #{hourglass_forward.1} parent=11 // pred_check
          %p2138 = pneg %p633
        $region90: #{hourglass_forward.1} parent=11 // pred_check_branch
          %2140 = sbr.rel (%p2138) target = $region92
        $region91: #{hourglass_forward.1} parent=11 // pred_region
          _
        $region92: #{hourglass_forward.1} parent=11 // pred_fallthru
          _
        // Predicated region
        $region93: #{hourglass_forward.1} parent=11 // pred_check
          %p2141 = pneg %p654
        $region94: #{hourglass_forward.1} parent=11 // pred_check_branch
          %2143 = sbr.rel (%p2141) target = $region96
        $region95: #{hourglass_forward.1} parent=11 // pred_region
          _
        $region96: #{hourglass_forward.1} parent=11 // pred_fallthru
          _
        // Predicated region
        $region97: #{hourglass_forward.1} parent=11 // pred_check
          %p2144 = pneg %p675
        $region98: #{hourglass_forward.1} parent=11 // pred_check_branch
          %2146 = sbr.rel (%p2144) target = $region100
        $region99: #{hourglass_forward.1} parent=11 // pred_region
          _
        $region100: #{hourglass_forward.1} parent=11 // pred_fallthru
          _
        // Predicated region
        $region101: #{hourglass_forward.1} parent=11 // pred_check
          %p2147 = pneg %p696
        $region102: #{hourglass_forward.1} parent=11 // pred_check_branch
          %2149 = sbr.rel (%p2147) target = $region104
        $region103: #{hourglass_forward.1} parent=11 // pred_region
          _
        $region104: #{hourglass_forward.1} parent=11 // pred_fallthru
          _
        // Predicated region
        $region105: #{hourglass_forward.1} parent=11 // pred_check
          %p2150 = pneg %p717
        $region106: #{hourglass_forward.1} parent=11 // pred_check_branch
          %2152 = sbr.rel (%p2150) target = $region108
        $region107: #{hourglass_forward.1} parent=11 // pred_region
          _
        $region108: #{hourglass_forward.1} parent=11 // pred_fallthru
          _
        // Predicated region
        $region109: #{hourglass_forward.1} parent=11 // pred_check
          %p2153 = pneg %p738
        $region110: #{hourglass_forward.1} parent=11 // pred_check_branch
          %2155 = sbr.rel (%p2153) target = $region112
        $region111: #{hourglass_forward.1} parent=11 // pred_region
          _
        $region112: #{hourglass_forward.1} parent=11 // pred_fallthru
          _
        // Predicated region
        $region113: #{hourglass_forward.1} parent=11 // pred_check
          %p2156 = pneg %p759
        $region114: #{hourglass_forward.1} parent=11 // pred_check_branch
          %2158 = sbr.rel (%p2156) target = $region116
        $region115: #{hourglass_forward.1} parent=11 // pred_region
          _
        $region116: #{hourglass_forward.1} parent=11 // pred_fallthru
          _
        // Predicated region
        $region117: #{hourglass_forward.1} parent=11 // pred_check
          %p2159 = pneg %p780
        $region118: #{hourglass_forward.1} parent=11 // pred_check_branch
          %2161 = sbr.rel (%p2159) target = $region120
        $region119: #{hourglass_forward.1} parent=11 // pred_region
          _
        $region120: #{hourglass_forward.1} parent=11 // pred_fallthru
          _
        // Predicated region
        $region121: #{hourglass_forward.1} parent=11 // pred_check
          %p2162 = pneg %p801
        $region122: #{hourglass_forward.1} parent=11 // pred_check_branch
          %2164 = sbr.rel (%p2162) target = $region124
        $region123: #{hourglass_forward.1} parent=11 // pred_region
          _
        $region124: #{hourglass_forward.1} parent=11 // pred_fallthru
          _
        // Predicated region
        $region125: #{hourglass_forward.1} parent=11 // pred_check
          %p2165 = pneg %p822
        $region126: #{hourglass_forward.1} parent=11 // pred_check_branch
          %2167 = sbr.rel (%p2165) target = $region128
        $region127: #{hourglass_forward.1} parent=11 // pred_region
          _
        $region128: #{hourglass_forward.1} parent=11 // pred_fallthru
          _
        // Predicated region
        $region129: #{hourglass_forward.1} parent=11 // pred_check
          %p2168 = pneg %p843
        $region130: #{hourglass_forward.1} parent=11 // pred_check_branch
          %2170 = sbr.rel (%p2168) target = $region132
        $region131: #{hourglass_forward.1} parent=11 // pred_region
          %s2172 = ssub.s32 32, 32
          %2173 = vsyncadd [#allocation3], %s2172
          %s2175 = sshll.u32 [#allocation2], 4
          %s2176 = int_to_ptr.vmem [resolvable:$true] %s2175
          %2178 = dma.hbm_to_vmem [thread:$0]  %s61, 32, %s2176, [#allocation3]
        $region132: #{hourglass_forward.1} parent=11 // pred_fallthru
          _
        // Predicated region
        $region133: #{hourglass_forward.1} parent=11 // pred_check
          %p2179 = pneg %p864
        $region134: #{hourglass_forward.1} parent=11 // pred_check_branch
          %2181 = sbr.rel (%p2179) target = $region136
        $region135: #{hourglass_forward.1} parent=11 // pred_region
          _
        $region136: #{hourglass_forward.1} parent=11 // pred_fallthru
          _
        // Predicated region
        $region137: #{hourglass_forward.1} parent=11 // pred_check
          %p2182 = pneg %p885
        $region138: #{hourglass_forward.1} parent=11 // pred_check_branch
          %2184 = sbr.rel (%p2182) target = $region140
        $region139: #{hourglass_forward.1} parent=11 // pred_region
          _
        $region140: #{hourglass_forward.1} parent=11 // pred_fallthru
          _
        // Predicated region
        $region141: #{hourglass_forward.1} parent=11 // pred_check
          %p2185 = pneg %p906
        $region142: #{hourglass_forward.1} parent=11 // pred_check_branch
          %2187 = sbr.rel (%p2185) target = $region144
        $region143: #{hourglass_forward.1} parent=11 // pred_region
          _
        $region144: #{hourglass_forward.1} parent=11 // pred_fallthru
          _
        // Predicated region
        $region145: #{hourglass_forward.1} parent=11 // pred_check
          %p2188 = pneg %p927
        $region146: #{hourglass_forward.1} parent=11 // pred_check_branch
          %2190 = sbr.rel (%p2188) target = $region148
        $region147: #{hourglass_forward.1} parent=11 // pred_region
          _
        $region148: #{hourglass_forward.1} parent=11 // pred_fallthru
          _
        // Predicated region
        $region149: #{hourglass_forward.1} parent=11 // pred_check
          %p2191 = pneg %p948
        $region150: #{hourglass_forward.1} parent=11 // pred_check_branch
          %2193 = sbr.rel (%p2191) target = $region152
        $region151: #{hourglass_forward.1} parent=11 // pred_region
          %s2195 = ssub.s32 32, 32
          %2196 = vsyncadd [#allocation5], %s2195
          %s2198 = sshll.u32 [#allocation4], 4
          %s2199 = int_to_ptr.vmem [resolvable:$true] %s2198
          %2201 = dma.hbm_to_vmem [thread:$0]  %s71, 32, %s2199, [#allocation5]
        $region152: #{hourglass_forward.1} parent=11 // pred_fallthru
          _
        // Predicated region
        $region153: #{hourglass_forward.1} parent=11 // pred_check
          %p2202 = pneg %p969
        $region154: #{hourglass_forward.1} parent=11 // pred_check_branch
          %2204 = sbr.rel (%p2202) target = $region156
        $region155: #{hourglass_forward.1} parent=11 // pred_region
          _
        $region156: #{hourglass_forward.1} parent=11 // pred_fallthru
          _
        // Predicated region
        $region157: #{hourglass_forward.1} parent=11 // pred_check
          %p2205 = pneg %p990
        $region158: #{hourglass_forward.1} parent=11 // pred_check_branch
          %2207 = sbr.rel (%p2205) target = $region160
        $region159: #{hourglass_forward.1} parent=11 // pred_region
          _
        $region160: #{hourglass_forward.1} parent=11 // pred_fallthru
          _
        // Predicated region
        $region161: #{hourglass_forward.1} parent=11 // pred_check
          %p2208 = pneg %p1011
        $region162: #{hourglass_forward.1} parent=11 // pred_check_branch
          %2210 = sbr.rel (%p2208) target = $region164
        $region163: #{hourglass_forward.1} parent=11 // pred_region
          _
        $region164: #{hourglass_forward.1} parent=11 // pred_fallthru
          _
        // Predicated region
        $region165: #{hourglass_forward.1} parent=11 // pred_check
          %p2211 = pneg %p1032
        $region166: #{hourglass_forward.1} parent=11 // pred_check_branch
          %2213 = sbr.rel (%p2211) target = $region168
        $region167: #{hourglass_forward.1} parent=11 // pred_region
          _
        $region168: #{hourglass_forward.1} parent=11 // pred_fallthru
          _
        // Predicated region
        $region169: #{hourglass_forward.1} parent=11 // pred_check
          %p2214 = pneg %p1053
        $region170: #{hourglass_forward.1} parent=11 // pred_check_branch
          %2216 = sbr.rel (%p2214) target = $region172
        $region171: #{hourglass_forward.1} parent=11 // pred_region
          _
        $region172: #{hourglass_forward.1} parent=11 // pred_fallthru
          _
        // Predicated region
        $region173: #{hourglass_forward.1} parent=11 // pred_check
          %p2217 = pneg %p1074
        $region174: #{hourglass_forward.1} parent=11 // pred_check_branch
          %2219 = sbr.rel (%p2217) target = $region176
        $region175: #{hourglass_forward.1} parent=11 // pred_region
          _
        $region176: #{hourglass_forward.1} parent=11 // pred_fallthru
          _
        // Predicated region
        $region177: #{hourglass_forward.1} parent=11 // pred_check
          %p2220 = pneg %p1095
        $region178: #{hourglass_forward.1} parent=11 // pred_check_branch
          %2222 = sbr.rel (%p2220) target = $region180
        $region179: #{hourglass_forward.1} parent=11 // pred_region
          _
        $region180: #{hourglass_forward.1} parent=11 // pred_fallthru
          _
        // Predicated region
        $region181: #{hourglass_forward.1} parent=11 // pred_check
          %p2223 = pneg %p1116
        $region182: #{hourglass_forward.1} parent=11 // pred_check_branch
          %2225 = sbr.rel (%p2223) target = $region184
        $region183: #{hourglass_forward.1} parent=11 // pred_region
          _
        $region184: #{hourglass_forward.1} parent=11 // pred_fallthru
          _
        // Predicated region
        $region185: #{hourglass_forward.1} parent=11 // pred_check
          %p2226 = pneg %p1137
        $region186: #{hourglass_forward.1} parent=11 // pred_check_branch
          %2228 = sbr.rel (%p2226) target = $region188
        $region187: #{hourglass_forward.1} parent=11 // pred_region
          _
        $region188: #{hourglass_forward.1} parent=11 // pred_fallthru
          _
        // Predicated region
        $region189: #{hourglass_forward.1} parent=11 // pred_check
          %p2229 = pneg %p1158
        $region190: #{hourglass_forward.1} parent=11 // pred_check_branch
          %2231 = sbr.rel (%p2229) target = $region192
        $region191: #{hourglass_forward.1} parent=11 // pred_region
          %s2233 = ssub.s32 16, 16
          %2234 = vsyncadd [#allocation5], %s2233
          %s2236 = sshll.u32 [#allocation6], 4
          %s2237 = int_to_ptr.vmem [resolvable:$true] %s2236
          %2239 = dma.hbm_to_vmem [thread:$0]  %s91, 16, %s2237, [#allocation5]
        $region192: #{hourglass_forward.1} parent=11 // pred_fallthru
          _
        // Predicated region
        $region193: #{hourglass_forward.1} parent=11 // pred_check
          %p2240 = pneg %p1179
        $region194: #{hourglass_forward.1} parent=11 // pred_check_branch
          %2242 = sbr.rel (%p2240) target = $region196
        $region195: #{hourglass_forward.1} parent=11 // pred_region
          _
        $region196: #{hourglass_forward.1} parent=11 // pred_fallthru
          _
        // Predicated region
        $region197: #{hourglass_forward.1} parent=11 // pred_check
          %p2243 = pneg %p1200
        $region198: #{hourglass_forward.1} parent=11 // pred_check_branch
          %2245 = sbr.rel (%p2243) target = $region200
        $region199: #{hourglass_forward.1} parent=11 // pred_region
          _
        $region200: #{hourglass_forward.1} parent=11 // pred_fallthru
          _
        // Predicated region
        $region201: #{hourglass_forward.1} parent=11 // pred_check
          %p2246 = pneg %p1221
        $region202: #{hourglass_forward.1} parent=11 // pred_check_branch
          %2248 = sbr.rel (%p2246) target = $region204
        $region203: #{hourglass_forward.1} parent=11 // pred_region
          _
        $region204: #{hourglass_forward.1} parent=11 // pred_fallthru
          _
        // Predicated region
        $region205: #{hourglass_forward.1} parent=11 // pred_check
          %p2249 = pneg %p1242
        $region206: #{hourglass_forward.1} parent=11 // pred_check_branch
          %2251 = sbr.rel (%p2249) target = $region208
        $region207: #{hourglass_forward.1} parent=11 // pred_region
          _
        $region208: #{hourglass_forward.1} parent=11 // pred_fallthru
          _
        // Predicated region
        $region209: #{hourglass_forward.1} parent=11 // pred_check
          %p2252 = pneg %p1263
        $region210: #{hourglass_forward.1} parent=11 // pred_check_branch
          %2254 = sbr.rel (%p2252) target = $region212
        $region211: #{hourglass_forward.1} parent=11 // pred_region
          %s2256 = ssub.s32 16, 16
          %2257 = vsyncadd [#allocation8], %s2256
          %s2259 = sshll.u32 [#allocation7], 4
          %s2260 = int_to_ptr.vmem [resolvable:$true] %s2259
          %2262 = dma.hbm_to_vmem [thread:$0]  %s101, 16, %s2260, [#allocation8]
        $region212: #{hourglass_forward.1} parent=11 // pred_fallthru
          _
        // Predicated region
        $region213: #{hourglass_forward.1} parent=11 // pred_check
          %p2263 = pneg %p1284
        $region214: #{hourglass_forward.1} parent=11 // pred_check_branch
          %2265 = sbr.rel (%p2263) target = $region216
        $region215: #{hourglass_forward.1} parent=11 // pred_region
          _
        $region216: #{hourglass_forward.1} parent=11 // pred_fallthru
          _
        // Predicated region
        $region217: #{hourglass_forward.1} parent=11 // pred_check
          %p2266 = pneg %p1305
        $region218: #{hourglass_forward.1} parent=11 // pred_check_branch
          %2268 = sbr.rel (%p2266) target = $region220
        $region219: #{hourglass_forward.1} parent=11 // pred_region
          _
        $region220: #{hourglass_forward.1} parent=11 // pred_fallthru
          _
        // Predicated region
        $region221: #{hourglass_forward.1} parent=11 // pred_check
          %p2269 = pneg %p1326
        $region222: #{hourglass_forward.1} parent=11 // pred_check_branch
          %2271 = sbr.rel (%p2269) target = $region224
        $region223: #{hourglass_forward.1} parent=11 // pred_region
          _
        $region224: #{hourglass_forward.1} parent=11 // pred_fallthru
          _
        // Predicated region
        $region225: #{hourglass_forward.1} parent=11 // pred_check
          %p2272 = pneg %p1347
        $region226: #{hourglass_forward.1} parent=11 // pred_check_branch
          %2274 = sbr.rel (%p2272) target = $region228
        $region227: #{hourglass_forward.1} parent=11 // pred_region
          _
        $region228: #{hourglass_forward.1} parent=11 // pred_fallthru
          _
        // Predicated region
        $region229: #{hourglass_forward.1} parent=11 // pred_check
          %p2275 = pneg %p1368
        $region230: #{hourglass_forward.1} parent=11 // pred_check_branch
          %2277 = sbr.rel (%p2275) target = $region232
        $region231: #{hourglass_forward.1} parent=11 // pred_region
          %s2279 = ssub.s32 32, 32
          %2280 = vsyncadd [#allocation8], %s2279
          %s2282 = sshll.u32 [#allocation9], 4
          %s2283 = int_to_ptr.vmem [resolvable:$true] %s2282
          %2285 = dma.hbm_to_vmem [thread:$0]  %s111, 32, %s2283, [#allocation8]
        $region232: #{hourglass_forward.1} parent=11 // pred_fallthru
          _
        // Predicated region
        $region233: #{hourglass_forward.1} parent=11 // pred_check
          %p2286 = pneg %p1389
        $region234: #{hourglass_forward.1} parent=11 // pred_check_branch
          %2288 = sbr.rel (%p2286) target = $region236
        $region235: #{hourglass_forward.1} parent=11 // pred_region
          _
        $region236: #{hourglass_forward.1} parent=11 // pred_fallthru
          _
        // Predicated region
        $region237: #{hourglass_forward.1} parent=11 // pred_check
          %p2289 = pneg %p1410
        $region238: #{hourglass_forward.1} parent=11 // pred_check_branch
          %2291 = sbr.rel (%p2289) target = $region240
        $region239: #{hourglass_forward.1} parent=11 // pred_region
          _
        $region240: #{hourglass_forward.1} parent=11 // pred_fallthru
          _
        // Predicated region
        $region241: #{hourglass_forward.1} parent=11 // pred_check
          %p2292 = pneg %p1431
        $region242: #{hourglass_forward.1} parent=11 // pred_check_branch
          %2294 = sbr.rel (%p2292) target = $region244
        $region243: #{hourglass_forward.1} parent=11 // pred_region
          _
        $region244: #{hourglass_forward.1} parent=11 // pred_fallthru
          _
        // Predicated region
        $region245: #{hourglass_forward.1} parent=11 // pred_check
          %p2295 = pneg %p1452
        $region246: #{hourglass_forward.1} parent=11 // pred_check_branch
          %2297 = sbr.rel (%p2295) target = $region248
        $region247: #{hourglass_forward.1} parent=11 // pred_region
          _
        $region248: #{hourglass_forward.1} parent=11 // pred_fallthru
          _
        // Predicated region
        $region249: #{hourglass_forward.1} parent=11 // pred_check
          %p2298 = pneg %p1473
        $region250: #{hourglass_forward.1} parent=11 // pred_check_branch
          %2300 = sbr.rel (%p2298) target = $region252
        $region251: #{hourglass_forward.1} parent=11 // pred_region
          _
        $region252: #{hourglass_forward.1} parent=11 // pred_fallthru
          _
        // Predicated region
        $region253: #{hourglass_forward.1} parent=11 // pred_check
          %p2301 = pneg %p1494
        $region254: #{hourglass_forward.1} parent=11 // pred_check_branch
          %2303 = sbr.rel (%p2301) target = $region256
        $region255: #{hourglass_forward.1} parent=11 // pred_region
          _
        $region256: #{hourglass_forward.1} parent=11 // pred_fallthru
          _
        // Predicated region
        $region257: #{hourglass_forward.1} parent=11 // pred_check
          %p2304 = pneg %p1515
        $region258: #{hourglass_forward.1} parent=11 // pred_check_branch
          %2306 = sbr.rel (%p2304) target = $region260
        $region259: #{hourglass_forward.1} parent=11 // pred_region
          _
        $region260: #{hourglass_forward.1} parent=11 // pred_fallthru
          _
        // Predicated region
        $region261: #{hourglass_forward.1} parent=11 // pred_check
          %p2307 = pneg %p1536
        $region262: #{hourglass_forward.1} parent=11 // pred_check_branch
          %2309 = sbr.rel (%p2307) target = $region264
        $region263: #{hourglass_forward.1} parent=11 // pred_region
          _
        $region264: #{hourglass_forward.1} parent=11 // pred_fallthru
          _
        // Predicated region
        $region265: #{hourglass_forward.1} parent=11 // pred_check
          %p2310 = pneg %p1557
        $region266: #{hourglass_forward.1} parent=11 // pred_check_branch
          %2312 = sbr.rel (%p2310) target = $region268
        $region267: #{hourglass_forward.1} parent=11 // pred_region
          _
        $region268: #{hourglass_forward.1} parent=11 // pred_fallthru
          _
        // Predicated region
        $region269: #{hourglass_forward.1} parent=11 // pred_check
          %p2313 = pneg %p1578
        $region270: #{hourglass_forward.1} parent=11 // pred_check_branch
          %2315 = sbr.rel (%p2313) target = $region272
        $region271: #{hourglass_forward.1} parent=11 // pred_region
          _
        $region272: #{hourglass_forward.1} parent=11 // pred_fallthru
          _
        // Predicated region
        $region273: #{hourglass_forward.1} parent=11 // pred_check
          %p2316 = pneg %p1599
        $region274: #{hourglass_forward.1} parent=11 // pred_check_branch
          %2318 = sbr.rel (%p2316) target = $region276
        $region275: #{hourglass_forward.1} parent=11 // pred_region
          _
        $region276: #{hourglass_forward.1} parent=11 // pred_fallthru
          _
        // Predicated region
        $region277: #{hourglass_forward.1} parent=11 // pred_check
          %p2319 = pneg %p1620
        $region278: #{hourglass_forward.1} parent=11 // pred_check_branch
          %2321 = sbr.rel (%p2319) target = $region280
        $region279: #{hourglass_forward.1} parent=11 // pred_region
          _
        $region280: #{hourglass_forward.1} parent=11 // pred_fallthru
          _
        // Predicated region
        $region281: #{hourglass_forward.1} parent=11 // pred_check
          %p2322 = pneg %p1641
        $region282: #{hourglass_forward.1} parent=11 // pred_check_branch
          %2324 = sbr.rel (%p2322) target = $region284
        $region283: #{hourglass_forward.1} parent=11 // pred_region
          _
        $region284: #{hourglass_forward.1} parent=11 // pred_fallthru
          _
        // Predicated region
        $region285: #{hourglass_forward.1} parent=11 // pred_check
          %p2325 = pneg %p1662
        $region286: #{hourglass_forward.1} parent=11 // pred_check_branch
          %2327 = sbr.rel (%p2325) target = $region288
        $region287: #{hourglass_forward.1} parent=11 // pred_region
          _
        $region288: #{hourglass_forward.1} parent=11 // pred_fallthru
          _
        // Predicated region
        $region289: #{hourglass_forward.1} parent=11 // pred_check
          %p2328 = pneg %p1683
        $region290: #{hourglass_forward.1} parent=11 // pred_check_branch
          %2330 = sbr.rel (%p2328) target = $region292
        $region291: #{hourglass_forward.1} parent=11 // pred_region
          _
        $region292: #{hourglass_forward.1} parent=11 // pred_fallthru
          _
        // Predicated region
        $region293: #{hourglass_forward.1} parent=11 // pred_check
          %p2331 = pneg %p1704
        $region294: #{hourglass_forward.1} parent=11 // pred_check_branch
          %2333 = sbr.rel (%p2331) target = $region296
        $region295: #{hourglass_forward.1} parent=11 // pred_region
          _
        $region296: #{hourglass_forward.1} parent=11 // pred_fallthru
          _
        // Predicated region
        $region297: #{hourglass_forward.1} parent=11 // pred_check
          %p2334 = pneg %p1725
        $region298: #{hourglass_forward.1} parent=11 // pred_check_branch
          %2336 = sbr.rel (%p2334) target = $region300
        $region299: #{hourglass_forward.1} parent=11 // pred_region
          _
        $region300: #{hourglass_forward.1} parent=11 // pred_fallthru
          _
        // Predicated region
        $region301: #{hourglass_forward.1} parent=11 // pred_check
          %p2337 = pneg %p1746
        $region302: #{hourglass_forward.1} parent=11 // pred_check_branch
          %2339 = sbr.rel (%p2337) target = $region304
        $region303: #{hourglass_forward.1} parent=11 // pred_region
          %s2341 = ssub.s32 32, 32
          %2342 = vsyncadd [#allocation11], %s2341
          %s2343 = sshll.u32 [#allocation10], 4
          %s2344 = int_to_ptr.vmem [resolvable:$true] %s2343
          %2349 = dma.hbm_to_vmem [thread:$0]  %s147, 32, %s2344, [#allocation11], 16, 16, 1
        $region304: #{hourglass_forward.1} parent=11 // pred_fallthru
          _
        // Predicated region
        $region305: #{hourglass_forward.1} parent=11 // pred_check
          %p2350 = pneg %p1767
        $region306: #{hourglass_forward.1} parent=11 // pred_check_branch
          %2352 = sbr.rel (%p2350) target = $region308
        $region307: #{hourglass_forward.1} parent=11 // pred_region
          _
        $region308: #{hourglass_forward.1} parent=11 // pred_fallthru
          _
        // Predicated region
        $region309: #{hourglass_forward.1} parent=11 // pred_check
          %p2353 = pneg %p1788
        $region310: #{hourglass_forward.1} parent=11 // pred_check_branch
          %2355 = sbr.rel (%p2353) target = $region312
        $region311: #{hourglass_forward.1} parent=11 // pred_region
          _
        $region312: #{hourglass_forward.1} parent=11 // pred_fallthru
          _
        // Predicated region
        $region313: #{hourglass_forward.1} parent=11 // pred_check
          %p2356 = pneg %p1809
        $region314: #{hourglass_forward.1} parent=11 // pred_check_branch
          %2358 = sbr.rel (%p2356) target = $region316
        $region315: #{hourglass_forward.1} parent=11 // pred_region
          _
        $region316: #{hourglass_forward.1} parent=11 // pred_fallthru
          _
        // Predicated region
        $region317: #{hourglass_forward.1} parent=11 // pred_check
          %p2359 = pneg %p1830
        $region318: #{hourglass_forward.1} parent=11 // pred_check_branch
          %2361 = sbr.rel (%p2359) target = $region320
        $region319: #{hourglass_forward.1} parent=11 // pred_region
          _
        $region320: #{hourglass_forward.1} parent=11 // pred_fallthru
          _
        // Predicated region
        $region321: #{hourglass_forward.1} parent=11 // pred_check
          %p2362 = pneg %p1851
        $region322: #{hourglass_forward.1} parent=11 // pred_check_branch
          %2364 = sbr.rel (%p2362) target = $region324
        $region323: #{hourglass_forward.1} parent=11 // pred_region
          _
        $region324: #{hourglass_forward.1} parent=11 // pred_fallthru
          _
        // Predicated region
        $region325: #{hourglass_forward.1} parent=11 // pred_check
          %p2365 = pneg %p1872
        $region326: #{hourglass_forward.1} parent=11 // pred_check_branch
          %2367 = sbr.rel (%p2365) target = $region328
        $region327: #{hourglass_forward.1} parent=11 // pred_region
          _
        $region328: #{hourglass_forward.1} parent=11 // pred_fallthru
          _
        // Predicated region
        $region329: #{hourglass_forward.1} parent=11 // pred_check
          %p2368 = pneg %p1893
        $region330: #{hourglass_forward.1} parent=11 // pred_check_branch
          %2370 = sbr.rel (%p2368) target = $region332
        $region331: #{hourglass_forward.1} parent=11 // pred_region
          _
        $region332: #{hourglass_forward.1} parent=11 // pred_fallthru
          _
        // Predicated region
        $region333: #{hourglass_forward.1} parent=11 // pred_check
          %p2371 = pneg %p1914
        $region334: #{hourglass_forward.1} parent=11 // pred_check_branch
          %2373 = sbr.rel (%p2371) target = $region336
        $region335: #{hourglass_forward.1} parent=11 // pred_region
          _
        $region336: #{hourglass_forward.1} parent=11 // pred_fallthru
          _
        // Predicated region
        $region337: #{hourglass_forward.1} parent=11 // pred_check
          %p2374 = pneg %p1935
        $region338: #{hourglass_forward.1} parent=11 // pred_check_branch
          %2376 = sbr.rel (%p2374) target = $region340
        $region339: #{hourglass_forward.1} parent=11 // pred_region
          %s2378 = ssub.s32 16, 16
          %2379 = vsyncadd [#allocation11], %s2378
          %s2381 = sshll.u32 [#allocation12], 4
          %s2382 = int_to_ptr.vmem [resolvable:$true] %s2381
          %2384 = dma.hbm_to_vmem [thread:$0]  %s165, 16, %s2382, [#allocation11]
        $region340: #{hourglass_forward.1} parent=11 // pred_fallthru
          _
        // Predicated region
        $region341: #{hourglass_forward.1} parent=11 // pred_check
          %p2385 = pneg %p1956
        $region342: #{hourglass_forward.1} parent=11 // pred_check_branch
          %2387 = sbr.rel (%p2385) target = $region344
        $region343: #{hourglass_forward.1} parent=11 // pred_region
          _
        $region344: #{hourglass_forward.1} parent=11 // pred_fallthru
          _
        // Predicated region
        $region345: #{hourglass_forward.1} parent=11 // pred_check
          %p2388 = pneg %p1977
        $region346: #{hourglass_forward.1} parent=11 // pred_check_branch
          %2390 = sbr.rel (%p2388) target = $region348
        $region347: #{hourglass_forward.1} parent=11 // pred_region
          _
        $region348: #{hourglass_forward.1} parent=11 // pred_fallthru
          _
        // Predicated region
        $region349: #{hourglass_forward.1} parent=11 // pred_check
          %p2391 = pneg %p1998
        $region350: #{hourglass_forward.1} parent=11 // pred_check_branch
          %2393 = sbr.rel (%p2391) target = $region352
        $region351: #{hourglass_forward.1} parent=11 // pred_region
          _
        $region352: #{hourglass_forward.1} parent=11 // pred_fallthru
          _
        // Predicated region
        $region353: #{hourglass_forward.1} parent=11 // pred_check
          %p2394 = pneg %p2019
        $region354: #{hourglass_forward.1} parent=11 // pred_check_branch
          %2396 = sbr.rel (%p2394) target = $region356
        $region355: #{hourglass_forward.1} parent=11 // pred_region
          _
        $region356: #{hourglass_forward.1} parent=11 // pred_fallthru
          _
        // Predicated region
        $region357: #{hourglass_forward.1} parent=11 // pred_check
          %p2397 = pneg %p2040
        $region358: #{hourglass_forward.1} parent=11 // pred_check_branch
          %2399 = sbr.rel (%p2397) target = $region360
        $region359: #{hourglass_forward.1} parent=11 // pred_region
          _
        $region360: #{hourglass_forward.1} parent=11 // pred_fallthru
          _
      $region12: #{hourglass_forward.1} parent=5 // pred_fallthru
        _
      %p2400 = scmp.lt.s32.totalorder %s187, 2
      // Predicated region
      $region361: #{hourglass_forward.1} parent=5 // pred_check
        %p2401 = pneg %p2400
      $region362: #{hourglass_forward.1} parent=5 // pred_check_branch
        %2403 = sbr.rel (%p2401) target = $region364
      $region363: #{hourglass_forward.1} parent=5 // pred_region
        // Predicated region
        $region365: #{hourglass_forward.1} parent=363 // pred_check
          %p2404 = pneg %p207
        $region366: #{hourglass_forward.1} parent=363 // pred_check_branch
          %2406 = sbr.rel (%p2404) target = $region368
        $region367: #{hourglass_forward.1} parent=363 // pred_region
          %p2407 = scmp.lt.s32.totalorder %s187, 1
          %s2408 = scalar_select %p2407, %s187, 1
          %s2409 = smul.addr %s2408, 2
          %s2410 = smul.addr %s2409, 8
          %s2411 = scalar_lea.vmem %s1, %s2410
        $region368: #{hourglass_forward.1} parent=363 // pred_fallthru
          _
      $region364: #{hourglass_forward.1} parent=5 // pred_fallthru
        _
      %p2412 = scmp.le.s32.totalorder 1, %s187
      %p2413 = scmp.lt.s32.totalorder %s187, 3
      %p2414 = pnand %p2412, %p2413
      %p2415 = pneg %p2414
      // Predicated region
      $region369: #{hourglass_forward.1} parent=5 // pred_check
        _
      $region370: #{hourglass_forward.1} parent=5 // pred_check_branch
        %2417 = sbr.rel (%p2414) target = $region372
      $region371: #{hourglass_forward.1} parent=5 // pred_region
        %s2418 = ssub.s32 %s187, 1
        // Predicated region
        $region373: #{hourglass_forward.1} parent=371 // pred_check
          %p2419 = pneg %p843
        $region374: #{hourglass_forward.1} parent=371 // pred_check_branch
          %2421 = sbr.rel (%p2419) target = $region376
        $region375: #{hourglass_forward.1} parent=371 // pred_region
          %2422 = dma.done [#allocation3], 32
        $region376: #{hourglass_forward.1} parent=371 // pred_fallthru
          _
        // Predicated region
        $region377: #{hourglass_forward.1} parent=371 // pred_check
          %p2423 = pneg %p948
        $region378: #{hourglass_forward.1} parent=371 // pred_check_branch
          %2425 = sbr.rel (%p2423) target = $region380
        $region379: #{hourglass_forward.1} parent=371 // pred_region
          %2426 = dma.done [#allocation5], 32
        $region380: #{hourglass_forward.1} parent=371 // pred_fallthru
          _
        // Predicated region
        $region381: #{hourglass_forward.1} parent=371 // pred_check
          %p2427 = pneg %p1158
        $region382: #{hourglass_forward.1} parent=371 // pred_check_branch
          %2429 = sbr.rel (%p2427) target = $region384
        $region383: #{hourglass_forward.1} parent=371 // pred_region
          %2430 = dma.done [#allocation5], 16
        $region384: #{hourglass_forward.1} parent=371 // pred_fallthru
          _
        // Predicated region
        $region385: #{hourglass_forward.1} parent=371 // pred_check
          %p2431 = pneg %p1263
        $region386: #{hourglass_forward.1} parent=371 // pred_check_branch
          %2433 = sbr.rel (%p2431) target = $region388
        $region387: #{hourglass_forward.1} parent=371 // pred_region
          %2434 = dma.done [#allocation8], 16
        $region388: #{hourglass_forward.1} parent=371 // pred_fallthru
          _
        // Predicated region
        $region389: #{hourglass_forward.1} parent=371 // pred_check
          %p2435 = pneg %p1368
        $region390: #{hourglass_forward.1} parent=371 // pred_check_branch
          %2437 = sbr.rel (%p2435) target = $region392
        $region391: #{hourglass_forward.1} parent=371 // pred_region
          %2438 = dma.done [#allocation8], 32
        $region392: #{hourglass_forward.1} parent=371 // pred_fallthru
          _
        // Predicated region
        $region393: #{hourglass_forward.1} parent=371 // pred_check
          %p2439 = pneg %p1746
        $region394: #{hourglass_forward.1} parent=371 // pred_check_branch
          %2441 = sbr.rel (%p2439) target = $region396
        $region395: #{hourglass_forward.1} parent=371 // pred_region
          %2442 = dma.done [#allocation11], 32
        $region396: #{hourglass_forward.1} parent=371 // pred_fallthru
          _
        // Predicated region
        $region397: #{hourglass_forward.1} parent=371 // pred_check
          %p2443 = pneg %p1935
        $region398: #{hourglass_forward.1} parent=371 // pred_check_branch
          %2445 = sbr.rel (%p2443) target = $region400
        $region399: #{hourglass_forward.1} parent=371 // pred_region
          %2446 = dma.done [#allocation11], 16
        $region400: #{hourglass_forward.1} parent=371 // pred_fallthru
          _
        %p2447 = scmp.lt.s32.totalorder %s192, 1
        %s2448 = scalar_select %p2447, %s192, 1
        %s2449 = smul.addr %s2448, 2
        %s2450 = smul.addr %s2449, 8
        %s2451 = scalar_lea.vmem %s1, %s2450
        %p2452 = pneg %p213
        %p2453 = pneg %p210
        %p2454 = pneg %p234
        %p2455 = pneg %p231
        %p2456 = pneg %p255
        %p2457 = pneg %p252
        %p2458 = pneg %p276
        %p2459 = pneg %p273
        %p2460 = pneg %p297
        %p2461 = pneg %p294
        %p2462 = pneg %p318
        %p2463 = pneg %p315
        %p2464 = pneg %p339
        %p2465 = pneg %p336
        %p2466 = pneg %p360
        %p2467 = pneg %p357
        %p2468 = pneg %p381
        %p2469 = pneg %p378
        %p2470 = pneg %p402
        %p2471 = pneg %p399
        %p2472 = pneg %p423
        %p2473 = pneg %p420
        %p2474 = pneg %p444
        %p2475 = pneg %p441
        %p2476 = pneg %p465
        %p2477 = pneg %p462
        %p2478 = pneg %p486
        %p2479 = pneg %p483
        %p2480 = pneg %p507
        %p2481 = pneg %p504
        %p2482 = pneg %p528
        %p2483 = pneg %p525
        %p2484 = pneg %p549
        %p2485 = pneg %p546
        %p2486 = pneg %p570
        %p2487 = pneg %p567
        %p2488 = pneg %p591
        %p2489 = pneg %p588
        %p2490 = pneg %p612
        %p2491 = pneg %p609
        %p2492 = pneg %p633
        %p2493 = pneg %p630
        %p2494 = pneg %p654
        %p2495 = pneg %p651
        %p2496 = pneg %p675
        %p2497 = pneg %p672
        %p2498 = pneg %p696
        %p2499 = pneg %p693
        %p2500 = pneg %p717
        %p2501 = pneg %p714
        %p2502 = pneg %p738
        %p2503 = pneg %p735
        %p2504 = pneg %p759
        %p2505 = pneg %p756
        %p2506 = pneg %p780
        %p2507 = pneg %p777
        %p2508 = pneg %p801
        %p2509 = pneg %p798
        %p2510 = pneg %p822
        %p2511 = pneg %p819
        %p2512 = pneg %p843
        %p2513 = pneg %p840
        %p2514 = pneg %p864
        %p2515 = pneg %p861
        %p2516 = pneg %p885
        %p2517 = pneg %p882
        %p2518 = pneg %p906
        %p2519 = pneg %p903
        %p2520 = pneg %p927
        %p2521 = pneg %p924
        %p2522 = pneg %p948
        %p2523 = pneg %p945
        %p2524 = pneg %p969
        %p2525 = pneg %p966
        %p2526 = pneg %p990
        %p2527 = pneg %p987
        %p2528 = pneg %p1011
        %p2529 = pneg %p1008
        %p2530 = pneg %p1032
        %p2531 = pneg %p1029
        %p2532 = pneg %p1053
        %p2533 = pneg %p1050
        %p2534 = pneg %p1074
        %p2535 = pneg %p1071
        %p2536 = pneg %p1095
        %p2537 = pneg %p1092
        %p2538 = pneg %p1116
        %p2539 = pneg %p1113
        %p2540 = pneg %p1137
        %p2541 = pneg %p1134
        %p2542 = pneg %p1158
        %p2543 = pneg %p1155
        %p2544 = pneg %p1179
        %p2545 = pneg %p1176
        %p2546 = pneg %p1200
        %p2547 = pneg %p1197
        %p2548 = pneg %p1221
        %p2549 = pneg %p1218
        %p2550 = pneg %p1242
        %p2551 = pneg %p1239
        %p2552 = pneg %p1263
        %p2553 = pneg %p1260
        %p2554 = pneg %p1284
        %p2555 = pneg %p1281
        %p2556 = pneg %p1305
        %p2557 = pneg %p1302
        %p2558 = pneg %p1326
        %p2559 = pneg %p1323
        %p2560 = pneg %p1347
        %p2561 = pneg %p1344
        %p2562 = pneg %p1368
        %p2563 = pneg %p1365
        %p2564 = pneg %p1389
        %p2565 = pneg %p1386
        %p2566 = pneg %p1410
        %p2567 = pneg %p1407
        %p2568 = pneg %p1431
        %p2569 = pneg %p1428
        %p2570 = pneg %p1452
        %p2571 = pneg %p1449
        %p2572 = pneg %p1473
        %p2573 = pneg %p1470
        %p2574 = pneg %p1494
        %p2575 = pneg %p1491
        %p2576 = pneg %p1515
        %p2577 = pneg %p1512
        %p2578 = pneg %p1536
        %p2579 = pneg %p1533
        %p2580 = pneg %p1557
        %p2581 = pneg %p1554
        %p2582 = pneg %p1578
        %p2583 = pneg %p1575
        %p2584 = pneg %p1599
        %p2585 = pneg %p1596
        %p2586 = pneg %p1620
        %p2587 = pneg %p1617
        %p2588 = pneg %p1641
        %p2589 = pneg %p1638
        %p2590 = pneg %p1662
        %p2591 = pneg %p1659
        %p2592 = pneg %p1683
        %p2593 = pneg %p1680
        %p2594 = pneg %p1704
        %p2595 = pneg %p1701
        %p2596 = pneg %p1725
        %p2597 = pneg %p1722
        %p2598 = pneg %p1746
        %p2599 = pneg %p1743
        %p2600 = pneg %p1767
        %p2601 = pneg %p1764
        %p2602 = pneg %p1788
        %p2603 = pneg %p1785
        %p2604 = pneg %p1809
        %p2605 = pneg %p1806
        %p2606 = pneg %p1830
        %p2607 = pneg %p1827
        %p2608 = pneg %p1851
        %p2609 = pneg %p1848
        %p2610 = pneg %p1872
        %p2611 = pneg %p1869
        %p2612 = pneg %p1893
        %p2613 = pneg %p1890
        %p2614 = pneg %p1914
        %p2615 = pneg %p1911
        %p2616 = pneg %p1935
        %p2617 = pneg %p1932
        %p2618 = pneg %p1956
        %p2619 = pneg %p1953
        %p2620 = pneg %p1977
        %p2621 = pneg %p1974
        %p2622 = pneg %p1998
        %p2623 = pneg %p1995
        %p2624 = pneg %p2019
        %p2625 = pneg %p2016
        %p2626 = pneg %p2040
        %p2627 = pneg %p2037
        %p2628 = pneg %p2066
        %p2629 = pneg %p2063
        %p2630 = scmp.lt.s32.totalorder %s192, 1
        %s2631 = scalar_select %p2630, %s192, 1
        %s2632 = smul.addr %s2631, 2
        %s2633 = smul.addr %s2632, 8
        %s2634 = scalar_lea.vmem %s177, %s2633
        %p2635 = scmp.lt.s32.totalorder %s192, 1
        %s2636 = scalar_select %p2635, %s192, 1
        %s2637 = smul.addr %s2636, 2
        %s2638 = smul.addr %s2637, 8
        %s2639 = scalar_lea.vmem %s1, %s2638
        %p2640 = scmp.lt.s32.totalorder %s192, 1
        %s2641 = scalar_select %p2640, %s192, 1
        %s2642 = smul.addr %s2641, 2
        %s2643 = smul.addr %s2642, 8
        %s2644 = scalar_lea.vmem %s177, %s2643
        %v2646 = vld [vmem:[%s2639] sm:$0xff]
        %v2647 = vld [vmem:[%s2639 + $0x8] sm:$0xff]
        %v2648 = vld [vmem:[%s3] sm:$0xf]
        %v2649 = vld [vmem:[%s5] sm:$0xff]
        %v2650 = vlaneseq
        %v2651 = vshrl.u32 %v2650, 7
        %v2652 = vsub.s32 0, %v2651
        %v2653 = vrot.slane %v2648, %v2652
        %v2654 = vmul.f32 %v2646, %v2653
        %v2655 = vmul.f32 %v2647, %v2653
        %v2656 = vlaneseq
        %v2657 = vshrl.u32 %v2656, 7
        %v2658 = vsub.s32 1, %v2657
        %v2659 = vrot.slane %v2648, %v2658
        %v2660 = vadd.f32 %v2654, %v2659
        %v2661 = vadd.f32 %v2655, %v2659
        %vm2662 = vcmp.ge.f32.partialorder %v2660, 0.0
        %vm2663 = vcmp.ge.f32.partialorder %v2661, 0.0
        %v2664 = vlaneseq
        %v2665 = vshrl.u32 %v2664, 7
        %v2666 = vsub.s32 2, %v2665
        %v2667 = vrot.slane %v2648, %v2666
        %v2668 = vmul.f32 %v2667, %v2660
        %v2669 = vmul.f32 %v2667, %v2661
        %v2670 = vsel %vm2662, %v2660, %v2668
        %v2671 = vsel %vm2663, %v2661, %v2669
        %v2672 = vpack.c.bf16 %v2671, %v2670
        %v2673 = vld [vmem:[%s7] sm:$0xf]
        %v2674 = vld [vmem:[%s7 + $0x4] sm:$0xf]
        %v2675 = vld [vmem:[%s7 + $0x8] sm:$0xf]
        %v2676 = vld [vmem:[%s7 + $0xc] sm:$0xf]
        %v2677 = vld [vmem:[%s7 + $0x10] sm:$0xf]
        %v2678 = vld [vmem:[%s7 + $0x14] sm:$0xf]
        %v2679 = vld [vmem:[%s7 + $0x18] sm:$0xf]
        %v2680 = vld [vmem:[%s7 + $0x1c] sm:$0xf]
        %v2681 = vld [vmem:[%s7 + $0x20] sm:$0xf]
        %v2682 = vld [vmem:[%s7 + $0x24] sm:$0xf]
        %v2683 = vld [vmem:[%s7 + $0x28] sm:$0xf]
        %v2684 = vld [vmem:[%s7 + $0x2c] sm:$0xf]
        %v2685 = vld [vmem:[%s7 + $0x30] sm:$0xf]
        %v2686 = vld [vmem:[%s7 + $0x34] sm:$0xf]
        %v2687 = vld [vmem:[%s7 + $0x38] sm:$0xf]
        %v2688 = vld [vmem:[%s7 + $0x3c] sm:$0xf]
        %v2689 = vlaneseq
        %v2690 = vshrl.u32 %v2689, 7
        %v2691 = vsub.s32 0, %v2690
        %v2692 = vrot.slane %v2649, %v2691
        %v2709 = vunpack.c.l.b16 %v2673
        %v2710 = vunpack.c.l.b16 %v2674
        %v2711 = vunpack.c.l.b16 %v2675
        %v2712 = vunpack.c.l.b16 %v2676
        %v2713 = vunpack.c.l.b16 %v2677
        %v2714 = vunpack.c.l.b16 %v2678
        %v2715 = vunpack.c.l.b16 %v2679
        %v2716 = vunpack.c.l.b16 %v2680
        %v2717 = vunpack.c.l.b16 %v2681
        %v2718 = vunpack.c.l.b16 %v2682
        %v2719 = vunpack.c.l.b16 %v2683
        %v2720 = vunpack.c.l.b16 %v2684
        %v2721 = vunpack.c.l.b16 %v2685
        %v2722 = vunpack.c.l.b16 %v2686
        %v2723 = vunpack.c.l.b16 %v2687
        %v2724 = vunpack.c.l.b16 %v2688
        %v2725 = vpack.c.b16 %v2710, %v2709
        %v2726 = vpack.c.b16 %v2712, %v2711
        %v2727 = vpack.c.b16 %v2714, %v2713
        %v2728 = vpack.c.b16 %v2716, %v2715
        %v2729 = vpack.c.b16 %v2718, %v2717
        %v2730 = vpack.c.b16 %v2720, %v2719
        %v2731 = vpack.c.b16 %v2722, %v2721
        %v2732 = vpack.c.b16 %v2724, %v2723
        %2741 = vmatprep.subr.bf16.mxu0 0
        %2742 = vmatpush1.bf16.msra.mxu0 %v2725
        %2743 = vmatprep.subr.bf16.mxu0 0
        %2744 = vmatpush1.bf16.msra.mxu0 %v2726
        %2745 = vmatprep.subr.bf16.mxu0 0
        %2746 = vmatpush1.bf16.msra.mxu0 %v2727
        %2747 = vmatprep.subr.bf16.mxu0 0
        %2748 = vmatpush1.bf16.msra.mxu0 %v2728
        %2749 = vmatprep.subr.bf16.mxu0 0
        %2750 = vmatpush1.bf16.msra.mxu0 %v2729
        %2751 = vmatprep.subr.bf16.mxu0 0
        %2752 = vmatpush1.bf16.msra.mxu0 %v2730
        %2753 = vmatprep.subr.bf16.mxu0 0
        %2754 = vmatpush1.bf16.msra.mxu0 %v2731
        %2755 = vmatprep.subr.bf16.mxu0 0
        %2756 = vmatpush1.bf16.msra.mxu0 %v2732
        %2757 = vmatprep.subr.bf16.mxu0 0
        %2758 = vmatpush1.bf16.msra.mxu0 0
        %2759 = vmatprep.subr.bf16.mxu0 0
        %2760 = vmatpush1.bf16.msra.mxu0 0
        %2761 = vmatprep.subr.bf16.mxu0 0
        %2762 = vmatpush1.bf16.msra.mxu0 0
        %2763 = vmatprep.subr.bf16.mxu0 0
        %2764 = vmatpush1.bf16.msra.mxu0 0
        %2765 = vmatprep.subr.bf16.mxu0 0
        %2766 = vmatpush1.bf16.msra.mxu0 0
        %2767 = vmatprep.subr.bf16.mxu0 0
        %2768 = vmatpush1.bf16.msra.mxu0 0
        %2769 = vmatprep.subr.bf16.mxu0 0
        %2770 = vmatpush1.bf16.msra.mxu0 0
        %2771 = vmatprep.subr.bf16.mxu0 0
        %2772 = vmatpush1.bf16.msra.mxu0 0
        %2773 = vmatprep.mubr.bf16.mxu0 0
        %2774 = vmatmul.mubr.bf16.gmra.mrb[0].mxu0 %v2672
        %v2775 = vpop.f32.mrb[0].mxu0
        %v2776 = vadd.f32 %v2692, %v2775
        %v2777 = vpop.f32.mrb[0].mxu0
        %v2778 = vpop.f32.mrb[0].mxu0
        %v2779 = vadd.f32 %v2692, %v2778
        %v2780 = vpop.f32.mrb[0].mxu0
        %2781 = vdwg.mxu0
        %v2782 = vlaneseq
        %v2783 = vshrl.u32 %v2782, 7
        %v2784 = vsub.s32 1, %v2783
        %v2785 = vrot.slane %v2649, %v2784
        %v2786 = vmul.f32 %v2776, %v2785
        %v2787 = vmul.f32 %v2779, %v2785
        %v2788 = vlaneseq
        %v2789 = vshrl.u32 %v2788, 7
        %v2790 = vsub.s32 2, %v2789
        %v2791 = vrot.slane %v2649, %v2790
        %v2792 = vadd.f32 %v2786, %v2791
        %v2793 = vadd.f32 %v2787, %v2791
        %vm2794 = vcmp.ge.f32.partialorder %v2792, 0.0
        %vm2795 = vcmp.ge.f32.partialorder %v2793, 0.0
        %v2796 = vlaneseq
        %v2797 = vshrl.u32 %v2796, 7
        %v2798 = vsub.s32 3, %v2797
        %v2799 = vrot.slane %v2649, %v2798
        %v2800 = vmul.f32 %v2799, %v2792
        %v2801 = vmul.f32 %v2799, %v2793
        %v2802 = vsel %vm2794, %v2792, %v2800
        %v2803 = vsel %vm2795, %v2793, %v2801
        %vm2806 = vcmask 1040384
        %v2807 = vrot.slane %v2802, 7
        %v2808 = vrot.slane %v2803, 7
        %v2809 = vsel %vm2806, %v2807, %v2808
        %v2812 = vsel %vm2806, 0.0, %v2807
        %vm2813 = vcmask 1046528
        %v2814 = vrot.slane %v2802, 1
        %v2815 = vrot.slane %v2803, 1
        %v2816 = vsel %vm2813, %v2814, %v2815
        %v2818 = vsel %vm2813, %v2815, 0.0
        %2819 = vrot.lane.b32.xlu0 %v2802, 32
        %v2820 = vpop.permute.xlu0 %2819
        %2821 = vrot.lane.b32.xlu0 %v2803, 32
        %v2822 = vpop.permute.xlu0 %2821
        %2826 = vrot.lane.b32.xlu0 %v2816, 64
        %v2827 = vpop.permute.xlu0 %2826
        %2828 = vrot.lane.b32.xlu0 %v2818, 64
        %v2829 = vpop.permute.xlu0 %2828
        %vm2832 = vcmask 261120
        %v2833 = vsel %vm2832, %v2812, %v2820
        %v2834 = vsel %vm2832, %v2809, %v2822
        %vm2835 = vcmask 523264
        %v2836 = vsel %vm2835, %v2833, %v2827
        %v2837 = vsel %vm2835, %v2834, %v2829
        %v2838 = vpack.c.bf16 %v2837, %v2836
        %v2839 = vld [vmem:[%s9] sm:$0xf]
        %v2840 = vld [vmem:[%s9 + $0x4] sm:$0xf]
        %v2841 = vld [vmem:[%s9 + $0x8] sm:$0xf]
        %v2842 = vld [vmem:[%s9 + $0xc] sm:$0xf]
        %v2843 = vld [vmem:[%s9 + $0x10] sm:$0xf]
        %v2844 = vld [vmem:[%s9 + $0x14] sm:$0xf]
        %v2845 = vld [vmem:[%s9 + $0x18] sm:$0xf]
        %v2846 = vld [vmem:[%s9 + $0x1c] sm:$0xf]
        %v2847 = vld [vmem:[%s9 + $0x20] sm:$0xf]
        %v2848 = vld [vmem:[%s9 + $0x24] sm:$0xf]
        %v2849 = vld [vmem:[%s9 + $0x28] sm:$0xf]
        %v2850 = vld [vmem:[%s9 + $0x2c] sm:$0xf]
        %v2851 = vlaneseq
        %v2852 = vshrl.u32 %v2851, 7
        %v2853 = vsub.s32 4, %v2852
        %v2854 = vrot.slane %v2649, %v2853
        %v2867 = vunpack.c.l.b16 %v2839
        %v2868 = vunpack.c.l.b16 %v2840
        %v2869 = vunpack.c.l.b16 %v2841
        %v2870 = vunpack.c.l.b16 %v2842
        %v2871 = vunpack.c.l.b16 %v2843
        %v2872 = vunpack.c.l.b16 %v2844
        %v2873 = vunpack.c.l.b16 %v2845
        %v2874 = vunpack.c.l.b16 %v2846
        %v2875 = vunpack.c.l.b16 %v2847
        %v2876 = vunpack.c.l.b16 %v2848
        %v2877 = vunpack.c.l.b16 %v2849
        %v2878 = vunpack.c.l.b16 %v2850
        %v2879 = vpack.c.b16 %v2868, %v2867
        %v2880 = vpack.c.b16 %v2870, %v2869
        %v2881 = vpack.c.b16 %v2872, %v2871
        %v2882 = vpack.c.b16 %v2874, %v2873
        %v2883 = vpack.c.b16 %v2876, %v2875
        %v2884 = vpack.c.b16 %v2878, %v2877
        %vm2891 = vcmask 785408
        %v2893 = vsel %vm2891, %v2838, 0
        %2895 = vmatprep.subr.bf16.mxu0 0
        %2896 = vmatpush1.bf16.msra.mxu0 %v2879
        %2897 = vmatprep.subr.bf16.mxu0 0
        %2898 = vmatpush1.bf16.msra.mxu0 %v2880
        %2899 = vmatprep.subr.bf16.mxu0 0
        %2900 = vmatpush1.bf16.msra.mxu0 %v2881
        %2901 = vmatprep.subr.bf16.mxu0 0
        %2902 = vmatpush1.bf16.msra.mxu0 %v2882
        %2903 = vmatprep.subr.bf16.mxu0 0
        %2904 = vmatpush1.bf16.msra.mxu0 %v2883
        %2905 = vmatprep.subr.bf16.mxu0 0
        %2906 = vmatpush1.bf16.msra.mxu0 %v2884
        %2907 = vmatprep.subr.bf16.mxu0 0
        %2908 = vmatpush1.bf16.msra.mxu0 0
        %2909 = vmatprep.subr.bf16.mxu0 0
        %2910 = vmatpush1.bf16.msra.mxu0 0
        %2911 = vmatprep.subr.bf16.mxu0 0
        %2912 = vmatpush1.bf16.msra.mxu0 0
        %2913 = vmatprep.subr.bf16.mxu0 0
        %2914 = vmatpush1.bf16.msra.mxu0 0
        %2915 = vmatprep.subr.bf16.mxu0 0
        %2916 = vmatpush1.bf16.msra.mxu0 0
        %2917 = vmatprep.subr.bf16.mxu0 0
        %2918 = vmatpush1.bf16.msra.mxu0 0
        %2919 = vmatprep.subr.bf16.mxu0 0
        %2920 = vmatpush1.bf16.msra.mxu0 0
        %2921 = vmatprep.subr.bf16.mxu0 0
        %2922 = vmatpush1.bf16.msra.mxu0 0
        %2923 = vmatprep.subr.bf16.mxu0 0
        %2924 = vmatpush1.bf16.msra.mxu0 0
        %2925 = vmatprep.subr.bf16.mxu0 0
        %2926 = vmatpush1.bf16.msra.mxu0 0
        %2927 = vmatprep.mubr.bf16.mxu0 0
        %2928 = vmatmul.mubr.bf16.gmra.mrb[0].mxu0 %v2893
        %v2929 = vpop.f32.mrb[0].mxu0
        %v2930 = vadd.f32 %v2854, %v2929
        %v2931 = vpop.f32.mrb[0].mxu0
        %v2932 = vpop.f32.mrb[0].mxu0
        %v2933 = vadd.f32 %v2854, %v2932
        %v2934 = vpop.f32.mrb[0].mxu0
        %2935 = vdwg.mxu0
        %v2936 = vlaneseq
        %v2937 = vshrl.u32 %v2936, 7
        %v2938 = vsub.s32 5, %v2937
        %v2939 = vrot.slane %v2649, %v2938
        %v2940 = vmul.f32 %v2930, %v2939
        %v2941 = vmul.f32 %v2933, %v2939
        %v2942 = vlaneseq
        %v2943 = vshrl.u32 %v2942, 7
        %v2944 = vsub.s32 6, %v2943
        %v2945 = vrot.slane %v2649, %v2944
        %v2946 = vadd.f32 %v2940, %v2945
        %v2947 = vadd.f32 %v2941, %v2945
        %vm2948 = vcmp.ge.f32.partialorder %v2946, 0.0
        %vm2949 = vcmp.ge.f32.partialorder %v2947, 0.0
        %v2950 = vlaneseq
        %v2951 = vshrl.u32 %v2950, 7
        %v2952 = vsub.s32 7, %v2951
        %v2953 = vrot.slane %v2649, %v2952
        %v2954 = vmul.f32 %v2953, %v2946
        %v2955 = vmul.f32 %v2953, %v2947
        %v2956 = vsel %vm2948, %v2946, %v2954
        %v2957 = vsel %vm2949, %v2947, %v2955
        %v2958 = vpack.c.bf16 %v2957, %v2956
        %v2959 = vld [vmem:[%s11] sm:$0xf]
        %v2960 = vld [vmem:[%s11 + $0x4] sm:$0xf]
        %v2961 = vld [vmem:[%s11 + $0x8] sm:$0xf]
        %v2962 = vld [vmem:[%s11 + $0xc] sm:$0xf]
        %v2963 = vlaneseq
        %v2964 = vshrl.u32 %v2963, 7
        %v2965 = vsub.s32 3, %v2964
        %v2966 = vrot.slane %v2648, %v2965
        %v2971 = vunpack.c.l.b16 %v2959
        %v2972 = vunpack.c.l.b16 %v2960
        %v2973 = vunpack.c.l.b16 %v2961
        %v2974 = vunpack.c.l.b16 %v2962
        %v2975 = vpack.c.b16 %v2972, %v2971
        %v2976 = vpack.c.b16 %v2974, %v2973
        %v2980 = vsel %vm2832, %v2958, 0
        %2982 = vmatprep.subr.bf16.mxu0 0
        %2983 = vmatpush1.bf16.msra.mxu0 %v2975
        %2984 = vmatprep.subr.bf16.mxu0 0
        %2985 = vmatpush1.bf16.msra.mxu0 %v2976
        %2986 = vmatprep.subr.bf16.mxu0 0
        %2987 = vmatpush1.bf16.msra.mxu0 0
        %2988 = vmatprep.subr.bf16.mxu0 0
        %2989 = vmatpush1.bf16.msra.mxu0 0
        %2990 = vmatprep.subr.bf16.mxu0 0
        %2991 = vmatpush1.bf16.msra.mxu0 0
        %2992 = vmatprep.subr.bf16.mxu0 0
        %2993 = vmatpush1.bf16.msra.mxu0 0
        %2994 = vmatprep.subr.bf16.mxu0 0
        %2995 = vmatpush1.bf16.msra.mxu0 0
        %2996 = vmatprep.subr.bf16.mxu0 0
        %2997 = vmatpush1.bf16.msra.mxu0 0
        %2998 = vmatprep.subr.bf16.mxu0 0
        %2999 = vmatpush1.bf16.msra.mxu0 0
        %3000 = vmatprep.subr.bf16.mxu0 0
        %3001 = vmatpush1.bf16.msra.mxu0 0
        %3002 = vmatprep.subr.bf16.mxu0 0
        %3003 = vmatpush1.bf16.msra.mxu0 0
        %3004 = vmatprep.subr.bf16.mxu0 0
        %3005 = vmatpush1.bf16.msra.mxu0 0
        %3006 = vmatprep.subr.bf16.mxu0 0
        %3007 = vmatpush1.bf16.msra.mxu0 0
        %3008 = vmatprep.subr.bf16.mxu0 0
        %3009 = vmatpush1.bf16.msra.mxu0 0
        %3010 = vmatprep.subr.bf16.mxu0 0
        %3011 = vmatpush1.bf16.msra.mxu0 0
        %3012 = vmatprep.subr.bf16.mxu0 0
        %3013 = vmatpush1.bf16.msra.mxu0 0
        %3014 = vmatprep.mubr.bf16.mxu0 0
        %3015 = vmatmul.mubr.bf16.gmra.mrb[0].mxu0 %v2980
        %v3016 = vpop.f32.mrb[0].mxu0
        %v3017 = vadd.f32 %v2966, %v3016
        %v3018 = vpop.f32.mrb[0].mxu0
        %v3019 = vpop.f32.mrb[0].mxu0
        %v3020 = vadd.f32 %v2966, %v3019
        %v3021 = vpop.f32.mrb[0].mxu0
        %3022 = vdwg.mxu0
        %v3023 = vadd.f32 %v2646, %v3017
        %v3024 = vadd.f32 %v2647, %v3020
        %v3025 = vpack.c.bf16 %v2647, %v2646
        %v3026 = vld [vmem:[%s143] sm:$0xf]
        %vm3027 = vcmask 130048
        %v3029 = vsel %vm3027, %v3026, 0
        %3031 = vmatprep.subr.bf16.mxu0 0
        %3032 = vmatpush1.bf16.msra.mxu0 %v3025
        %3033 = vmatprep.subr.bf16.mxu0 0
        %3034 = vmatpush1.bf16.msra.mxu0 0
        %3035 = vmatprep.subr.bf16.mxu0 0
        %3036 = vmatpush1.bf16.msra.mxu0 0
        %3037 = vmatprep.subr.bf16.mxu0 0
        %3038 = vmatpush1.bf16.msra.mxu0 0
        %3039 = vmatprep.subr.bf16.mxu0 0
        %3040 = vmatpush1.bf16.msra.mxu0 0
        %3041 = vmatprep.subr.bf16.mxu0 0
        %3042 = vmatpush1.bf16.msra.mxu0 0
        %3043 = vmatprep.subr.bf16.mxu0 0
        %3044 = vmatpush1.bf16.msra.mxu0 0
        %3045 = vmatprep.subr.bf16.mxu0 0
        %3046 = vmatpush1.bf16.msra.mxu0 0
        %3047 = vmatprep.subr.bf16.mxu0 0
        %3048 = vmatpush1.bf16.msra.mxu0 0
        %3049 = vmatprep.subr.bf16.mxu0 0
        %3050 = vmatpush1.bf16.msra.mxu0 0
        %3051 = vmatprep.subr.bf16.mxu0 0
        %3052 = vmatpush1.bf16.msra.mxu0 0
        %3053 = vmatprep.subr.bf16.mxu0 0
        %3054 = vmatpush1.bf16.msra.mxu0 0
        %3055 = vmatprep.subr.bf16.mxu0 0
        %3056 = vmatpush1.bf16.msra.mxu0 0
        %3057 = vmatprep.subr.bf16.mxu0 0
        %3058 = vmatpush1.bf16.msra.mxu0 0
        %3059 = vmatprep.subr.bf16.mxu0 0
        %3060 = vmatpush1.bf16.msra.mxu0 0
        %3061 = vmatprep.subr.bf16.mxu0 0
        %3062 = vmatpush1.bf16.msra.mxu0 0
        %3063 = vmatprep.mubr.bf16.mxu0 0
        %3064 = vmatmul.mubr.bf16.gmra.mrb[0].mxu0 %v3029
        %v3065 = vpop.f32.mrb[0].mxu0
        %v3066 = vadd.f32 0.0, %v3065
        %v3067 = vpop.f32.mrb[0].mxu0
        %v3068 = vpop.f32.mrb[0].mxu0
        %v3069 = vpop.f32.mrb[0].mxu0
        %3070 = vdwg.mxu0
        %s3071 = scalar_lea.vmem %s143, 4
        %v3072 = vld [vmem:[%s3071] sm:$0xf]
        %v3074 = vsel %vm3027, %v3072, 0
        %3076 = vmatprep.subr.bf16.mxu0 0
        %3077 = vmatpush1.bf16.msra.mxu0 %v3025
        %3078 = vmatprep.subr.bf16.mxu0 0
        %3079 = vmatpush1.bf16.msra.mxu0 0
        %3080 = vmatprep.subr.bf16.mxu0 0
        %3081 = vmatpush1.bf16.msra.mxu0 0
        %3082 = vmatprep.subr.bf16.mxu0 0
        %3083 = vmatpush1.bf16.msra.mxu0 0
        %3084 = vmatprep.subr.bf16.mxu0 0
        %3085 = vmatpush1.bf16.msra.mxu0 0
        %3086 = vmatprep.subr.bf16.mxu0 0
        %3087 = vmatpush1.bf16.msra.mxu0 0
        %3088 = vmatprep.subr.bf16.mxu0 0
        %3089 = vmatpush1.bf16.msra.mxu0 0
        %3090 = vmatprep.subr.bf16.mxu0 0
        %3091 = vmatpush1.bf16.msra.mxu0 0
        %3092 = vmatprep.subr.bf16.mxu0 0
        %3093 = vmatpush1.bf16.msra.mxu0 0
        %3094 = vmatprep.subr.bf16.mxu0 0
        %3095 = vmatpush1.bf16.msra.mxu0 0
        %3096 = vmatprep.subr.bf16.mxu0 0
        %3097 = vmatpush1.bf16.msra.mxu0 0
        %3098 = vmatprep.subr.bf16.mxu0 0
        %3099 = vmatpush1.bf16.msra.mxu0 0
        %3100 = vmatprep.subr.bf16.mxu0 0
        %3101 = vmatpush1.bf16.msra.mxu0 0
        %3102 = vmatprep.subr.bf16.mxu0 0
        %3103 = vmatpush1.bf16.msra.mxu0 0
        %3104 = vmatprep.subr.bf16.mxu0 0
        %3105 = vmatpush1.bf16.msra.mxu0 0
        %3106 = vmatprep.subr.bf16.mxu0 0
        %3107 = vmatpush1.bf16.msra.mxu0 0
        %3108 = vmatprep.mubr.bf16.mxu0 0
        %3109 = vmatmul.mubr.bf16.gmra.mrb[0].mxu0 %v3074
        %v3110 = vpop.f32.mrb[0].mxu0
        %v3111 = vadd.f32 0.0, %v3110
        %v3112 = vpop.f32.mrb[0].mxu0
        %v3113 = vpop.f32.mrb[0].mxu0
        %v3114 = vpop.f32.mrb[0].mxu0
        %3115 = vdwg.mxu0
        %v3116 = vmax.f32 %v3066, %v3111
        %v3117 = vpack.c.bf16 %v3116, %v3116
        %v3118 = vld [vmem:[%s151] sm:$0xf]
        %v3119 = vld [vmem:[%s151 + $0x4] sm:$0xf]
        %v3120 = vld [vmem:[%s151 + $0x8] sm:$0xf]
        %v3121 = vld [vmem:[%s151 + $0xc] sm:$0xf]
        %v3122 = vld [vmem:[%s151 + $0x10] sm:$0xf]
        %v3123 = vld [vmem:[%s151 + $0x14] sm:$0xf]
        %v3124 = vld [vmem:[%s151 + $0x18] sm:$0xf]
        %v3125 = vld [vmem:[%s151 + $0x1c] sm:$0xf]
        %v3126 = vld [vmem:[%s151 + $0x20] sm:$0xf]
        %v3127 = vld [vmem:[%s151 + $0x24] sm:$0xf]
        %v3128 = vld [vmem:[%s151 + $0x28] sm:$0xf]
        %v3129 = vld [vmem:[%s151 + $0x2c] sm:$0xf]
        %v3130 = vld [vmem:[%s151 + $0x30] sm:$0xf]
        %v3131 = vld [vmem:[%s151 + $0x34] sm:$0xf]
        %v3132 = vld [vmem:[%s151 + $0x38] sm:$0xf]
        %v3133 = vld [vmem:[%s151 + $0x3c] sm:$0xf]
        %v3150 = vunpack.c.l.b16 %v3118
        %v3151 = vunpack.c.l.b16 %v3119
        %v3152 = vunpack.c.l.b16 %v3120
        %v3153 = vunpack.c.l.b16 %v3121
        %v3154 = vunpack.c.l.b16 %v3122
        %v3155 = vunpack.c.l.b16 %v3123
        %v3156 = vunpack.c.l.b16 %v3124
        %v3157 = vunpack.c.l.b16 %v3125
        %v3158 = vunpack.c.l.b16 %v3126
        %v3159 = vunpack.c.l.b16 %v3127
        %v3160 = vunpack.c.l.b16 %v3128
        %v3161 = vunpack.c.l.b16 %v3129
        %v3162 = vunpack.c.l.b16 %v3130
        %v3163 = vunpack.c.l.b16 %v3131
        %v3164 = vunpack.c.l.b16 %v3132
        %v3165 = vunpack.c.l.b16 %v3133
        %v3166 = vpack.c.b16 %v3151, %v3150
        %v3167 = vpack.c.b16 %v3153, %v3152
        %v3168 = vpack.c.b16 %v3155, %v3154
        %v3169 = vpack.c.b16 %v3157, %v3156
        %v3170 = vpack.c.b16 %v3159, %v3158
        %v3171 = vpack.c.b16 %v3161, %v3160
        %v3172 = vpack.c.b16 %v3163, %v3162
        %v3173 = vpack.c.b16 %v3165, %v3164
        %3182 = vmatprep.subr.bf16.mxu0 0
        %3183 = vmatpush1.bf16.msra.mxu0 %v3166
        %3184 = vmatprep.subr.bf16.mxu0 0
        %3185 = vmatpush1.bf16.msra.mxu0 %v3167
        %3186 = vmatprep.subr.bf16.mxu0 0
        %3187 = vmatpush1.bf16.msra.mxu0 %v3168
        %3188 = vmatprep.subr.bf16.mxu0 0
        %3189 = vmatpush1.bf16.msra.mxu0 %v3169
        %3190 = vmatprep.subr.bf16.mxu0 0
        %3191 = vmatpush1.bf16.msra.mxu0 %v3170
        %3192 = vmatprep.subr.bf16.mxu0 0
        %3193 = vmatpush1.bf16.msra.mxu0 %v3171
        %3194 = vmatprep.subr.bf16.mxu0 0
        %3195 = vmatpush1.bf16.msra.mxu0 %v3172
        %3196 = vmatprep.subr.bf16.mxu0 0
        %3197 = vmatpush1.bf16.msra.mxu0 %v3173
        %3198 = vmatprep.subr.bf16.mxu0 0
        %3199 = vmatpush1.bf16.msra.mxu0 0
        %3200 = vmatprep.subr.bf16.mxu0 0
        %3201 = vmatpush1.bf16.msra.mxu0 0
        %3202 = vmatprep.subr.bf16.mxu0 0
        %3203 = vmatpush1.bf16.msra.mxu0 0
        %3204 = vmatprep.subr.bf16.mxu0 0
        %3205 = vmatpush1.bf16.msra.mxu0 0
        %3206 = vmatprep.subr.bf16.mxu0 0
        %3207 = vmatpush1.bf16.msra.mxu0 0
        %3208 = vmatprep.subr.bf16.mxu0 0
        %3209 = vmatpush1.bf16.msra.mxu0 0
        %3210 = vmatprep.subr.bf16.mxu0 0
        %3211 = vmatpush1.bf16.msra.mxu0 0
        %3212 = vmatprep.subr.bf16.mxu0 0
        %3213 = vmatpush1.bf16.msra.mxu0 0
        %3214 = vmatprep.mubr.bf16.mxu0 0
        %3215 = vmatmul.mubr.bf16.gmra.mrb[0].mxu0 %v3117
        %v3216 = vpop.f32.mrb[0].mxu0
        %v3217 = vadd.f32 0.0, %v3216
        %v3218 = vpop.f32.mrb[0].mxu0
        %v3219 = vpop.f32.mrb[0].mxu0
        %v3220 = vpop.f32.mrb[0].mxu0
        %3221 = vdwg.mxu0
        %s3222 = scalar_lea.vmem %s151, 64
        %v3223 = vld [vmem:[%s3222] sm:$0xf]
        %v3224 = vld [vmem:[%s3222 + $0x4] sm:$0xf]
        %v3225 = vld [vmem:[%s3222 + $0x8] sm:$0xf]
        %v3226 = vld [vmem:[%s3222 + $0xc] sm:$0xf]
        %v3227 = vld [vmem:[%s3222 + $0x10] sm:$0xf]
        %v3228 = vld [vmem:[%s3222 + $0x14] sm:$0xf]
        %v3229 = vld [vmem:[%s3222 + $0x18] sm:$0xf]
        %v3230 = vld [vmem:[%s3222 + $0x1c] sm:$0xf]
        %v3231 = vld [vmem:[%s3222 + $0x20] sm:$0xf]
        %v3232 = vld [vmem:[%s3222 + $0x24] sm:$0xf]
        %v3233 = vld [vmem:[%s3222 + $0x28] sm:$0xf]
        %v3234 = vld [vmem:[%s3222 + $0x2c] sm:$0xf]
        %v3235 = vld [vmem:[%s3222 + $0x30] sm:$0xf]
        %v3236 = vld [vmem:[%s3222 + $0x34] sm:$0xf]
        %v3237 = vld [vmem:[%s3222 + $0x38] sm:$0xf]
        %v3238 = vld [vmem:[%s3222 + $0x3c] sm:$0xf]
        %v3255 = vunpack.c.l.b16 %v3223
        %v3256 = vunpack.c.l.b16 %v3224
        %v3257 = vunpack.c.l.b16 %v3225
        %v3258 = vunpack.c.l.b16 %v3226
        %v3259 = vunpack.c.l.b16 %v3227
        %v3260 = vunpack.c.l.b16 %v3228
        %v3261 = vunpack.c.l.b16 %v3229
        %v3262 = vunpack.c.l.b16 %v3230
        %v3263 = vunpack.c.l.b16 %v3231
        %v3264 = vunpack.c.l.b16 %v3232
        %v3265 = vunpack.c.l.b16 %v3233
        %v3266 = vunpack.c.l.b16 %v3234
        %v3267 = vunpack.c.l.b16 %v3235
        %v3268 = vunpack.c.l.b16 %v3236
        %v3269 = vunpack.c.l.b16 %v3237
        %v3270 = vunpack.c.l.b16 %v3238
        %v3271 = vpack.c.b16 %v3256, %v3255
        %v3272 = vpack.c.b16 %v3258, %v3257
        %v3273 = vpack.c.b16 %v3260, %v3259
        %v3274 = vpack.c.b16 %v3262, %v3261
        %v3275 = vpack.c.b16 %v3264, %v3263
        %v3276 = vpack.c.b16 %v3266, %v3265
        %v3277 = vpack.c.b16 %v3268, %v3267
        %v3278 = vpack.c.b16 %v3270, %v3269
        %3287 = vmatprep.subr.bf16.mxu0 0
        %3288 = vmatpush1.bf16.msra.mxu0 %v3271
        %3289 = vmatprep.subr.bf16.mxu0 0
        %3290 = vmatpush1.bf16.msra.mxu0 %v3272
        %3291 = vmatprep.subr.bf16.mxu0 0
        %3292 = vmatpush1.bf16.msra.mxu0 %v3273
        %3293 = vmatprep.subr.bf16.mxu0 0
        %3294 = vmatpush1.bf16.msra.mxu0 %v3274
        %3295 = vmatprep.subr.bf16.mxu0 0
        %3296 = vmatpush1.bf16.msra.mxu0 %v3275
        %3297 = vmatprep.subr.bf16.mxu0 0
        %3298 = vmatpush1.bf16.msra.mxu0 %v3276
        %3299 = vmatprep.subr.bf16.mxu0 0
        %3300 = vmatpush1.bf16.msra.mxu0 %v3277
        %3301 = vmatprep.subr.bf16.mxu0 0
        %3302 = vmatpush1.bf16.msra.mxu0 %v3278
        %3303 = vmatprep.subr.bf16.mxu0 0
        %3304 = vmatpush1.bf16.msra.mxu0 0
        %3305 = vmatprep.subr.bf16.mxu0 0
        %3306 = vmatpush1.bf16.msra.mxu0 0
        %3307 = vmatprep.subr.bf16.mxu0 0
        %3308 = vmatpush1.bf16.msra.mxu0 0
        %3309 = vmatprep.subr.bf16.mxu0 0
        %3310 = vmatpush1.bf16.msra.mxu0 0
        %3311 = vmatprep.subr.bf16.mxu0 0
        %3312 = vmatpush1.bf16.msra.mxu0 0
        %3313 = vmatprep.subr.bf16.mxu0 0
        %3314 = vmatpush1.bf16.msra.mxu0 0
        %3315 = vmatprep.subr.bf16.mxu0 0
        %3316 = vmatpush1.bf16.msra.mxu0 0
        %3317 = vmatprep.subr.bf16.mxu0 0
        %3318 = vmatpush1.bf16.msra.mxu0 0
        %3319 = vmatprep.mubr.bf16.mxu0 0
        %3320 = vmatmul.mubr.bf16.gmra.mrb[0].mxu0 %v3117
        %v3321 = vpop.f32.mrb[0].mxu0
        %v3322 = vadd.f32 0.0, %v3321
        %v3323 = vpop.f32.mrb[0].mxu0
        %v3324 = vpop.f32.mrb[0].mxu0
        %v3325 = vpop.f32.mrb[0].mxu0
        %3326 = vdwg.mxu0
        %v3327 = vmax.f32 %v3217, %v3322
        %v3328 = vld [vmem:[%s13] sm:$0xf]
        %v3329 = vld [vmem:[%s15] sm:$0xff]
        %v3330 = vlaneseq
        %v3331 = vshrl.u32 %v3330, 7
        %v3332 = vsub.s32 0, %v3331
        %v3333 = vrot.slane %v3328, %v3332
        %v3334 = vmul.f32 %v3327, %v3333
        %v3335 = vlaneseq
        %v3336 = vshrl.u32 %v3335, 7
        %v3337 = vsub.s32 1, %v3336
        %v3338 = vrot.slane %v3328, %v3337
        %v3339 = vadd.f32 %v3334, %v3338
        %vm3340 = vcmp.ge.f32.partialorder %v3339, 0.0
        %v3341 = vlaneseq
        %v3342 = vshrl.u32 %v3341, 7
        %v3343 = vsub.s32 2, %v3342
        %v3344 = vrot.slane %v3328, %v3343
        %v3345 = vmul.f32 %v3344, %v3339
        %v3346 = vsel %vm3340, %v3339, %v3345
        %v3347 = vpack.c.bf16 %v3346, %v3346
        %v3348 = vld [vmem:[%s17] sm:$0xf]
        %v3349 = vld [vmem:[%s17 + $0x4] sm:$0xf]
        %v3350 = vld [vmem:[%s17 + $0x8] sm:$0xf]
        %v3351 = vld [vmem:[%s17 + $0xc] sm:$0xf]
        %v3352 = vld [vmem:[%s17 + $0x10] sm:$0xf]
        %v3353 = vld [vmem:[%s17 + $0x14] sm:$0xf]
        %v3354 = vld [vmem:[%s17 + $0x18] sm:$0xf]
        %v3355 = vld [vmem:[%s17 + $0x1c] sm:$0xf]
        %v3356 = vlaneseq
        %v3357 = vshrl.u32 %v3356, 7
        %v3358 = vsub.s32 0, %v3357
        %v3359 = vrot.slane %v3329, %v3358
        %v3368 = vunpack.c.l.b16 %v3348
        %v3369 = vunpack.c.l.b16 %v3349
        %v3370 = vunpack.c.l.b16 %v3350
        %v3371 = vunpack.c.l.b16 %v3351
        %v3372 = vunpack.c.l.b16 %v3352
        %v3373 = vunpack.c.l.b16 %v3353
        %v3374 = vunpack.c.l.b16 %v3354
        %v3375 = vunpack.c.l.b16 %v3355
        %v3376 = vpack.c.b16 %v3369, %v3368
        %v3377 = vpack.c.b16 %v3371, %v3370
        %v3378 = vpack.c.b16 %v3373, %v3372
        %v3379 = vpack.c.b16 %v3375, %v3374
        %v3385 = vsel %vm2835, %v3347, 0
        %3387 = vmatprep.subr.bf16.mxu0 0
        %3388 = vmatpush1.bf16.msra.mxu0 %v3376
        %3389 = vmatprep.subr.bf16.mxu0 0
        %3390 = vmatpush1.bf16.msra.mxu0 %v3377
        %3391 = vmatprep.subr.bf16.mxu0 0
        %3392 = vmatpush1.bf16.msra.mxu0 %v3378
        %3393 = vmatprep.subr.bf16.mxu0 0
        %3394 = vmatpush1.bf16.msra.mxu0 %v3379
        %3395 = vmatprep.subr.bf16.mxu0 0
        %3396 = vmatpush1.bf16.msra.mxu0 0
        %3397 = vmatprep.subr.bf16.mxu0 0
        %3398 = vmatpush1.bf16.msra.mxu0 0
        %3399 = vmatprep.subr.bf16.mxu0 0
        %3400 = vmatpush1.bf16.msra.mxu0 0
        %3401 = vmatprep.subr.bf16.mxu0 0
        %3402 = vmatpush1.bf16.msra.mxu0 0
        %3403 = vmatprep.subr.bf16.mxu0 0
        %3404 = vmatpush1.bf16.msra.mxu0 0
        %3405 = vmatprep.subr.bf16.mxu0 0
        %3406 = vmatpush1.bf16.msra.mxu0 0
        %3407 = vmatprep.subr.bf16.mxu0 0
        %3408 = vmatpush1.bf16.msra.mxu0 0
        %3409 = vmatprep.subr.bf16.mxu0 0
        %3410 = vmatpush1.bf16.msra.mxu0 0
        %3411 = vmatprep.subr.bf16.mxu0 0
        %3412 = vmatpush1.bf16.msra.mxu0 0
        %3413 = vmatprep.subr.bf16.mxu0 0
        %3414 = vmatpush1.bf16.msra.mxu0 0
        %3415 = vmatprep.subr.bf16.mxu0 0
        %3416 = vmatpush1.bf16.msra.mxu0 0
        %3417 = vmatprep.subr.bf16.mxu0 0
        %3418 = vmatpush1.bf16.msra.mxu0 0
        %3419 = vmatprep.mubr.bf16.mxu0 0
        %3420 = vmatmul.mubr.bf16.gmra.mrb[0].mxu0 %v3385
        %v3421 = vpop.f32.mrb[0].mxu0
        %v3422 = vadd.f32 %v3359, %v3421
        %v3423 = vpop.f32.mrb[0].mxu0
        %v3424 = vpop.f32.mrb[0].mxu0
        %v3425 = vpop.f32.mrb[0].mxu0
        %3426 = vdwg.mxu0
        %v3427 = vlaneseq
        %v3428 = vshrl.u32 %v3427, 7
        %v3429 = vsub.s32 1, %v3428
        %v3430 = vrot.slane %v3329, %v3429
        %v3431 = vmul.f32 %v3422, %v3430
        %v3432 = vlaneseq
        %v3433 = vshrl.u32 %v3432, 7
        %v3434 = vsub.s32 2, %v3433
        %v3435 = vrot.slane %v3329, %v3434
        %v3436 = vadd.f32 %v3431, %v3435
        %vm3437 = vcmp.ge.f32.partialorder %v3436, 0.0
        %v3438 = vlaneseq
        %v3439 = vshrl.u32 %v3438, 7
        %v3440 = vsub.s32 3, %v3439
        %v3441 = vrot.slane %v3329, %v3440
        %v3442 = vmul.f32 %v3441, %v3436
        %v3443 = vsel %vm3437, %v3436, %v3442
        %v3445 = vrot.slane %v3443, 7
        %v3447 = vsel %vm2806, 0.0, %v3445
        %v3448 = vrot.slane %v3443, 1
        %v3450 = vsel %vm2813, %v3448, 0.0
        %3451 = vrot.lane.b32.xlu0 %v3443, 16
        %v3452 = vpop.permute.xlu0 %3451
        %3455 = vrot.lane.b32.xlu0 %v3450, 32
        %v3456 = vpop.permute.xlu0 %3455
        %v3458 = vsel %vm3027, %v3447, %v3452
        %v3459 = vsel %vm2832, %v3458, %v3456
        %v3460 = vpack.c.bf16 %v3459, %v3459
        %v3461 = vld [vmem:[%s19] sm:$0xf]
        %v3462 = vld [vmem:[%s19 + $0x4] sm:$0xf]
        %v3463 = vld [vmem:[%s19 + $0x8] sm:$0xf]
        %v3464 = vld [vmem:[%s19 + $0xc] sm:$0xf]
        %v3465 = vld [vmem:[%s19 + $0x10] sm:$0xf]
        %v3466 = vld [vmem:[%s19 + $0x14] sm:$0xf]
        %v3467 = vlaneseq
        %v3468 = vshrl.u32 %v3467, 7
        %v3469 = vsub.s32 4, %v3468
        %v3470 = vrot.slane %v3329, %v3469
        %v3477 = vunpack.c.l.b16 %v3461
        %v3478 = vunpack.c.l.b16 %v3462
        %v3479 = vunpack.c.l.b16 %v3463
        %v3480 = vunpack.c.l.b16 %v3464
        %v3481 = vunpack.c.l.b16 %v3465
        %v3482 = vunpack.c.l.b16 %v3466
        %v3483 = vpack.c.b16 %v3478, %v3477
        %v3484 = vpack.c.b16 %v3480, %v3479
        %v3485 = vpack.c.b16 %v3482, %v3481
        %vm3489 = vcmask 392192
        %v3491 = vsel %vm3489, %v3460, 0
        %3493 = vmatprep.subr.bf16.mxu0 0
        %3494 = vmatpush1.bf16.msra.mxu0 %v3483
        %3495 = vmatprep.subr.bf16.mxu0 0
        %3496 = vmatpush1.bf16.msra.mxu0 %v3484
        %3497 = vmatprep.subr.bf16.mxu0 0
        %3498 = vmatpush1.bf16.msra.mxu0 %v3485
        %3499 = vmatprep.subr.bf16.mxu0 0
        %3500 = vmatpush1.bf16.msra.mxu0 0
        %3501 = vmatprep.subr.bf16.mxu0 0
        %3502 = vmatpush1.bf16.msra.mxu0 0
        %3503 = vmatprep.subr.bf16.mxu0 0
        %3504 = vmatpush1.bf16.msra.mxu0 0
        %3505 = vmatprep.subr.bf16.mxu0 0
        %3506 = vmatpush1.bf16.msra.mxu0 0
        %3507 = vmatprep.subr.bf16.mxu0 0
        %3508 = vmatpush1.bf16.msra.mxu0 0
        %3509 = vmatprep.subr.bf16.mxu0 0
        %3510 = vmatpush1.bf16.msra.mxu0 0
        %3511 = vmatprep.subr.bf16.mxu0 0
        %3512 = vmatpush1.bf16.msra.mxu0 0
        %3513 = vmatprep.subr.bf16.mxu0 0
        %3514 = vmatpush1.bf16.msra.mxu0 0
        %3515 = vmatprep.subr.bf16.mxu0 0
        %3516 = vmatpush1.bf16.msra.mxu0 0
        %3517 = vmatprep.subr.bf16.mxu0 0
        %3518 = vmatpush1.bf16.msra.mxu0 0
        %3519 = vmatprep.subr.bf16.mxu0 0
        %3520 = vmatpush1.bf16.msra.mxu0 0
        %3521 = vmatprep.subr.bf16.mxu0 0
        %3522 = vmatpush1.bf16.msra.mxu0 0
        %3523 = vmatprep.subr.bf16.mxu0 0
        %3524 = vmatpush1.bf16.msra.mxu0 0
        %3525 = vmatprep.mubr.bf16.mxu0 0
        %3526 = vmatmul.mubr.bf16.gmra.mrb[0].mxu0 %v3491
        %v3527 = vpop.f32.mrb[0].mxu0
        %v3528 = vadd.f32 %v3470, %v3527
        %v3529 = vpop.f32.mrb[0].mxu0
        %v3530 = vpop.f32.mrb[0].mxu0
        %v3531 = vpop.f32.mrb[0].mxu0
        %3532 = vdwg.mxu0
        %v3533 = vlaneseq
        %v3534 = vshrl.u32 %v3533, 7
        %v3535 = vsub.s32 5, %v3534
        %v3536 = vrot.slane %v3329, %v3535
        %v3537 = vmul.f32 %v3528, %v3536
        %v3538 = vlaneseq
        %v3539 = vshrl.u32 %v3538, 7
        %v3540 = vsub.s32 6, %v3539
        %v3541 = vrot.slane %v3329, %v3540
        %v3542 = vadd.f32 %v3537, %v3541
        %vm3543 = vcmp.ge.f32.partialorder %v3542, 0.0
        %v3544 = vlaneseq
        %v3545 = vshrl.u32 %v3544, 7
        %v3546 = vsub.s32 7, %v3545
        %v3547 = vrot.slane %v3329, %v3546
        %v3548 = vmul.f32 %v3547, %v3542
        %v3549 = vsel %vm3543, %v3542, %v3548
        %v3550 = vpack.c.bf16 %v3549, %v3549
        %v3551 = vld [vmem:[%s21] sm:$0xf]
        %v3552 = vld [vmem:[%s21 + $0x4] sm:$0xf]
        %v3553 = vlaneseq
        %v3554 = vshrl.u32 %v3553, 7
        %v3555 = vsub.s32 3, %v3554
        %v3556 = vrot.slane %v3328, %v3555
        %v3559 = vunpack.c.l.b16 %v3551
        %v3560 = vunpack.c.l.b16 %v3552
        %v3561 = vpack.c.b16 %v3560, %v3559
        %v3564 = vsel %vm3027, %v3550, 0
        %3566 = vmatprep.subr.bf16.mxu0 0
        %3567 = vmatpush1.bf16.msra.mxu0 %v3561
        %3568 = vmatprep.subr.bf16.mxu0 0
        %3569 = vmatpush1.bf16.msra.mxu0 0
        %3570 = vmatprep.subr.bf16.mxu0 0
        %3571 = vmatpush1.bf16.msra.mxu0 0
        %3572 = vmatprep.subr.bf16.mxu0 0
        %3573 = vmatpush1.bf16.msra.mxu0 0
        %3574 = vmatprep.subr.bf16.mxu0 0
        %3575 = vmatpush1.bf16.msra.mxu0 0
        %3576 = vmatprep.subr.bf16.mxu0 0
        %3577 = vmatpush1.bf16.msra.mxu0 0
        %3578 = vmatprep.subr.bf16.mxu0 0
        %3579 = vmatpush1.bf16.msra.mxu0 0
        %3580 = vmatprep.subr.bf16.mxu0 0
        %3581 = vmatpush1.bf16.msra.mxu0 0
        %3582 = vmatprep.subr.bf16.mxu0 0
        %3583 = vmatpush1.bf16.msra.mxu0 0
        %3584 = vmatprep.subr.bf16.mxu0 0
        %3585 = vmatpush1.bf16.msra.mxu0 0
        %3586 = vmatprep.subr.bf16.mxu0 0
        %3587 = vmatpush1.bf16.msra.mxu0 0
        %3588 = vmatprep.subr.bf16.mxu0 0
        %3589 = vmatpush1.bf16.msra.mxu0 0
        %3590 = vmatprep.subr.bf16.mxu0 0
        %3591 = vmatpush1.bf16.msra.mxu0 0
        %3592 = vmatprep.subr.bf16.mxu0 0
        %3593 = vmatpush1.bf16.msra.mxu0 0
        %3594 = vmatprep.subr.bf16.mxu0 0
        %3595 = vmatpush1.bf16.msra.mxu0 0
        %3596 = vmatprep.subr.bf16.mxu0 0
        %3597 = vmatpush1.bf16.msra.mxu0 0
        %3598 = vmatprep.mubr.bf16.mxu0 0
        %3599 = vmatmul.mubr.bf16.gmra.mrb[0].mxu0 %v3564
        %v3600 = vpop.f32.mrb[0].mxu0
        %v3601 = vadd.f32 %v3556, %v3600
        %v3602 = vpop.f32.mrb[0].mxu0
        %v3603 = vpop.f32.mrb[0].mxu0
        %v3604 = vpop.f32.mrb[0].mxu0
        %3605 = vdwg.mxu0
        %v3606 = vadd.f32 %v3327, %v3601
        %v3607 = vld [vmem:[%s23] sm:$0xf]
        %v3608 = vld [vmem:[%s25] sm:$0xff]
        %v3609 = vlaneseq
        %v3610 = vshrl.u32 %v3609, 7
        %v3611 = vsub.s32 0, %v3610
        %v3612 = vrot.slane %v3607, %v3611
        %v3613 = vmul.f32 %v3606, %v3612
        %v3614 = vlaneseq
        %v3615 = vshrl.u32 %v3614, 7
        %v3616 = vsub.s32 1, %v3615
        %v3617 = vrot.slane %v3607, %v3616
        %v3618 = vadd.f32 %v3613, %v3617
        %vm3619 = vcmp.ge.f32.partialorder %v3618, 0.0
        %v3620 = vlaneseq
        %v3621 = vshrl.u32 %v3620, 7
        %v3622 = vsub.s32 2, %v3621
        %v3623 = vrot.slane %v3607, %v3622
        %v3624 = vmul.f32 %v3623, %v3618
        %v3625 = vsel %vm3619, %v3618, %v3624
        %v3626 = vpack.c.bf16 %v3625, %v3625
        %v3627 = vld [vmem:[%s27] sm:$0xf]
        %v3628 = vld [vmem:[%s27 + $0x4] sm:$0xf]
        %v3629 = vld [vmem:[%s27 + $0x8] sm:$0xf]
        %v3630 = vld [vmem:[%s27 + $0xc] sm:$0xf]
        %v3631 = vld [vmem:[%s27 + $0x10] sm:$0xf]
        %v3632 = vld [vmem:[%s27 + $0x14] sm:$0xf]
        %v3633 = vld [vmem:[%s27 + $0x18] sm:$0xf]
        %v3634 = vld [vmem:[%s27 + $0x1c] sm:$0xf]
        %v3635 = vlaneseq
        %v3636 = vshrl.u32 %v3635, 7
        %v3637 = vsub.s32 0, %v3636
        %v3638 = vrot.slane %v3608, %v3637
        %v3647 = vunpack.c.l.b16 %v3627
        %v3648 = vunpack.c.l.b16 %v3628
        %v3649 = vunpack.c.l.b16 %v3629
        %v3650 = vunpack.c.l.b16 %v3630
        %v3651 = vunpack.c.l.b16 %v3631
        %v3652 = vunpack.c.l.b16 %v3632
        %v3653 = vunpack.c.l.b16 %v3633
        %v3654 = vunpack.c.l.b16 %v3634
        %v3655 = vpack.c.b16 %v3648, %v3647
        %v3656 = vpack.c.b16 %v3650, %v3649
        %v3657 = vpack.c.b16 %v3652, %v3651
        %v3658 = vpack.c.b16 %v3654, %v3653
        %v3664 = vsel %vm2835, %v3626, 0
        %3666 = vmatprep.subr.bf16.mxu0 0
        %3667 = vmatpush1.bf16.msra.mxu0 %v3655
        %3668 = vmatprep.subr.bf16.mxu0 0
        %3669 = vmatpush1.bf16.msra.mxu0 %v3656
        %3670 = vmatprep.subr.bf16.mxu0 0
        %3671 = vmatpush1.bf16.msra.mxu0 %v3657
        %3672 = vmatprep.subr.bf16.mxu0 0
        %3673 = vmatpush1.bf16.msra.mxu0 %v3658
        %3674 = vmatprep.subr.bf16.mxu0 0
        %3675 = vmatpush1.bf16.msra.mxu0 0
        %3676 = vmatprep.subr.bf16.mxu0 0
        %3677 = vmatpush1.bf16.msra.mxu0 0
        %3678 = vmatprep.subr.bf16.mxu0 0
        %3679 = vmatpush1.bf16.msra.mxu0 0
        %3680 = vmatprep.subr.bf16.mxu0 0
        %3681 = vmatpush1.bf16.msra.mxu0 0
        %3682 = vmatprep.subr.bf16.mxu0 0
        %3683 = vmatpush1.bf16.msra.mxu0 0
        %3684 = vmatprep.subr.bf16.mxu0 0
        %3685 = vmatpush1.bf16.msra.mxu0 0
        %3686 = vmatprep.subr.bf16.mxu0 0
        %3687 = vmatpush1.bf16.msra.mxu0 0
        %3688 = vmatprep.subr.bf16.mxu0 0
        %3689 = vmatpush1.bf16.msra.mxu0 0
        %3690 = vmatprep.subr.bf16.mxu0 0
        %3691 = vmatpush1.bf16.msra.mxu0 0
        %3692 = vmatprep.subr.bf16.mxu0 0
        %3693 = vmatpush1.bf16.msra.mxu0 0
        %3694 = vmatprep.subr.bf16.mxu0 0
        %3695 = vmatpush1.bf16.msra.mxu0 0
        %3696 = vmatprep.subr.bf16.mxu0 0
        %3697 = vmatpush1.bf16.msra.mxu0 0
        %3698 = vmatprep.mubr.bf16.mxu0 0
        %3699 = vmatmul.mubr.bf16.gmra.mrb[0].mxu0 %v3664
        %v3700 = vpop.f32.mrb[0].mxu0
        %v3701 = vadd.f32 %v3638, %v3700
        %v3702 = vpop.f32.mrb[0].mxu0
        %v3703 = vpop.f32.mrb[0].mxu0
        %v3704 = vpop.f32.mrb[0].mxu0
        %3705 = vdwg.mxu0
        %v3706 = vlaneseq
        %v3707 = vshrl.u32 %v3706, 7
        %v3708 = vsub.s32 1, %v3707
        %v3709 = vrot.slane %v3608, %v3708
        %v3710 = vmul.f32 %v3701, %v3709
        %v3711 = vlaneseq
        %v3712 = vshrl.u32 %v3711, 7
        %v3713 = vsub.s32 2, %v3712
        %v3714 = vrot.slane %v3608, %v3713
        %v3715 = vadd.f32 %v3710, %v3714
        %vm3716 = vcmp.ge.f32.partialorder %v3715, 0.0
        %v3717 = vlaneseq
        %v3718 = vshrl.u32 %v3717, 7
        %v3719 = vsub.s32 3, %v3718
        %v3720 = vrot.slane %v3608, %v3719
        %v3721 = vmul.f32 %v3720, %v3715
        %v3722 = vsel %vm3716, %v3715, %v3721
        %v3724 = vrot.slane %v3722, 7
        %v3726 = vsel %vm2806, 0.0, %v3724
        %v3727 = vrot.slane %v3722, 1
        %v3729 = vsel %vm2813, %v3727, 0.0
        %3730 = vrot.lane.b32.xlu0 %v3722, 16
        %v3731 = vpop.permute.xlu0 %3730
        %3734 = vrot.lane.b32.xlu0 %v3729, 32
        %v3735 = vpop.permute.xlu0 %3734
        %v3737 = vsel %vm3027, %v3726, %v3731
        %v3738 = vsel %vm2832, %v3737, %v3735
        %v3739 = vpack.c.bf16 %v3738, %v3738
        %v3740 = vld [vmem:[%s29] sm:$0xf]
        %v3741 = vld [vmem:[%s29 + $0x4] sm:$0xf]
        %v3742 = vld [vmem:[%s29 + $0x8] sm:$0xf]
        %v3743 = vld [vmem:[%s29 + $0xc] sm:$0xf]
        %v3744 = vld [vmem:[%s29 + $0x10] sm:$0xf]
        %v3745 = vld [vmem:[%s29 + $0x14] sm:$0xf]
        %v3746 = vlaneseq
        %v3747 = vshrl.u32 %v3746, 7
        %v3748 = vsub.s32 4, %v3747
        %v3749 = vrot.slane %v3608, %v3748
        %v3756 = vunpack.c.l.b16 %v3740
        %v3757 = vunpack.c.l.b16 %v3741
        %v3758 = vunpack.c.l.b16 %v3742
        %v3759 = vunpack.c.l.b16 %v3743
        %v3760 = vunpack.c.l.b16 %v3744
        %v3761 = vunpack.c.l.b16 %v3745
        %v3762 = vpack.c.b16 %v3757, %v3756
        %v3763 = vpack.c.b16 %v3759, %v3758
        %v3764 = vpack.c.b16 %v3761, %v3760
        %v3769 = vsel %vm3489, %v3739, 0
        %3771 = vmatprep.subr.bf16.mxu0 0
        %3772 = vmatpush1.bf16.msra.mxu0 %v3762
        %3773 = vmatprep.subr.bf16.mxu0 0
        %3774 = vmatpush1.bf16.msra.mxu0 %v3763
        %3775 = vmatprep.subr.bf16.mxu0 0
        %3776 = vmatpush1.bf16.msra.mxu0 %v3764
        %3777 = vmatprep.subr.bf16.mxu0 0
        %3778 = vmatpush1.bf16.msra.mxu0 0
        %3779 = vmatprep.subr.bf16.mxu0 0
        %3780 = vmatpush1.bf16.msra.mxu0 0
        %3781 = vmatprep.subr.bf16.mxu0 0
        %3782 = vmatpush1.bf16.msra.mxu0 0
        %3783 = vmatprep.subr.bf16.mxu0 0
        %3784 = vmatpush1.bf16.msra.mxu0 0
        %3785 = vmatprep.subr.bf16.mxu0 0
        %3786 = vmatpush1.bf16.msra.mxu0 0
        %3787 = vmatprep.subr.bf16.mxu0 0
        %3788 = vmatpush1.bf16.msra.mxu0 0
        %3789 = vmatprep.subr.bf16.mxu0 0
        %3790 = vmatpush1.bf16.msra.mxu0 0
        %3791 = vmatprep.subr.bf16.mxu0 0
        %3792 = vmatpush1.bf16.msra.mxu0 0
        %3793 = vmatprep.subr.bf16.mxu0 0
        %3794 = vmatpush1.bf16.msra.mxu0 0
        %3795 = vmatprep.subr.bf16.mxu0 0
        %3796 = vmatpush1.bf16.msra.mxu0 0
        %3797 = vmatprep.subr.bf16.mxu0 0
        %3798 = vmatpush1.bf16.msra.mxu0 0
        %3799 = vmatprep.subr.bf16.mxu0 0
        %3800 = vmatpush1.bf16.msra.mxu0 0
        %3801 = vmatprep.subr.bf16.mxu0 0
        %3802 = vmatpush1.bf16.msra.mxu0 0
        %3803 = vmatprep.mubr.bf16.mxu0 0
        %3804 = vmatmul.mubr.bf16.gmra.mrb[0].mxu0 %v3769
        %v3805 = vpop.f32.mrb[0].mxu0
        %v3806 = vadd.f32 %v3749, %v3805
        %v3807 = vpop.f32.mrb[0].mxu0
        %v3808 = vpop.f32.mrb[0].mxu0
        %v3809 = vpop.f32.mrb[0].mxu0
        %3810 = vdwg.mxu0
        %v3811 = vlaneseq
        %v3812 = vshrl.u32 %v3811, 7
        %v3813 = vsub.s32 5, %v3812
        %v3814 = vrot.slane %v3608, %v3813
        %v3815 = vmul.f32 %v3806, %v3814
        %v3816 = vlaneseq
        %v3817 = vshrl.u32 %v3816, 7
        %v3818 = vsub.s32 6, %v3817
        %v3819 = vrot.slane %v3608, %v3818
        %v3820 = vadd.f32 %v3815, %v3819
        %vm3821 = vcmp.ge.f32.partialorder %v3820, 0.0
        %v3822 = vlaneseq
        %v3823 = vshrl.u32 %v3822, 7
        %v3824 = vsub.s32 7, %v3823
        %v3825 = vrot.slane %v3608, %v3824
        %v3826 = vmul.f32 %v3825, %v3820
        %v3827 = vsel %vm3821, %v3820, %v3826
        %v3828 = vpack.c.bf16 %v3827, %v3827
        %v3829 = vld [vmem:[%s31] sm:$0xf]
        %v3830 = vld [vmem:[%s31 + $0x4] sm:$0xf]
        %v3831 = vlaneseq
        %v3832 = vshrl.u32 %v3831, 7
        %v3833 = vsub.s32 3, %v3832
        %v3834 = vrot.slane %v3607, %v3833
        %v3837 = vunpack.c.l.b16 %v3829
        %v3838 = vunpack.c.l.b16 %v3830
        %v3839 = vpack.c.b16 %v3838, %v3837
        %v3842 = vsel %vm3027, %v3828, 0
        %3844 = vmatprep.subr.bf16.mxu0 0
        %3845 = vmatpush1.bf16.msra.mxu0 %v3839
        %3846 = vmatprep.subr.bf16.mxu0 0
        %3847 = vmatpush1.bf16.msra.mxu0 0
        %3848 = vmatprep.subr.bf16.mxu0 0
        %3849 = vmatpush1.bf16.msra.mxu0 0
        %3850 = vmatprep.subr.bf16.mxu0 0
        %3851 = vmatpush1.bf16.msra.mxu0 0
        %3852 = vmatprep.subr.bf16.mxu0 0
        %3853 = vmatpush1.bf16.msra.mxu0 0
        %3854 = vmatprep.subr.bf16.mxu0 0
        %3855 = vmatpush1.bf16.msra.mxu0 0
        %3856 = vmatprep.subr.bf16.mxu0 0
        %3857 = vmatpush1.bf16.msra.mxu0 0
        %3858 = vmatprep.subr.bf16.mxu0 0
        %3859 = vmatpush1.bf16.msra.mxu0 0
        %3860 = vmatprep.subr.bf16.mxu0 0
        %3861 = vmatpush1.bf16.msra.mxu0 0
        %3862 = vmatprep.subr.bf16.mxu0 0
        %3863 = vmatpush1.bf16.msra.mxu0 0
        %3864 = vmatprep.subr.bf16.mxu0 0
        %3865 = vmatpush1.bf16.msra.mxu0 0
        %3866 = vmatprep.subr.bf16.mxu0 0
        %3867 = vmatpush1.bf16.msra.mxu0 0
        %3868 = vmatprep.subr.bf16.mxu0 0
        %3869 = vmatpush1.bf16.msra.mxu0 0
        %3870 = vmatprep.subr.bf16.mxu0 0
        %3871 = vmatpush1.bf16.msra.mxu0 0
        %3872 = vmatprep.subr.bf16.mxu0 0
        %3873 = vmatpush1.bf16.msra.mxu0 0
        %3874 = vmatprep.subr.bf16.mxu0 0
        %3875 = vmatpush1.bf16.msra.mxu0 0
        %3876 = vmatprep.mubr.bf16.mxu0 0
        %3877 = vmatmul.mubr.bf16.gmra.mrb[0].mxu0 %v3842
        %v3878 = vpop.f32.mrb[0].mxu0
        %v3879 = vadd.f32 %v3834, %v3878
        %v3880 = vpop.f32.mrb[0].mxu0
        %v3881 = vpop.f32.mrb[0].mxu0
        %v3882 = vpop.f32.mrb[0].mxu0
        %3883 = vdwg.mxu0
        %v3884 = vadd.f32 %v3606, %v3879
        %v3885 = vpack.c.bf16 %v3606, %v3606
        %v3886 = vld [vmem:[%s145] sm:$0x3]
        %vm3887 = vcmask 64512
        %v3889 = vsel %vm3887, %v3886, 0
        %vm3891 = vcmask 1043456
        %v3893 = vsel %vm3891, %v3885, 0
        %3895 = vmatprep.subr.bf16.mxu0 0
        %3896 = vmatpush1.bf16.msra.mxu0 %v3893
        %3897 = vmatprep.subr.bf16.mxu0 0
        %3898 = vmatpush1.bf16.msra.mxu0 0
        %3899 = vmatprep.subr.bf16.mxu0 0
        %3900 = vmatpush1.bf16.msra.mxu0 0
        %3901 = vmatprep.subr.bf16.mxu0 0
        %3902 = vmatpush1.bf16.msra.mxu0 0
        %3903 = vmatprep.subr.bf16.mxu0 0
        %3904 = vmatpush1.bf16.msra.mxu0 0
        %3905 = vmatprep.subr.bf16.mxu0 0
        %3906 = vmatpush1.bf16.msra.mxu0 0
        %3907 = vmatprep.subr.bf16.mxu0 0
        %3908 = vmatpush1.bf16.msra.mxu0 0
        %3909 = vmatprep.subr.bf16.mxu0 0
        %3910 = vmatpush1.bf16.msra.mxu0 0
        %3911 = vmatprep.subr.bf16.mxu0 0
        %3912 = vmatpush1.bf16.msra.mxu0 0
        %3913 = vmatprep.subr.bf16.mxu0 0
        %3914 = vmatpush1.bf16.msra.mxu0 0
        %3915 = vmatprep.subr.bf16.mxu0 0
        %3916 = vmatpush1.bf16.msra.mxu0 0
        %3917 = vmatprep.subr.bf16.mxu0 0
        %3918 = vmatpush1.bf16.msra.mxu0 0
        %3919 = vmatprep.subr.bf16.mxu0 0
        %3920 = vmatpush1.bf16.msra.mxu0 0
        %3921 = vmatprep.subr.bf16.mxu0 0
        %3922 = vmatpush1.bf16.msra.mxu0 0
        %3923 = vmatprep.subr.bf16.mxu0 0
        %3924 = vmatpush1.bf16.msra.mxu0 0
        %3925 = vmatprep.subr.bf16.mxu0 0
        %3926 = vmatpush1.bf16.msra.mxu0 0
        %3927 = vmatprep.mubr.bf16.mxu0 0
        %3928 = vmatmul.mubr.bf16.gmra.mrb[0].mxu0 %v3889
        %v3929 = vpop.f32.mrb[0].mxu0
        %v3930 = vadd.f32 0.0, %v3929
        %v3931 = vpop.f32.mrb[0].mxu0
        %v3932 = vpop.f32.mrb[0].mxu0
        %v3933 = vpop.f32.mrb[0].mxu0
        %3934 = vdwg.mxu0
        %s3935 = scalar_lea.vmem %s145, 2
        %v3936 = vld [vmem:[%s3935] sm:$0x3]
        %v3938 = vsel %vm3887, %v3936, 0
        %3940 = vmatprep.subr.bf16.mxu0 0
        %3941 = vmatpush1.bf16.msra.mxu0 %v3893
        %3942 = vmatprep.subr.bf16.mxu0 0
        %3943 = vmatpush1.bf16.msra.mxu0 0
        %3944 = vmatprep.subr.bf16.mxu0 0
        %3945 = vmatpush1.bf16.msra.mxu0 0
        %3946 = vmatprep.subr.bf16.mxu0 0
        %3947 = vmatpush1.bf16.msra.mxu0 0
        %3948 = vmatprep.subr.bf16.mxu0 0
        %3949 = vmatpush1.bf16.msra.mxu0 0
        %3950 = vmatprep.subr.bf16.mxu0 0
        %3951 = vmatpush1.bf16.msra.mxu0 0
        %3952 = vmatprep.subr.bf16.mxu0 0
        %3953 = vmatpush1.bf16.msra.mxu0 0
        %3954 = vmatprep.subr.bf16.mxu0 0
        %3955 = vmatpush1.bf16.msra.mxu0 0
        %3956 = vmatprep.subr.bf16.mxu0 0
        %3957 = vmatpush1.bf16.msra.mxu0 0
        %3958 = vmatprep.subr.bf16.mxu0 0
        %3959 = vmatpush1.bf16.msra.mxu0 0
        %3960 = vmatprep.subr.bf16.mxu0 0
        %3961 = vmatpush1.bf16.msra.mxu0 0
        %3962 = vmatprep.subr.bf16.mxu0 0
        %3963 = vmatpush1.bf16.msra.mxu0 0
        %3964 = vmatprep.subr.bf16.mxu0 0
        %3965 = vmatpush1.bf16.msra.mxu0 0
        %3966 = vmatprep.subr.bf16.mxu0 0
        %3967 = vmatpush1.bf16.msra.mxu0 0
        %3968 = vmatprep.subr.bf16.mxu0 0
        %3969 = vmatpush1.bf16.msra.mxu0 0
        %3970 = vmatprep.subr.bf16.mxu0 0
        %3971 = vmatpush1.bf16.msra.mxu0 0
        %3972 = vmatprep.mubr.bf16.mxu0 0
        %3973 = vmatmul.mubr.bf16.gmra.mrb[0].mxu0 %v3938
        %v3974 = vpop.f32.mrb[0].mxu0
        %v3975 = vadd.f32 0.0, %v3974
        %v3976 = vpop.f32.mrb[0].mxu0
        %v3977 = vpop.f32.mrb[0].mxu0
        %v3978 = vpop.f32.mrb[0].mxu0
        %3979 = vdwg.mxu0
        %v3980 = vmax.f32 %v3930, %v3975
        %v3981 = vpack.c.bf16 %v3980, %v3980
        %v3982 = vld [vmem:[%s153] sm:$0xf]
        %v3983 = vld [vmem:[%s153 + $0x4] sm:$0xf]
        %v3984 = vld [vmem:[%s153 + $0x8] sm:$0xf]
        %v3985 = vld [vmem:[%s153 + $0xc] sm:$0xf]
        %v3986 = vld [vmem:[%s153 + $0x10] sm:$0xf]
        %v3987 = vld [vmem:[%s153 + $0x14] sm:$0xf]
        %v3988 = vld [vmem:[%s153 + $0x18] sm:$0xf]
        %v3989 = vld [vmem:[%s153 + $0x1c] sm:$0xf]
        %v3998 = vunpack.c.l.b16 %v3982
        %v3999 = vunpack.c.l.b16 %v3983
        %v4000 = vunpack.c.l.b16 %v3984
        %v4001 = vunpack.c.l.b16 %v3985
        %v4002 = vunpack.c.l.b16 %v3986
        %v4003 = vunpack.c.l.b16 %v3987
        %v4004 = vunpack.c.l.b16 %v3988
        %v4005 = vunpack.c.l.b16 %v3989
        %v4006 = vpack.c.b16 %v3999, %v3998
        %v4007 = vpack.c.b16 %v4001, %v4000
        %v4008 = vpack.c.b16 %v4003, %v4002
        %v4009 = vpack.c.b16 %v4005, %v4004
        %v4015 = vsel %vm2835, %v3981, 0
        %4017 = vmatprep.subr.bf16.mxu0 0
        %4018 = vmatpush1.bf16.msra.mxu0 %v4006
        %4019 = vmatprep.subr.bf16.mxu0 0
        %4020 = vmatpush1.bf16.msra.mxu0 %v4007
        %4021 = vmatprep.subr.bf16.mxu0 0
        %4022 = vmatpush1.bf16.msra.mxu0 %v4008
        %4023 = vmatprep.subr.bf16.mxu0 0
        %4024 = vmatpush1.bf16.msra.mxu0 %v4009
        %4025 = vmatprep.subr.bf16.mxu0 0
        %4026 = vmatpush1.bf16.msra.mxu0 0
        %4027 = vmatprep.subr.bf16.mxu0 0
        %4028 = vmatpush1.bf16.msra.mxu0 0
        %4029 = vmatprep.subr.bf16.mxu0 0
        %4030 = vmatpush1.bf16.msra.mxu0 0
        %4031 = vmatprep.subr.bf16.mxu0 0
        %4032 = vmatpush1.bf16.msra.mxu0 0
        %4033 = vmatprep.subr.bf16.mxu0 0
        %4034 = vmatpush1.bf16.msra.mxu0 0
        %4035 = vmatprep.subr.bf16.mxu0 0
        %4036 = vmatpush1.bf16.msra.mxu0 0
        %4037 = vmatprep.subr.bf16.mxu0 0
        %4038 = vmatpush1.bf16.msra.mxu0 0
        %4039 = vmatprep.subr.bf16.mxu0 0
        %4040 = vmatpush1.bf16.msra.mxu0 0
        %4041 = vmatprep.subr.bf16.mxu0 0
        %4042 = vmatpush1.bf16.msra.mxu0 0
        %4043 = vmatprep.subr.bf16.mxu0 0
        %4044 = vmatpush1.bf16.msra.mxu0 0
        %4045 = vmatprep.subr.bf16.mxu0 0
        %4046 = vmatpush1.bf16.msra.mxu0 0
        %4047 = vmatprep.subr.bf16.mxu0 0
        %4048 = vmatpush1.bf16.msra.mxu0 0
        %4049 = vmatprep.mubr.bf16.mxu0 0
        %4050 = vmatmul.mubr.bf16.gmra.mrb[0].mxu0 %v4015
        %v4051 = vpop.f32.mrb[0].mxu0
        %v4052 = vadd.f32 0.0, %v4051
        %v4053 = vpop.f32.mrb[0].mxu0
        %v4054 = vpop.f32.mrb[0].mxu0
        %v4055 = vpop.f32.mrb[0].mxu0
        %4056 = vdwg.mxu0
        %s4057 = scalar_lea.vmem %s153, 32
        %v4058 = vld [vmem:[%s4057] sm:$0xf]
        %v4059 = vld [vmem:[%s4057 + $0x4] sm:$0xf]
        %v4060 = vld [vmem:[%s4057 + $0x8] sm:$0xf]
        %v4061 = vld [vmem:[%s4057 + $0xc] sm:$0xf]
        %v4062 = vld [vmem:[%s4057 + $0x10] sm:$0xf]
        %v4063 = vld [vmem:[%s4057 + $0x14] sm:$0xf]
        %v4064 = vld [vmem:[%s4057 + $0x18] sm:$0xf]
        %v4065 = vld [vmem:[%s4057 + $0x1c] sm:$0xf]
        %v4074 = vunpack.c.l.b16 %v4058
        %v4075 = vunpack.c.l.b16 %v4059
        %v4076 = vunpack.c.l.b16 %v4060
        %v4077 = vunpack.c.l.b16 %v4061
        %v4078 = vunpack.c.l.b16 %v4062
        %v4079 = vunpack.c.l.b16 %v4063
        %v4080 = vunpack.c.l.b16 %v4064
        %v4081 = vunpack.c.l.b16 %v4065
        %v4082 = vpack.c.b16 %v4075, %v4074
        %v4083 = vpack.c.b16 %v4077, %v4076
        %v4084 = vpack.c.b16 %v4079, %v4078
        %v4085 = vpack.c.b16 %v4081, %v4080
        %4090 = vmatprep.subr.bf16.mxu0 0
        %4091 = vmatpush1.bf16.msra.mxu0 %v4082
        %4092 = vmatprep.subr.bf16.mxu0 0
        %4093 = vmatpush1.bf16.msra.mxu0 %v4083
        %4094 = vmatprep.subr.bf16.mxu0 0
        %4095 = vmatpush1.bf16.msra.mxu0 %v4084
        %4096 = vmatprep.subr.bf16.mxu0 0
        %4097 = vmatpush1.bf16.msra.mxu0 %v4085
        %4098 = vmatprep.subr.bf16.mxu0 0
        %4099 = vmatpush1.bf16.msra.mxu0 0
        %4100 = vmatprep.subr.bf16.mxu0 0
        %4101 = vmatpush1.bf16.msra.mxu0 0
        %4102 = vmatprep.subr.bf16.mxu0 0
        %4103 = vmatpush1.bf16.msra.mxu0 0
        %4104 = vmatprep.subr.bf16.mxu0 0
        %4105 = vmatpush1.bf16.msra.mxu0 0
        %4106 = vmatprep.subr.bf16.mxu0 0
        %4107 = vmatpush1.bf16.msra.mxu0 0
        %4108 = vmatprep.subr.bf16.mxu0 0
        %4109 = vmatpush1.bf16.msra.mxu0 0
        %4110 = vmatprep.subr.bf16.mxu0 0
        %4111 = vmatpush1.bf16.msra.mxu0 0
        %4112 = vmatprep.subr.bf16.mxu0 0
        %4113 = vmatpush1.bf16.msra.mxu0 0
        %4114 = vmatprep.subr.bf16.mxu0 0
        %4115 = vmatpush1.bf16.msra.mxu0 0
        %4116 = vmatprep.subr.bf16.mxu0 0
        %4117 = vmatpush1.bf16.msra.mxu0 0
        %4118 = vmatprep.subr.bf16.mxu0 0
        %4119 = vmatpush1.bf16.msra.mxu0 0
        %4120 = vmatprep.subr.bf16.mxu0 0
        %4121 = vmatpush1.bf16.msra.mxu0 0
        %4122 = vmatprep.mubr.bf16.mxu0 0
        %4123 = vmatmul.mubr.bf16.gmra.mrb[0].mxu0 %v4015
        %v4124 = vpop.f32.mrb[0].mxu0
        %v4125 = vadd.f32 0.0, %v4124
        %v4126 = vpop.f32.mrb[0].mxu0
        %v4127 = vpop.f32.mrb[0].mxu0
        %v4128 = vpop.f32.mrb[0].mxu0
        %4129 = vdwg.mxu0
        %v4130 = vmax.f32 %v4052, %v4125
        %v4131 = vld [vmem:[%s33] sm:$0xf]
        %v4132 = vld [vmem:[%s35] sm:$0xff]
        %v4133 = vlaneseq
        %v4134 = vshrl.u32 %v4133, 7
        %v4135 = vsub.s32 0, %v4134
        %v4136 = vrot.slane %v4131, %v4135
        %v4137 = vmul.f32 %v4130, %v4136
        %v4138 = vlaneseq
        %v4139 = vshrl.u32 %v4138, 7
        %v4140 = vsub.s32 1, %v4139
        %v4141 = vrot.slane %v4131, %v4140
        %v4142 = vadd.f32 %v4137, %v4141
        %vm4143 = vcmp.ge.f32.partialorder %v4142, 0.0
        %v4144 = vlaneseq
        %v4145 = vshrl.u32 %v4144, 7
        %v4146 = vsub.s32 2, %v4145
        %v4147 = vrot.slane %v4131, %v4146
        %v4148 = vmul.f32 %v4147, %v4142
        %v4149 = vsel %vm4143, %v4142, %v4148
        %v4150 = vpack.c.bf16 %v4149, %v4149
        %v4151 = vld [vmem:[%s37] sm:$0xf]
        %v4152 = vld [vmem:[%s37 + $0x4] sm:$0xf]
        %v4153 = vld [vmem:[%s37 + $0x8] sm:$0xf]
        %v4154 = vld [vmem:[%s37 + $0xc] sm:$0xf]
        %v4155 = vlaneseq
        %v4156 = vshrl.u32 %v4155, 7
        %v4157 = vsub.s32 0, %v4156
        %v4158 = vrot.slane %v4132, %v4157
        %v4163 = vunpack.c.l.b16 %v4151
        %v4164 = vunpack.c.l.b16 %v4152
        %v4165 = vunpack.c.l.b16 %v4153
        %v4166 = vunpack.c.l.b16 %v4154
        %v4167 = vpack.c.b16 %v4164, %v4163
        %v4168 = vpack.c.b16 %v4166, %v4165
        %v4172 = vsel %vm2832, %v4150, 0
        %4174 = vmatprep.subr.bf16.mxu0 0
        %4175 = vmatpush1.bf16.msra.mxu0 %v4167
        %4176 = vmatprep.subr.bf16.mxu0 0
        %4177 = vmatpush1.bf16.msra.mxu0 %v4168
        %4178 = vmatprep.subr.bf16.mxu0 0
        %4179 = vmatpush1.bf16.msra.mxu0 0
        %4180 = vmatprep.subr.bf16.mxu0 0
        %4181 = vmatpush1.bf16.msra.mxu0 0
        %4182 = vmatprep.subr.bf16.mxu0 0
        %4183 = vmatpush1.bf16.msra.mxu0 0
        %4184 = vmatprep.subr.bf16.mxu0 0
        %4185 = vmatpush1.bf16.msra.mxu0 0
        %4186 = vmatprep.subr.bf16.mxu0 0
        %4187 = vmatpush1.bf16.msra.mxu0 0
        %4188 = vmatprep.subr.bf16.mxu0 0
        %4189 = vmatpush1.bf16.msra.mxu0 0
        %4190 = vmatprep.subr.bf16.mxu0 0
        %4191 = vmatpush1.bf16.msra.mxu0 0
        %4192 = vmatprep.subr.bf16.mxu0 0
        %4193 = vmatpush1.bf16.msra.mxu0 0
        %4194 = vmatprep.subr.bf16.mxu0 0
        %4195 = vmatpush1.bf16.msra.mxu0 0
        %4196 = vmatprep.subr.bf16.mxu0 0
        %4197 = vmatpush1.bf16.msra.mxu0 0
        %4198 = vmatprep.subr.bf16.mxu0 0
        %4199 = vmatpush1.bf16.msra.mxu0 0
        %4200 = vmatprep.subr.bf16.mxu0 0
        %4201 = vmatpush1.bf16.msra.mxu0 0
        %4202 = vmatprep.subr.bf16.mxu0 0
        %4203 = vmatpush1.bf16.msra.mxu0 0
        %4204 = vmatprep.subr.bf16.mxu0 0
        %4205 = vmatpush1.bf16.msra.mxu0 0
        %4206 = vmatprep.mubr.bf16.mxu0 0
        %4207 = vmatmul.mubr.bf16.gmra.mrb[0].mxu0 %v4172
        %v4208 = vpop.f32.mrb[0].mxu0
        %v4209 = vadd.f32 %v4158, %v4208
        %v4210 = vpop.f32.mrb[0].mxu0
        %v4211 = vpop.f32.mrb[0].mxu0
        %v4212 = vpop.f32.mrb[0].mxu0
        %4213 = vdwg.mxu0
        %v4214 = vlaneseq
        %v4215 = vshrl.u32 %v4214, 7
        %v4216 = vsub.s32 1, %v4215
        %v4217 = vrot.slane %v4132, %v4216
        %v4218 = vmul.f32 %v4209, %v4217
        %v4219 = vlaneseq
        %v4220 = vshrl.u32 %v4219, 7
        %v4221 = vsub.s32 2, %v4220
        %v4222 = vrot.slane %v4132, %v4221
        %v4223 = vadd.f32 %v4218, %v4222
        %vm4224 = vcmp.ge.f32.partialorder %v4223, 0.0
        %v4225 = vlaneseq
        %v4226 = vshrl.u32 %v4225, 7
        %v4227 = vsub.s32 3, %v4226
        %v4228 = vrot.slane %v4132, %v4227
        %v4229 = vmul.f32 %v4228, %v4223
        %v4230 = vsel %vm4224, %v4223, %v4229
        %v4232 = vrot.slane %v4230, 7
        %v4234 = vsel %vm2806, 0.0, %v4232
        %v4235 = vrot.slane %v4230, 1
        %vm4237 = vcmask 1042432
        %v4238 = vsel %vm4237, %v4235, 0.0
        %4239 = vrot.lane.b32.xlu0 %v4230, 8
        %v4240 = vpop.permute.xlu0 %4239
        %4243 = vrot.lane.b32.xlu0 %v4238, 16
        %v4244 = vpop.permute.xlu0 %4243
        %v4246 = vsel %vm3887, %v4234, %v4240
        %v4247 = vsel %vm3027, %v4246, %v4244
        %v4248 = vpack.c.bf16 %v4247, %v4247
        %v4249 = vld [vmem:[%s39] sm:$0xf]
        %v4250 = vld [vmem:[%s39 + $0x4] sm:$0xf]
        %v4251 = vld [vmem:[%s39 + $0x8] sm:$0xf]
        %v4252 = vlaneseq
        %v4253 = vshrl.u32 %v4252, 7
        %v4254 = vsub.s32 4, %v4253
        %v4255 = vrot.slane %v4132, %v4254
        %v4259 = vunpack.c.l.b16 %v4249
        %v4260 = vunpack.c.l.b16 %v4250
        %v4261 = vunpack.c.l.b16 %v4251
        %v4262 = vpack.c.b16 %v4260, %v4259
        %v4263 = vpack.c.b16 %v4261, %v4261
        %vm4265 = vcmask 195584
        %v4267 = vsel %vm4265, %v4248, 0
        %v4270 = vsel %vm3891, %v4263, 0
        %4272 = vmatprep.subr.bf16.mxu0 0
        %4273 = vmatpush1.bf16.msra.mxu0 %v4262
        %4274 = vmatprep.subr.bf16.mxu0 0
        %4275 = vmatpush1.bf16.msra.mxu0 %v4270
        %4276 = vmatprep.subr.bf16.mxu0 0
        %4277 = vmatpush1.bf16.msra.mxu0 0
        %4278 = vmatprep.subr.bf16.mxu0 0
        %4279 = vmatpush1.bf16.msra.mxu0 0
        %4280 = vmatprep.subr.bf16.mxu0 0
        %4281 = vmatpush1.bf16.msra.mxu0 0
        %4282 = vmatprep.subr.bf16.mxu0 0
        %4283 = vmatpush1.bf16.msra.mxu0 0
        %4284 = vmatprep.subr.bf16.mxu0 0
        %4285 = vmatpush1.bf16.msra.mxu0 0
        %4286 = vmatprep.subr.bf16.mxu0 0
        %4287 = vmatpush1.bf16.msra.mxu0 0
        %4288 = vmatprep.subr.bf16.mxu0 0
        %4289 = vmatpush1.bf16.msra.mxu0 0
        %4290 = vmatprep.subr.bf16.mxu0 0
        %4291 = vmatpush1.bf16.msra.mxu0 0
        %4292 = vmatprep.subr.bf16.mxu0 0
        %4293 = vmatpush1.bf16.msra.mxu0 0
        %4294 = vmatprep.subr.bf16.mxu0 0
        %4295 = vmatpush1.bf16.msra.mxu0 0
        %4296 = vmatprep.subr.bf16.mxu0 0
        %4297 = vmatpush1.bf16.msra.mxu0 0
        %4298 = vmatprep.subr.bf16.mxu0 0
        %4299 = vmatpush1.bf16.msra.mxu0 0
        %4300 = vmatprep.subr.bf16.mxu0 0
        %4301 = vmatpush1.bf16.msra.mxu0 0
        %4302 = vmatprep.subr.bf16.mxu0 0
        %4303 = vmatpush1.bf16.msra.mxu0 0
        %4304 = vmatprep.mubr.bf16.mxu0 0
        %4305 = vmatmul.mubr.bf16.gmra.mrb[0].mxu0 %v4267
        %v4306 = vpop.f32.mrb[0].mxu0
        %v4307 = vadd.f32 %v4255, %v4306
        %v4308 = vpop.f32.mrb[0].mxu0
        %v4309 = vpop.f32.mrb[0].mxu0
        %v4310 = vpop.f32.mrb[0].mxu0
        %4311 = vdwg.mxu0
        %v4312 = vlaneseq
        %v4313 = vshrl.u32 %v4312, 7
        %v4314 = vsub.s32 5, %v4313
        %v4315 = vrot.slane %v4132, %v4314
        %v4316 = vmul.f32 %v4307, %v4315
        %v4317 = vlaneseq
        %v4318 = vshrl.u32 %v4317, 7
        %v4319 = vsub.s32 6, %v4318
        %v4320 = vrot.slane %v4132, %v4319
        %v4321 = vadd.f32 %v4316, %v4320
        %vm4322 = vcmp.ge.f32.partialorder %v4321, 0.0
        %v4323 = vlaneseq
        %v4324 = vshrl.u32 %v4323, 7
        %v4325 = vsub.s32 7, %v4324
        %v4326 = vrot.slane %v4132, %v4325
        %v4327 = vmul.f32 %v4326, %v4321
        %v4328 = vsel %vm4322, %v4321, %v4327
        %v4329 = vpack.c.bf16 %v4328, %v4328
        %v4330 = vld [vmem:[%s41] sm:$0xf]
        %v4331 = vlaneseq
        %v4332 = vshrl.u32 %v4331, 7
        %v4333 = vsub.s32 3, %v4332
        %v4334 = vrot.slane %v4131, %v4333
        %v4336 = vsel %vm3887, %v4329, 0
        %v4339 = vsel %vm3891, %v4330, 0
        %4341 = vmatprep.subr.bf16.mxu0 0
        %4342 = vmatpush1.bf16.msra.mxu0 %v4339
        %4343 = vmatprep.subr.bf16.mxu0 0
        %4344 = vmatpush1.bf16.msra.mxu0 0
        %4345 = vmatprep.subr.bf16.mxu0 0
        %4346 = vmatpush1.bf16.msra.mxu0 0
        %4347 = vmatprep.subr.bf16.mxu0 0
        %4348 = vmatpush1.bf16.msra.mxu0 0
        %4349 = vmatprep.subr.bf16.mxu0 0
        %4350 = vmatpush1.bf16.msra.mxu0 0
        %4351 = vmatprep.subr.bf16.mxu0 0
        %4352 = vmatpush1.bf16.msra.mxu0 0
        %4353 = vmatprep.subr.bf16.mxu0 0
        %4354 = vmatpush1.bf16.msra.mxu0 0
        %4355 = vmatprep.subr.bf16.mxu0 0
        %4356 = vmatpush1.bf16.msra.mxu0 0
        %4357 = vmatprep.subr.bf16.mxu0 0
        %4358 = vmatpush1.bf16.msra.mxu0 0
        %4359 = vmatprep.subr.bf16.mxu0 0
        %4360 = vmatpush1.bf16.msra.mxu0 0
        %4361 = vmatprep.subr.bf16.mxu0 0
        %4362 = vmatpush1.bf16.msra.mxu0 0
        %4363 = vmatprep.subr.bf16.mxu0 0
        %4364 = vmatpush1.bf16.msra.mxu0 0
        %4365 = vmatprep.subr.bf16.mxu0 0
        %4366 = vmatpush1.bf16.msra.mxu0 0
        %4367 = vmatprep.subr.bf16.mxu0 0
        %4368 = vmatpush1.bf16.msra.mxu0 0
        %4369 = vmatprep.subr.bf16.mxu0 0
        %4370 = vmatpush1.bf16.msra.mxu0 0
        %4371 = vmatprep.subr.bf16.mxu0 0
        %4372 = vmatpush1.bf16.msra.mxu0 0
        %4373 = vmatprep.mubr.bf16.mxu0 0
        %4374 = vmatmul.mubr.bf16.gmra.mrb[0].mxu0 %v4336
        %v4375 = vpop.f32.mrb[0].mxu0
        %v4376 = vadd.f32 %v4334, %v4375
        %v4377 = vpop.f32.mrb[0].mxu0
        %v4378 = vpop.f32.mrb[0].mxu0
        %v4379 = vpop.f32.mrb[0].mxu0
        %4380 = vdwg.mxu0
        %v4381 = vadd.f32 %v4130, %v4376
        %v4382 = vld [vmem:[%s43] sm:$0xf]
        %v4383 = vld [vmem:[%s45] sm:$0xff]
        %v4384 = vlaneseq
        %v4385 = vshrl.u32 %v4384, 7
        %v4386 = vsub.s32 0, %v4385
        %v4387 = vrot.slane %v4382, %v4386
        %v4388 = vmul.f32 %v4381, %v4387
        %v4389 = vlaneseq
        %v4390 = vshrl.u32 %v4389, 7
        %v4391 = vsub.s32 1, %v4390
        %v4392 = vrot.slane %v4382, %v4391
        %v4393 = vadd.f32 %v4388, %v4392
        %vm4394 = vcmp.ge.f32.partialorder %v4393, 0.0
        %v4395 = vlaneseq
        %v4396 = vshrl.u32 %v4395, 7
        %v4397 = vsub.s32 2, %v4396
        %v4398 = vrot.slane %v4382, %v4397
        %v4399 = vmul.f32 %v4398, %v4393
        %v4400 = vsel %vm4394, %v4393, %v4399
        %v4401 = vpack.c.bf16 %v4400, %v4400
        %v4402 = vld [vmem:[%s47] sm:$0xf]
        %v4403 = vld [vmem:[%s47 + $0x4] sm:$0xf]
        %v4404 = vld [vmem:[%s47 + $0x8] sm:$0xf]
        %v4405 = vld [vmem:[%s47 + $0xc] sm:$0xf]
        %v4406 = vlaneseq
        %v4407 = vshrl.u32 %v4406, 7
        %v4408 = vsub.s32 0, %v4407
        %v4409 = vrot.slane %v4383, %v4408
        %v4414 = vunpack.c.l.b16 %v4402
        %v4415 = vunpack.c.l.b16 %v4403
        %v4416 = vunpack.c.l.b16 %v4404
        %v4417 = vunpack.c.l.b16 %v4405
        %v4418 = vpack.c.b16 %v4415, %v4414
        %v4419 = vpack.c.b16 %v4417, %v4416
        %v4423 = vsel %vm2832, %v4401, 0
        %4425 = vmatprep.subr.bf16.mxu0 0
        %4426 = vmatpush1.bf16.msra.mxu0 %v4418
        %4427 = vmatprep.subr.bf16.mxu0 0
        %4428 = vmatpush1.bf16.msra.mxu0 %v4419
        %4429 = vmatprep.subr.bf16.mxu0 0
        %4430 = vmatpush1.bf16.msra.mxu0 0
        %4431 = vmatprep.subr.bf16.mxu0 0
        %4432 = vmatpush1.bf16.msra.mxu0 0
        %4433 = vmatprep.subr.bf16.mxu0 0
        %4434 = vmatpush1.bf16.msra.mxu0 0
        %4435 = vmatprep.subr.bf16.mxu0 0
        %4436 = vmatpush1.bf16.msra.mxu0 0
        %4437 = vmatprep.subr.bf16.mxu0 0
        %4438 = vmatpush1.bf16.msra.mxu0 0
        %4439 = vmatprep.subr.bf16.mxu0 0
        %4440 = vmatpush1.bf16.msra.mxu0 0
        %4441 = vmatprep.subr.bf16.mxu0 0
        %4442 = vmatpush1.bf16.msra.mxu0 0
        %4443 = vmatprep.subr.bf16.mxu0 0
        %4444 = vmatpush1.bf16.msra.mxu0 0
        %4445 = vmatprep.subr.bf16.mxu0 0
        %4446 = vmatpush1.bf16.msra.mxu0 0
        %4447 = vmatprep.subr.bf16.mxu0 0
        %4448 = vmatpush1.bf16.msra.mxu0 0
        %4449 = vmatprep.subr.bf16.mxu0 0
        %4450 = vmatpush1.bf16.msra.mxu0 0
        %4451 = vmatprep.subr.bf16.mxu0 0
        %4452 = vmatpush1.bf16.msra.mxu0 0
        %4453 = vmatprep.subr.bf16.mxu0 0
        %4454 = vmatpush1.bf16.msra.mxu0 0
        %4455 = vmatprep.subr.bf16.mxu0 0
        %4456 = vmatpush1.bf16.msra.mxu0 0
        %4457 = vmatprep.mubr.bf16.mxu0 0
        %4458 = vmatmul.mubr.bf16.gmra.mrb[0].mxu0 %v4423
        %v4459 = vpop.f32.mrb[0].mxu0
        %v4460 = vadd.f32 %v4409, %v4459
        %v4461 = vpop.f32.mrb[0].mxu0
        %v4462 = vpop.f32.mrb[0].mxu0
        %v4463 = vpop.f32.mrb[0].mxu0
        %4464 = vdwg.mxu0
        %v4465 = vlaneseq
        %v4466 = vshrl.u32 %v4465, 7
        %v4467 = vsub.s32 1, %v4466
        %v4468 = vrot.slane %v4383, %v4467
        %v4469 = vmul.f32 %v4460, %v4468
        %v4470 = vlaneseq
        %v4471 = vshrl.u32 %v4470, 7
        %v4472 = vsub.s32 2, %v4471
        %v4473 = vrot.slane %v4383, %v4472
        %v4474 = vadd.f32 %v4469, %v4473
        %vm4475 = vcmp.ge.f32.partialorder %v4474, 0.0
        %v4476 = vlaneseq
        %v4477 = vshrl.u32 %v4476, 7
        %v4478 = vsub.s32 3, %v4477
        %v4479 = vrot.slane %v4383, %v4478
        %v4480 = vmul.f32 %v4479, %v4474
        %v4481 = vsel %vm4475, %v4474, %v4480
        %v4483 = vrot.slane %v4481, 7
        %v4485 = vsel %vm2806, 0.0, %v4483
        %v4486 = vrot.slane %v4481, 1
        %v4488 = vsel %vm4237, %v4486, 0.0
        %4489 = vrot.lane.b32.xlu0 %v4481, 8
        %v4490 = vpop.permute.xlu0 %4489
        %4493 = vrot.lane.b32.xlu0 %v4488, 16
        %v4494 = vpop.permute.xlu0 %4493
        %v4496 = vsel %vm3887, %v4485, %v4490
        %v4497 = vsel %vm3027, %v4496, %v4494
        %v4498 = vpack.c.bf16 %v4497, %v4497
        %v4499 = vld [vmem:[%s49] sm:$0xf]
        %v4500 = vld [vmem:[%s49 + $0x4] sm:$0xf]
        %v4501 = vld [vmem:[%s49 + $0x8] sm:$0xf]
        %v4502 = vlaneseq
        %v4503 = vshrl.u32 %v4502, 7
        %v4504 = vsub.s32 4, %v4503
        %v4505 = vrot.slane %v4383, %v4504
        %v4509 = vunpack.c.l.b16 %v4499
        %v4510 = vunpack.c.l.b16 %v4500
        %v4511 = vunpack.c.l.b16 %v4501
        %v4512 = vpack.c.b16 %v4510, %v4509
        %v4513 = vpack.c.b16 %v4511, %v4511
        %v4516 = vsel %vm4265, %v4498, 0
        %v4519 = vsel %vm3891, %v4513, 0
        %4521 = vmatprep.subr.bf16.mxu0 0
        %4522 = vmatpush1.bf16.msra.mxu0 %v4512
        %4523 = vmatprep.subr.bf16.mxu0 0
        %4524 = vmatpush1.bf16.msra.mxu0 %v4519
        %4525 = vmatprep.subr.bf16.mxu0 0
        %4526 = vmatpush1.bf16.msra.mxu0 0
        %4527 = vmatprep.subr.bf16.mxu0 0
        %4528 = vmatpush1.bf16.msra.mxu0 0
        %4529 = vmatprep.subr.bf16.mxu0 0
        %4530 = vmatpush1.bf16.msra.mxu0 0
        %4531 = vmatprep.subr.bf16.mxu0 0
        %4532 = vmatpush1.bf16.msra.mxu0 0
        %4533 = vmatprep.subr.bf16.mxu0 0
        %4534 = vmatpush1.bf16.msra.mxu0 0
        %4535 = vmatprep.subr.bf16.mxu0 0
        %4536 = vmatpush1.bf16.msra.mxu0 0
        %4537 = vmatprep.subr.bf16.mxu0 0
        %4538 = vmatpush1.bf16.msra.mxu0 0
        %4539 = vmatprep.subr.bf16.mxu0 0
        %4540 = vmatpush1.bf16.msra.mxu0 0
        %4541 = vmatprep.subr.bf16.mxu0 0
        %4542 = vmatpush1.bf16.msra.mxu0 0
        %4543 = vmatprep.subr.bf16.mxu0 0
        %4544 = vmatpush1.bf16.msra.mxu0 0
        %4545 = vmatprep.subr.bf16.mxu0 0
        %4546 = vmatpush1.bf16.msra.mxu0 0
        %4547 = vmatprep.subr.bf16.mxu0 0
        %4548 = vmatpush1.bf16.msra.mxu0 0
        %4549 = vmatprep.subr.bf16.mxu0 0
        %4550 = vmatpush1.bf16.msra.mxu0 0
        %4551 = vmatprep.subr.bf16.mxu0 0
        %4552 = vmatpush1.bf16.msra.mxu0 0
        %4553 = vmatprep.mubr.bf16.mxu0 0
        %4554 = vmatmul.mubr.bf16.gmra.mrb[0].mxu0 %v4516
        %v4555 = vpop.f32.mrb[0].mxu0
        %v4556 = vadd.f32 %v4505, %v4555
        %v4557 = vpop.f32.mrb[0].mxu0
        %v4558 = vpop.f32.mrb[0].mxu0
        %v4559 = vpop.f32.mrb[0].mxu0
        %4560 = vdwg.mxu0
        %v4561 = vlaneseq
        %v4562 = vshrl.u32 %v4561, 7
        %v4563 = vsub.s32 5, %v4562
        %v4564 = vrot.slane %v4383, %v4563
        %v4565 = vmul.f32 %v4556, %v4564
        %v4566 = vlaneseq
        %v4567 = vshrl.u32 %v4566, 7
        %v4568 = vsub.s32 6, %v4567
        %v4569 = vrot.slane %v4383, %v4568
        %v4570 = vadd.f32 %v4565, %v4569
        %vm4571 = vcmp.ge.f32.partialorder %v4570, 0.0
        %v4572 = vlaneseq
        %v4573 = vshrl.u32 %v4572, 7
        %v4574 = vsub.s32 7, %v4573
        %v4575 = vrot.slane %v4383, %v4574
        %v4576 = vmul.f32 %v4575, %v4570
        %v4577 = vsel %vm4571, %v4570, %v4576
        %v4578 = vpack.c.bf16 %v4577, %v4577
        %v4579 = vld [vmem:[%s51] sm:$0xf]
        %v4580 = vlaneseq
        %v4581 = vshrl.u32 %v4580, 7
        %v4582 = vsub.s32 3, %v4581
        %v4583 = vrot.slane %v4382, %v4582
        %v4585 = vsel %vm3887, %v4578, 0
        %v4588 = vsel %vm3891, %v4579, 0
        %4590 = vmatprep.subr.bf16.mxu0 0
        %4591 = vmatpush1.bf16.msra.mxu0 %v4588
        %4592 = vmatprep.subr.bf16.mxu0 0
        %4593 = vmatpush1.bf16.msra.mxu0 0
        %4594 = vmatprep.subr.bf16.mxu0 0
        %4595 = vmatpush1.bf16.msra.mxu0 0
        %4596 = vmatprep.subr.bf16.mxu0 0
        %4597 = vmatpush1.bf16.msra.mxu0 0
        %4598 = vmatprep.subr.bf16.mxu0 0
        %4599 = vmatpush1.bf16.msra.mxu0 0
        %4600 = vmatprep.subr.bf16.mxu0 0
        %4601 = vmatpush1.bf16.msra.mxu0 0
        %4602 = vmatprep.subr.bf16.mxu0 0
        %4603 = vmatpush1.bf16.msra.mxu0 0
        %4604 = vmatprep.subr.bf16.mxu0 0
        %4605 = vmatpush1.bf16.msra.mxu0 0
        %4606 = vmatprep.subr.bf16.mxu0 0
        %4607 = vmatpush1.bf16.msra.mxu0 0
        %4608 = vmatprep.subr.bf16.mxu0 0
        %4609 = vmatpush1.bf16.msra.mxu0 0
        %4610 = vmatprep.subr.bf16.mxu0 0
        %4611 = vmatpush1.bf16.msra.mxu0 0
        %4612 = vmatprep.subr.bf16.mxu0 0
        %4613 = vmatpush1.bf16.msra.mxu0 0
        %4614 = vmatprep.subr.bf16.mxu0 0
        %4615 = vmatpush1.bf16.msra.mxu0 0
        %4616 = vmatprep.subr.bf16.mxu0 0
        %4617 = vmatpush1.bf16.msra.mxu0 0
        %4618 = vmatprep.subr.bf16.mxu0 0
        %4619 = vmatpush1.bf16.msra.mxu0 0
        %4620 = vmatprep.subr.bf16.mxu0 0
        %4621 = vmatpush1.bf16.msra.mxu0 0
        %4622 = vmatprep.mubr.bf16.mxu0 0
        %4623 = vmatmul.mubr.bf16.gmra.mrb[0].mxu0 %v4585
        %v4624 = vpop.f32.mrb[0].mxu0
        %v4625 = vadd.f32 %v4583, %v4624
        %v4626 = vpop.f32.mrb[0].mxu0
        %v4627 = vpop.f32.mrb[0].mxu0
        %v4628 = vpop.f32.mrb[0].mxu0
        %4629 = vdwg.mxu0
        %v4630 = vadd.f32 %v4381, %v4625
        %v4631 = vpack.c.bf16 %v4381, %v4381
        %v4632 = vld [vmem:[#allocation10] sm:$0x1]
        %vm4633 = vcmask 31744
        %v4635 = vsel %vm4633, %v4632, 0
        %vm4637 = vcmask 1041408
        %v4639 = vsel %vm4637, %v4631, 0
        %4641 = vmatprep.subr.bf16.mxu0 0
        %4642 = vmatpush1.bf16.msra.mxu0 %v4639
        %4643 = vmatprep.subr.bf16.mxu0 0
        %4644 = vmatpush1.bf16.msra.mxu0 0
        %4645 = vmatprep.subr.bf16.mxu0 0
        %4646 = vmatpush1.bf16.msra.mxu0 0
        %4647 = vmatprep.subr.bf16.mxu0 0
        %4648 = vmatpush1.bf16.msra.mxu0 0
        %4649 = vmatprep.subr.bf16.mxu0 0
        %4650 = vmatpush1.bf16.msra.mxu0 0
        %4651 = vmatprep.subr.bf16.mxu0 0
        %4652 = vmatpush1.bf16.msra.mxu0 0
        %4653 = vmatprep.subr.bf16.mxu0 0
        %4654 = vmatpush1.bf16.msra.mxu0 0
        %4655 = vmatprep.subr.bf16.mxu0 0
        %4656 = vmatpush1.bf16.msra.mxu0 0
        %4657 = vmatprep.subr.bf16.mxu0 0
        %4658 = vmatpush1.bf16.msra.mxu0 0
        %4659 = vmatprep.subr.bf16.mxu0 0
        %4660 = vmatpush1.bf16.msra.mxu0 0
        %4661 = vmatprep.subr.bf16.mxu0 0
        %4662 = vmatpush1.bf16.msra.mxu0 0
        %4663 = vmatprep.subr.bf16.mxu0 0
        %4664 = vmatpush1.bf16.msra.mxu0 0
        %4665 = vmatprep.subr.bf16.mxu0 0
        %4666 = vmatpush1.bf16.msra.mxu0 0
        %4667 = vmatprep.subr.bf16.mxu0 0
        %4668 = vmatpush1.bf16.msra.mxu0 0
        %4669 = vmatprep.subr.bf16.mxu0 0
        %4670 = vmatpush1.bf16.msra.mxu0 0
        %4671 = vmatprep.subr.bf16.mxu0 0
        %4672 = vmatpush1.bf16.msra.mxu0 0
        %4673 = vmatprep.mubr.bf16.mxu0 0
        %4674 = vmatmul.mubr.bf16.gmra.mrb[0].mxu0 %v4635
        %v4675 = vpop.f32.mrb[0].mxu0
        %v4676 = vadd.f32 0.0, %v4675
        %v4677 = vpop.f32.mrb[0].mxu0
        %v4678 = vpop.f32.mrb[0].mxu0
        %v4679 = vpop.f32.mrb[0].mxu0
        %4680 = vdwg.mxu0
        %s4681 = scalar_lea.vmem [#allocation10], 1
        %v4682 = vld [vmem:[%s4681] sm:$0x1]
        %v4684 = vsel %vm4633, %v4682, 0
        %4686 = vmatprep.subr.bf16.mxu0 0
        %4687 = vmatpush1.bf16.msra.mxu0 %v4639
        %4688 = vmatprep.subr.bf16.mxu0 0
        %4689 = vmatpush1.bf16.msra.mxu0 0
        %4690 = vmatprep.subr.bf16.mxu0 0
        %4691 = vmatpush1.bf16.msra.mxu0 0
        %4692 = vmatprep.subr.bf16.mxu0 0
        %4693 = vmatpush1.bf16.msra.mxu0 0
        %4694 = vmatprep.subr.bf16.mxu0 0
        %4695 = vmatpush1.bf16.msra.mxu0 0
        %4696 = vmatprep.subr.bf16.mxu0 0
        %4697 = vmatpush1.bf16.msra.mxu0 0
        %4698 = vmatprep.subr.bf16.mxu0 0
        %4699 = vmatpush1.bf16.msra.mxu0 0
        %4700 = vmatprep.subr.bf16.mxu0 0
        %4701 = vmatpush1.bf16.msra.mxu0 0
        %4702 = vmatprep.subr.bf16.mxu0 0
        %4703 = vmatpush1.bf16.msra.mxu0 0
        %4704 = vmatprep.subr.bf16.mxu0 0
        %4705 = vmatpush1.bf16.msra.mxu0 0
        %4706 = vmatprep.subr.bf16.mxu0 0
        %4707 = vmatpush1.bf16.msra.mxu0 0
        %4708 = vmatprep.subr.bf16.mxu0 0
        %4709 = vmatpush1.bf16.msra.mxu0 0
        %4710 = vmatprep.subr.bf16.mxu0 0
        %4711 = vmatpush1.bf16.msra.mxu0 0
        %4712 = vmatprep.subr.bf16.mxu0 0
        %4713 = vmatpush1.bf16.msra.mxu0 0
        %4714 = vmatprep.subr.bf16.mxu0 0
        %4715 = vmatpush1.bf16.msra.mxu0 0
        %4716 = vmatprep.subr.bf16.mxu0 0
        %4717 = vmatpush1.bf16.msra.mxu0 0
        %4718 = vmatprep.mubr.bf16.mxu0 0
        %4719 = vmatmul.mubr.bf16.gmra.mrb[0].mxu0 %v4684
        %v4720 = vpop.f32.mrb[0].mxu0
        %v4721 = vadd.f32 0.0, %v4720
        %v4722 = vpop.f32.mrb[0].mxu0
        %v4723 = vpop.f32.mrb[0].mxu0
        %v4724 = vpop.f32.mrb[0].mxu0
        %4725 = vdwg.mxu0
        %v4726 = vmax.f32 %v4676, %v4721
        %v4727 = vpack.c.bf16 %v4726, %v4726
        %v4728 = vld [vmem:[%s155] sm:$0xf]
        %v4729 = vld [vmem:[%s155 + $0x4] sm:$0xf]
        %v4730 = vld [vmem:[%s155 + $0x8] sm:$0xf]
        %v4731 = vld [vmem:[%s155 + $0xc] sm:$0xf]
        %v4736 = vunpack.c.l.b16 %v4728
        %v4737 = vunpack.c.l.b16 %v4729
        %v4738 = vunpack.c.l.b16 %v4730
        %v4739 = vunpack.c.l.b16 %v4731
        %v4740 = vpack.c.b16 %v4737, %v4736
        %v4741 = vpack.c.b16 %v4739, %v4738
        %v4745 = vsel %vm2832, %v4727, 0
        %4747 = vmatprep.subr.bf16.mxu0 0
        %4748 = vmatpush1.bf16.msra.mxu0 %v4740
        %4749 = vmatprep.subr.bf16.mxu0 0
        %4750 = vmatpush1.bf16.msra.mxu0 %v4741
        %4751 = vmatprep.subr.bf16.mxu0 0
        %4752 = vmatpush1.bf16.msra.mxu0 0
        %4753 = vmatprep.subr.bf16.mxu0 0
        %4754 = vmatpush1.bf16.msra.mxu0 0
        %4755 = vmatprep.subr.bf16.mxu0 0
        %4756 = vmatpush1.bf16.msra.mxu0 0
        %4757 = vmatprep.subr.bf16.mxu0 0
        %4758 = vmatpush1.bf16.msra.mxu0 0
        %4759 = vmatprep.subr.bf16.mxu0 0
        %4760 = vmatpush1.bf16.msra.mxu0 0
        %4761 = vmatprep.subr.bf16.mxu0 0
        %4762 = vmatpush1.bf16.msra.mxu0 0
        %4763 = vmatprep.subr.bf16.mxu0 0
        %4764 = vmatpush1.bf16.msra.mxu0 0
        %4765 = vmatprep.subr.bf16.mxu0 0
        %4766 = vmatpush1.bf16.msra.mxu0 0
        %4767 = vmatprep.subr.bf16.mxu0 0
        %4768 = vmatpush1.bf16.msra.mxu0 0
        %4769 = vmatprep.subr.bf16.mxu0 0
        %4770 = vmatpush1.bf16.msra.mxu0 0
        %4771 = vmatprep.subr.bf16.mxu0 0
        %4772 = vmatpush1.bf16.msra.mxu0 0
        %4773 = vmatprep.subr.bf16.mxu0 0
        %4774 = vmatpush1.bf16.msra.mxu0 0
        %4775 = vmatprep.subr.bf16.mxu0 0
        %4776 = vmatpush1.bf16.msra.mxu0 0
        %4777 = vmatprep.subr.bf16.mxu0 0
        %4778 = vmatpush1.bf16.msra.mxu0 0
        %4779 = vmatprep.mubr.bf16.mxu0 0
        %4780 = vmatmul.mubr.bf16.gmra.mrb[0].mxu0 %v4745
        %v4781 = vpop.f32.mrb[0].mxu0
        %v4782 = vadd.f32 0.0, %v4781
        %v4783 = vpop.f32.mrb[0].mxu0
        %v4784 = vpop.f32.mrb[0].mxu0
        %v4785 = vpop.f32.mrb[0].mxu0
        %4786 = vdwg.mxu0
        %s4787 = scalar_lea.vmem %s155, 16
        %v4788 = vld [vmem:[%s4787] sm:$0xf]
        %v4789 = vld [vmem:[%s4787 + $0x4] sm:$0xf]
        %v4790 = vld [vmem:[%s4787 + $0x8] sm:$0xf]
        %v4791 = vld [vmem:[%s4787 + $0xc] sm:$0xf]
        %v4796 = vunpack.c.l.b16 %v4788
        %v4797 = vunpack.c.l.b16 %v4789
        %v4798 = vunpack.c.l.b16 %v4790
        %v4799 = vunpack.c.l.b16 %v4791
        %v4800 = vpack.c.b16 %v4797, %v4796
        %v4801 = vpack.c.b16 %v4799, %v4798
        %4804 = vmatprep.subr.bf16.mxu0 0
        %4805 = vmatpush1.bf16.msra.mxu0 %v4800
        %4806 = vmatprep.subr.bf16.mxu0 0
        %4807 = vmatpush1.bf16.msra.mxu0 %v4801
        %4808 = vmatprep.subr.bf16.mxu0 0
        %4809 = vmatpush1.bf16.msra.mxu0 0
        %4810 = vmatprep.subr.bf16.mxu0 0
        %4811 = vmatpush1.bf16.msra.mxu0 0
        %4812 = vmatprep.subr.bf16.mxu0 0
        %4813 = vmatpush1.bf16.msra.mxu0 0
        %4814 = vmatprep.subr.bf16.mxu0 0
        %4815 = vmatpush1.bf16.msra.mxu0 0
        %4816 = vmatprep.subr.bf16.mxu0 0
        %4817 = vmatpush1.bf16.msra.mxu0 0
        %4818 = vmatprep.subr.bf16.mxu0 0
        %4819 = vmatpush1.bf16.msra.mxu0 0
        %4820 = vmatprep.subr.bf16.mxu0 0
        %4821 = vmatpush1.bf16.msra.mxu0 0
        %4822 = vmatprep.subr.bf16.mxu0 0
        %4823 = vmatpush1.bf16.msra.mxu0 0
        %4824 = vmatprep.subr.bf16.mxu0 0
        %4825 = vmatpush1.bf16.msra.mxu0 0
        %4826 = vmatprep.subr.bf16.mxu0 0
        %4827 = vmatpush1.bf16.msra.mxu0 0
        %4828 = vmatprep.subr.bf16.mxu0 0
        %4829 = vmatpush1.bf16.msra.mxu0 0
        %4830 = vmatprep.subr.bf16.mxu0 0
        %4831 = vmatpush1.bf16.msra.mxu0 0
        %4832 = vmatprep.subr.bf16.mxu0 0
        %4833 = vmatpush1.bf16.msra.mxu0 0
        %4834 = vmatprep.subr.bf16.mxu0 0
        %4835 = vmatpush1.bf16.msra.mxu0 0
        %4836 = vmatprep.mubr.bf16.mxu0 0
        %4837 = vmatmul.mubr.bf16.gmra.mrb[0].mxu0 %v4745
        %v4838 = vpop.f32.mrb[0].mxu0
        %v4839 = vadd.f32 0.0, %v4838
        %v4840 = vpop.f32.mrb[0].mxu0
        %v4841 = vpop.f32.mrb[0].mxu0
        %v4842 = vpop.f32.mrb[0].mxu0
        %4843 = vdwg.mxu0
        %v4844 = vmax.f32 %v4782, %v4839
        %v4845 = vld [vmem:[%s53] sm:$0xf]
        %v4846 = vld [vmem:[%s55] sm:$0xff]
        %v4847 = vlaneseq
        %v4848 = vshrl.u32 %v4847, 7
        %v4849 = vsub.s32 0, %v4848
        %v4850 = vrot.slane %v4845, %v4849
        %v4851 = vmul.f32 %v4844, %v4850
        %v4852 = vlaneseq
        %v4853 = vshrl.u32 %v4852, 7
        %v4854 = vsub.s32 1, %v4853
        %v4855 = vrot.slane %v4845, %v4854
        %v4856 = vadd.f32 %v4851, %v4855
        %vm4857 = vcmp.ge.f32.partialorder %v4856, 0.0
        %v4858 = vlaneseq
        %v4859 = vshrl.u32 %v4858, 7
        %v4860 = vsub.s32 2, %v4859
        %v4861 = vrot.slane %v4845, %v4860
        %v4862 = vmul.f32 %v4861, %v4856
        %v4863 = vsel %vm4857, %v4856, %v4862
        %v4864 = vpack.c.bf16 %v4863, %v4863
        %v4865 = vld [vmem:[%s57] sm:$0xf]
        %v4866 = vld [vmem:[%s57 + $0x4] sm:$0xf]
        %v4867 = vlaneseq
        %v4868 = vshrl.u32 %v4867, 7
        %v4869 = vsub.s32 0, %v4868
        %v4870 = vrot.slane %v4846, %v4869
        %v4873 = vunpack.c.l.b16 %v4865
        %v4874 = vunpack.c.l.b16 %v4866
        %v4875 = vpack.c.b16 %v4874, %v4873
        %v4878 = vsel %vm3027, %v4864, 0
        %4880 = vmatprep.subr.bf16.mxu0 0
        %4881 = vmatpush1.bf16.msra.mxu0 %v4875
        %4882 = vmatprep.subr.bf16.mxu0 0
        %4883 = vmatpush1.bf16.msra.mxu0 0
        %4884 = vmatprep.subr.bf16.mxu0 0
        %4885 = vmatpush1.bf16.msra.mxu0 0
        %4886 = vmatprep.subr.bf16.mxu0 0
        %4887 = vmatpush1.bf16.msra.mxu0 0
        %4888 = vmatprep.subr.bf16.mxu0 0
        %4889 = vmatpush1.bf16.msra.mxu0 0
        %4890 = vmatprep.subr.bf16.mxu0 0
        %4891 = vmatpush1.bf16.msra.mxu0 0
        %4892 = vmatprep.subr.bf16.mxu0 0
        %4893 = vmatpush1.bf16.msra.mxu0 0
        %4894 = vmatprep.subr.bf16.mxu0 0
        %4895 = vmatpush1.bf16.msra.mxu0 0
        %4896 = vmatprep.subr.bf16.mxu0 0
        %4897 = vmatpush1.bf16.msra.mxu0 0
        %4898 = vmatprep.subr.bf16.mxu0 0
        %4899 = vmatpush1.bf16.msra.mxu0 0
        %4900 = vmatprep.subr.bf16.mxu0 0
        %4901 = vmatpush1.bf16.msra.mxu0 0
        %4902 = vmatprep.subr.bf16.mxu0 0
        %4903 = vmatpush1.bf16.msra.mxu0 0
        %4904 = vmatprep.subr.bf16.mxu0 0
        %4905 = vmatpush1.bf16.msra.mxu0 0
        %4906 = vmatprep.subr.bf16.mxu0 0
        %4907 = vmatpush1.bf16.msra.mxu0 0
        %4908 = vmatprep.subr.bf16.mxu0 0
        %4909 = vmatpush1.bf16.msra.mxu0 0
        %4910 = vmatprep.subr.bf16.mxu0 0
        %4911 = vmatpush1.bf16.msra.mxu0 0
        %4912 = vmatprep.mubr.bf16.mxu0 0
        %4913 = vmatmul.mubr.bf16.gmra.mrb[0].mxu0 %v4878
        %v4914 = vpop.f32.mrb[0].mxu0
        %v4915 = vadd.f32 %v4870, %v4914
        %v4916 = vpop.f32.mrb[0].mxu0
        %v4917 = vpop.f32.mrb[0].mxu0
        %v4918 = vpop.f32.mrb[0].mxu0
        %4919 = vdwg.mxu0
        %v4920 = vlaneseq
        %v4921 = vshrl.u32 %v4920, 7
        %v4922 = vsub.s32 1, %v4921
        %v4923 = vrot.slane %v4846, %v4922
        %v4924 = vmul.f32 %v4915, %v4923
        %v4925 = vlaneseq
        %v4926 = vshrl.u32 %v4925, 7
        %v4927 = vsub.s32 2, %v4926
        %v4928 = vrot.slane %v4846, %v4927
        %v4929 = vadd.f32 %v4924, %v4928
        %vm4930 = vcmp.ge.f32.partialorder %v4929, 0.0
        %v4931 = vlaneseq
        %v4932 = vshrl.u32 %v4931, 7
        %v4933 = vsub.s32 3, %v4932
        %v4934 = vrot.slane %v4846, %v4933
        %v4935 = vmul.f32 %v4934, %v4929
        %v4936 = vsel %vm4930, %v4929, %v4935
        %v4938 = vrot.slane %v4936, 7
        %v4940 = vsel %vm2806, 0.0, %v4938
        %v4941 = vrot.slane %v4936, 1
        %v4943 = vsel %vm2806, %v4941, 0.0
        %4944 = vrot.lane.b32.xlu0 %v4936, 4
        %v4945 = vpop.permute.xlu0 %4944
        %4948 = vrot.lane.b32.xlu0 %v4943, 8
        %v4949 = vpop.permute.xlu0 %4948
        %v4951 = vsel %vm4633, %v4940, %v4945
        %v4952 = vsel %vm3887, %v4951, %v4949
        %v4953 = vpack.c.bf16 %v4952, %v4952
        %v4954 = vld [vmem:[%s59] sm:$0xf]
        %v4955 = vld [vmem:[%s59 + $0x4] sm:$0x3]
        %v4956 = vlaneseq
        %v4957 = vshrl.u32 %v4956, 7
        %v4958 = vsub.s32 4, %v4957
        %v4959 = vrot.slane %v4846, %v4958
        %v4962 = vunpack.c.l.b16 %v4954
        %v4963 = vunpack.c.l.b16 %v4955
        %v4964 = vpack.c.b16 %v4963, %v4962
        %vm4965 = vcmask 97280
        %v4967 = vsel %vm4965, %v4953, 0
        %vm4969 = vcmask 1045504
        %v4971 = vsel %vm4969, %v4964, 0
        %4973 = vmatprep.subr.bf16.mxu0 0
        %4974 = vmatpush1.bf16.msra.mxu0 %v4971
        %4975 = vmatprep.subr.bf16.mxu0 0
        %4976 = vmatpush1.bf16.msra.mxu0 0
        %4977 = vmatprep.subr.bf16.mxu0 0
        %4978 = vmatpush1.bf16.msra.mxu0 0
        %4979 = vmatprep.subr.bf16.mxu0 0
        %4980 = vmatpush1.bf16.msra.mxu0 0
        %4981 = vmatprep.subr.bf16.mxu0 0
        %4982 = vmatpush1.bf16.msra.mxu0 0
        %4983 = vmatprep.subr.bf16.mxu0 0
        %4984 = vmatpush1.bf16.msra.mxu0 0
        %4985 = vmatprep.subr.bf16.mxu0 0
        %4986 = vmatpush1.bf16.msra.mxu0 0
        %4987 = vmatprep.subr.bf16.mxu0 0
        %4988 = vmatpush1.bf16.msra.mxu0 0
        %4989 = vmatprep.subr.bf16.mxu0 0
        %4990 = vmatpush1.bf16.msra.mxu0 0
        %4991 = vmatprep.subr.bf16.mxu0 0
        %4992 = vmatpush1.bf16.msra.mxu0 0
        %4993 = vmatprep.subr.bf16.mxu0 0
        %4994 = vmatpush1.bf16.msra.mxu0 0
        %4995 = vmatprep.subr.bf16.mxu0 0
        %4996 = vmatpush1.bf16.msra.mxu0 0
        %4997 = vmatprep.subr.bf16.mxu0 0
        %4998 = vmatpush1.bf16.msra.mxu0 0
        %4999 = vmatprep.subr.bf16.mxu0 0
        %5000 = vmatpush1.bf16.msra.mxu0 0
        %5001 = vmatprep.subr.bf16.mxu0 0
        %5002 = vmatpush1.bf16.msra.mxu0 0
        %5003 = vmatprep.subr.bf16.mxu0 0
        %5004 = vmatpush1.bf16.msra.mxu0 0
        %5005 = vmatprep.mubr.bf16.mxu0 0
        %5006 = vmatmul.mubr.bf16.gmra.mrb[0].mxu0 %v4967
        %v5007 = vpop.f32.mrb[0].mxu0
        %v5008 = vadd.f32 %v4959, %v5007
        %v5009 = vpop.f32.mrb[0].mxu0
        %v5010 = vpop.f32.mrb[0].mxu0
        %v5011 = vpop.f32.mrb[0].mxu0
        %5012 = vdwg.mxu0
        %v5013 = vlaneseq
        %v5014 = vshrl.u32 %v5013, 7
        %v5015 = vsub.s32 5, %v5014
        %v5016 = vrot.slane %v4846, %v5015
        %v5017 = vmul.f32 %v5008, %v5016
        %v5018 = vlaneseq
        %v5019 = vshrl.u32 %v5018, 7
        %v5020 = vsub.s32 6, %v5019
        %v5021 = vrot.slane %v4846, %v5020
        %v5022 = vadd.f32 %v5017, %v5021
        %vm5023 = vcmp.ge.f32.partialorder %v5022, 0.0
        %v5024 = vlaneseq
        %v5025 = vshrl.u32 %v5024, 7
        %v5026 = vsub.s32 7, %v5025
        %v5027 = vrot.slane %v4846, %v5026
        %v5028 = vmul.f32 %v5027, %v5022
        %v5029 = vsel %vm5023, %v5022, %v5028
        %v5030 = vpack.c.bf16 %v5029, %v5029
        %v5031 = vld [vmem:[#allocation2] sm:$0x3]
        %v5032 = vlaneseq
        %v5033 = vshrl.u32 %v5032, 7
        %v5034 = vsub.s32 3, %v5033
        %v5035 = vrot.slane %v4845, %v5034
        %v5037 = vsel %vm4633, %v5030, 0
        %v5040 = vsel %vm4637, %v5031, 0
        %5042 = vmatprep.subr.bf16.mxu0 0
        %5043 = vmatpush1.bf16.msra.mxu0 %v5040
        %5044 = vmatprep.subr.bf16.mxu0 0
        %5045 = vmatpush1.bf16.msra.mxu0 0
        %5046 = vmatprep.subr.bf16.mxu0 0
        %5047 = vmatpush1.bf16.msra.mxu0 0
        %5048 = vmatprep.subr.bf16.mxu0 0
        %5049 = vmatpush1.bf16.msra.mxu0 0
        %5050 = vmatprep.subr.bf16.mxu0 0
        %5051 = vmatpush1.bf16.msra.mxu0 0
        %5052 = vmatprep.subr.bf16.mxu0 0
        %5053 = vmatpush1.bf16.msra.mxu0 0
        %5054 = vmatprep.subr.bf16.mxu0 0
        %5055 = vmatpush1.bf16.msra.mxu0 0
        %5056 = vmatprep.subr.bf16.mxu0 0
        %5057 = vmatpush1.bf16.msra.mxu0 0
        %5058 = vmatprep.subr.bf16.mxu0 0
        %5059 = vmatpush1.bf16.msra.mxu0 0
        %5060 = vmatprep.subr.bf16.mxu0 0
        %5061 = vmatpush1.bf16.msra.mxu0 0
        %5062 = vmatprep.subr.bf16.mxu0 0
        %5063 = vmatpush1.bf16.msra.mxu0 0
        %5064 = vmatprep.subr.bf16.mxu0 0
        %5065 = vmatpush1.bf16.msra.mxu0 0
        %5066 = vmatprep.subr.bf16.mxu0 0
        %5067 = vmatpush1.bf16.msra.mxu0 0
        %5068 = vmatprep.subr.bf16.mxu0 0
        %5069 = vmatpush1.bf16.msra.mxu0 0
        %5070 = vmatprep.subr.bf16.mxu0 0
        %5071 = vmatpush1.bf16.msra.mxu0 0
        %5072 = vmatprep.subr.bf16.mxu0 0
        %5073 = vmatpush1.bf16.msra.mxu0 0
        %5074 = vmatprep.mubr.bf16.mxu0 0
        %5075 = vmatmul.mubr.bf16.gmra.mrb[0].mxu0 %v5037
        %v5076 = vpop.f32.mrb[0].mxu0
        %v5077 = vadd.f32 %v5035, %v5076
        %v5078 = vpop.f32.mrb[0].mxu0
        %v5079 = vpop.f32.mrb[0].mxu0
        %v5080 = vpop.f32.mrb[0].mxu0
        %5081 = vdwg.mxu0
        %v5082 = vadd.f32 %v4844, %v5077
        %v5083 = vld [vmem:[%s63] sm:$0xf]
        %v5084 = vld [vmem:[%s65] sm:$0xff]
        %v5085 = vlaneseq
        %v5086 = vshrl.u32 %v5085, 7
        %v5087 = vsub.s32 0, %v5086
        %v5088 = vrot.slane %v5083, %v5087
        %v5089 = vmul.f32 %v5082, %v5088
        %v5090 = vlaneseq
        %v5091 = vshrl.u32 %v5090, 7
        %v5092 = vsub.s32 1, %v5091
        %v5093 = vrot.slane %v5083, %v5092
        %v5094 = vadd.f32 %v5089, %v5093
        %vm5095 = vcmp.ge.f32.partialorder %v5094, 0.0
        %v5096 = vlaneseq
        %v5097 = vshrl.u32 %v5096, 7
        %v5098 = vsub.s32 2, %v5097
        %v5099 = vrot.slane %v5083, %v5098
        %v5100 = vmul.f32 %v5099, %v5094
        %v5101 = vsel %vm5095, %v5094, %v5100
        %v5102 = vpack.c.bf16 %v5101, %v5101
        %v5103 = vld [vmem:[%s67] sm:$0xf]
        %v5104 = vld [vmem:[%s67 + $0x4] sm:$0xf]
        %v5105 = vlaneseq
        %v5106 = vshrl.u32 %v5105, 7
        %v5107 = vsub.s32 0, %v5106
        %v5108 = vrot.slane %v5084, %v5107
        %v5111 = vunpack.c.l.b16 %v5103
        %v5112 = vunpack.c.l.b16 %v5104
        %v5113 = vpack.c.b16 %v5112, %v5111
        %v5116 = vsel %vm3027, %v5102, 0
        %5118 = vmatprep.subr.bf16.mxu0 0
        %5119 = vmatpush1.bf16.msra.mxu0 %v5113
        %5120 = vmatprep.subr.bf16.mxu0 0
        %5121 = vmatpush1.bf16.msra.mxu0 0
        %5122 = vmatprep.subr.bf16.mxu0 0
        %5123 = vmatpush1.bf16.msra.mxu0 0
        %5124 = vmatprep.subr.bf16.mxu0 0
        %5125 = vmatpush1.bf16.msra.mxu0 0
        %5126 = vmatprep.subr.bf16.mxu0 0
        %5127 = vmatpush1.bf16.msra.mxu0 0
        %5128 = vmatprep.subr.bf16.mxu0 0
        %5129 = vmatpush1.bf16.msra.mxu0 0
        %5130 = vmatprep.subr.bf16.mxu0 0
        %5131 = vmatpush1.bf16.msra.mxu0 0
        %5132 = vmatprep.subr.bf16.mxu0 0
        %5133 = vmatpush1.bf16.msra.mxu0 0
        %5134 = vmatprep.subr.bf16.mxu0 0
        %5135 = vmatpush1.bf16.msra.mxu0 0
        %5136 = vmatprep.subr.bf16.mxu0 0
        %5137 = vmatpush1.bf16.msra.mxu0 0
        %5138 = vmatprep.subr.bf16.mxu0 0
        %5139 = vmatpush1.bf16.msra.mxu0 0
        %5140 = vmatprep.subr.bf16.mxu0 0
        %5141 = vmatpush1.bf16.msra.mxu0 0
        %5142 = vmatprep.subr.bf16.mxu0 0
        %5143 = vmatpush1.bf16.msra.mxu0 0
        %5144 = vmatprep.subr.bf16.mxu0 0
        %5145 = vmatpush1.bf16.msra.mxu0 0
        %5146 = vmatprep.subr.bf16.mxu0 0
        %5147 = vmatpush1.bf16.msra.mxu0 0
        %5148 = vmatprep.subr.bf16.mxu0 0
        %5149 = vmatpush1.bf16.msra.mxu0 0
        %5150 = vmatprep.mubr.bf16.mxu0 0
        %5151 = vmatmul.mubr.bf16.gmra.mrb[0].mxu0 %v5116
        %v5152 = vpop.f32.mrb[0].mxu0
        %v5153 = vadd.f32 %v5108, %v5152
        %v5154 = vpop.f32.mrb[0].mxu0
        %v5155 = vpop.f32.mrb[0].mxu0
        %v5156 = vpop.f32.mrb[0].mxu0
        %5157 = vdwg.mxu0
        %v5158 = vlaneseq
        %v5159 = vshrl.u32 %v5158, 7
        %v5160 = vsub.s32 1, %v5159
        %v5161 = vrot.slane %v5084, %v5160
        %v5162 = vmul.f32 %v5153, %v5161
        %v5163 = vlaneseq
        %v5164 = vshrl.u32 %v5163, 7
        %v5165 = vsub.s32 2, %v5164
        %v5166 = vrot.slane %v5084, %v5165
        %v5167 = vadd.f32 %v5162, %v5166
        %vm5168 = vcmp.ge.f32.partialorder %v5167, 0.0
        %v5169 = vlaneseq
        %v5170 = vshrl.u32 %v5169, 7
        %v5171 = vsub.s32 3, %v5170
        %v5172 = vrot.slane %v5084, %v5171
        %v5173 = vmul.f32 %v5172, %v5167
        %v5174 = vsel %vm5168, %v5167, %v5173
        %v5176 = vrot.slane %v5174, 7
        %v5178 = vsel %vm2806, 0.0, %v5176
        %v5179 = vrot.slane %v5174, 1
        %v5181 = vsel %vm2806, %v5179, 0.0
        %5182 = vrot.lane.b32.xlu0 %v5174, 4
        %v5183 = vpop.permute.xlu0 %5182
        %5186 = vrot.lane.b32.xlu0 %v5181, 8
        %v5187 = vpop.permute.xlu0 %5186
        %v5189 = vsel %vm4633, %v5178, %v5183
        %v5190 = vsel %vm3887, %v5189, %v5187
        %v5191 = vpack.c.bf16 %v5190, %v5190
        %v5192 = vld [vmem:[%s69] sm:$0xf]
        %v5193 = vld [vmem:[%s69 + $0x4] sm:$0x3]
        %v5194 = vlaneseq
        %v5195 = vshrl.u32 %v5194, 7
        %v5196 = vsub.s32 4, %v5195
        %v5197 = vrot.slane %v5084, %v5196
        %v5200 = vunpack.c.l.b16 %v5192
        %v5201 = vunpack.c.l.b16 %v5193
        %v5202 = vpack.c.b16 %v5201, %v5200
        %v5204 = vsel %vm4965, %v5191, 0
        %v5207 = vsel %vm4969, %v5202, 0
        %5209 = vmatprep.subr.bf16.mxu0 0
        %5210 = vmatpush1.bf16.msra.mxu0 %v5207
        %5211 = vmatprep.subr.bf16.mxu0 0
        %5212 = vmatpush1.bf16.msra.mxu0 0
        %5213 = vmatprep.subr.bf16.mxu0 0
        %5214 = vmatpush1.bf16.msra.mxu0 0
        %5215 = vmatprep.subr.bf16.mxu0 0
        %5216 = vmatpush1.bf16.msra.mxu0 0
        %5217 = vmatprep.subr.bf16.mxu0 0
        %5218 = vmatpush1.bf16.msra.mxu0 0
        %5219 = vmatprep.subr.bf16.mxu0 0
        %5220 = vmatpush1.bf16.msra.mxu0 0
        %5221 = vmatprep.subr.bf16.mxu0 0
        %5222 = vmatpush1.bf16.msra.mxu0 0
        %5223 = vmatprep.subr.bf16.mxu0 0
        %5224 = vmatpush1.bf16.msra.mxu0 0
        %5225 = vmatprep.subr.bf16.mxu0 0
        %5226 = vmatpush1.bf16.msra.mxu0 0
        %5227 = vmatprep.subr.bf16.mxu0 0
        %5228 = vmatpush1.bf16.msra.mxu0 0
        %5229 = vmatprep.subr.bf16.mxu0 0
        %5230 = vmatpush1.bf16.msra.mxu0 0
        %5231 = vmatprep.subr.bf16.mxu0 0
        %5232 = vmatpush1.bf16.msra.mxu0 0
        %5233 = vmatprep.subr.bf16.mxu0 0
        %5234 = vmatpush1.bf16.msra.mxu0 0
        %5235 = vmatprep.subr.bf16.mxu0 0
        %5236 = vmatpush1.bf16.msra.mxu0 0
        %5237 = vmatprep.subr.bf16.mxu0 0
        %5238 = vmatpush1.bf16.msra.mxu0 0
        %5239 = vmatprep.subr.bf16.mxu0 0
        %5240 = vmatpush1.bf16.msra.mxu0 0
        %5241 = vmatprep.mubr.bf16.mxu0 0
        %5242 = vmatmul.mubr.bf16.gmra.mrb[0].mxu0 %v5204
        %v5243 = vpop.f32.mrb[0].mxu0
        %v5244 = vadd.f32 %v5197, %v5243
        %v5245 = vpop.f32.mrb[0].mxu0
        %v5246 = vpop.f32.mrb[0].mxu0
        %v5247 = vpop.f32.mrb[0].mxu0
        %5248 = vdwg.mxu0
        %v5249 = vlaneseq
        %v5250 = vshrl.u32 %v5249, 7
        %v5251 = vsub.s32 5, %v5250
        %v5252 = vrot.slane %v5084, %v5251
        %v5253 = vmul.f32 %v5244, %v5252
        %v5254 = vlaneseq
        %v5255 = vshrl.u32 %v5254, 7
        %v5256 = vsub.s32 6, %v5255
        %v5257 = vrot.slane %v5084, %v5256
        %v5258 = vadd.f32 %v5253, %v5257
        %vm5259 = vcmp.ge.f32.partialorder %v5258, 0.0
        %v5260 = vlaneseq
        %v5261 = vshrl.u32 %v5260, 7
        %v5262 = vsub.s32 7, %v5261
        %v5263 = vrot.slane %v5084, %v5262
        %v5264 = vmul.f32 %v5263, %v5258
        %v5265 = vsel %vm5259, %v5258, %v5264
        %v5266 = vpack.c.bf16 %v5265, %v5265
        %v5267 = vld [vmem:[#allocation4] sm:$0x3]
        %v5268 = vlaneseq
        %v5269 = vshrl.u32 %v5268, 7
        %v5270 = vsub.s32 3, %v5269
        %v5271 = vrot.slane %v5083, %v5270
        %v5273 = vsel %vm4633, %v5266, 0
        %v5276 = vsel %vm4637, %v5267, 0
        %5278 = vmatprep.subr.bf16.mxu0 0
        %5279 = vmatpush1.bf16.msra.mxu0 %v5276
        %5280 = vmatprep.subr.bf16.mxu0 0
        %5281 = vmatpush1.bf16.msra.mxu0 0
        %5282 = vmatprep.subr.bf16.mxu0 0
        %5283 = vmatpush1.bf16.msra.mxu0 0
        %5284 = vmatprep.subr.bf16.mxu0 0
        %5285 = vmatpush1.bf16.msra.mxu0 0
        %5286 = vmatprep.subr.bf16.mxu0 0
        %5287 = vmatpush1.bf16.msra.mxu0 0
        %5288 = vmatprep.subr.bf16.mxu0 0
        %5289 = vmatpush1.bf16.msra.mxu0 0
        %5290 = vmatprep.subr.bf16.mxu0 0
        %5291 = vmatpush1.bf16.msra.mxu0 0
        %5292 = vmatprep.subr.bf16.mxu0 0
        %5293 = vmatpush1.bf16.msra.mxu0 0
        %5294 = vmatprep.subr.bf16.mxu0 0
        %5295 = vmatpush1.bf16.msra.mxu0 0
        %5296 = vmatprep.subr.bf16.mxu0 0
        %5297 = vmatpush1.bf16.msra.mxu0 0
        %5298 = vmatprep.subr.bf16.mxu0 0
        %5299 = vmatpush1.bf16.msra.mxu0 0
        %5300 = vmatprep.subr.bf16.mxu0 0
        %5301 = vmatpush1.bf16.msra.mxu0 0
        %5302 = vmatprep.subr.bf16.mxu0 0
        %5303 = vmatpush1.bf16.msra.mxu0 0
        %5304 = vmatprep.subr.bf16.mxu0 0
        %5305 = vmatpush1.bf16.msra.mxu0 0
        %5306 = vmatprep.subr.bf16.mxu0 0
        %5307 = vmatpush1.bf16.msra.mxu0 0
        %5308 = vmatprep.subr.bf16.mxu0 0
        %5309 = vmatpush1.bf16.msra.mxu0 0
        %5310 = vmatprep.mubr.bf16.mxu0 0
        %5311 = vmatmul.mubr.bf16.gmra.mrb[0].mxu0 %v5273
        %v5312 = vpop.f32.mrb[0].mxu0
        %v5313 = vadd.f32 %v5271, %v5312
        %v5314 = vpop.f32.mrb[0].mxu0
        %v5315 = vpop.f32.mrb[0].mxu0
        %v5316 = vpop.f32.mrb[0].mxu0
        %5317 = vdwg.mxu0
        %v5318 = vadd.f32 %v5082, %v5313
        %v5319 = vpack.c.bf16 %v5082, %v5082
        %v5320 = vld [vmem:[%s149] sm:$0x1]
        %vm5321 = vcmask 15360
        %v5323 = vsel %vm5321, %v5320, 0
        %v5326 = vsel %vm2806, %v5319, 0
        %5328 = vmatprep.subr.bf16.mxu0 0
        %5329 = vmatpush1.bf16.msra.mxu0 %v5326
        %5330 = vmatprep.subr.bf16.mxu0 0
        %5331 = vmatpush1.bf16.msra.mxu0 0
        %5332 = vmatprep.subr.bf16.mxu0 0
        %5333 = vmatpush1.bf16.msra.mxu0 0
        %5334 = vmatprep.subr.bf16.mxu0 0
        %5335 = vmatpush1.bf16.msra.mxu0 0
        %5336 = vmatprep.subr.bf16.mxu0 0
        %5337 = vmatpush1.bf16.msra.mxu0 0
        %5338 = vmatprep.subr.bf16.mxu0 0
        %5339 = vmatpush1.bf16.msra.mxu0 0
        %5340 = vmatprep.subr.bf16.mxu0 0
        %5341 = vmatpush1.bf16.msra.mxu0 0
        %5342 = vmatprep.subr.bf16.mxu0 0
        %5343 = vmatpush1.bf16.msra.mxu0 0
        %5344 = vmatprep.subr.bf16.mxu0 0
        %5345 = vmatpush1.bf16.msra.mxu0 0
        %5346 = vmatprep.subr.bf16.mxu0 0
        %5347 = vmatpush1.bf16.msra.mxu0 0
        %5348 = vmatprep.subr.bf16.mxu0 0
        %5349 = vmatpush1.bf16.msra.mxu0 0
        %5350 = vmatprep.subr.bf16.mxu0 0
        %5351 = vmatpush1.bf16.msra.mxu0 0
        %5352 = vmatprep.subr.bf16.mxu0 0
        %5353 = vmatpush1.bf16.msra.mxu0 0
        %5354 = vmatprep.subr.bf16.mxu0 0
        %5355 = vmatpush1.bf16.msra.mxu0 0
        %5356 = vmatprep.subr.bf16.mxu0 0
        %5357 = vmatpush1.bf16.msra.mxu0 0
        %5358 = vmatprep.subr.bf16.mxu0 0
        %5359 = vmatpush1.bf16.msra.mxu0 0
        %5360 = vmatprep.mubr.bf16.mxu0 0
        %5361 = vmatmul.mubr.bf16.gmra.mrb[0].mxu0 %v5323
        %v5362 = vpop.f32.mrb[0].mxu0
        %v5363 = vadd.f32 0.0, %v5362
        %v5364 = vpop.f32.mrb[0].mxu0
        %v5365 = vpop.f32.mrb[0].mxu0
        %v5366 = vpop.f32.mrb[0].mxu0
        %5367 = vdwg.mxu0
        %s5368 = scalar_lea.vmem %s149, 1
        %v5369 = vld [vmem:[%s5368] sm:$0x1]
        %v5371 = vsel %vm5321, %v5369, 0
        %5373 = vmatprep.subr.bf16.mxu0 0
        %5374 = vmatpush1.bf16.msra.mxu0 %v5326
        %5375 = vmatprep.subr.bf16.mxu0 0
        %5376 = vmatpush1.bf16.msra.mxu0 0
        %5377 = vmatprep.subr.bf16.mxu0 0
        %5378 = vmatpush1.bf16.msra.mxu0 0
        %5379 = vmatprep.subr.bf16.mxu0 0
        %5380 = vmatpush1.bf16.msra.mxu0 0
        %5381 = vmatprep.subr.bf16.mxu0 0
        %5382 = vmatpush1.bf16.msra.mxu0 0
        %5383 = vmatprep.subr.bf16.mxu0 0
        %5384 = vmatpush1.bf16.msra.mxu0 0
        %5385 = vmatprep.subr.bf16.mxu0 0
        %5386 = vmatpush1.bf16.msra.mxu0 0
        %5387 = vmatprep.subr.bf16.mxu0 0
        %5388 = vmatpush1.bf16.msra.mxu0 0
        %5389 = vmatprep.subr.bf16.mxu0 0
        %5390 = vmatpush1.bf16.msra.mxu0 0
        %5391 = vmatprep.subr.bf16.mxu0 0
        %5392 = vmatpush1.bf16.msra.mxu0 0
        %5393 = vmatprep.subr.bf16.mxu0 0
        %5394 = vmatpush1.bf16.msra.mxu0 0
        %5395 = vmatprep.subr.bf16.mxu0 0
        %5396 = vmatpush1.bf16.msra.mxu0 0
        %5397 = vmatprep.subr.bf16.mxu0 0
        %5398 = vmatpush1.bf16.msra.mxu0 0
        %5399 = vmatprep.subr.bf16.mxu0 0
        %5400 = vmatpush1.bf16.msra.mxu0 0
        %5401 = vmatprep.subr.bf16.mxu0 0
        %5402 = vmatpush1.bf16.msra.mxu0 0
        %5403 = vmatprep.subr.bf16.mxu0 0
        %5404 = vmatpush1.bf16.msra.mxu0 0
        %5405 = vmatprep.mubr.bf16.mxu0 0
        %5406 = vmatmul.mubr.bf16.gmra.mrb[0].mxu0 %v5371
        %v5407 = vpop.f32.mrb[0].mxu0
        %v5408 = vadd.f32 0.0, %v5407
        %v5409 = vpop.f32.mrb[0].mxu0
        %v5410 = vpop.f32.mrb[0].mxu0
        %v5411 = vpop.f32.mrb[0].mxu0
        %5412 = vdwg.mxu0
        %v5413 = vmax.f32 %v5363, %v5408
        %v5414 = vpack.c.bf16 %v5413, %v5413
        %v5415 = vld [vmem:[%s157] sm:$0xf]
        %v5416 = vld [vmem:[%s157 + $0x4] sm:$0xf]
        %v5419 = vunpack.c.l.b16 %v5415
        %v5420 = vunpack.c.l.b16 %v5416
        %v5421 = vpack.c.b16 %v5420, %v5419
        %v5424 = vsel %vm3027, %v5414, 0
        %5426 = vmatprep.subr.bf16.mxu0 0
        %5427 = vmatpush1.bf16.msra.mxu0 %v5421
        %5428 = vmatprep.subr.bf16.mxu0 0
        %5429 = vmatpush1.bf16.msra.mxu0 0
        %5430 = vmatprep.subr.bf16.mxu0 0
        %5431 = vmatpush1.bf16.msra.mxu0 0
        %5432 = vmatprep.subr.bf16.mxu0 0
        %5433 = vmatpush1.bf16.msra.mxu0 0
        %5434 = vmatprep.subr.bf16.mxu0 0
        %5435 = vmatpush1.bf16.msra.mxu0 0
        %5436 = vmatprep.subr.bf16.mxu0 0
        %5437 = vmatpush1.bf16.msra.mxu0 0
        %5438 = vmatprep.subr.bf16.mxu0 0
        %5439 = vmatpush1.bf16.msra.mxu0 0
        %5440 = vmatprep.subr.bf16.mxu0 0
        %5441 = vmatpush1.bf16.msra.mxu0 0
        %5442 = vmatprep.subr.bf16.mxu0 0
        %5443 = vmatpush1.bf16.msra.mxu0 0
        %5444 = vmatprep.subr.bf16.mxu0 0
        %5445 = vmatpush1.bf16.msra.mxu0 0
        %5446 = vmatprep.subr.bf16.mxu0 0
        %5447 = vmatpush1.bf16.msra.mxu0 0
        %5448 = vmatprep.subr.bf16.mxu0 0
        %5449 = vmatpush1.bf16.msra.mxu0 0
        %5450 = vmatprep.subr.bf16.mxu0 0
        %5451 = vmatpush1.bf16.msra.mxu0 0
        %5452 = vmatprep.subr.bf16.mxu0 0
        %5453 = vmatpush1.bf16.msra.mxu0 0
        %5454 = vmatprep.subr.bf16.mxu0 0
        %5455 = vmatpush1.bf16.msra.mxu0 0
        %5456 = vmatprep.subr.bf16.mxu0 0
        %5457 = vmatpush1.bf16.msra.mxu0 0
        %5458 = vmatprep.mubr.bf16.mxu0 0
        %5459 = vmatmul.mubr.bf16.gmra.mrb[0].mxu0 %v5424
        %v5460 = vpop.f32.mrb[0].mxu0
        %v5461 = vadd.f32 0.0, %v5460
        %v5462 = vpop.f32.mrb[0].mxu0
        %v5463 = vpop.f32.mrb[0].mxu0
        %v5464 = vpop.f32.mrb[0].mxu0
        %5465 = vdwg.mxu0
        %s5466 = scalar_lea.vmem %s157, 8
        %v5467 = vld [vmem:[%s5466] sm:$0xf]
        %v5468 = vld [vmem:[%s5466 + $0x4] sm:$0xf]
        %v5471 = vunpack.c.l.b16 %v5467
        %v5472 = vunpack.c.l.b16 %v5468
        %v5473 = vpack.c.b16 %v5472, %v5471
        %5475 = vmatprep.subr.bf16.mxu0 0
        %5476 = vmatpush1.bf16.msra.mxu0 %v5473
        %5477 = vmatprep.subr.bf16.mxu0 0
        %5478 = vmatpush1.bf16.msra.mxu0 0
        %5479 = vmatprep.subr.bf16.mxu0 0
        %5480 = vmatpush1.bf16.msra.mxu0 0
        %5481 = vmatprep.subr.bf16.mxu0 0
        %5482 = vmatpush1.bf16.msra.mxu0 0
        %5483 = vmatprep.subr.bf16.mxu0 0
        %5484 = vmatpush1.bf16.msra.mxu0 0
        %5485 = vmatprep.subr.bf16.mxu0 0
        %5486 = vmatpush1.bf16.msra.mxu0 0
        %5487 = vmatprep.subr.bf16.mxu0 0
        %5488 = vmatpush1.bf16.msra.mxu0 0
        %5489 = vmatprep.subr.bf16.mxu0 0
        %5490 = vmatpush1.bf16.msra.mxu0 0
        %5491 = vmatprep.subr.bf16.mxu0 0
        %5492 = vmatpush1.bf16.msra.mxu0 0
        %5493 = vmatprep.subr.bf16.mxu0 0
        %5494 = vmatpush1.bf16.msra.mxu0 0
        %5495 = vmatprep.subr.bf16.mxu0 0
        %5496 = vmatpush1.bf16.msra.mxu0 0
        %5497 = vmatprep.subr.bf16.mxu0 0
        %5498 = vmatpush1.bf16.msra.mxu0 0
        %5499 = vmatprep.subr.bf16.mxu0 0
        %5500 = vmatpush1.bf16.msra.mxu0 0
        %5501 = vmatprep.subr.bf16.mxu0 0
        %5502 = vmatpush1.bf16.msra.mxu0 0
        %5503 = vmatprep.subr.bf16.mxu0 0
        %5504 = vmatpush1.bf16.msra.mxu0 0
        %5505 = vmatprep.subr.bf16.mxu0 0
        %5506 = vmatpush1.bf16.msra.mxu0 0
        %5507 = vmatprep.mubr.bf16.mxu0 0
        %5508 = vmatmul.mubr.bf16.gmra.mrb[0].mxu0 %v5424
        %v5509 = vpop.f32.mrb[0].mxu0
        %v5510 = vadd.f32 0.0, %v5509
        %v5511 = vpop.f32.mrb[0].mxu0
        %v5512 = vpop.f32.mrb[0].mxu0
        %v5513 = vpop.f32.mrb[0].mxu0
        %5514 = vdwg.mxu0
        %v5515 = vmax.f32 %v5461, %v5510
        %v5516 = vld [vmem:[%s73] sm:$0xf]
        %v5517 = vld [vmem:[%s75] sm:$0xff]
        %v5518 = vmul.f32 %v5515, %v5516
        %v5520 = vrot.slane %v5516, 1
        %v5522 = vadd.f32 %v5518, %v5520
        %vm5523 = vcmp.ge.f32.partialorder %v5522, 0.0
        %v5525 = vrot.slane %v5522, 6
        %v5527 = vmul.f32 %v5516, %v5525
        %v5529 = vrot.slane %v5527, 2
        %v5531 = vsel %vm5523, %v5522, %v5529
        %v5532 = vpack.c.bf16 %v5531, %v5531
        %v5533 = vld [vmem:[%s77] sm:$0xf]
        %v5535 = vsel %vm3887, %v5532, 0
        %v5538 = vsel %vm3891, %v5533, 0
        %5540 = vmatprep.subr.bf16.mxu0 0
        %5541 = vmatpush1.bf16.msra.mxu0 %v5538
        %5542 = vmatprep.subr.bf16.mxu0 0
        %5543 = vmatpush1.bf16.msra.mxu0 0
        %5544 = vmatprep.subr.bf16.mxu0 0
        %5545 = vmatpush1.bf16.msra.mxu0 0
        %5546 = vmatprep.subr.bf16.mxu0 0
        %5547 = vmatpush1.bf16.msra.mxu0 0
        %5548 = vmatprep.subr.bf16.mxu0 0
        %5549 = vmatpush1.bf16.msra.mxu0 0
        %5550 = vmatprep.subr.bf16.mxu0 0
        %5551 = vmatpush1.bf16.msra.mxu0 0
        %5552 = vmatprep.subr.bf16.mxu0 0
        %5553 = vmatpush1.bf16.msra.mxu0 0
        %5554 = vmatprep.subr.bf16.mxu0 0
        %5555 = vmatpush1.bf16.msra.mxu0 0
        %5556 = vmatprep.subr.bf16.mxu0 0
        %5557 = vmatpush1.bf16.msra.mxu0 0
        %5558 = vmatprep.subr.bf16.mxu0 0
        %5559 = vmatpush1.bf16.msra.mxu0 0
        %5560 = vmatprep.subr.bf16.mxu0 0
        %5561 = vmatpush1.bf16.msra.mxu0 0
        %5562 = vmatprep.subr.bf16.mxu0 0
        %5563 = vmatpush1.bf16.msra.mxu0 0
        %5564 = vmatprep.subr.bf16.mxu0 0
        %5565 = vmatpush1.bf16.msra.mxu0 0
        %5566 = vmatprep.subr.bf16.mxu0 0
        %5567 = vmatpush1.bf16.msra.mxu0 0
        %5568 = vmatprep.subr.bf16.mxu0 0
        %5569 = vmatpush1.bf16.msra.mxu0 0
        %5570 = vmatprep.subr.bf16.mxu0 0
        %5571 = vmatpush1.bf16.msra.mxu0 0
        %5572 = vmatprep.mubr.bf16.mxu0 0
        %5573 = vmatmul.mubr.bf16.gmra.mrb[0].mxu0 %v5535
        %v5574 = vpop.f32.mrb[0].mxu0
        %v5575 = vadd.f32 %v5517, %v5574
        %v5576 = vpop.f32.mrb[0].mxu0
        %v5577 = vpop.f32.mrb[0].mxu0
        %v5578 = vpop.f32.mrb[0].mxu0
        %5579 = vdwg.mxu0
        %v5581 = vrot.slane %v5517, 1
        %v5583 = vmul.f32 %v5575, %v5581
        %v5584 = vrot.slane %v5517, 2
        %v5586 = vadd.f32 %v5583, %v5584
        %vm5587 = vcmp.ge.f32.partialorder %v5586, 0.0
        %v5589 = vrot.slane %v5586, 5
        %v5591 = vmul.f32 %v5517, %v5589
        %v5593 = vrot.slane %v5591, 3
        %v5595 = vsel %vm5587, %v5586, %v5593
        %5597 = vrot.lane.b32.xlu0 %v5595, 2
        %v5598 = vpop.permute.xlu0 %5597
        %v5600 = vsel %vm5321, 0.0, %v5598
        %v5601 = vsel %vm4633, %v5600, 0.0
        %v5602 = vpack.c.bf16 %v5601, %v5601
        %v5603 = vld [vmem:[%s79] sm:$0x7]
        %v5604 = vrot.slane %v5517, 4
        %vm5606 = vcmask 48128
        %v5608 = vsel %vm5606, %v5602, 0
        %v5611 = vsel %vm4237, %v5603, 0
        %5613 = vmatprep.subr.bf16.mxu0 0
        %5614 = vmatpush1.bf16.msra.mxu0 %v5611
        %5615 = vmatprep.subr.bf16.mxu0 0
        %5616 = vmatpush1.bf16.msra.mxu0 0
        %5617 = vmatprep.subr.bf16.mxu0 0
        %5618 = vmatpush1.bf16.msra.mxu0 0
        %5619 = vmatprep.subr.bf16.mxu0 0
        %5620 = vmatpush1.bf16.msra.mxu0 0
        %5621 = vmatprep.subr.bf16.mxu0 0
        %5622 = vmatpush1.bf16.msra.mxu0 0
        %5623 = vmatprep.subr.bf16.mxu0 0
        %5624 = vmatpush1.bf16.msra.mxu0 0
        %5625 = vmatprep.subr.bf16.mxu0 0
        %5626 = vmatpush1.bf16.msra.mxu0 0
        %5627 = vmatprep.subr.bf16.mxu0 0
        %5628 = vmatpush1.bf16.msra.mxu0 0
        %5629 = vmatprep.subr.bf16.mxu0 0
        %5630 = vmatpush1.bf16.msra.mxu0 0
        %5631 = vmatprep.subr.bf16.mxu0 0
        %5632 = vmatpush1.bf16.msra.mxu0 0
        %5633 = vmatprep.subr.bf16.mxu0 0
        %5634 = vmatpush1.bf16.msra.mxu0 0
        %5635 = vmatprep.subr.bf16.mxu0 0
        %5636 = vmatpush1.bf16.msra.mxu0 0
        %5637 = vmatprep.subr.bf16.mxu0 0
        %5638 = vmatpush1.bf16.msra.mxu0 0
        %5639 = vmatprep.subr.bf16.mxu0 0
        %5640 = vmatpush1.bf16.msra.mxu0 0
        %5641 = vmatprep.subr.bf16.mxu0 0
        %5642 = vmatpush1.bf16.msra.mxu0 0
        %5643 = vmatprep.subr.bf16.mxu0 0
        %5644 = vmatpush1.bf16.msra.mxu0 0
        %5645 = vmatprep.mubr.bf16.mxu0 0
        %5646 = vmatmul.mubr.bf16.gmra.mrb[0].mxu0 %v5608
        %v5647 = vpop.f32.mrb[0].mxu0
        %v5648 = vadd.f32 %v5604, %v5647
        %v5649 = vpop.f32.mrb[0].mxu0
        %v5650 = vpop.f32.mrb[0].mxu0
        %v5651 = vpop.f32.mrb[0].mxu0
        %5652 = vdwg.mxu0
        %v5653 = vrot.slane %v5517, 5
        %v5655 = vmul.f32 %v5648, %v5653
        %v5656 = vrot.slane %v5517, 6
        %v5658 = vadd.f32 %v5655, %v5656
        %vm5659 = vcmp.ge.f32.partialorder %v5658, 0.0
        %v5661 = vrot.slane %v5658, 1
        %v5663 = vmul.f32 %v5517, %v5661
        %v5665 = vrot.slane %v5663, 7
        %v5667 = vsel %vm5659, %v5658, %v5665
        %v5668 = vpack.c.bf16 %v5667, %v5667
        %v5669 = vld [vmem:[%s81] sm:$0x1]
        %v5670 = vrot.slane %v5516, 3
        %v5673 = vsel %vm5321, %v5668, 0
        %v5676 = vsel %vm2806, %v5669, 0
        %5678 = vmatprep.subr.bf16.mxu0 0
        %5679 = vmatpush1.bf16.msra.mxu0 %v5676
        %5680 = vmatprep.subr.bf16.mxu0 0
        %5681 = vmatpush1.bf16.msra.mxu0 0
        %5682 = vmatprep.subr.bf16.mxu0 0
        %5683 = vmatpush1.bf16.msra.mxu0 0
        %5684 = vmatprep.subr.bf16.mxu0 0
        %5685 = vmatpush1.bf16.msra.mxu0 0
        %5686 = vmatprep.subr.bf16.mxu0 0
        %5687 = vmatpush1.bf16.msra.mxu0 0
        %5688 = vmatprep.subr.bf16.mxu0 0
        %5689 = vmatpush1.bf16.msra.mxu0 0
        %5690 = vmatprep.subr.bf16.mxu0 0
        %5691 = vmatpush1.bf16.msra.mxu0 0
        %5692 = vmatprep.subr.bf16.mxu0 0
        %5693 = vmatpush1.bf16.msra.mxu0 0
        %5694 = vmatprep.subr.bf16.mxu0 0
        %5695 = vmatpush1.bf16.msra.mxu0 0
        %5696 = vmatprep.subr.bf16.mxu0 0
        %5697 = vmatpush1.bf16.msra.mxu0 0
        %5698 = vmatprep.subr.bf16.mxu0 0
        %5699 = vmatpush1.bf16.msra.mxu0 0
        %5700 = vmatprep.subr.bf16.mxu0 0
        %5701 = vmatpush1.bf16.msra.mxu0 0
        %5702 = vmatprep.subr.bf16.mxu0 0
        %5703 = vmatpush1.bf16.msra.mxu0 0
        %5704 = vmatprep.subr.bf16.mxu0 0
        %5705 = vmatpush1.bf16.msra.mxu0 0
        %5706 = vmatprep.subr.bf16.mxu0 0
        %5707 = vmatpush1.bf16.msra.mxu0 0
        %5708 = vmatprep.subr.bf16.mxu0 0
        %5709 = vmatpush1.bf16.msra.mxu0 0
        %5710 = vmatprep.mubr.bf16.mxu0 0
        %5711 = vmatmul.mubr.bf16.gmra.mrb[0].mxu0 %v5673
        %v5712 = vpop.f32.mrb[0].mxu0
        %v5713 = vadd.f32 %v5670, %v5712
        %v5714 = vpop.f32.mrb[0].mxu0
        %v5715 = vpop.f32.mrb[0].mxu0
        %v5716 = vpop.f32.mrb[0].mxu0
        %5717 = vdwg.mxu0
        %v5718 = vadd.f32 %v5515, %v5713
        %v5719 = vld [vmem:[%s83] sm:$0xf]
        %v5720 = vld [vmem:[%s85] sm:$0xff]
        %v5721 = vmul.f32 %v5718, %v5719
        %v5723 = vrot.slane %v5719, 1
        %v5725 = vadd.f32 %v5721, %v5723
        %vm5726 = vcmp.ge.f32.partialorder %v5725, 0.0
        %v5728 = vrot.slane %v5725, 6
        %v5730 = vmul.f32 %v5719, %v5728
        %v5732 = vrot.slane %v5730, 2
        %v5734 = vsel %vm5726, %v5725, %v5732
        %v5735 = vpack.c.bf16 %v5734, %v5734
        %v5736 = vld [vmem:[%s87] sm:$0xf]
        %v5738 = vsel %vm3887, %v5735, 0
        %v5741 = vsel %vm3891, %v5736, 0
        %5743 = vmatprep.subr.bf16.mxu0 0
        %5744 = vmatpush1.bf16.msra.mxu0 %v5741
        %5745 = vmatprep.subr.bf16.mxu0 0
        %5746 = vmatpush1.bf16.msra.mxu0 0
        %5747 = vmatprep.subr.bf16.mxu0 0
        %5748 = vmatpush1.bf16.msra.mxu0 0
        %5749 = vmatprep.subr.bf16.mxu0 0
        %5750 = vmatpush1.bf16.msra.mxu0 0
        %5751 = vmatprep.subr.bf16.mxu0 0
        %5752 = vmatpush1.bf16.msra.mxu0 0
        %5753 = vmatprep.subr.bf16.mxu0 0
        %5754 = vmatpush1.bf16.msra.mxu0 0
        %5755 = vmatprep.subr.bf16.mxu0 0
        %5756 = vmatpush1.bf16.msra.mxu0 0
        %5757 = vmatprep.subr.bf16.mxu0 0
        %5758 = vmatpush1.bf16.msra.mxu0 0
        %5759 = vmatprep.subr.bf16.mxu0 0
        %5760 = vmatpush1.bf16.msra.mxu0 0
        %5761 = vmatprep.subr.bf16.mxu0 0
        %5762 = vmatpush1.bf16.msra.mxu0 0
        %5763 = vmatprep.subr.bf16.mxu0 0
        %5764 = vmatpush1.bf16.msra.mxu0 0
        %5765 = vmatprep.subr.bf16.mxu0 0
        %5766 = vmatpush1.bf16.msra.mxu0 0
        %5767 = vmatprep.subr.bf16.mxu0 0
        %5768 = vmatpush1.bf16.msra.mxu0 0
        %5769 = vmatprep.subr.bf16.mxu0 0
        %5770 = vmatpush1.bf16.msra.mxu0 0
        %5771 = vmatprep.subr.bf16.mxu0 0
        %5772 = vmatpush1.bf16.msra.mxu0 0
        %5773 = vmatprep.subr.bf16.mxu0 0
        %5774 = vmatpush1.bf16.msra.mxu0 0
        %5775 = vmatprep.mubr.bf16.mxu0 0
        %5776 = vmatmul.mubr.bf16.gmra.mrb[0].mxu0 %v5738
        %v5777 = vpop.f32.mrb[0].mxu0
        %v5778 = vadd.f32 %v5720, %v5777
        %v5779 = vpop.f32.mrb[0].mxu0
        %v5780 = vpop.f32.mrb[0].mxu0
        %v5781 = vpop.f32.mrb[0].mxu0
        %5782 = vdwg.mxu0
        %v5784 = vrot.slane %v5720, 1
        %v5786 = vmul.f32 %v5778, %v5784
        %v5787 = vrot.slane %v5720, 2
        %v5789 = vadd.f32 %v5786, %v5787
        %vm5790 = vcmp.ge.f32.partialorder %v5789, 0.0
        %v5792 = vrot.slane %v5789, 5
        %v5794 = vmul.f32 %v5720, %v5792
        %v5796 = vrot.slane %v5794, 3
        %v5798 = vsel %vm5790, %v5789, %v5796
        %5800 = vrot.lane.b32.xlu0 %v5798, 2
        %v5801 = vpop.permute.xlu0 %5800
        %v5803 = vsel %vm5321, 0.0, %v5801
        %v5804 = vsel %vm4633, %v5803, 0.0
        %v5805 = vpack.c.bf16 %v5804, %v5804
        %v5806 = vld [vmem:[%s89] sm:$0x7]
        %v5807 = vrot.slane %v5720, 4
        %v5810 = vsel %vm5606, %v5805, 0
        %v5813 = vsel %vm4237, %v5806, 0
        %5815 = vmatprep.subr.bf16.mxu0 0
        %5816 = vmatpush1.bf16.msra.mxu0 %v5813
        %5817 = vmatprep.subr.bf16.mxu0 0
        %5818 = vmatpush1.bf16.msra.mxu0 0
        %5819 = vmatprep.subr.bf16.mxu0 0
        %5820 = vmatpush1.bf16.msra.mxu0 0
        %5821 = vmatprep.subr.bf16.mxu0 0
        %5822 = vmatpush1.bf16.msra.mxu0 0
        %5823 = vmatprep.subr.bf16.mxu0 0
        %5824 = vmatpush1.bf16.msra.mxu0 0
        %5825 = vmatprep.subr.bf16.mxu0 0
        %5826 = vmatpush1.bf16.msra.mxu0 0
        %5827 = vmatprep.subr.bf16.mxu0 0
        %5828 = vmatpush1.bf16.msra.mxu0 0
        %5829 = vmatprep.subr.bf16.mxu0 0
        %5830 = vmatpush1.bf16.msra.mxu0 0
        %5831 = vmatprep.subr.bf16.mxu0 0
        %5832 = vmatpush1.bf16.msra.mxu0 0
        %5833 = vmatprep.subr.bf16.mxu0 0
        %5834 = vmatpush1.bf16.msra.mxu0 0
        %5835 = vmatprep.subr.bf16.mxu0 0
        %5836 = vmatpush1.bf16.msra.mxu0 0
        %5837 = vmatprep.subr.bf16.mxu0 0
        %5838 = vmatpush1.bf16.msra.mxu0 0
        %5839 = vmatprep.subr.bf16.mxu0 0
        %5840 = vmatpush1.bf16.msra.mxu0 0
        %5841 = vmatprep.subr.bf16.mxu0 0
        %5842 = vmatpush1.bf16.msra.mxu0 0
        %5843 = vmatprep.subr.bf16.mxu0 0
        %5844 = vmatpush1.bf16.msra.mxu0 0
        %5845 = vmatprep.subr.bf16.mxu0 0
        %5846 = vmatpush1.bf16.msra.mxu0 0
        %5847 = vmatprep.mubr.bf16.mxu0 0
        %5848 = vmatmul.mubr.bf16.gmra.mrb[0].mxu0 %v5810
        %v5849 = vpop.f32.mrb[0].mxu0
        %v5850 = vadd.f32 %v5807, %v5849
        %v5851 = vpop.f32.mrb[0].mxu0
        %v5852 = vpop.f32.mrb[0].mxu0
        %v5853 = vpop.f32.mrb[0].mxu0
        %5854 = vdwg.mxu0
        %v5855 = vrot.slane %v5720, 5
        %v5857 = vmul.f32 %v5850, %v5855
        %v5858 = vrot.slane %v5720, 6
        %v5860 = vadd.f32 %v5857, %v5858
        %vm5861 = vcmp.ge.f32.partialorder %v5860, 0.0
        %v5863 = vrot.slane %v5860, 1
        %v5865 = vmul.f32 %v5720, %v5863
        %v5867 = vrot.slane %v5865, 7
        %v5869 = vsel %vm5861, %v5860, %v5867
        %v5870 = vpack.c.bf16 %v5869, %v5869
        %v5871 = vld [vmem:[#allocation6] sm:$0x1]
        %v5872 = vrot.slane %v5719, 3
        %v5875 = vsel %vm5321, %v5870, 0
        %v5878 = vsel %vm2806, %v5871, 0
        %5880 = vmatprep.subr.bf16.mxu0 0
        %5881 = vmatpush1.bf16.msra.mxu0 %v5878
        %5882 = vmatprep.subr.bf16.mxu0 0
        %5883 = vmatpush1.bf16.msra.mxu0 0
        %5884 = vmatprep.subr.bf16.mxu0 0
        %5885 = vmatpush1.bf16.msra.mxu0 0
        %5886 = vmatprep.subr.bf16.mxu0 0
        %5887 = vmatpush1.bf16.msra.mxu0 0
        %5888 = vmatprep.subr.bf16.mxu0 0
        %5889 = vmatpush1.bf16.msra.mxu0 0
        %5890 = vmatprep.subr.bf16.mxu0 0
        %5891 = vmatpush1.bf16.msra.mxu0 0
        %5892 = vmatprep.subr.bf16.mxu0 0
        %5893 = vmatpush1.bf16.msra.mxu0 0
        %5894 = vmatprep.subr.bf16.mxu0 0
        %5895 = vmatpush1.bf16.msra.mxu0 0
        %5896 = vmatprep.subr.bf16.mxu0 0
        %5897 = vmatpush1.bf16.msra.mxu0 0
        %5898 = vmatprep.subr.bf16.mxu0 0
        %5899 = vmatpush1.bf16.msra.mxu0 0
        %5900 = vmatprep.subr.bf16.mxu0 0
        %5901 = vmatpush1.bf16.msra.mxu0 0
        %5902 = vmatprep.subr.bf16.mxu0 0
        %5903 = vmatpush1.bf16.msra.mxu0 0
        %5904 = vmatprep.subr.bf16.mxu0 0
        %5905 = vmatpush1.bf16.msra.mxu0 0
        %5906 = vmatprep.subr.bf16.mxu0 0
        %5907 = vmatpush1.bf16.msra.mxu0 0
        %5908 = vmatprep.subr.bf16.mxu0 0
        %5909 = vmatpush1.bf16.msra.mxu0 0
        %5910 = vmatprep.subr.bf16.mxu0 0
        %5911 = vmatpush1.bf16.msra.mxu0 0
        %5912 = vmatprep.mubr.bf16.mxu0 0
        %5913 = vmatmul.mubr.bf16.gmra.mrb[0].mxu0 %v5875
        %v5914 = vpop.f32.mrb[0].mxu0
        %v5915 = vadd.f32 %v5872, %v5914
        %v5916 = vpop.f32.mrb[0].mxu0
        %v5917 = vpop.f32.mrb[0].mxu0
        %v5918 = vpop.f32.mrb[0].mxu0
        %5919 = vdwg.mxu0
        %v5920 = vadd.f32 %v5718, %v5915
        %v5921 = vld [vmem:[%s93] sm:$0xf]
        %v5922 = vld [vmem:[%s95] sm:$0xff]
        %v5923 = vmul.f32 %v5920, %v5921
        %v5925 = vrot.slane %v5921, 1
        %v5927 = vadd.f32 %v5923, %v5925
        %vm5928 = vcmp.ge.f32.partialorder %v5927, 0.0
        %v5930 = vrot.slane %v5927, 6
        %v5932 = vmul.f32 %v5921, %v5930
        %v5934 = vrot.slane %v5932, 2
        %v5936 = vsel %vm5928, %v5927, %v5934
        %v5937 = vpack.c.bf16 %v5936, %v5936
        %v5938 = vld [vmem:[%s97] sm:$0xf]
        %v5940 = vsel %vm3887, %v5937, 0
        %v5943 = vsel %vm3891, %v5938, 0
        %5945 = vmatprep.subr.bf16.mxu0 0
        %5946 = vmatpush1.bf16.msra.mxu0 %v5943
        %5947 = vmatprep.subr.bf16.mxu0 0
        %5948 = vmatpush1.bf16.msra.mxu0 0
        %5949 = vmatprep.subr.bf16.mxu0 0
        %5950 = vmatpush1.bf16.msra.mxu0 0
        %5951 = vmatprep.subr.bf16.mxu0 0
        %5952 = vmatpush1.bf16.msra.mxu0 0
        %5953 = vmatprep.subr.bf16.mxu0 0
        %5954 = vmatpush1.bf16.msra.mxu0 0
        %5955 = vmatprep.subr.bf16.mxu0 0
        %5956 = vmatpush1.bf16.msra.mxu0 0
        %5957 = vmatprep.subr.bf16.mxu0 0
        %5958 = vmatpush1.bf16.msra.mxu0 0
        %5959 = vmatprep.subr.bf16.mxu0 0
        %5960 = vmatpush1.bf16.msra.mxu0 0
        %5961 = vmatprep.subr.bf16.mxu0 0
        %5962 = vmatpush1.bf16.msra.mxu0 0
        %5963 = vmatprep.subr.bf16.mxu0 0
        %5964 = vmatpush1.bf16.msra.mxu0 0
        %5965 = vmatprep.subr.bf16.mxu0 0
        %5966 = vmatpush1.bf16.msra.mxu0 0
        %5967 = vmatprep.subr.bf16.mxu0 0
        %5968 = vmatpush1.bf16.msra.mxu0 0
        %5969 = vmatprep.subr.bf16.mxu0 0
        %5970 = vmatpush1.bf16.msra.mxu0 0
        %5971 = vmatprep.subr.bf16.mxu0 0
        %5972 = vmatpush1.bf16.msra.mxu0 0
        %5973 = vmatprep.subr.bf16.mxu0 0
        %5974 = vmatpush1.bf16.msra.mxu0 0
        %5975 = vmatprep.subr.bf16.mxu0 0
        %5976 = vmatpush1.bf16.msra.mxu0 0
        %5977 = vmatprep.mubr.bf16.mxu0 0
        %5978 = vmatmul.mubr.bf16.gmra.mrb[0].mxu0 %v5940
        %v5979 = vpop.f32.mrb[0].mxu0
        %v5980 = vadd.f32 %v5922, %v5979
        %v5981 = vpop.f32.mrb[0].mxu0
        %v5982 = vpop.f32.mrb[0].mxu0
        %v5983 = vpop.f32.mrb[0].mxu0
        %5984 = vdwg.mxu0
        %v5986 = vrot.slane %v5922, 1
        %v5988 = vmul.f32 %v5980, %v5986
        %v5989 = vrot.slane %v5922, 2
        %v5991 = vadd.f32 %v5988, %v5989
        %vm5992 = vcmp.ge.f32.partialorder %v5991, 0.0
        %v5994 = vrot.slane %v5991, 5
        %v5996 = vmul.f32 %v5922, %v5994
        %v5998 = vrot.slane %v5996, 3
        %v6000 = vsel %vm5992, %v5991, %v5998
        %6002 = vrot.lane.b32.xlu0 %v6000, 2
        %v6003 = vpop.permute.xlu0 %6002
        %v6005 = vsel %vm5321, 0.0, %v6003
        %v6006 = vsel %vm4633, %v6005, 0.0
        %v6007 = vpack.c.bf16 %v6006, %v6006
        %v6008 = vld [vmem:[%s99] sm:$0x7]
        %v6009 = vrot.slane %v5922, 4
        %v6012 = vsel %vm5606, %v6007, 0
        %v6015 = vsel %vm4237, %v6008, 0
        %6017 = vmatprep.subr.bf16.mxu0 0
        %6018 = vmatpush1.bf16.msra.mxu0 %v6015
        %6019 = vmatprep.subr.bf16.mxu0 0
        %6020 = vmatpush1.bf16.msra.mxu0 0
        %6021 = vmatprep.subr.bf16.mxu0 0
        %6022 = vmatpush1.bf16.msra.mxu0 0
        %6023 = vmatprep.subr.bf16.mxu0 0
        %6024 = vmatpush1.bf16.msra.mxu0 0
        %6025 = vmatprep.subr.bf16.mxu0 0
        %6026 = vmatpush1.bf16.msra.mxu0 0
        %6027 = vmatprep.subr.bf16.mxu0 0
        %6028 = vmatpush1.bf16.msra.mxu0 0
        %6029 = vmatprep.subr.bf16.mxu0 0
        %6030 = vmatpush1.bf16.msra.mxu0 0
        %6031 = vmatprep.subr.bf16.mxu0 0
        %6032 = vmatpush1.bf16.msra.mxu0 0
        %6033 = vmatprep.subr.bf16.mxu0 0
        %6034 = vmatpush1.bf16.msra.mxu0 0
        %6035 = vmatprep.subr.bf16.mxu0 0
        %6036 = vmatpush1.bf16.msra.mxu0 0
        %6037 = vmatprep.subr.bf16.mxu0 0
        %6038 = vmatpush1.bf16.msra.mxu0 0
        %6039 = vmatprep.subr.bf16.mxu0 0
        %6040 = vmatpush1.bf16.msra.mxu0 0
        %6041 = vmatprep.subr.bf16.mxu0 0
        %6042 = vmatpush1.bf16.msra.mxu0 0
        %6043 = vmatprep.subr.bf16.mxu0 0
        %6044 = vmatpush1.bf16.msra.mxu0 0
        %6045 = vmatprep.subr.bf16.mxu0 0
        %6046 = vmatpush1.bf16.msra.mxu0 0
        %6047 = vmatprep.subr.bf16.mxu0 0
        %6048 = vmatpush1.bf16.msra.mxu0 0
        %6049 = vmatprep.mubr.bf16.mxu0 0
        %6050 = vmatmul.mubr.bf16.gmra.mrb[0].mxu0 %v6012
        %v6051 = vpop.f32.mrb[0].mxu0
        %v6052 = vadd.f32 %v6009, %v6051
        %v6053 = vpop.f32.mrb[0].mxu0
        %v6054 = vpop.f32.mrb[0].mxu0
        %v6055 = vpop.f32.mrb[0].mxu0
        %6056 = vdwg.mxu0
        %v6057 = vrot.slane %v5922, 5
        %v6059 = vmul.f32 %v6052, %v6057
        %v6060 = vrot.slane %v5922, 6
        %v6062 = vadd.f32 %v6059, %v6060
        %vm6063 = vcmp.ge.f32.partialorder %v6062, 0.0
        %v6065 = vrot.slane %v6062, 1
        %v6067 = vmul.f32 %v5922, %v6065
        %v6069 = vrot.slane %v6067, 7
        %v6071 = vsel %vm6063, %v6062, %v6069
        %v6072 = vpack.c.bf16 %v6071, %v6071
        %v6073 = vld [vmem:[#allocation7] sm:$0x1]
        %v6074 = vrot.slane %v5921, 3
        %v6077 = vsel %vm5321, %v6072, 0
        %v6080 = vsel %vm2806, %v6073, 0
        %6082 = vmatprep.subr.bf16.mxu0 0
        %6083 = vmatpush1.bf16.msra.mxu0 %v6080
        %6084 = vmatprep.subr.bf16.mxu0 0
        %6085 = vmatpush1.bf16.msra.mxu0 0
        %6086 = vmatprep.subr.bf16.mxu0 0
        %6087 = vmatpush1.bf16.msra.mxu0 0
        %6088 = vmatprep.subr.bf16.mxu0 0
        %6089 = vmatpush1.bf16.msra.mxu0 0
        %6090 = vmatprep.subr.bf16.mxu0 0
        %6091 = vmatpush1.bf16.msra.mxu0 0
        %6092 = vmatprep.subr.bf16.mxu0 0
        %6093 = vmatpush1.bf16.msra.mxu0 0
        %6094 = vmatprep.subr.bf16.mxu0 0
        %6095 = vmatpush1.bf16.msra.mxu0 0
        %6096 = vmatprep.subr.bf16.mxu0 0
        %6097 = vmatpush1.bf16.msra.mxu0 0
        %6098 = vmatprep.subr.bf16.mxu0 0
        %6099 = vmatpush1.bf16.msra.mxu0 0
        %6100 = vmatprep.subr.bf16.mxu0 0
        %6101 = vmatpush1.bf16.msra.mxu0 0
        %6102 = vmatprep.subr.bf16.mxu0 0
        %6103 = vmatpush1.bf16.msra.mxu0 0
        %6104 = vmatprep.subr.bf16.mxu0 0
        %6105 = vmatpush1.bf16.msra.mxu0 0
        %6106 = vmatprep.subr.bf16.mxu0 0
        %6107 = vmatpush1.bf16.msra.mxu0 0
        %6108 = vmatprep.subr.bf16.mxu0 0
        %6109 = vmatpush1.bf16.msra.mxu0 0
        %6110 = vmatprep.subr.bf16.mxu0 0
        %6111 = vmatpush1.bf16.msra.mxu0 0
        %6112 = vmatprep.subr.bf16.mxu0 0
        %6113 = vmatpush1.bf16.msra.mxu0 0
        %6114 = vmatprep.mubr.bf16.mxu0 0
        %6115 = vmatmul.mubr.bf16.gmra.mrb[0].mxu0 %v6077
        %v6116 = vpop.f32.mrb[0].mxu0
        %v6117 = vadd.f32 %v6074, %v6116
        %v6118 = vpop.f32.mrb[0].mxu0
        %v6119 = vpop.f32.mrb[0].mxu0
        %v6120 = vpop.f32.mrb[0].mxu0
        %6121 = vdwg.mxu0
        %v6122 = vadd.f32 %v5920, %v6117
        %v6123 = vpack.c.bf16 %v6122, %v6122
        %v6124 = vld [vmem:[%s173] sm:$0xf]
        %v6126 = vsel %vm3887, %v6123, 0
        %v6129 = vsel %vm3891, %v6124, 0
        %6131 = vmatprep.subr.bf16.mxu0 0
        %6132 = vmatpush1.bf16.msra.mxu0 %v6129
        %6133 = vmatprep.subr.bf16.mxu0 0
        %6134 = vmatpush1.bf16.msra.mxu0 0
        %6135 = vmatprep.subr.bf16.mxu0 0
        %6136 = vmatpush1.bf16.msra.mxu0 0
        %6137 = vmatprep.subr.bf16.mxu0 0
        %6138 = vmatpush1.bf16.msra.mxu0 0
        %6139 = vmatprep.subr.bf16.mxu0 0
        %6140 = vmatpush1.bf16.msra.mxu0 0
        %6141 = vmatprep.subr.bf16.mxu0 0
        %6142 = vmatpush1.bf16.msra.mxu0 0
        %6143 = vmatprep.subr.bf16.mxu0 0
        %6144 = vmatpush1.bf16.msra.mxu0 0
        %6145 = vmatprep.subr.bf16.mxu0 0
        %6146 = vmatpush1.bf16.msra.mxu0 0
        %6147 = vmatprep.subr.bf16.mxu0 0
        %6148 = vmatpush1.bf16.msra.mxu0 0
        %6149 = vmatprep.subr.bf16.mxu0 0
        %6150 = vmatpush1.bf16.msra.mxu0 0
        %6151 = vmatprep.subr.bf16.mxu0 0
        %6152 = vmatpush1.bf16.msra.mxu0 0
        %6153 = vmatprep.subr.bf16.mxu0 0
        %6154 = vmatpush1.bf16.msra.mxu0 0
        %6155 = vmatprep.subr.bf16.mxu0 0
        %6156 = vmatpush1.bf16.msra.mxu0 0
        %6157 = vmatprep.subr.bf16.mxu0 0
        %6158 = vmatpush1.bf16.msra.mxu0 0
        %6159 = vmatprep.subr.bf16.mxu0 0
        %6160 = vmatpush1.bf16.msra.mxu0 0
        %6161 = vmatprep.subr.bf16.mxu0 0
        %6162 = vmatpush1.bf16.msra.mxu0 0
        %6163 = vmatprep.mubr.bf16.mxu0 0
        %6164 = vmatmul.mubr.bf16.gmra.mrb[0].mxu0 %v6126
        %v6165 = vpop.f32.mrb[0].mxu0
        %v6166 = vadd.f32 0.0, %v6165
        %v6167 = vpop.f32.mrb[0].mxu0
        %v6168 = vpop.f32.mrb[0].mxu0
        %v6169 = vpop.f32.mrb[0].mxu0
        %6170 = vdwg.mxu0
        %v6171 = vld [vmem:[#allocation12] sm:$0x1]
        %v6172 = vpack.c.bf16 %v6166, %v6166
        %vm6173 = vcmask 7168
        %v6175 = vsel %vm6173, %v6171, 0
        %v6177 = vsel 0, 4294967295, 65535
        %v6178 = vsel %vm2806, %v6177, 0
        %v6180 = vand.u32 %v6172, %v6178
        %6182 = vmatprep.subr.bf16.mxu0 0
        %6183 = vmatpush1.bf16.msra.mxu0 %v6180
        %6184 = vmatprep.subr.bf16.mxu0 0
        %6185 = vmatpush1.bf16.msra.mxu0 0
        %6186 = vmatprep.subr.bf16.mxu0 0
        %6187 = vmatpush1.bf16.msra.mxu0 0
        %6188 = vmatprep.subr.bf16.mxu0 0
        %6189 = vmatpush1.bf16.msra.mxu0 0
        %6190 = vmatprep.subr.bf16.mxu0 0
        %6191 = vmatpush1.bf16.msra.mxu0 0
        %6192 = vmatprep.subr.bf16.mxu0 0
        %6193 = vmatpush1.bf16.msra.mxu0 0
        %6194 = vmatprep.subr.bf16.mxu0 0
        %6195 = vmatpush1.bf16.msra.mxu0 0
        %6196 = vmatprep.subr.bf16.mxu0 0
        %6197 = vmatpush1.bf16.msra.mxu0 0
        %6198 = vmatprep.subr.bf16.mxu0 0
        %6199 = vmatpush1.bf16.msra.mxu0 0
        %6200 = vmatprep.subr.bf16.mxu0 0
        %6201 = vmatpush1.bf16.msra.mxu0 0
        %6202 = vmatprep.subr.bf16.mxu0 0
        %6203 = vmatpush1.bf16.msra.mxu0 0
        %6204 = vmatprep.subr.bf16.mxu0 0
        %6205 = vmatpush1.bf16.msra.mxu0 0
        %6206 = vmatprep.subr.bf16.mxu0 0
        %6207 = vmatpush1.bf16.msra.mxu0 0
        %6208 = vmatprep.subr.bf16.mxu0 0
        %6209 = vmatpush1.bf16.msra.mxu0 0
        %6210 = vmatprep.subr.bf16.mxu0 0
        %6211 = vmatpush1.bf16.msra.mxu0 0
        %6212 = vmatprep.subr.bf16.mxu0 0
        %6213 = vmatpush1.bf16.msra.mxu0 0
        %6214 = vmatprep.mubr.bf16.mxu0 0
        %6215 = vmatmul.mubr.bf16.gmra.mrb[0].mxu0 %v6175
        %v6216 = vpop.f32.mrb[0].mxu0
        %v6217 = vadd.f32 %v5318, %v6216
        %v6218 = vpop.f32.mrb[0].mxu0
        %v6219 = vpop.f32.mrb[0].mxu0
        %v6220 = vpop.f32.mrb[0].mxu0
        %6221 = vdwg.mxu0
        %v6222 = vld [vmem:[%s103] sm:$0xf]
        %v6223 = vld [vmem:[%s105] sm:$0xff]
        %v6224 = vlaneseq
        %v6225 = vshrl.u32 %v6224, 7
        %v6226 = vsub.s32 0, %v6225
        %v6227 = vrot.slane %v6222, %v6226
        %v6228 = vmul.f32 %v6217, %v6227
        %v6229 = vlaneseq
        %v6230 = vshrl.u32 %v6229, 7
        %v6231 = vsub.s32 1, %v6230
        %v6232 = vrot.slane %v6222, %v6231
        %v6233 = vadd.f32 %v6228, %v6232
        %vm6234 = vcmp.ge.f32.partialorder %v6233, 0.0
        %v6235 = vlaneseq
        %v6236 = vshrl.u32 %v6235, 7
        %v6237 = vsub.s32 2, %v6236
        %v6238 = vrot.slane %v6222, %v6237
        %v6239 = vmul.f32 %v6238, %v6233
        %v6240 = vsel %vm6234, %v6233, %v6239
        %v6241 = vpack.c.bf16 %v6240, %v6240
        %v6242 = vld [vmem:[%s107] sm:$0xf]
        %v6243 = vld [vmem:[%s107 + $0x4] sm:$0xf]
        %v6244 = vlaneseq
        %v6245 = vshrl.u32 %v6244, 7
        %v6246 = vsub.s32 0, %v6245
        %v6247 = vrot.slane %v6223, %v6246
        %v6250 = vunpack.c.l.b16 %v6242
        %v6251 = vunpack.c.l.b16 %v6243
        %v6252 = vpack.c.b16 %v6251, %v6250
        %v6255 = vsel %vm3027, %v6241, 0
        %6257 = vmatprep.subr.bf16.mxu0 0
        %6258 = vmatpush1.bf16.msra.mxu0 %v6252
        %6259 = vmatprep.subr.bf16.mxu0 0
        %6260 = vmatpush1.bf16.msra.mxu0 0
        %6261 = vmatprep.subr.bf16.mxu0 0
        %6262 = vmatpush1.bf16.msra.mxu0 0
        %6263 = vmatprep.subr.bf16.mxu0 0
        %6264 = vmatpush1.bf16.msra.mxu0 0
        %6265 = vmatprep.subr.bf16.mxu0 0
        %6266 = vmatpush1.bf16.msra.mxu0 0
        %6267 = vmatprep.subr.bf16.mxu0 0
        %6268 = vmatpush1.bf16.msra.mxu0 0
        %6269 = vmatprep.subr.bf16.mxu0 0
        %6270 = vmatpush1.bf16.msra.mxu0 0
        %6271 = vmatprep.subr.bf16.mxu0 0
        %6272 = vmatpush1.bf16.msra.mxu0 0
        %6273 = vmatprep.subr.bf16.mxu0 0
        %6274 = vmatpush1.bf16.msra.mxu0 0
        %6275 = vmatprep.subr.bf16.mxu0 0
        %6276 = vmatpush1.bf16.msra.mxu0 0
        %6277 = vmatprep.subr.bf16.mxu0 0
        %6278 = vmatpush1.bf16.msra.mxu0 0
        %6279 = vmatprep.subr.bf16.mxu0 0
        %6280 = vmatpush1.bf16.msra.mxu0 0
        %6281 = vmatprep.subr.bf16.mxu0 0
        %6282 = vmatpush1.bf16.msra.mxu0 0
        %6283 = vmatprep.subr.bf16.mxu0 0
        %6284 = vmatpush1.bf16.msra.mxu0 0
        %6285 = vmatprep.subr.bf16.mxu0 0
        %6286 = vmatpush1.bf16.msra.mxu0 0
        %6287 = vmatprep.subr.bf16.mxu0 0
        %6288 = vmatpush1.bf16.msra.mxu0 0
        %6289 = vmatprep.mubr.bf16.mxu0 0
        %6290 = vmatmul.mubr.bf16.gmra.mrb[0].mxu0 %v6255
        %v6291 = vpop.f32.mrb[0].mxu0
        %v6292 = vadd.f32 %v6247, %v6291
        %v6293 = vpop.f32.mrb[0].mxu0
        %v6294 = vpop.f32.mrb[0].mxu0
        %v6295 = vpop.f32.mrb[0].mxu0
        %6296 = vdwg.mxu0
        %v6297 = vlaneseq
        %v6298 = vshrl.u32 %v6297, 7
        %v6299 = vsub.s32 1, %v6298
        %v6300 = vrot.slane %v6223, %v6299
        %v6301 = vmul.f32 %v6292, %v6300
        %v6302 = vlaneseq
        %v6303 = vshrl.u32 %v6302, 7
        %v6304 = vsub.s32 2, %v6303
        %v6305 = vrot.slane %v6223, %v6304
        %v6306 = vadd.f32 %v6301, %v6305
        %vm6307 = vcmp.ge.f32.partialorder %v6306, 0.0
        %v6308 = vlaneseq
        %v6309 = vshrl.u32 %v6308, 7
        %v6310 = vsub.s32 3, %v6309
        %v6311 = vrot.slane %v6223, %v6310
        %v6312 = vmul.f32 %v6311, %v6306
        %v6313 = vsel %vm6307, %v6306, %v6312
        %v6315 = vrot.slane %v6313, 7
        %v6317 = vsel %vm2806, 0.0, %v6315
        %v6318 = vrot.slane %v6313, 1
        %v6320 = vsel %vm2806, %v6318, 0.0
        %6321 = vrot.lane.b32.xlu0 %v6313, 4
        %v6322 = vpop.permute.xlu0 %6321
        %6325 = vrot.lane.b32.xlu0 %v6320, 8
        %v6326 = vpop.permute.xlu0 %6325
        %v6328 = vsel %vm4633, %v6317, %v6322
        %v6329 = vsel %vm3887, %v6328, %v6326
        %v6330 = vpack.c.bf16 %v6329, %v6329
        %v6331 = vld [vmem:[%s109] sm:$0xf]
        %v6332 = vld [vmem:[%s109 + $0x4] sm:$0x3]
        %v6333 = vlaneseq
        %v6334 = vshrl.u32 %v6333, 7
        %v6335 = vsub.s32 4, %v6334
        %v6336 = vrot.slane %v6223, %v6335
        %v6339 = vunpack.c.l.b16 %v6331
        %v6340 = vunpack.c.l.b16 %v6332
        %v6341 = vpack.c.b16 %v6340, %v6339
        %v6343 = vsel %vm4965, %v6330, 0
        %v6346 = vsel %vm4969, %v6341, 0
        %6348 = vmatprep.subr.bf16.mxu0 0
        %6349 = vmatpush1.bf16.msra.mxu0 %v6346
        %6350 = vmatprep.subr.bf16.mxu0 0
        %6351 = vmatpush1.bf16.msra.mxu0 0
        %6352 = vmatprep.subr.bf16.mxu0 0
        %6353 = vmatpush1.bf16.msra.mxu0 0
        %6354 = vmatprep.subr.bf16.mxu0 0
        %6355 = vmatpush1.bf16.msra.mxu0 0
        %6356 = vmatprep.subr.bf16.mxu0 0
        %6357 = vmatpush1.bf16.msra.mxu0 0
        %6358 = vmatprep.subr.bf16.mxu0 0
        %6359 = vmatpush1.bf16.msra.mxu0 0
        %6360 = vmatprep.subr.bf16.mxu0 0
        %6361 = vmatpush1.bf16.msra.mxu0 0
        %6362 = vmatprep.subr.bf16.mxu0 0
        %6363 = vmatpush1.bf16.msra.mxu0 0
        %6364 = vmatprep.subr.bf16.mxu0 0
        %6365 = vmatpush1.bf16.msra.mxu0 0
        %6366 = vmatprep.subr.bf16.mxu0 0
        %6367 = vmatpush1.bf16.msra.mxu0 0
        %6368 = vmatprep.subr.bf16.mxu0 0
        %6369 = vmatpush1.bf16.msra.mxu0 0
        %6370 = vmatprep.subr.bf16.mxu0 0
        %6371 = vmatpush1.bf16.msra.mxu0 0
        %6372 = vmatprep.subr.bf16.mxu0 0
        %6373 = vmatpush1.bf16.msra.mxu0 0
        %6374 = vmatprep.subr.bf16.mxu0 0
        %6375 = vmatpush1.bf16.msra.mxu0 0
        %6376 = vmatprep.subr.bf16.mxu0 0
        %6377 = vmatpush1.bf16.msra.mxu0 0
        %6378 = vmatprep.subr.bf16.mxu0 0
        %6379 = vmatpush1.bf16.msra.mxu0 0
        %6380 = vmatprep.mubr.bf16.mxu0 0
        %6381 = vmatmul.mubr.bf16.gmra.mrb[0].mxu0 %v6343
        %v6382 = vpop.f32.mrb[0].mxu0
        %v6383 = vadd.f32 %v6336, %v6382
        %v6384 = vpop.f32.mrb[0].mxu0
        %v6385 = vpop.f32.mrb[0].mxu0
        %v6386 = vpop.f32.mrb[0].mxu0
        %6387 = vdwg.mxu0
        %v6388 = vlaneseq
        %v6389 = vshrl.u32 %v6388, 7
        %v6390 = vsub.s32 5, %v6389
        %v6391 = vrot.slane %v6223, %v6390
        %v6392 = vmul.f32 %v6383, %v6391
        %v6393 = vlaneseq
        %v6394 = vshrl.u32 %v6393, 7
        %v6395 = vsub.s32 6, %v6394
        %v6396 = vrot.slane %v6223, %v6395
        %v6397 = vadd.f32 %v6392, %v6396
        %vm6398 = vcmp.ge.f32.partialorder %v6397, 0.0
        %v6399 = vlaneseq
        %v6400 = vshrl.u32 %v6399, 7
        %v6401 = vsub.s32 7, %v6400
        %v6402 = vrot.slane %v6223, %v6401
        %v6403 = vmul.f32 %v6402, %v6397
        %v6404 = vsel %vm6398, %v6397, %v6403
        %v6405 = vpack.c.bf16 %v6404, %v6404
        %v6406 = vld [vmem:[#allocation9] sm:$0x3]
        %v6407 = vlaneseq
        %v6408 = vshrl.u32 %v6407, 7
        %v6409 = vsub.s32 3, %v6408
        %v6410 = vrot.slane %v6222, %v6409
        %v6412 = vsel %vm4633, %v6405, 0
        %v6415 = vsel %vm4637, %v6406, 0
        %6417 = vmatprep.subr.bf16.mxu0 0
        %6418 = vmatpush1.bf16.msra.mxu0 %v6415
        %6419 = vmatprep.subr.bf16.mxu0 0
        %6420 = vmatpush1.bf16.msra.mxu0 0
        %6421 = vmatprep.subr.bf16.mxu0 0
        %6422 = vmatpush1.bf16.msra.mxu0 0
        %6423 = vmatprep.subr.bf16.mxu0 0
        %6424 = vmatpush1.bf16.msra.mxu0 0
        %6425 = vmatprep.subr.bf16.mxu0 0
        %6426 = vmatpush1.bf16.msra.mxu0 0
        %6427 = vmatprep.subr.bf16.mxu0 0
        %6428 = vmatpush1.bf16.msra.mxu0 0
        %6429 = vmatprep.subr.bf16.mxu0 0
        %6430 = vmatpush1.bf16.msra.mxu0 0
        %6431 = vmatprep.subr.bf16.mxu0 0
        %6432 = vmatpush1.bf16.msra.mxu0 0
        %6433 = vmatprep.subr.bf16.mxu0 0
        %6434 = vmatpush1.bf16.msra.mxu0 0
        %6435 = vmatprep.subr.bf16.mxu0 0
        %6436 = vmatpush1.bf16.msra.mxu0 0
        %6437 = vmatprep.subr.bf16.mxu0 0
        %6438 = vmatpush1.bf16.msra.mxu0 0
        %6439 = vmatprep.subr.bf16.mxu0 0
        %6440 = vmatpush1.bf16.msra.mxu0 0
        %6441 = vmatprep.subr.bf16.mxu0 0
        %6442 = vmatpush1.bf16.msra.mxu0 0
        %6443 = vmatprep.subr.bf16.mxu0 0
        %6444 = vmatpush1.bf16.msra.mxu0 0
        %6445 = vmatprep.subr.bf16.mxu0 0
        %6446 = vmatpush1.bf16.msra.mxu0 0
        %6447 = vmatprep.subr.bf16.mxu0 0
        %6448 = vmatpush1.bf16.msra.mxu0 0
        %6449 = vmatprep.mubr.bf16.mxu0 0
        %6450 = vmatmul.mubr.bf16.gmra.mrb[0].mxu0 %v6412
        %v6451 = vpop.f32.mrb[0].mxu0
        %v6452 = vadd.f32 %v6410, %v6451
        %v6453 = vpop.f32.mrb[0].mxu0
        %v6454 = vpop.f32.mrb[0].mxu0
        %v6455 = vpop.f32.mrb[0].mxu0
        %6456 = vdwg.mxu0
        %v6457 = vadd.f32 %v6217, %v6452
        %v6458 = vpack.c.bf16 %v6457, %v6457
        %v6459 = vld [vmem:[%s171] sm:$0xf]
        %v6460 = vld [vmem:[%s171 + $0x4] sm:$0xf]
        %v6463 = vunpack.c.l.b16 %v6459
        %v6464 = vunpack.c.l.b16 %v6460
        %v6465 = vpack.c.b16 %v6464, %v6463
        %v6468 = vsel %vm3027, %v6458, 0
        %6470 = vmatprep.subr.bf16.mxu0 0
        %6471 = vmatpush1.bf16.msra.mxu0 %v6465
        %6472 = vmatprep.subr.bf16.mxu0 0
        %6473 = vmatpush1.bf16.msra.mxu0 0
        %6474 = vmatprep.subr.bf16.mxu0 0
        %6475 = vmatpush1.bf16.msra.mxu0 0
        %6476 = vmatprep.subr.bf16.mxu0 0
        %6477 = vmatpush1.bf16.msra.mxu0 0
        %6478 = vmatprep.subr.bf16.mxu0 0
        %6479 = vmatpush1.bf16.msra.mxu0 0
        %6480 = vmatprep.subr.bf16.mxu0 0
        %6481 = vmatpush1.bf16.msra.mxu0 0
        %6482 = vmatprep.subr.bf16.mxu0 0
        %6483 = vmatpush1.bf16.msra.mxu0 0
        %6484 = vmatprep.subr.bf16.mxu0 0
        %6485 = vmatpush1.bf16.msra.mxu0 0
        %6486 = vmatprep.subr.bf16.mxu0 0
        %6487 = vmatpush1.bf16.msra.mxu0 0
        %6488 = vmatprep.subr.bf16.mxu0 0
        %6489 = vmatpush1.bf16.msra.mxu0 0
        %6490 = vmatprep.subr.bf16.mxu0 0
        %6491 = vmatpush1.bf16.msra.mxu0 0
        %6492 = vmatprep.subr.bf16.mxu0 0
        %6493 = vmatpush1.bf16.msra.mxu0 0
        %6494 = vmatprep.subr.bf16.mxu0 0
        %6495 = vmatpush1.bf16.msra.mxu0 0
        %6496 = vmatprep.subr.bf16.mxu0 0
        %6497 = vmatpush1.bf16.msra.mxu0 0
        %6498 = vmatprep.subr.bf16.mxu0 0
        %6499 = vmatpush1.bf16.msra.mxu0 0
        %6500 = vmatprep.subr.bf16.mxu0 0
        %6501 = vmatpush1.bf16.msra.mxu0 0
        %6502 = vmatprep.mubr.bf16.mxu0 0
        %6503 = vmatmul.mubr.bf16.gmra.mrb[0].mxu0 %v6468
        %v6504 = vpop.f32.mrb[0].mxu0
        %v6505 = vadd.f32 0.0, %v6504
        %v6506 = vpop.f32.mrb[0].mxu0
        %v6507 = vpop.f32.mrb[0].mxu0
        %v6508 = vpop.f32.mrb[0].mxu0
        %6509 = vdwg.mxu0
        %v6510 = vld [vmem:[%s163] sm:$0x3]
        %v6511 = vpack.c.bf16 %v6505, %v6505
        %v6513 = vsel %vm5321, %v6510, 0
        %v6516 = vsel %vm2806, %v6511, 0
        %6518 = vmatprep.subr.bf16.mxu0 0
        %6519 = vmatpush1.bf16.msra.mxu0 %v6516
        %6520 = vmatprep.subr.bf16.mxu0 0
        %6521 = vmatpush1.bf16.msra.mxu0 0
        %6522 = vmatprep.subr.bf16.mxu0 0
        %6523 = vmatpush1.bf16.msra.mxu0 0
        %6524 = vmatprep.subr.bf16.mxu0 0
        %6525 = vmatpush1.bf16.msra.mxu0 0
        %6526 = vmatprep.subr.bf16.mxu0 0
        %6527 = vmatpush1.bf16.msra.mxu0 0
        %6528 = vmatprep.subr.bf16.mxu0 0
        %6529 = vmatpush1.bf16.msra.mxu0 0
        %6530 = vmatprep.subr.bf16.mxu0 0
        %6531 = vmatpush1.bf16.msra.mxu0 0
        %6532 = vmatprep.subr.bf16.mxu0 0
        %6533 = vmatpush1.bf16.msra.mxu0 0
        %6534 = vmatprep.subr.bf16.mxu0 0
        %6535 = vmatpush1.bf16.msra.mxu0 0
        %6536 = vmatprep.subr.bf16.mxu0 0
        %6537 = vmatpush1.bf16.msra.mxu0 0
        %6538 = vmatprep.subr.bf16.mxu0 0
        %6539 = vmatpush1.bf16.msra.mxu0 0
        %6540 = vmatprep.subr.bf16.mxu0 0
        %6541 = vmatpush1.bf16.msra.mxu0 0
        %6542 = vmatprep.subr.bf16.mxu0 0
        %6543 = vmatpush1.bf16.msra.mxu0 0
        %6544 = vmatprep.subr.bf16.mxu0 0
        %6545 = vmatpush1.bf16.msra.mxu0 0
        %6546 = vmatprep.subr.bf16.mxu0 0
        %6547 = vmatpush1.bf16.msra.mxu0 0
        %6548 = vmatprep.subr.bf16.mxu0 0
        %6549 = vmatpush1.bf16.msra.mxu0 0
        %6550 = vmatprep.mubr.bf16.mxu0 0
        %6551 = vmatmul.mubr.bf16.gmra.mrb[0].mxu0 %v6513
        %v6552 = vpop.f32.mrb[0].mxu0
        %v6553 = vadd.f32 %v4630, %v6552
        %v6554 = vpop.f32.mrb[0].mxu0
        %v6555 = vpop.f32.mrb[0].mxu0
        %v6556 = vpop.f32.mrb[0].mxu0
        %6557 = vdwg.mxu0
        %v6558 = vld [vmem:[%s113] sm:$0xf]
        %v6559 = vld [vmem:[%s115] sm:$0xff]
        %v6560 = vlaneseq
        %v6561 = vshrl.u32 %v6560, 7
        %v6562 = vsub.s32 0, %v6561
        %v6563 = vrot.slane %v6558, %v6562
        %v6564 = vmul.f32 %v6553, %v6563
        %v6565 = vlaneseq
        %v6566 = vshrl.u32 %v6565, 7
        %v6567 = vsub.s32 1, %v6566
        %v6568 = vrot.slane %v6558, %v6567
        %v6569 = vadd.f32 %v6564, %v6568
        %vm6570 = vcmp.ge.f32.partialorder %v6569, 0.0
        %v6571 = vlaneseq
        %v6572 = vshrl.u32 %v6571, 7
        %v6573 = vsub.s32 2, %v6572
        %v6574 = vrot.slane %v6558, %v6573
        %v6575 = vmul.f32 %v6574, %v6569
        %v6576 = vsel %vm6570, %v6569, %v6575
        %v6577 = vpack.c.bf16 %v6576, %v6576
        %v6578 = vld [vmem:[%s117] sm:$0xf]
        %v6579 = vld [vmem:[%s117 + $0x4] sm:$0xf]
        %v6580 = vld [vmem:[%s117 + $0x8] sm:$0xf]
        %v6581 = vld [vmem:[%s117 + $0xc] sm:$0xf]
        %v6582 = vlaneseq
        %v6583 = vshrl.u32 %v6582, 7
        %v6584 = vsub.s32 0, %v6583
        %v6585 = vrot.slane %v6559, %v6584
        %v6590 = vunpack.c.l.b16 %v6578
        %v6591 = vunpack.c.l.b16 %v6579
        %v6592 = vunpack.c.l.b16 %v6580
        %v6593 = vunpack.c.l.b16 %v6581
        %v6594 = vpack.c.b16 %v6591, %v6590
        %v6595 = vpack.c.b16 %v6593, %v6592
        %v6599 = vsel %vm2832, %v6577, 0
        %6601 = vmatprep.subr.bf16.mxu0 0
        %6602 = vmatpush1.bf16.msra.mxu0 %v6594
        %6603 = vmatprep.subr.bf16.mxu0 0
        %6604 = vmatpush1.bf16.msra.mxu0 %v6595
        %6605 = vmatprep.subr.bf16.mxu0 0
        %6606 = vmatpush1.bf16.msra.mxu0 0
        %6607 = vmatprep.subr.bf16.mxu0 0
        %6608 = vmatpush1.bf16.msra.mxu0 0
        %6609 = vmatprep.subr.bf16.mxu0 0
        %6610 = vmatpush1.bf16.msra.mxu0 0
        %6611 = vmatprep.subr.bf16.mxu0 0
        %6612 = vmatpush1.bf16.msra.mxu0 0
        %6613 = vmatprep.subr.bf16.mxu0 0
        %6614 = vmatpush1.bf16.msra.mxu0 0
        %6615 = vmatprep.subr.bf16.mxu0 0
        %6616 = vmatpush1.bf16.msra.mxu0 0
        %6617 = vmatprep.subr.bf16.mxu0 0
        %6618 = vmatpush1.bf16.msra.mxu0 0
        %6619 = vmatprep.subr.bf16.mxu0 0
        %6620 = vmatpush1.bf16.msra.mxu0 0
        %6621 = vmatprep.subr.bf16.mxu0 0
        %6622 = vmatpush1.bf16.msra.mxu0 0
        %6623 = vmatprep.subr.bf16.mxu0 0
        %6624 = vmatpush1.bf16.msra.mxu0 0
        %6625 = vmatprep.subr.bf16.mxu0 0
        %6626 = vmatpush1.bf16.msra.mxu0 0
        %6627 = vmatprep.subr.bf16.mxu0 0
        %6628 = vmatpush1.bf16.msra.mxu0 0
        %6629 = vmatprep.subr.bf16.mxu0 0
        %6630 = vmatpush1.bf16.msra.mxu0 0
        %6631 = vmatprep.subr.bf16.mxu0 0
        %6632 = vmatpush1.bf16.msra.mxu0 0
        %6633 = vmatprep.mubr.bf16.mxu0 0
        %6634 = vmatmul.mubr.bf16.gmra.mrb[0].mxu0 %v6599
        %v6635 = vpop.f32.mrb[0].mxu0
        %v6636 = vadd.f32 %v6585, %v6635
        %v6637 = vpop.f32.mrb[0].mxu0
        %v6638 = vpop.f32.mrb[0].mxu0
        %v6639 = vpop.f32.mrb[0].mxu0
        %6640 = vdwg.mxu0
        %v6641 = vlaneseq
        %v6642 = vshrl.u32 %v6641, 7
        %v6643 = vsub.s32 1, %v6642
        %v6644 = vrot.slane %v6559, %v6643
        %v6645 = vmul.f32 %v6636, %v6644
        %v6646 = vlaneseq
        %v6647 = vshrl.u32 %v6646, 7
        %v6648 = vsub.s32 2, %v6647
        %v6649 = vrot.slane %v6559, %v6648
        %v6650 = vadd.f32 %v6645, %v6649
        %vm6651 = vcmp.ge.f32.partialorder %v6650, 0.0
        %v6652 = vlaneseq
        %v6653 = vshrl.u32 %v6652, 7
        %v6654 = vsub.s32 3, %v6653
        %v6655 = vrot.slane %v6559, %v6654
        %v6656 = vmul.f32 %v6655, %v6650
        %v6657 = vsel %vm6651, %v6650, %v6656
        %v6659 = vrot.slane %v6657, 7
        %v6661 = vsel %vm2806, 0.0, %v6659
        %v6662 = vrot.slane %v6657, 1
        %v6664 = vsel %vm4237, %v6662, 0.0
        %6665 = vrot.lane.b32.xlu0 %v6657, 8
        %v6666 = vpop.permute.xlu0 %6665
        %6669 = vrot.lane.b32.xlu0 %v6664, 16
        %v6670 = vpop.permute.xlu0 %6669
        %v6672 = vsel %vm3887, %v6661, %v6666
        %v6673 = vsel %vm3027, %v6672, %v6670
        %v6674 = vpack.c.bf16 %v6673, %v6673
        %v6675 = vld [vmem:[%s119] sm:$0xf]
        %v6676 = vld [vmem:[%s119 + $0x4] sm:$0xf]
        %v6677 = vld [vmem:[%s119 + $0x8] sm:$0xf]
        %v6678 = vlaneseq
        %v6679 = vshrl.u32 %v6678, 7
        %v6680 = vsub.s32 4, %v6679
        %v6681 = vrot.slane %v6559, %v6680
        %v6685 = vunpack.c.l.b16 %v6675
        %v6686 = vunpack.c.l.b16 %v6676
        %v6687 = vunpack.c.l.b16 %v6677
        %v6688 = vpack.c.b16 %v6686, %v6685
        %v6689 = vpack.c.b16 %v6687, %v6687
        %v6692 = vsel %vm4265, %v6674, 0
        %v6695 = vsel %vm3891, %v6689, 0
        %6697 = vmatprep.subr.bf16.mxu0 0
        %6698 = vmatpush1.bf16.msra.mxu0 %v6688
        %6699 = vmatprep.subr.bf16.mxu0 0
        %6700 = vmatpush1.bf16.msra.mxu0 %v6695
        %6701 = vmatprep.subr.bf16.mxu0 0
        %6702 = vmatpush1.bf16.msra.mxu0 0
        %6703 = vmatprep.subr.bf16.mxu0 0
        %6704 = vmatpush1.bf16.msra.mxu0 0
        %6705 = vmatprep.subr.bf16.mxu0 0
        %6706 = vmatpush1.bf16.msra.mxu0 0
        %6707 = vmatprep.subr.bf16.mxu0 0
        %6708 = vmatpush1.bf16.msra.mxu0 0
        %6709 = vmatprep.subr.bf16.mxu0 0
        %6710 = vmatpush1.bf16.msra.mxu0 0
        %6711 = vmatprep.subr.bf16.mxu0 0
        %6712 = vmatpush1.bf16.msra.mxu0 0
        %6713 = vmatprep.subr.bf16.mxu0 0
        %6714 = vmatpush1.bf16.msra.mxu0 0
        %6715 = vmatprep.subr.bf16.mxu0 0
        %6716 = vmatpush1.bf16.msra.mxu0 0
        %6717 = vmatprep.subr.bf16.mxu0 0
        %6718 = vmatpush1.bf16.msra.mxu0 0
        %6719 = vmatprep.subr.bf16.mxu0 0
        %6720 = vmatpush1.bf16.msra.mxu0 0
        %6721 = vmatprep.subr.bf16.mxu0 0
        %6722 = vmatpush1.bf16.msra.mxu0 0
        %6723 = vmatprep.subr.bf16.mxu0 0
        %6724 = vmatpush1.bf16.msra.mxu0 0
        %6725 = vmatprep.subr.bf16.mxu0 0
        %6726 = vmatpush1.bf16.msra.mxu0 0
        %6727 = vmatprep.subr.bf16.mxu0 0
        %6728 = vmatpush1.bf16.msra.mxu0 0
        %6729 = vmatprep.mubr.bf16.mxu0 0
        %6730 = vmatmul.mubr.bf16.gmra.mrb[0].mxu0 %v6692
        %v6731 = vpop.f32.mrb[0].mxu0
        %v6732 = vadd.f32 %v6681, %v6731
        %v6733 = vpop.f32.mrb[0].mxu0
        %v6734 = vpop.f32.mrb[0].mxu0
        %v6735 = vpop.f32.mrb[0].mxu0
        %6736 = vdwg.mxu0
        %v6737 = vlaneseq
        %v6738 = vshrl.u32 %v6737, 7
        %v6739 = vsub.s32 5, %v6738
        %v6740 = vrot.slane %v6559, %v6739
        %v6741 = vmul.f32 %v6732, %v6740
        %v6742 = vlaneseq
        %v6743 = vshrl.u32 %v6742, 7
        %v6744 = vsub.s32 6, %v6743
        %v6745 = vrot.slane %v6559, %v6744
        %v6746 = vadd.f32 %v6741, %v6745
        %vm6747 = vcmp.ge.f32.partialorder %v6746, 0.0
        %v6748 = vlaneseq
        %v6749 = vshrl.u32 %v6748, 7
        %v6750 = vsub.s32 7, %v6749
        %v6751 = vrot.slane %v6559, %v6750
        %v6752 = vmul.f32 %v6751, %v6746
        %v6753 = vsel %vm6747, %v6746, %v6752
        %v6754 = vpack.c.bf16 %v6753, %v6753
        %v6755 = vld [vmem:[%s121] sm:$0xf]
        %v6756 = vlaneseq
        %v6757 = vshrl.u32 %v6756, 7
        %v6758 = vsub.s32 3, %v6757
        %v6759 = vrot.slane %v6558, %v6758
        %v6761 = vsel %vm3887, %v6754, 0
        %v6764 = vsel %vm3891, %v6755, 0
        %6766 = vmatprep.subr.bf16.mxu0 0
        %6767 = vmatpush1.bf16.msra.mxu0 %v6764
        %6768 = vmatprep.subr.bf16.mxu0 0
        %6769 = vmatpush1.bf16.msra.mxu0 0
        %6770 = vmatprep.subr.bf16.mxu0 0
        %6771 = vmatpush1.bf16.msra.mxu0 0
        %6772 = vmatprep.subr.bf16.mxu0 0
        %6773 = vmatpush1.bf16.msra.mxu0 0
        %6774 = vmatprep.subr.bf16.mxu0 0
        %6775 = vmatpush1.bf16.msra.mxu0 0
        %6776 = vmatprep.subr.bf16.mxu0 0
        %6777 = vmatpush1.bf16.msra.mxu0 0
        %6778 = vmatprep.subr.bf16.mxu0 0
        %6779 = vmatpush1.bf16.msra.mxu0 0
        %6780 = vmatprep.subr.bf16.mxu0 0
        %6781 = vmatpush1.bf16.msra.mxu0 0
        %6782 = vmatprep.subr.bf16.mxu0 0
        %6783 = vmatpush1.bf16.msra.mxu0 0
        %6784 = vmatprep.subr.bf16.mxu0 0
        %6785 = vmatpush1.bf16.msra.mxu0 0
        %6786 = vmatprep.subr.bf16.mxu0 0
        %6787 = vmatpush1.bf16.msra.mxu0 0
        %6788 = vmatprep.subr.bf16.mxu0 0
        %6789 = vmatpush1.bf16.msra.mxu0 0
        %6790 = vmatprep.subr.bf16.mxu0 0
        %6791 = vmatpush1.bf16.msra.mxu0 0
        %6792 = vmatprep.subr.bf16.mxu0 0
        %6793 = vmatpush1.bf16.msra.mxu0 0
        %6794 = vmatprep.subr.bf16.mxu0 0
        %6795 = vmatpush1.bf16.msra.mxu0 0
        %6796 = vmatprep.subr.bf16.mxu0 0
        %6797 = vmatpush1.bf16.msra.mxu0 0
        %6798 = vmatprep.mubr.bf16.mxu0 0
        %6799 = vmatmul.mubr.bf16.gmra.mrb[0].mxu0 %v6761
        %v6800 = vpop.f32.mrb[0].mxu0
        %v6801 = vadd.f32 %v6759, %v6800
        %v6802 = vpop.f32.mrb[0].mxu0
        %v6803 = vpop.f32.mrb[0].mxu0
        %v6804 = vpop.f32.mrb[0].mxu0
        %6805 = vdwg.mxu0
        %v6806 = vadd.f32 %v6553, %v6801
        %v6807 = vpack.c.bf16 %v6806, %v6806
        %v6808 = vld [vmem:[%s169] sm:$0xf]
        %v6809 = vld [vmem:[%s169 + $0x4] sm:$0xf]
        %v6810 = vld [vmem:[%s169 + $0x8] sm:$0xf]
        %v6811 = vld [vmem:[%s169 + $0xc] sm:$0xf]
        %v6816 = vunpack.c.l.b16 %v6808
        %v6817 = vunpack.c.l.b16 %v6809
        %v6818 = vunpack.c.l.b16 %v6810
        %v6819 = vunpack.c.l.b16 %v6811
        %v6820 = vpack.c.b16 %v6817, %v6816
        %v6821 = vpack.c.b16 %v6819, %v6818
        %v6825 = vsel %vm2832, %v6807, 0
        %6827 = vmatprep.subr.bf16.mxu0 0
        %6828 = vmatpush1.bf16.msra.mxu0 %v6820
        %6829 = vmatprep.subr.bf16.mxu0 0
        %6830 = vmatpush1.bf16.msra.mxu0 %v6821
        %6831 = vmatprep.subr.bf16.mxu0 0
        %6832 = vmatpush1.bf16.msra.mxu0 0
        %6833 = vmatprep.subr.bf16.mxu0 0
        %6834 = vmatpush1.bf16.msra.mxu0 0
        %6835 = vmatprep.subr.bf16.mxu0 0
        %6836 = vmatpush1.bf16.msra.mxu0 0
        %6837 = vmatprep.subr.bf16.mxu0 0
        %6838 = vmatpush1.bf16.msra.mxu0 0
        %6839 = vmatprep.subr.bf16.mxu0 0
        %6840 = vmatpush1.bf16.msra.mxu0 0
        %6841 = vmatprep.subr.bf16.mxu0 0
        %6842 = vmatpush1.bf16.msra.mxu0 0
        %6843 = vmatprep.subr.bf16.mxu0 0
        %6844 = vmatpush1.bf16.msra.mxu0 0
        %6845 = vmatprep.subr.bf16.mxu0 0
        %6846 = vmatpush1.bf16.msra.mxu0 0
        %6847 = vmatprep.subr.bf16.mxu0 0
        %6848 = vmatpush1.bf16.msra.mxu0 0
        %6849 = vmatprep.subr.bf16.mxu0 0
        %6850 = vmatpush1.bf16.msra.mxu0 0
        %6851 = vmatprep.subr.bf16.mxu0 0
        %6852 = vmatpush1.bf16.msra.mxu0 0
        %6853 = vmatprep.subr.bf16.mxu0 0
        %6854 = vmatpush1.bf16.msra.mxu0 0
        %6855 = vmatprep.subr.bf16.mxu0 0
        %6856 = vmatpush1.bf16.msra.mxu0 0
        %6857 = vmatprep.subr.bf16.mxu0 0
        %6858 = vmatpush1.bf16.msra.mxu0 0
        %6859 = vmatprep.mubr.bf16.mxu0 0
        %6860 = vmatmul.mubr.bf16.gmra.mrb[0].mxu0 %v6825
        %v6861 = vpop.f32.mrb[0].mxu0
        %v6862 = vadd.f32 0.0, %v6861
        %v6863 = vpop.f32.mrb[0].mxu0
        %v6864 = vpop.f32.mrb[0].mxu0
        %v6865 = vpop.f32.mrb[0].mxu0
        %6866 = vdwg.mxu0
        %v6867 = vld [vmem:[%s161] sm:$0xf]
        %v6868 = vpack.c.bf16 %v6862, %v6862
        %v6870 = vsel %vm4633, %v6867, 0
        %v6873 = vsel %vm4637, %v6868, 0
        %6875 = vmatprep.subr.bf16.mxu0 0
        %6876 = vmatpush1.bf16.msra.mxu0 %v6873
        %6877 = vmatprep.subr.bf16.mxu0 0
        %6878 = vmatpush1.bf16.msra.mxu0 0
        %6879 = vmatprep.subr.bf16.mxu0 0
        %6880 = vmatpush1.bf16.msra.mxu0 0
        %6881 = vmatprep.subr.bf16.mxu0 0
        %6882 = vmatpush1.bf16.msra.mxu0 0
        %6883 = vmatprep.subr.bf16.mxu0 0
        %6884 = vmatpush1.bf16.msra.mxu0 0
        %6885 = vmatprep.subr.bf16.mxu0 0
        %6886 = vmatpush1.bf16.msra.mxu0 0
        %6887 = vmatprep.subr.bf16.mxu0 0
        %6888 = vmatpush1.bf16.msra.mxu0 0
        %6889 = vmatprep.subr.bf16.mxu0 0
        %6890 = vmatpush1.bf16.msra.mxu0 0
        %6891 = vmatprep.subr.bf16.mxu0 0
        %6892 = vmatpush1.bf16.msra.mxu0 0
        %6893 = vmatprep.subr.bf16.mxu0 0
        %6894 = vmatpush1.bf16.msra.mxu0 0
        %6895 = vmatprep.subr.bf16.mxu0 0
        %6896 = vmatpush1.bf16.msra.mxu0 0
        %6897 = vmatprep.subr.bf16.mxu0 0
        %6898 = vmatpush1.bf16.msra.mxu0 0
        %6899 = vmatprep.subr.bf16.mxu0 0
        %6900 = vmatpush1.bf16.msra.mxu0 0
        %6901 = vmatprep.subr.bf16.mxu0 0
        %6902 = vmatpush1.bf16.msra.mxu0 0
        %6903 = vmatprep.subr.bf16.mxu0 0
        %6904 = vmatpush1.bf16.msra.mxu0 0
        %6905 = vmatprep.subr.bf16.mxu0 0
        %6906 = vmatpush1.bf16.msra.mxu0 0
        %6907 = vmatprep.mubr.bf16.mxu0 0
        %6908 = vmatmul.mubr.bf16.gmra.mrb[0].mxu0 %v6870
        %v6909 = vpop.f32.mrb[0].mxu0
        %v6910 = vadd.f32 %v3884, %v6909
        %v6911 = vpop.f32.mrb[0].mxu0
        %v6912 = vpop.f32.mrb[0].mxu0
        %v6913 = vpop.f32.mrb[0].mxu0
        %6914 = vdwg.mxu0
        %v6915 = vld [vmem:[%s123] sm:$0xf]
        %v6916 = vld [vmem:[%s125] sm:$0xff]
        %v6917 = vlaneseq
        %v6918 = vshrl.u32 %v6917, 7
        %v6919 = vsub.s32 0, %v6918
        %v6920 = vrot.slane %v6915, %v6919
        %v6921 = vmul.f32 %v6910, %v6920
        %v6922 = vlaneseq
        %v6923 = vshrl.u32 %v6922, 7
        %v6924 = vsub.s32 1, %v6923
        %v6925 = vrot.slane %v6915, %v6924
        %v6926 = vadd.f32 %v6921, %v6925
        %vm6927 = vcmp.ge.f32.partialorder %v6926, 0.0
        %v6928 = vlaneseq
        %v6929 = vshrl.u32 %v6928, 7
        %v6930 = vsub.s32 2, %v6929
        %v6931 = vrot.slane %v6915, %v6930
        %v6932 = vmul.f32 %v6931, %v6926
        %v6933 = vsel %vm6927, %v6926, %v6932
        %v6934 = vpack.c.bf16 %v6933, %v6933
        %v6935 = vld [vmem:[%s127] sm:$0xf]
        %v6936 = vld [vmem:[%s127 + $0x4] sm:$0xf]
        %v6937 = vld [vmem:[%s127 + $0x8] sm:$0xf]
        %v6938 = vld [vmem:[%s127 + $0xc] sm:$0xf]
        %v6939 = vld [vmem:[%s127 + $0x10] sm:$0xf]
        %v6940 = vld [vmem:[%s127 + $0x14] sm:$0xf]
        %v6941 = vld [vmem:[%s127 + $0x18] sm:$0xf]
        %v6942 = vld [vmem:[%s127 + $0x1c] sm:$0xf]
        %v6943 = vlaneseq
        %v6944 = vshrl.u32 %v6943, 7
        %v6945 = vsub.s32 0, %v6944
        %v6946 = vrot.slane %v6916, %v6945
        %v6955 = vunpack.c.l.b16 %v6935
        %v6956 = vunpack.c.l.b16 %v6936
        %v6957 = vunpack.c.l.b16 %v6937
        %v6958 = vunpack.c.l.b16 %v6938
        %v6959 = vunpack.c.l.b16 %v6939
        %v6960 = vunpack.c.l.b16 %v6940
        %v6961 = vunpack.c.l.b16 %v6941
        %v6962 = vunpack.c.l.b16 %v6942
        %v6963 = vpack.c.b16 %v6956, %v6955
        %v6964 = vpack.c.b16 %v6958, %v6957
        %v6965 = vpack.c.b16 %v6960, %v6959
        %v6966 = vpack.c.b16 %v6962, %v6961
        %v6972 = vsel %vm2835, %v6934, 0
        %6974 = vmatprep.subr.bf16.mxu0 0
        %6975 = vmatpush1.bf16.msra.mxu0 %v6963
        %6976 = vmatprep.subr.bf16.mxu0 0
        %6977 = vmatpush1.bf16.msra.mxu0 %v6964
        %6978 = vmatprep.subr.bf16.mxu0 0
        %6979 = vmatpush1.bf16.msra.mxu0 %v6965
        %6980 = vmatprep.subr.bf16.mxu0 0
        %6981 = vmatpush1.bf16.msra.mxu0 %v6966
        %6982 = vmatprep.subr.bf16.mxu0 0
        %6983 = vmatpush1.bf16.msra.mxu0 0
        %6984 = vmatprep.subr.bf16.mxu0 0
        %6985 = vmatpush1.bf16.msra.mxu0 0
        %6986 = vmatprep.subr.bf16.mxu0 0
        %6987 = vmatpush1.bf16.msra.mxu0 0
        %6988 = vmatprep.subr.bf16.mxu0 0
        %6989 = vmatpush1.bf16.msra.mxu0 0
        %6990 = vmatprep.subr.bf16.mxu0 0
        %6991 = vmatpush1.bf16.msra.mxu0 0
        %6992 = vmatprep.subr.bf16.mxu0 0
        %6993 = vmatpush1.bf16.msra.mxu0 0
        %6994 = vmatprep.subr.bf16.mxu0 0
        %6995 = vmatpush1.bf16.msra.mxu0 0
        %6996 = vmatprep.subr.bf16.mxu0 0
        %6997 = vmatpush1.bf16.msra.mxu0 0
        %6998 = vmatprep.subr.bf16.mxu0 0
        %6999 = vmatpush1.bf16.msra.mxu0 0
        %7000 = vmatprep.subr.bf16.mxu0 0
        %7001 = vmatpush1.bf16.msra.mxu0 0
        %7002 = vmatprep.subr.bf16.mxu0 0
        %7003 = vmatpush1.bf16.msra.mxu0 0
        %7004 = vmatprep.subr.bf16.mxu0 0
        %7005 = vmatpush1.bf16.msra.mxu0 0
        %7006 = vmatprep.mubr.bf16.mxu0 0
        %7007 = vmatmul.mubr.bf16.gmra.mrb[0].mxu0 %v6972
        %v7008 = vpop.f32.mrb[0].mxu0
        %v7009 = vadd.f32 %v6946, %v7008
        %v7010 = vpop.f32.mrb[0].mxu0
        %v7011 = vpop.f32.mrb[0].mxu0
        %v7012 = vpop.f32.mrb[0].mxu0
        %7013 = vdwg.mxu0
        %v7014 = vlaneseq
        %v7015 = vshrl.u32 %v7014, 7
        %v7016 = vsub.s32 1, %v7015
        %v7017 = vrot.slane %v6916, %v7016
        %v7018 = vmul.f32 %v7009, %v7017
        %v7019 = vlaneseq
        %v7020 = vshrl.u32 %v7019, 7
        %v7021 = vsub.s32 2, %v7020
        %v7022 = vrot.slane %v6916, %v7021
        %v7023 = vadd.f32 %v7018, %v7022
        %vm7024 = vcmp.ge.f32.partialorder %v7023, 0.0
        %v7025 = vlaneseq
        %v7026 = vshrl.u32 %v7025, 7
        %v7027 = vsub.s32 3, %v7026
        %v7028 = vrot.slane %v6916, %v7027
        %v7029 = vmul.f32 %v7028, %v7023
        %v7030 = vsel %vm7024, %v7023, %v7029
        %v7032 = vrot.slane %v7030, 7
        %v7034 = vsel %vm2806, 0.0, %v7032
        %v7035 = vrot.slane %v7030, 1
        %v7037 = vsel %vm2813, %v7035, 0.0
        %7038 = vrot.lane.b32.xlu0 %v7030, 16
        %v7039 = vpop.permute.xlu0 %7038
        %7042 = vrot.lane.b32.xlu0 %v7037, 32
        %v7043 = vpop.permute.xlu0 %7042
        %v7045 = vsel %vm3027, %v7034, %v7039
        %v7046 = vsel %vm2832, %v7045, %v7043
        %v7047 = vpack.c.bf16 %v7046, %v7046
        %v7048 = vld [vmem:[%s129] sm:$0xf]
        %v7049 = vld [vmem:[%s129 + $0x4] sm:$0xf]
        %v7050 = vld [vmem:[%s129 + $0x8] sm:$0xf]
        %v7051 = vld [vmem:[%s129 + $0xc] sm:$0xf]
        %v7052 = vld [vmem:[%s129 + $0x10] sm:$0xf]
        %v7053 = vld [vmem:[%s129 + $0x14] sm:$0xf]
        %v7054 = vlaneseq
        %v7055 = vshrl.u32 %v7054, 7
        %v7056 = vsub.s32 4, %v7055
        %v7057 = vrot.slane %v6916, %v7056
        %v7064 = vunpack.c.l.b16 %v7048
        %v7065 = vunpack.c.l.b16 %v7049
        %v7066 = vunpack.c.l.b16 %v7050
        %v7067 = vunpack.c.l.b16 %v7051
        %v7068 = vunpack.c.l.b16 %v7052
        %v7069 = vunpack.c.l.b16 %v7053
        %v7070 = vpack.c.b16 %v7065, %v7064
        %v7071 = vpack.c.b16 %v7067, %v7066
        %v7072 = vpack.c.b16 %v7069, %v7068
        %v7077 = vsel %vm3489, %v7047, 0
        %7079 = vmatprep.subr.bf16.mxu0 0
        %7080 = vmatpush1.bf16.msra.mxu0 %v7070
        %7081 = vmatprep.subr.bf16.mxu0 0
        %7082 = vmatpush1.bf16.msra.mxu0 %v7071
        %7083 = vmatprep.subr.bf16.mxu0 0
        %7084 = vmatpush1.bf16.msra.mxu0 %v7072
        %7085 = vmatprep.subr.bf16.mxu0 0
        %7086 = vmatpush1.bf16.msra.mxu0 0
        %7087 = vmatprep.subr.bf16.mxu0 0
        %7088 = vmatpush1.bf16.msra.mxu0 0
        %7089 = vmatprep.subr.bf16.mxu0 0
        %7090 = vmatpush1.bf16.msra.mxu0 0
        %7091 = vmatprep.subr.bf16.mxu0 0
        %7092 = vmatpush1.bf16.msra.mxu0 0
        %7093 = vmatprep.subr.bf16.mxu0 0
        %7094 = vmatpush1.bf16.msra.mxu0 0
        %7095 = vmatprep.subr.bf16.mxu0 0
        %7096 = vmatpush1.bf16.msra.mxu0 0
        %7097 = vmatprep.subr.bf16.mxu0 0
        %7098 = vmatpush1.bf16.msra.mxu0 0
        %7099 = vmatprep.subr.bf16.mxu0 0
        %7100 = vmatpush1.bf16.msra.mxu0 0
        %7101 = vmatprep.subr.bf16.mxu0 0
        %7102 = vmatpush1.bf16.msra.mxu0 0
        %7103 = vmatprep.subr.bf16.mxu0 0
        %7104 = vmatpush1.bf16.msra.mxu0 0
        %7105 = vmatprep.subr.bf16.mxu0 0
        %7106 = vmatpush1.bf16.msra.mxu0 0
        %7107 = vmatprep.subr.bf16.mxu0 0
        %7108 = vmatpush1.bf16.msra.mxu0 0
        %7109 = vmatprep.subr.bf16.mxu0 0
        %7110 = vmatpush1.bf16.msra.mxu0 0
        %7111 = vmatprep.mubr.bf16.mxu0 0
        %7112 = vmatmul.mubr.bf16.gmra.mrb[0].mxu0 %v7077
        %v7113 = vpop.f32.mrb[0].mxu0
        %v7114 = vadd.f32 %v7057, %v7113
        %v7115 = vpop.f32.mrb[0].mxu0
        %v7116 = vpop.f32.mrb[0].mxu0
        %v7117 = vpop.f32.mrb[0].mxu0
        %7118 = vdwg.mxu0
        %v7119 = vlaneseq
        %v7120 = vshrl.u32 %v7119, 7
        %v7121 = vsub.s32 5, %v7120
        %v7122 = vrot.slane %v6916, %v7121
        %v7123 = vmul.f32 %v7114, %v7122
        %v7124 = vlaneseq
        %v7125 = vshrl.u32 %v7124, 7
        %v7126 = vsub.s32 6, %v7125
        %v7127 = vrot.slane %v6916, %v7126
        %v7128 = vadd.f32 %v7123, %v7127
        %vm7129 = vcmp.ge.f32.partialorder %v7128, 0.0
        %v7130 = vlaneseq
        %v7131 = vshrl.u32 %v7130, 7
        %v7132 = vsub.s32 7, %v7131
        %v7133 = vrot.slane %v6916, %v7132
        %v7134 = vmul.f32 %v7133, %v7128
        %v7135 = vsel %vm7129, %v7128, %v7134
        %v7136 = vpack.c.bf16 %v7135, %v7135
        %v7137 = vld [vmem:[%s131] sm:$0xf]
        %v7138 = vld [vmem:[%s131 + $0x4] sm:$0xf]
        %v7139 = vlaneseq
        %v7140 = vshrl.u32 %v7139, 7
        %v7141 = vsub.s32 3, %v7140
        %v7142 = vrot.slane %v6915, %v7141
        %v7145 = vunpack.c.l.b16 %v7137
        %v7146 = vunpack.c.l.b16 %v7138
        %v7147 = vpack.c.b16 %v7146, %v7145
        %v7150 = vsel %vm3027, %v7136, 0
        %7152 = vmatprep.subr.bf16.mxu0 0
        %7153 = vmatpush1.bf16.msra.mxu0 %v7147
        %7154 = vmatprep.subr.bf16.mxu0 0
        %7155 = vmatpush1.bf16.msra.mxu0 0
        %7156 = vmatprep.subr.bf16.mxu0 0
        %7157 = vmatpush1.bf16.msra.mxu0 0
        %7158 = vmatprep.subr.bf16.mxu0 0
        %7159 = vmatpush1.bf16.msra.mxu0 0
        %7160 = vmatprep.subr.bf16.mxu0 0
        %7161 = vmatpush1.bf16.msra.mxu0 0
        %7162 = vmatprep.subr.bf16.mxu0 0
        %7163 = vmatpush1.bf16.msra.mxu0 0
        %7164 = vmatprep.subr.bf16.mxu0 0
        %7165 = vmatpush1.bf16.msra.mxu0 0
        %7166 = vmatprep.subr.bf16.mxu0 0
        %7167 = vmatpush1.bf16.msra.mxu0 0
        %7168 = vmatprep.subr.bf16.mxu0 0
        %7169 = vmatpush1.bf16.msra.mxu0 0
        %7170 = vmatprep.subr.bf16.mxu0 0
        %7171 = vmatpush1.bf16.msra.mxu0 0
        %7172 = vmatprep.subr.bf16.mxu0 0
        %7173 = vmatpush1.bf16.msra.mxu0 0
        %7174 = vmatprep.subr.bf16.mxu0 0
        %7175 = vmatpush1.bf16.msra.mxu0 0
        %7176 = vmatprep.subr.bf16.mxu0 0
        %7177 = vmatpush1.bf16.msra.mxu0 0
        %7178 = vmatprep.subr.bf16.mxu0 0
        %7179 = vmatpush1.bf16.msra.mxu0 0
        %7180 = vmatprep.subr.bf16.mxu0 0
        %7181 = vmatpush1.bf16.msra.mxu0 0
        %7182 = vmatprep.subr.bf16.mxu0 0
        %7183 = vmatpush1.bf16.msra.mxu0 0
        %7184 = vmatprep.mubr.bf16.mxu0 0
        %7185 = vmatmul.mubr.bf16.gmra.mrb[0].mxu0 %v7150
        %v7186 = vpop.f32.mrb[0].mxu0
        %v7187 = vadd.f32 %v7142, %v7186
        %v7188 = vpop.f32.mrb[0].mxu0
        %v7189 = vpop.f32.mrb[0].mxu0
        %v7190 = vpop.f32.mrb[0].mxu0
        %7191 = vdwg.mxu0
        %v7192 = vadd.f32 %v6910, %v7187
        %v7193 = vpack.c.bf16 %v7192, %v7192
        %v7194 = vld [vmem:[%s167] sm:$0xf]
        %v7195 = vld [vmem:[%s167 + $0x4] sm:$0xf]
        %v7196 = vld [vmem:[%s167 + $0x8] sm:$0xf]
        %v7197 = vld [vmem:[%s167 + $0xc] sm:$0xf]
        %v7198 = vld [vmem:[%s167 + $0x10] sm:$0xf]
        %v7199 = vld [vmem:[%s167 + $0x14] sm:$0xf]
        %v7200 = vld [vmem:[%s167 + $0x18] sm:$0xf]
        %v7201 = vld [vmem:[%s167 + $0x1c] sm:$0xf]
        %v7210 = vunpack.c.l.b16 %v7194
        %v7211 = vunpack.c.l.b16 %v7195
        %v7212 = vunpack.c.l.b16 %v7196
        %v7213 = vunpack.c.l.b16 %v7197
        %v7214 = vunpack.c.l.b16 %v7198
        %v7215 = vunpack.c.l.b16 %v7199
        %v7216 = vunpack.c.l.b16 %v7200
        %v7217 = vunpack.c.l.b16 %v7201
        %v7218 = vpack.c.b16 %v7211, %v7210
        %v7219 = vpack.c.b16 %v7213, %v7212
        %v7220 = vpack.c.b16 %v7215, %v7214
        %v7221 = vpack.c.b16 %v7217, %v7216
        %v7227 = vsel %vm2835, %v7193, 0
        %7229 = vmatprep.subr.bf16.mxu0 0
        %7230 = vmatpush1.bf16.msra.mxu0 %v7218
        %7231 = vmatprep.subr.bf16.mxu0 0
        %7232 = vmatpush1.bf16.msra.mxu0 %v7219
        %7233 = vmatprep.subr.bf16.mxu0 0
        %7234 = vmatpush1.bf16.msra.mxu0 %v7220
        %7235 = vmatprep.subr.bf16.mxu0 0
        %7236 = vmatpush1.bf16.msra.mxu0 %v7221
        %7237 = vmatprep.subr.bf16.mxu0 0
        %7238 = vmatpush1.bf16.msra.mxu0 0
        %7239 = vmatprep.subr.bf16.mxu0 0
        %7240 = vmatpush1.bf16.msra.mxu0 0
        %7241 = vmatprep.subr.bf16.mxu0 0
        %7242 = vmatpush1.bf16.msra.mxu0 0
        %7243 = vmatprep.subr.bf16.mxu0 0
        %7244 = vmatpush1.bf16.msra.mxu0 0
        %7245 = vmatprep.subr.bf16.mxu0 0
        %7246 = vmatpush1.bf16.msra.mxu0 0
        %7247 = vmatprep.subr.bf16.mxu0 0
        %7248 = vmatpush1.bf16.msra.mxu0 0
        %7249 = vmatprep.subr.bf16.mxu0 0
        %7250 = vmatpush1.bf16.msra.mxu0 0
        %7251 = vmatprep.subr.bf16.mxu0 0
        %7252 = vmatpush1.bf16.msra.mxu0 0
        %7253 = vmatprep.subr.bf16.mxu0 0
        %7254 = vmatpush1.bf16.msra.mxu0 0
        %7255 = vmatprep.subr.bf16.mxu0 0
        %7256 = vmatpush1.bf16.msra.mxu0 0
        %7257 = vmatprep.subr.bf16.mxu0 0
        %7258 = vmatpush1.bf16.msra.mxu0 0
        %7259 = vmatprep.subr.bf16.mxu0 0
        %7260 = vmatpush1.bf16.msra.mxu0 0
        %7261 = vmatprep.mubr.bf16.mxu0 0
        %7262 = vmatmul.mubr.bf16.gmra.mrb[0].mxu0 %v7227
        %v7263 = vpop.f32.mrb[0].mxu0
        %v7264 = vadd.f32 0.0, %v7263
        %v7265 = vpop.f32.mrb[0].mxu0
        %v7266 = vpop.f32.mrb[0].mxu0
        %v7267 = vpop.f32.mrb[0].mxu0
        %7268 = vdwg.mxu0
        %v7269 = vld [vmem:[%s159] sm:$0xf]
        %v7270 = vld [vmem:[%s159 + $0x4] sm:$0xf]
        %v7271 = vpack.c.bf16 %v7264, %v7264
        %v7274 = vunpack.c.l.b16 %v7269
        %v7275 = vunpack.c.l.b16 %v7270
        %v7276 = vpack.c.b16 %v7275, %v7274
        %v7278 = vsel %vm3887, %v7276, 0
        %v7281 = vsel %vm3891, %v7271, 0
        %7283 = vmatprep.subr.bf16.mxu0 0
        %7284 = vmatpush1.bf16.msra.mxu0 %v7281
        %7285 = vmatprep.subr.bf16.mxu0 0
        %7286 = vmatpush1.bf16.msra.mxu0 0
        %7287 = vmatprep.subr.bf16.mxu0 0
        %7288 = vmatpush1.bf16.msra.mxu0 0
        %7289 = vmatprep.subr.bf16.mxu0 0
        %7290 = vmatpush1.bf16.msra.mxu0 0
        %7291 = vmatprep.subr.bf16.mxu0 0
        %7292 = vmatpush1.bf16.msra.mxu0 0
        %7293 = vmatprep.subr.bf16.mxu0 0
        %7294 = vmatpush1.bf16.msra.mxu0 0
        %7295 = vmatprep.subr.bf16.mxu0 0
        %7296 = vmatpush1.bf16.msra.mxu0 0
        %7297 = vmatprep.subr.bf16.mxu0 0
        %7298 = vmatpush1.bf16.msra.mxu0 0
        %7299 = vmatprep.subr.bf16.mxu0 0
        %7300 = vmatpush1.bf16.msra.mxu0 0
        %7301 = vmatprep.subr.bf16.mxu0 0
        %7302 = vmatpush1.bf16.msra.mxu0 0
        %7303 = vmatprep.subr.bf16.mxu0 0
        %7304 = vmatpush1.bf16.msra.mxu0 0
        %7305 = vmatprep.subr.bf16.mxu0 0
        %7306 = vmatpush1.bf16.msra.mxu0 0
        %7307 = vmatprep.subr.bf16.mxu0 0
        %7308 = vmatpush1.bf16.msra.mxu0 0
        %7309 = vmatprep.subr.bf16.mxu0 0
        %7310 = vmatpush1.bf16.msra.mxu0 0
        %7311 = vmatprep.subr.bf16.mxu0 0
        %7312 = vmatpush1.bf16.msra.mxu0 0
        %7313 = vmatprep.subr.bf16.mxu0 0
        %7314 = vmatpush1.bf16.msra.mxu0 0
        %7315 = vmatprep.mubr.bf16.mxu0 0
        %7316 = vmatmul.mubr.bf16.gmra.mrb[0].mxu0 %v7278
        %v7317 = vpop.f32.mrb[0].mxu0
        %v7318 = vadd.f32 %v3023, %v7317
        %v7319 = vpop.f32.mrb[0].mxu0
        %v7320 = vpop.f32.mrb[0].mxu0
        %v7321 = vadd.f32 %v3024, %v7320
        %v7322 = vpop.f32.mrb[0].mxu0
        %7323 = vdwg.mxu0
        %v7324 = vld [vmem:[%s133] sm:$0xf]
        %v7325 = vld [vmem:[%s135] sm:$0xff]
        %v7326 = vlaneseq
        %v7327 = vshrl.u32 %v7326, 7
        %v7328 = vsub.s32 0, %v7327
        %v7329 = vrot.slane %v7324, %v7328
        %v7330 = vmul.f32 %v7318, %v7329
        %v7331 = vmul.f32 %v7321, %v7329
        %v7332 = vlaneseq
        %v7333 = vshrl.u32 %v7332, 7
        %v7334 = vsub.s32 1, %v7333
        %v7335 = vrot.slane %v7324, %v7334
        %v7336 = vadd.f32 %v7330, %v7335
        %v7337 = vadd.f32 %v7331, %v7335
        %vm7338 = vcmp.ge.f32.partialorder %v7336, 0.0
        %vm7339 = vcmp.ge.f32.partialorder %v7337, 0.0
        %v7340 = vlaneseq
        %v7341 = vshrl.u32 %v7340, 7
        %v7342 = vsub.s32 2, %v7341
        %v7343 = vrot.slane %v7324, %v7342
        %v7344 = vmul.f32 %v7343, %v7336
        %v7345 = vmul.f32 %v7343, %v7337
        %v7346 = vsel %vm7338, %v7336, %v7344
        %v7347 = vsel %vm7339, %v7337, %v7345
        %v7348 = vpack.c.bf16 %v7347, %v7346
        %v7349 = vld [vmem:[%s137] sm:$0xf]
        %v7350 = vld [vmem:[%s137 + $0x4] sm:$0xf]
        %v7351 = vld [vmem:[%s137 + $0x8] sm:$0xf]
        %v7352 = vld [vmem:[%s137 + $0xc] sm:$0xf]
        %v7353 = vld [vmem:[%s137 + $0x10] sm:$0xf]
        %v7354 = vld [vmem:[%s137 + $0x14] sm:$0xf]
        %v7355 = vld [vmem:[%s137 + $0x18] sm:$0xf]
        %v7356 = vld [vmem:[%s137 + $0x1c] sm:$0xf]
        %v7357 = vld [vmem:[%s137 + $0x20] sm:$0xf]
        %v7358 = vld [vmem:[%s137 + $0x24] sm:$0xf]
        %v7359 = vld [vmem:[%s137 + $0x28] sm:$0xf]
        %v7360 = vld [vmem:[%s137 + $0x2c] sm:$0xf]
        %v7361 = vld [vmem:[%s137 + $0x30] sm:$0xf]
        %v7362 = vld [vmem:[%s137 + $0x34] sm:$0xf]
        %v7363 = vld [vmem:[%s137 + $0x38] sm:$0xf]
        %v7364 = vld [vmem:[%s137 + $0x3c] sm:$0xf]
        %v7365 = vlaneseq
        %v7366 = vshrl.u32 %v7365, 7
        %v7367 = vsub.s32 0, %v7366
        %v7368 = vrot.slane %v7325, %v7367
        %v7385 = vunpack.c.l.b16 %v7349
        %v7386 = vunpack.c.l.b16 %v7350
        %v7387 = vunpack.c.l.b16 %v7351
        %v7388 = vunpack.c.l.b16 %v7352
        %v7389 = vunpack.c.l.b16 %v7353
        %v7390 = vunpack.c.l.b16 %v7354
        %v7391 = vunpack.c.l.b16 %v7355
        %v7392 = vunpack.c.l.b16 %v7356
        %v7393 = vunpack.c.l.b16 %v7357
        %v7394 = vunpack.c.l.b16 %v7358
        %v7395 = vunpack.c.l.b16 %v7359
        %v7396 = vunpack.c.l.b16 %v7360
        %v7397 = vunpack.c.l.b16 %v7361
        %v7398 = vunpack.c.l.b16 %v7362
        %v7399 = vunpack.c.l.b16 %v7363
        %v7400 = vunpack.c.l.b16 %v7364
        %v7401 = vpack.c.b16 %v7386, %v7385
        %v7402 = vpack.c.b16 %v7388, %v7387
        %v7403 = vpack.c.b16 %v7390, %v7389
        %v7404 = vpack.c.b16 %v7392, %v7391
        %v7405 = vpack.c.b16 %v7394, %v7393
        %v7406 = vpack.c.b16 %v7396, %v7395
        %v7407 = vpack.c.b16 %v7398, %v7397
        %v7408 = vpack.c.b16 %v7400, %v7399
        %7417 = vmatprep.subr.bf16.mxu0 0
        %7418 = vmatpush1.bf16.msra.mxu0 %v7401
        %7419 = vmatprep.subr.bf16.mxu0 0
        %7420 = vmatpush1.bf16.msra.mxu0 %v7402
        %7421 = vmatprep.subr.bf16.mxu0 0
        %7422 = vmatpush1.bf16.msra.mxu0 %v7403
        %7423 = vmatprep.subr.bf16.mxu0 0
        %7424 = vmatpush1.bf16.msra.mxu0 %v7404
        %7425 = vmatprep.subr.bf16.mxu0 0
        %7426 = vmatpush1.bf16.msra.mxu0 %v7405
        %7427 = vmatprep.subr.bf16.mxu0 0
        %7428 = vmatpush1.bf16.msra.mxu0 %v7406
        %7429 = vmatprep.subr.bf16.mxu0 0
        %7430 = vmatpush1.bf16.msra.mxu0 %v7407
        %7431 = vmatprep.subr.bf16.mxu0 0
        %7432 = vmatpush1.bf16.msra.mxu0 %v7408
        %7433 = vmatprep.subr.bf16.mxu0 0
        %7434 = vmatpush1.bf16.msra.mxu0 0
        %7435 = vmatprep.subr.bf16.mxu0 0
        %7436 = vmatpush1.bf16.msra.mxu0 0
        %7437 = vmatprep.subr.bf16.mxu0 0
        %7438 = vmatpush1.bf16.msra.mxu0 0
        %7439 = vmatprep.subr.bf16.mxu0 0
        %7440 = vmatpush1.bf16.msra.mxu0 0
        %7441 = vmatprep.subr.bf16.mxu0 0
        %7442 = vmatpush1.bf16.msra.mxu0 0
        %7443 = vmatprep.subr.bf16.mxu0 0
        %7444 = vmatpush1.bf16.msra.mxu0 0
        %7445 = vmatprep.subr.bf16.mxu0 0
        %7446 = vmatpush1.bf16.msra.mxu0 0
        %7447 = vmatprep.subr.bf16.mxu0 0
        %7448 = vmatpush1.bf16.msra.mxu0 0
        %7449 = vmatprep.mubr.bf16.mxu0 0
        %7450 = vmatmul.mubr.bf16.gmra.mrb[0].mxu0 %v7348
        %v7451 = vpop.f32.mrb[0].mxu0
        %v7452 = vadd.f32 %v7368, %v7451
        %v7453 = vpop.f32.mrb[0].mxu0
        %v7454 = vpop.f32.mrb[0].mxu0
        %v7455 = vadd.f32 %v7368, %v7454
        %v7456 = vpop.f32.mrb[0].mxu0
        %7457 = vdwg.mxu0
        %v7458 = vlaneseq
        %v7459 = vshrl.u32 %v7458, 7
        %v7460 = vsub.s32 1, %v7459
        %v7461 = vrot.slane %v7325, %v7460
        %v7462 = vmul.f32 %v7452, %v7461
        %v7463 = vmul.f32 %v7455, %v7461
        %v7464 = vlaneseq
        %v7465 = vshrl.u32 %v7464, 7
        %v7466 = vsub.s32 2, %v7465
        %v7467 = vrot.slane %v7325, %v7466
        %v7468 = vadd.f32 %v7462, %v7467
        %v7469 = vadd.f32 %v7463, %v7467
        %vm7470 = vcmp.ge.f32.partialorder %v7468, 0.0
        %vm7471 = vcmp.ge.f32.partialorder %v7469, 0.0
        %v7472 = vlaneseq
        %v7473 = vshrl.u32 %v7472, 7
        %v7474 = vsub.s32 3, %v7473
        %v7475 = vrot.slane %v7325, %v7474
        %v7476 = vmul.f32 %v7475, %v7468
        %v7477 = vmul.f32 %v7475, %v7469
        %v7478 = vsel %vm7470, %v7468, %v7476
        %v7479 = vsel %vm7471, %v7469, %v7477
        %v7482 = vrot.slane %v7478, 7
        %v7483 = vrot.slane %v7479, 7
        %v7484 = vsel %vm2806, %v7482, %v7483
        %v7487 = vsel %vm2806, 0.0, %v7482
        %v7488 = vrot.slane %v7478, 1
        %v7489 = vrot.slane %v7479, 1
        %v7490 = vsel %vm2813, %v7488, %v7489
        %v7492 = vsel %vm2813, %v7489, 0.0
        %7493 = vrot.lane.b32.xlu0 %v7478, 32
        %v7494 = vpop.permute.xlu0 %7493
        %7495 = vrot.lane.b32.xlu0 %v7479, 32
        %v7496 = vpop.permute.xlu0 %7495
        %7500 = vrot.lane.b32.xlu0 %v7490, 64
        %v7501 = vpop.permute.xlu0 %7500
        %7502 = vrot.lane.b32.xlu0 %v7492, 64
        %v7503 = vpop.permute.xlu0 %7502
        %v7506 = vsel %vm2832, %v7487, %v7494
        %v7507 = vsel %vm2832, %v7484, %v7496
        %v7508 = vsel %vm2835, %v7506, %v7501
        %v7509 = vsel %vm2835, %v7507, %v7503
        %v7510 = vpack.c.bf16 %v7509, %v7508
        %v7511 = vld [vmem:[%s139] sm:$0xf]
        %v7512 = vld [vmem:[%s139 + $0x4] sm:$0xf]
        %v7513 = vld [vmem:[%s139 + $0x8] sm:$0xf]
        %v7514 = vld [vmem:[%s139 + $0xc] sm:$0xf]
        %v7515 = vld [vmem:[%s139 + $0x10] sm:$0xf]
        %v7516 = vld [vmem:[%s139 + $0x14] sm:$0xf]
        %v7517 = vld [vmem:[%s139 + $0x18] sm:$0xf]
        %v7518 = vld [vmem:[%s139 + $0x1c] sm:$0xf]
        %v7519 = vld [vmem:[%s139 + $0x20] sm:$0xf]
        %v7520 = vld [vmem:[%s139 + $0x24] sm:$0xf]
        %v7521 = vld [vmem:[%s139 + $0x28] sm:$0xf]
        %v7522 = vld [vmem:[%s139 + $0x2c] sm:$0xf]
        %v7523 = vlaneseq
        %v7524 = vshrl.u32 %v7523, 7
        %v7525 = vsub.s32 4, %v7524
        %v7526 = vrot.slane %v7325, %v7525
        %v7539 = vunpack.c.l.b16 %v7511
        %v7540 = vunpack.c.l.b16 %v7512
        %v7541 = vunpack.c.l.b16 %v7513
        %v7542 = vunpack.c.l.b16 %v7514
        %v7543 = vunpack.c.l.b16 %v7515
        %v7544 = vunpack.c.l.b16 %v7516
        %v7545 = vunpack.c.l.b16 %v7517
        %v7546 = vunpack.c.l.b16 %v7518
        %v7547 = vunpack.c.l.b16 %v7519
        %v7548 = vunpack.c.l.b16 %v7520
        %v7549 = vunpack.c.l.b16 %v7521
        %v7550 = vunpack.c.l.b16 %v7522
        %v7551 = vpack.c.b16 %v7540, %v7539
        %v7552 = vpack.c.b16 %v7542, %v7541
        %v7553 = vpack.c.b16 %v7544, %v7543
        %v7554 = vpack.c.b16 %v7546, %v7545
        %v7555 = vpack.c.b16 %v7548, %v7547
        %v7556 = vpack.c.b16 %v7550, %v7549
        %v7564 = vsel %vm2891, %v7510, 0
        %7566 = vmatprep.subr.bf16.mxu0 0
        %7567 = vmatpush1.bf16.msra.mxu0 %v7551
        %7568 = vmatprep.subr.bf16.mxu0 0
        %7569 = vmatpush1.bf16.msra.mxu0 %v7552
        %7570 = vmatprep.subr.bf16.mxu0 0
        %7571 = vmatpush1.bf16.msra.mxu0 %v7553
        %7572 = vmatprep.subr.bf16.mxu0 0
        %7573 = vmatpush1.bf16.msra.mxu0 %v7554
        %7574 = vmatprep.subr.bf16.mxu0 0
        %7575 = vmatpush1.bf16.msra.mxu0 %v7555
        %7576 = vmatprep.subr.bf16.mxu0 0
        %7577 = vmatpush1.bf16.msra.mxu0 %v7556
        %7578 = vmatprep.subr.bf16.mxu0 0
        %7579 = vmatpush1.bf16.msra.mxu0 0
        %7580 = vmatprep.subr.bf16.mxu0 0
        %7581 = vmatpush1.bf16.msra.mxu0 0
        %7582 = vmatprep.subr.bf16.mxu0 0
        %7583 = vmatpush1.bf16.msra.mxu0 0
        %7584 = vmatprep.subr.bf16.mxu0 0
        %7585 = vmatpush1.bf16.msra.mxu0 0
        %7586 = vmatprep.subr.bf16.mxu0 0
        %7587 = vmatpush1.bf16.msra.mxu0 0
        %7588 = vmatprep.subr.bf16.mxu0 0
        %7589 = vmatpush1.bf16.msra.mxu0 0
        %7590 = vmatprep.subr.bf16.mxu0 0
        %7591 = vmatpush1.bf16.msra.mxu0 0
        %7592 = vmatprep.subr.bf16.mxu0 0
        %7593 = vmatpush1.bf16.msra.mxu0 0
        %7594 = vmatprep.subr.bf16.mxu0 0
        %7595 = vmatpush1.bf16.msra.mxu0 0
        %7596 = vmatprep.subr.bf16.mxu0 0
        %7597 = vmatpush1.bf16.msra.mxu0 0
        %7598 = vmatprep.mubr.bf16.mxu0 0
        %7599 = vmatmul.mubr.bf16.gmra.mrb[0].mxu0 %v7564
        %v7600 = vpop.f32.mrb[0].mxu0
        %v7601 = vadd.f32 %v7526, %v7600
        %v7602 = vpop.f32.mrb[0].mxu0
        %v7603 = vpop.f32.mrb[0].mxu0
        %v7604 = vadd.f32 %v7526, %v7603
        %v7605 = vpop.f32.mrb[0].mxu0
        %7606 = vdwg.mxu0
        %v7607 = vlaneseq
        %v7608 = vshrl.u32 %v7607, 7
        %v7609 = vsub.s32 5, %v7608
        %v7610 = vrot.slane %v7325, %v7609
        %v7611 = vmul.f32 %v7601, %v7610
        %v7612 = vmul.f32 %v7604, %v7610
        %v7613 = vlaneseq
        %v7614 = vshrl.u32 %v7613, 7
        %v7615 = vsub.s32 6, %v7614
        %v7616 = vrot.slane %v7325, %v7615
        %v7617 = vadd.f32 %v7611, %v7616
        %v7618 = vadd.f32 %v7612, %v7616
        %vm7619 = vcmp.ge.f32.partialorder %v7617, 0.0
        %vm7620 = vcmp.ge.f32.partialorder %v7618, 0.0
        %v7621 = vlaneseq
        %v7622 = vshrl.u32 %v7621, 7
        %v7623 = vsub.s32 7, %v7622
        %v7624 = vrot.slane %v7325, %v7623
        %v7625 = vmul.f32 %v7624, %v7617
        %v7626 = vmul.f32 %v7624, %v7618
        %v7627 = vsel %vm7619, %v7617, %v7625
        %v7628 = vsel %vm7620, %v7618, %v7626
        %v7629 = vpack.c.bf16 %v7628, %v7627
        %v7630 = vld [vmem:[%s141] sm:$0xf]
        %v7631 = vld [vmem:[%s141 + $0x4] sm:$0xf]
        %v7632 = vld [vmem:[%s141 + $0x8] sm:$0xf]
        %v7633 = vld [vmem:[%s141 + $0xc] sm:$0xf]
        %v7634 = vlaneseq
        %v7635 = vshrl.u32 %v7634, 7
        %v7636 = vsub.s32 3, %v7635
        %v7637 = vrot.slane %v7324, %v7636
        %v7642 = vunpack.c.l.b16 %v7630
        %v7643 = vunpack.c.l.b16 %v7631
        %v7644 = vunpack.c.l.b16 %v7632
        %v7645 = vunpack.c.l.b16 %v7633
        %v7646 = vpack.c.b16 %v7643, %v7642
        %v7647 = vpack.c.b16 %v7645, %v7644
        %v7651 = vsel %vm2832, %v7629, 0
        %7653 = vmatprep.subr.bf16.mxu0 0
        %7654 = vmatpush1.bf16.msra.mxu0 %v7646
        %7655 = vmatprep.subr.bf16.mxu0 0
        %7656 = vmatpush1.bf16.msra.mxu0 %v7647
        %7657 = vmatprep.subr.bf16.mxu0 0
        %7658 = vmatpush1.bf16.msra.mxu0 0
        %7659 = vmatprep.subr.bf16.mxu0 0
        %7660 = vmatpush1.bf16.msra.mxu0 0
        %7661 = vmatprep.subr.bf16.mxu0 0
        %7662 = vmatpush1.bf16.msra.mxu0 0
        %7663 = vmatprep.subr.bf16.mxu0 0
        %7664 = vmatpush1.bf16.msra.mxu0 0
        %7665 = vmatprep.subr.bf16.mxu0 0
        %7666 = vmatpush1.bf16.msra.mxu0 0
        %7667 = vmatprep.subr.bf16.mxu0 0
        %7668 = vmatpush1.bf16.msra.mxu0 0
        %7669 = vmatprep.subr.bf16.mxu0 0
        %7670 = vmatpush1.bf16.msra.mxu0 0
        %7671 = vmatprep.subr.bf16.mxu0 0
        %7672 = vmatpush1.bf16.msra.mxu0 0
        %7673 = vmatprep.subr.bf16.mxu0 0
        %7674 = vmatpush1.bf16.msra.mxu0 0
        %7675 = vmatprep.subr.bf16.mxu0 0
        %7676 = vmatpush1.bf16.msra.mxu0 0
        %7677 = vmatprep.subr.bf16.mxu0 0
        %7678 = vmatpush1.bf16.msra.mxu0 0
        %7679 = vmatprep.subr.bf16.mxu0 0
        %7680 = vmatpush1.bf16.msra.mxu0 0
        %7681 = vmatprep.subr.bf16.mxu0 0
        %7682 = vmatpush1.bf16.msra.mxu0 0
        %7683 = vmatprep.subr.bf16.mxu0 0
        %7684 = vmatpush1.bf16.msra.mxu0 0
        %7685 = vmatprep.mubr.bf16.mxu0 0
        %7686 = vmatmul.mubr.bf16.gmra.mrb[0].mxu0 %v7651
        %v7687 = vpop.f32.mrb[0].mxu0
        %v7688 = vadd.f32 %v7637, %v7687
        %v7689 = vpop.f32.mrb[0].mxu0
        %v7690 = vpop.f32.mrb[0].mxu0
        %v7691 = vadd.f32 %v7637, %v7690
        %v7692 = vpop.f32.mrb[0].mxu0
        %7693 = vdwg.mxu0
        %v7694 = vadd.f32 %v7318, %v7688
        %v7695 = vadd.f32 %v7321, %v7691
        %v7696 = vld [vmem:[%s175] sm:$0x7]
        %v7697 = vlaneseq
        %v7698 = vshrl.u32 %v7697, 7
        %v7699 = vsub.s32 0, %v7698
        %v7700 = vrot.slane %v7696, %v7699
        %v7701 = vmul.f32 %v7694, %v7700
        %v7702 = vmul.f32 %v7695, %v7700
        %v7703 = vlaneseq
        %v7704 = vshrl.u32 %v7703, 7
        %v7705 = vsub.s32 1, %v7704
        %v7706 = vrot.slane %v7696, %v7705
        %v7707 = vadd.f32 %v7701, %v7706
        %v7708 = vadd.f32 %v7702, %v7706
        %vm7709 = vcmp.ge.f32.partialorder %v7707, 0.0
        %vm7710 = vcmp.ge.f32.partialorder %v7708, 0.0
        %v7711 = vlaneseq
        %v7712 = vshrl.u32 %v7711, 7
        %v7713 = vsub.s32 2, %v7712
        %v7714 = vrot.slane %v7696, %v7713
        %v7715 = vmul.f32 %v7714, %v7707
        %v7716 = vmul.f32 %v7714, %v7708
        %v7717 = vsel %vm7709, %v7707, %v7715
        %v7718 = vsel %vm7710, %v7708, %v7716
        %7719 = vst [vmem:[%s2644] sm:$0xff] %v7717
        %7720 = vst [vmem:[%s2644 + $0x8] sm:$0xff] %v7718
        %p7721 = scmp.lt.s32.totalorder %s192, 1
        %s7722 = scalar_select %p7721, %s192, 1
        %s7723 = smul.addr %s7722, 2
        %s7724 = smul.addr %s7723, 8
        %s7725 = scalar_lea.vmem %s177, %s7724
        // Predicated region
        $region401: #{hourglass_forward.1} parent=371 // pred_check
          %p7726 = pneg %p2063
        $region402: #{hourglass_forward.1} parent=371 // pred_check_branch
          %7728 = sbr.rel (%p7726) target = $region404
        $region403: #{hourglass_forward.1} parent=371 // pred_region
          _
        $region404: #{hourglass_forward.1} parent=371 // pred_fallthru
          _
      $region372: #{hourglass_forward.1} parent=5 // pred_fallthru
        _
      %p7729 = scmp.le.s32.totalorder 2, %s187
      // Predicated region
      $region405: #{hourglass_forward.1} parent=5 // pred_check
        %p7730 = pneg %p7729
      $region406: #{hourglass_forward.1} parent=5 // pred_check_branch
        %7732 = sbr.rel (%p7730) target = $region408
      $region407: #{hourglass_forward.1} parent=5 // pred_region
        %s7733 = ssub.s32 %s187, 2
        // Predicated region
        $region409: #{hourglass_forward.1} parent=407 // pred_check
          %p7734 = pneg %p2069
        $region410: #{hourglass_forward.1} parent=407 // pred_check_branch
          %7736 = sbr.rel (%p7734) target = $region412
        $region411: #{hourglass_forward.1} parent=407 // pred_region
          %p7737 = scmp.lt.s32.totalorder %s193, 1
          %s7738 = scalar_select %p7737, %s193, 1
          %s7739 = smul.addr %s7738, 2
          %s7740 = smul.addr %s7739, 8
          %s7741 = scalar_lea.vmem %s177, %s7740
        $region412: #{hourglass_forward.1} parent=407 // pred_fallthru
          _
      $region408: #{hourglass_forward.1} parent=5 // pred_fallthru
        _
    $region6: #{hourglass_forward.1} parent=1 // loop_footer
      %s191 = sadd.s32 1, %s187
    $region7: #{hourglass_forward.1} parent=1 // loop_footer_branch
      %186 = sbr.rel target = $region3
    $region8: #{hourglass_forward.1} parent=1 // loop_exit
      _
    %7742 = vsyncpa [#allocation3], 1
    %s7743 = scalar_lea.sflag [#allocation3], 1
    %7744 = vsyncpa %s7743, 1
    %7745 = vsyncpa [#allocation5], 1
    %7746 = vsyncpa [#allocation8], 1
    %7747 = vsyncpa [#allocation11], 1

</llo_original>
